<compile_context>
chip_gen: v7x
topology: tpu7x:2x2x1
jax: 0.10.0
libtpu: 0.0.40
codegen_flags: <defaults>
</compile_context>

<pallas_src>
import functools

import jax
import jax.numpy as jnp
from jax.experimental import pallas as pl
from jax.experimental.pallas import tpu as pltpu

# ----------------------------- hyper-parameters -----------------------------
L1, L2, L3 = 8, 16, 24          # encoder kernel lengths
STRIDE = L1 // 2                # encoder stride
NF = 16                         # num_filters
R = 32                          # representation_channels
D = 32                          # de_cnn_channels (TCN hidden / resnet channels)
KDW = 3                         # de_cnn_k
E = 32                          # speaker_emb_size
NCLS = 10                       # num_classes
NBLK = 2                        # num_blocks per stack
NSTK = 1                        # num_stacks
EPS = 1e-5
C3 = 3 * NF                     # concatenated encoder channels
WIN3 = L1 + L2 + L3             # concatenated decoder window samples


def _round_up(x, m):
    return (x + m - 1) // m * m


# ===================== row-collapsed pointwise-conv calls ====================
_ROW_TILE = 512                 # rows per grid step once inputs get large


def _rows_call(kernel, x2d, consts, n_out):
    """x2d: (M, K) rows; consts: small 2-D arrays resident across the grid."""
    m, k = x2d.shape
    tm = m if m <= _ROW_TILE else _ROW_TILE
    grid = (pl.cdiv(m, tm),)
    in_specs = [pl.BlockSpec((tm, k), lambda i: (i, 0))]
    in_specs += [pl.BlockSpec(c.shape, lambda i: (0, 0)) for c in consts]
    return pl.pallas_call(
        kernel,
        out_shape=jax.ShapeDtypeStruct((m, n_out), jnp.float32),
        grid_spec=pltpu.PrefetchScalarGridSpec(
            num_scalar_prefetch=0,
            grid=grid,
            in_specs=in_specs,
            out_specs=pl.BlockSpec((tm, n_out), lambda i: (i, 0)),
        ),
        compiler_params=pltpu.CompilerParams(
            dimension_semantics=("parallel",)),
    )(x2d, *consts)


def _matmul_bias_kernel(a_ref, w_ref, b_ref, o_ref):
    o_ref[...] = (jnp.dot(a_ref[...], w_ref[...],
                          preferred_element_type=jnp.float32) + b_ref[...])


def _ln_matmul_bias_kernel(a_ref, g_ref, bt_ref, w_ref, b_ref, o_ref):
    a = a_ref[...]
    mean = jnp.mean(a, axis=1, keepdims=True)
    d = a - mean
    var = jnp.mean(d * d, axis=1, keepdims=True)      # biased (torch LayerNorm)
    a_n = d * jax.lax.rsqrt(var + EPS) * g_ref[...] + bt_ref[...]
    o_ref[...] = (jnp.dot(a_n, w_ref[...],
                          preferred_element_type=jnp.float32) + b_ref[...])


def matmul_bias(x, w, bias=None):
    """x: (..., K) @ w (K, N) + bias -> (..., N), batch folded into rows."""
    x = x.astype(jnp.float32)
    w = w.astype(jnp.float32)
    k = x.shape[-1]
    n_out = w.shape[1]
    b2 = (jnp.zeros((n_out,), jnp.float32) if bias is None
          else bias.astype(jnp.float32)).reshape(1, n_out)
    x2 = x.reshape(-1, k)
    if x2.shape[0] < 8:                   # degenerate: pallas_call is overhead
        y2 = x2 @ w + b2
    else:
        y2 = _rows_call(_matmul_bias_kernel, x2, [w, b2], n_out)
    return y2.reshape(*x.shape[:-1], n_out)


def ln_matmul_bias(x, gamma, beta, w, bias):
    """LayerNorm over the last dim fused with a pointwise conv."""
    x = x.astype(jnp.float32)
    k = x.shape[-1]
    n_out = w.shape[1]
    g2 = gamma.astype(jnp.float32).reshape(1, k)
    bt2 = beta.astype(jnp.float32).reshape(1, k)
    w = w.astype(jnp.float32)
    b2 = bias.astype(jnp.float32).reshape(1, n_out)
    x2 = x.reshape(-1, k)
    if x2.shape[0] < 8:
        mean = x2.mean(-1, keepdims=True)
        d = x2 - mean
        var = (d * d).mean(-1, keepdims=True)
        y2 = (d * jax.lax.rsqrt(var + EPS) * g2 + bt2) @ w + b2
    else:
        y2 = _rows_call(_ln_matmul_bias_kernel, x2, [g2, bt2, w, b2], n_out)
    return y2.reshape(*x.shape[:-1], n_out)


# ===================== fused speaker-encoder ResNet block ====================
def _resnet_block_kernel(inv_n, has_res, *refs):
    if has_res:
        (x_ref, w1_ref, w2_ref, wres_ref, al_ref,
         g1_ref, be1_ref, g2_ref, be2_ref, o_ref) = refs
    else:
        (x_ref, w1_ref, w2_ref, al_ref,
         g1_ref, be1_ref, g2_ref, be2_ref, o_ref) = refs
        wres_ref = None
    x = x_ref[...]
    al = al_ref[...]
    out = jnp.dot(x, w1_ref[...], preferred_element_type=jnp.float32)
    out = jnp.where(out > 0, out, al[0:1, 0:1] * out)            # PReLU #1
    # training-mode BatchNorm (batch stats, biased var), single fused sweep
    s1 = jnp.sum(out, axis=0, keepdims=True)
    s2 = jnp.sum(out * out, axis=0, keepdims=True)
    mean = s1 * inv_n
    var = s2 * inv_n - mean * mean
    out = (out - mean) * jax.lax.rsqrt(var + EPS) * g1_ref[...] + be1_ref[...]
    out = jnp.dot(out, w2_ref[...], preferred_element_type=jnp.float32)
    s1 = jnp.sum(out, axis=0, keepdims=True)
    s2 = jnp.sum(out * out, axis=0, keepdims=True)
    mean = s1 * inv_n
    var = s2 * inv_n - mean * mean
    out = (out - mean) * jax.lax.rsqrt(var + EPS) * g2_ref[...] + be2_ref[...]
    if wres_ref is not None:
        res = jnp.dot(x, wres_ref[...], preferred_element_type=jnp.float32)
    else:
        res = x
    out = out + res
    o_ref[...] = jnp.where(out > 0, out, al[0:1, 1:2] * out)     # PReLU #2


def resnet_block(x, p):
    """x: (B, T, Cin) -> fused conv/PReLU/BN/residual, then maxpool(3)."""
    b_sz, t_len, cin = x.shape
    m = b_sz * t_len
    cout = p['w1'].shape[1]
    has_res = 'wres' in p
    x2 = x.reshape(m, cin).astype(jnp.float32)
    al = jnp.stack([p['a1'], p['a2']]).reshape(1, 2).astype(jnp.float32)
    consts = [p['w1'].astype(jnp.float32), p['w2'].astype(jnp.float32)]
    if has_res:
        consts.append(p['wres'].astype(jnp.float32))
    consts += [al,
               p['bn1_g'].astype(jnp.float32).reshape(1, cout),
               p['bn1_b'].astype(jnp.float32).reshape(1, cout),
               p['bn2_g'].astype(jnp.float32).reshape(1, cout),
               p['bn2_b'].astype(jnp.float32).reshape(1, cout)]
    kern = functools.partial(_resnet_block_kernel, 1.0 / m, has_res)
    in_specs = [pl.BlockSpec((m, cin), lambda i: (0, 0))]
    in_specs += [pl.BlockSpec(c.shape, lambda i: (0, 0)) for c in consts]
    out2 = pl.pallas_call(
        kern,
        out_shape=jax.ShapeDtypeStruct((m, cout), jnp.float32),
        grid_spec=pltpu.PrefetchScalarGridSpec(
            num_scalar_prefetch=0, grid=(1,),
            in_specs=in_specs,
            out_specs=pl.BlockSpec((m, cout), lambda i: (0, 0))),
    )(x2, *consts)
    out = out2.reshape(b_sz, t_len, cout)
    # TODO(synk): the stride-3 maxpool stays in XLA (a non-8-aligned strided
    # row downsample has no clean Mosaic lowering); it is tiny here.
    tp = t_len // 3
    return out[:, :tp * 3, :].reshape(b_sz, tp, 3, cout).max(axis=2)


# ========== fully fused TCN stack + mask heads + decoder projection ==========
def _tcn_stack_kernel(t_valid, dils, x_ref, mix_ref, eb_ref, al_ref, wx_ref,
                      g1_ref, b1_ref, dw_ref, db_ref, g2_ref, b2_ref,
                      wo_ref, bo_ref, wm_ref, bm_ref, wd_ref, o_ref):
    t_pad = x_ref.shape[1]
    d_ch = wx_ref.shape[2]
    n = float(t_valid * d_ch)
    x = x_ref[0]                                      # (T_pad, R), VMEM-resident
    eb_all = eb_ref[0]                                # (NB, D) per-batch biases
    al = al_ref[...]                                  # (1, 2*NB) PReLU alphas
    row_ids = jax.lax.broadcasted_iota(jnp.int32, (t_pad, d_ch), 0)
    row_mask = (row_ids < t_valid).astype(jnp.float32)

    for bi, dil in enumerate(dils):                   # static unrolled blocks
        a1 = al[0:1, 2 * bi:2 * bi + 1]
        a2 = al[0:1, 2 * bi + 1:2 * bi + 2]

        # conv1x1_in (speaker-emb contribution pre-folded into eb) + PReLU
        h = (jnp.dot(x, wx_ref[bi], preferred_element_type=jnp.float32)
             + eb_all[bi:bi + 1, :])
        h = jnp.where(h > 0, h, a1 * h)
        h = h * row_mask                              # zero the padded rows

        # GlobalLayerNorm #1: one sum / sum-of-squares sweep, unbiased var
        s1 = jnp.sum(h)
        s2 = jnp.sum(h * h)
        mean = s1 / n
        var = (s2 - n * mean * mean) / (n - 1.0)
        h = (h - mean) * jax.lax.rsqrt(var + EPS) * g1_ref[bi] + b1_ref[bi]
        h = h * row_mask                              # 'same' zero pad (right)

        # dilated depthwise conv along T: in-register rolls + edge masks
        pad = (KDW - 1) * dil // 2
        w_taps = dw_ref[bi]                           # (KDW, D)
        acc = jnp.zeros((t_pad, d_ch), jnp.float32)
        for j in range(KDW):                          # static unrolled taps
            off = j * dil - pad
            if off == 0:
                contrib = h
            else:
                rolled = pltpu.roll(h, shift=(-off) % t_pad, axis=0)
                tgt = row_ids + off
                valid = jnp.logical_and(tgt >= 0, tgt < t_valid)
                contrib = jnp.where(valid, rolled, 0.0)
            acc = acc + contrib * w_taps[j:j + 1, :]
        h = acc + db_ref[bi]

        # PReLU + GlobalLayerNorm #2
        h = jnp.where(h > 0, h, a2 * h)
        h = h * row_mask
        s1 = jnp.sum(h)
        s2 = jnp.sum(h * h)
        mean = s1 / n
        var = (s2 - n * mean * mean) / (n - 1.0)
        h = (h - mean) * jax.lax.rsqrt(var + EPS) * g2_ref[bi] + b2_ref[bi]

        # conv1x1_out + residual
        x = (jnp.dot(h, wo_ref[bi], preferred_element_type=jnp.float32)
             + bo_ref[bi] + x)

    # fused mask heads (ReLU + 1x1 conv) * mixed encodings -> decoder frames
    e = jnp.maximum(x, 0.0)
    m = (jnp.dot(e, wm_ref[...], preferred_element_type=jnp.float32)
         + bm_ref[...])
    p = m * mix_ref[0]
    o_ref[0] = jnp.dot(p, wd_ref[...], preferred_element_type=jnp.float32)


def tcn_stack_mask_decode(mixed_enc, mixed_cat, emb, tcn_params,
                          w_mask, b_mask, w_dec, t_valid):
    """mixed_enc: (B, T_pad, R); mixed_cat: (B, T_pad, 3*NF); emb: (B, E).

    Returns decoder frames (B, T_pad, L1+L2+L3); rows >= t_valid are junk and
    are sliced off by the caller.
    """
    b_sz, t_pad, r_ch = mixed_enc.shape
    c3 = mixed_cat.shape[2]
    n_cols = w_dec.shape[1]

    blocks, dils, firsts = [], [], []
    for stack in tcn_params:
        for i, bp in enumerate(stack):
            blocks.append(bp)
            dils.append(2 ** i)
            firsts.append(i == 0)
    nb = len(blocks)
    d_ch = blocks[0]['in_w'].shape[1]

    wx_l, eb_l, al_l = [], [], []
    g1_l, b1_l, dw_l, db_l, g2_l, b2_l, wo_l, bo_l = ([] for _ in range(8))
    for bp, first in zip(blocks, firsts):
        w_in = bp['in_w'].astype(jnp.float32)
        in_b = bp['in_b'].astype(jnp.float32)
        if first:
            wx = w_in[:r_ch]
            we = w_in[r_ch:]
            eb = emb.astype(jnp.float32) @ we + in_b[None, :]
        else:
            wx = w_in
            eb = jnp.broadcast_to(in_b[None, :], (b_sz, d_ch))
        wx_l.append(wx)
        eb_l.append(eb)
        al_l += [bp['a1'], bp['a2']]
        g1_l.append(bp['gln1_w'].astype(jnp.float32).reshape(1, d_ch))
        b1_l.append(bp['gln1_b'].astype(jnp.float32).reshape(1, d_ch))
        dw_l.append(bp['dw_w'].astype(jnp.float32))
        db_l.append(bp['dw_b'].astype(jnp.float32).reshape(1, d_ch))
        g2_l.append(bp['gln2_w'].astype(jnp.float32).reshape(1, d_ch))
        b2_l.append(bp['gln2_b'].astype(jnp.float32).reshape(1, d_ch))
        wo_l.append(bp['out_w'].astype(jnp.float32))
        bo_l.append(bp['out_b'].astype(jnp.float32).reshape(1, r_ch))

    wx_s = jnp.stack(wx_l)                    # (NB, R, D)
    eb_s = jnp.stack(eb_l, axis=1)            # (B, NB, D)
    al_s = jnp.stack(al_l).reshape(1, 2 * nb).astype(jnp.float32)
    g1_s, b1_s = jnp.stack(g1_l), jnp.stack(b1_l)      # (NB, 1, D)
    dw_s, db_s = jnp.stack(dw_l), jnp.stack(db_l)      # (NB, KDW, D)/(NB, 1, D)
    g2_s, b2_s = jnp.stack(g2_l), jnp.stack(b2_l)
    wo_s, bo_s = jnp.stack(wo_l), jnp.stack(bo_l)      # (NB, D, R)/(NB, 1, R)
    wm = w_mask.astype(jnp.float32)                    # (R, 3*NF)
    bm = b_mask.astype(jnp.float32).reshape(1, c3)
    wd = w_dec.astype(jnp.float32)                     # (3*NF, WIN3)

    kern = functools.partial(_tcn_stack_kernel, t_valid, tuple(dils))
    c2 = lambda s: pl.BlockSpec(s, lambda b: (0, 0))
    c3spec = lambda s: pl.BlockSpec(s, lambda b: (0, 0, 0))
    return pl.pallas_call(
        kern,
        out_shape=jax.ShapeDtypeStruct((b_sz, t_pad, n_cols), jnp.float32),
        grid_spec=pltpu.PrefetchScalarGridSpec(
            num_scalar_prefetch=0,
            grid=(b_sz,),
            in_specs=[
                pl.BlockSpec((1, t_pad, r_ch), lambda b: (b, 0, 0)),
                pl.BlockSpec((1, t_pad, c3), lambda b: (b, 0, 0)),
                pl.BlockSpec((1, nb, d_ch), lambda b: (b, 0, 0)),
                c2(al_s.shape),
                c3spec(wx_s.shape), c3spec(g1_s.shape), c3spec(b1_s.shape),
                c3spec(dw_s.shape), c3spec(db_s.shape),
                c3spec(g2_s.shape), c3spec(b2_s.shape),
                c3spec(wo_s.shape), c3spec(bo_s.shape),
                c2(wm.shape), c2(bm.shape), c2(wd.shape),
            ],
            out_specs=pl.BlockSpec((1, t_pad, n_cols), lambda b: (b, 0, 0)),
        ),
        compiler_params=pltpu.CompilerParams(
            dimension_semantics=("parallel",)),
    )(mixed_enc.astype(jnp.float32), mixed_cat.astype(jnp.float32),
      eb_s, al_s, wx_s, g1_s, b1_s, dw_s, db_s, g2_s, b2_s, wo_s, bo_s,
      wm, bm, wd)


# =============================== glue helpers ================================
def _frame_indices(n_frames, win):
    return jnp.arange(n_frames)[:, None] * STRIDE + jnp.arange(win)[None, :]


def _block_diag3(w_a, w_b, w_c):
    r_a, c_a = w_a.shape
    r_b, c_b = w_b.shape
    r_c, c_c = w_c.shape
    out = jnp.zeros((r_a + r_b + r_c, c_a + c_b + c_c), jnp.float32)
    out = out.at[:r_a, :c_a].set(w_a)
    out = out.at[r_a:r_a + r_b, c_a:c_a + c_b].set(w_b)
    out = out.at[r_a + r_b:, c_a + c_b:].set(w_c)
    return out


def get_real_ref_lens(ref_lens):
    rl = (1 + (ref_lens - L1) // (L1 // 2)).reshape(-1, 1)
    rl = rl // 3 // 3 // 3
    return rl.astype(jnp.float32)


# ================================= forward ===================================
def spex_forward(P, mixed, mixed_lens, ref, ref_lens):
    del mixed_lens                                    # unused (as in reference)
    b_sz, t_mix = mixed.shape
    t_ref = ref.shape[1]
    mixed = mixed.astype(jnp.float32)
    ref = ref.astype(jnp.float32)

    t1 = (t_mix - L1) // STRIDE + 1                   # short-encoder frames
    tr1 = (t_ref - L1) // STRIDE + 1
    t1p = _round_up(t1, 8)                            # sublane-aligned frames

    # ReLU commutes with zero padding, so one padded+ReLU'd copy of `mixed`
    # serves every encoder branch (short/mid/long of both paths).
    pad_to = max((t1p - 1) * STRIDE + L3, (tr1 - 1) * STRIDE + L3)
    mixed_rp = jax.nn.relu(jnp.pad(mixed, ((0, 0), (0, pad_to - t_mix))))
    ref_r = jax.nn.relu(ref)

    # TODO(synk): for long audio, move this overlapping-frame gather inside
    # the encoder kernel; at these lengths the XLA gather is negligible.
    f_s = mixed_rp[:, _frame_indices(t1p, L1)]
    f_m = mixed_rp[:, _frame_indices(t1p, L2)]
    f_l = mixed_rp[:, _frame_indices(t1p, L3)]
    mixed_frames = jnp.concatenate([f_s, f_m, f_l], axis=-1)   # (B, T1p, 48)

    # (reference-model quirk preserved: the ref-path mid/long encoders consume
    #  `mixed`, not `ref`)
    rf_s = ref_r[:, _frame_indices(tr1, L1)]
    rf_m = mixed_rp[:, _frame_indices(tr1, L2)]
    rf_l = mixed_rp[:, _frame_indices(tr1, L3)]
    ref_frames = jnp.concatenate([rf_s, rf_m, rf_l], axis=-1)  # (B, Tr1, 48)

    # one block-diagonal matmul == three parallel encoders + channel concat;
    # mixed-path and ref-path frames share a single row-collapsed call.
    w_enc = _block_diag3(P['enc_short_w'], P['enc_mid_w'], P['enc_long_w'])
    b_enc = jnp.concatenate([P['enc_short_b'], P['enc_mid_b'],
                             P['enc_long_b']])
    all_frames = jnp.concatenate(
        [mixed_frames.reshape(b_sz * t1p, WIN3),
         ref_frames.reshape(b_sz * tr1, WIN3)], axis=0)
    enc_all = matmul_bias(all_frames, w_enc, b_enc)            # (rows, 3*NF)
    mixed_cat = enc_all[:b_sz * t1p].reshape(b_sz, t1p, C3)
    ref_cat = enc_all[b_sz * t1p:].reshape(b_sz, tr1, C3)

    # mixed head: LayerNorm(3*NF) + 1x1 conv, fused
    mixed_enc = ln_matmul_bias(mixed_cat, P['enc_norm_g'], P['enc_norm_b'],
                               P['enc_c1_w'], P['enc_c1_b'])   # (B, T1p, R)

    # ---- speaker encoder (fused ResNet blocks) ----
    spk = P['spk']
    x = ln_matmul_bias(ref_cat, spk['ln_g'], spk['ln_b'],
                       spk['in_w'], spk['in_b'])               # (B, Tr1, R)
    for rp in spk['rb']:
        x = resnet_block(x, rp)
    ref_enc = matmul_bias(x, spk['out_w'], spk['out_b'])       # (B, Tf, E)
    rl = get_real_ref_lens(ref_lens)
    ref_emb = ref_enc.sum(axis=1) / rl                         # (B, E)
    # degenerate (M = B) matmul: plain XLA dot beats a pallas_call launch
    ref_logits = ref_emb @ P['cls_w'].astype(jnp.float32) + P['cls_b'][None, :]

    # ---- fused TCN stack + mask heads + decoder frame projection ----
    w_mask = jnp.concatenate([P['mask_s_w'], P['mask_m_w'], P['mask_l_w']],
                             axis=1)                           # (R, 3*NF)
    b_mask = jnp.concatenate([P['mask_s_b'], P['mask_m_b'], P['mask_l_b']])
    w_dec = _block_diag3(P['dec_s_w'], P['dec_m_w'], P['dec_l_w'])  # (48, 48)
    frames = tcn_stack_mask_decode(mixed_enc, mixed_cat, ref_emb, P['tcn'],
                                   w_mask, b_mask, w_dec, t1)  # (B, T1p, 48)
    frames = frames[:, :t1, :]

    # ---- overlap-add decoders (scatter-add glue) + bias ----
    def overlap_add(fr, win, bias):
        l_out = (t1 - 1) * STRIDE + win
        idx = _frame_indices(t1, win)
        out = jnp.zeros((b_sz, l_out), jnp.float32).at[:, idx].add(fr)
        return out + bias[0]

    pred_short = overlap_add(frames[..., :L1], L1, P['dec_s_b'])
    pred_short = jnp.pad(pred_short,
                         ((0, 0), (0, t_mix - pred_short.shape[1])))
    pred_mid = overlap_add(frames[..., L1:L1 + L2], L2,
                           P['dec_m_b'])[:, :t_mix]
    pred_long = overlap_add(frames[..., L1 + L2:], L3,
                            P['dec_l_b'])[:, :t_mix]

    return {'pred_short': pred_short, 'pred_mid': pred_mid,
            'pred_long': pred_long, 'speakers_logits': ref_logits}


# ============================ parameter creation =============================
def make_params(seed=42):
    key = jax.random.PRNGKey(seed)

    def nxt():
        nonlocal key
        key, sub = jax.random.split(key)
        return sub

    def rand(shape, scale=0.1):
        return scale * jax.random.normal(nxt(), shape, jnp.float32)

    def resblock(cin, cout):
        p = {'w1': rand((cin, cout)), 'w2': rand((cout, cout)),
             'a1': jnp.float32(0.25), 'a2': jnp.float32(0.25),
             'bn1_g': jnp.ones((cout,), jnp.float32),
             'bn1_b': jnp.zeros((cout,), jnp.float32),
             'bn2_g': jnp.ones((cout,), jnp.float32),
             'bn2_b': jnp.zeros((cout,), jnp.float32)}
        if cin != cout:
            p['wres'] = rand((cin, cout))
        return p

    def tcn(i):
        cin = R + E if i == 0 else R
        return {'in_w': rand((cin, D)), 'in_b': rand((D,)),
                'a1': jnp.float32(0.25), 'a2': jnp.float32(0.25),
                'gln1_w': jnp.ones((D,), jnp.float32),
                'gln1_b': jnp.zeros((D,), jnp.float32),
                'dw_w': rand((KDW, D)), 'dw_b': rand((D,)),
                'gln2_w': jnp.ones((D,), jnp.float32),
                'gln2_b': jnp.zeros((D,), jnp.float32),
                'out_w': rand((D, R)), 'out_b': rand((R,))}

    return {
        'enc_short_w': rand((L1, NF)), 'enc_short_b': rand((NF,)),
        'enc_mid_w': rand((L2, NF)), 'enc_mid_b': rand((NF,)),
        'enc_long_w': rand((L3, NF)), 'enc_long_b': rand((NF,)),
        'enc_norm_g': jnp.ones((3 * NF,), jnp.float32),
        'enc_norm_b': jnp.zeros((3 * NF,), jnp.float32),
        'enc_c1_w': rand((3 * NF, R)), 'enc_c1_b': rand((R,)),
        'spk': {
            'ln_g': jnp.ones((3 * NF,), jnp.float32),
            'ln_b': jnp.zeros((3 * NF,), jnp.float32),
            'in_w': rand((3 * NF, R)), 'in_b': rand((R,)),
            'out_w': rand((D, E)), 'out_b': rand((E,)),
            'rb': [resblock(R, R), resblock(R, D), resblock(D, D)],
        },
        'cls_w': rand((E, NCLS)), 'cls_b': rand((NCLS,)),
        'tcn': [[tcn(i) for i in range(NBLK)] for _ in range(NSTK)],
        'mask_s_w': rand((R, NF)), 'mask_s_b': rand((NF,)),
        'mask_m_w': rand((R, NF)), 'mask_m_b': rand((NF,)),
        'mask_l_w': rand((R, NF)), 'mask_l_b': rand((NF,)),
        'dec_s_w': rand((NF, L1)), 'dec_s_b': rand((1,)),
        'dec_m_w': rand((NF, L2)), 'dec_m_b': rand((1,)),
        'dec_l_w': rand((NF, L3)), 'dec_l_b': rand((1,)),
    }


# =================================== main ====================================
if __name__ == "__main__":
    params = make_params()

    key = jax.random.PRNGKey(0)
    k1, k2 = jax.random.split(key)
    B, T = 2, 200
    mixed = jax.random.normal(k1, (B, T), jnp.float32)
    ref = jax.random.normal(k2, (B, T), jnp.float32)
    mixed_lens = jnp.array([T, T], jnp.int32)
    ref_lens = jnp.array([200, 180], jnp.int32)

    fwd = jax.jit(spex_forward)
    out = fwd(params, mixed, mixed_lens, ref, ref_lens)
    jax.block_until_ready(out)

    assert out['pred_short'].shape == (B, T)
    assert out['pred_mid'].shape == (B, T)
    assert out['pred_long'].shape == (B, T)
    assert out['speakers_logits'].shape == (B, NCLS)

    print("KERNEL_OK")
</pallas_src>

<mosaic_0001>
module attributes {stable_mosaic.version = 11 : i64} {
  func.func @_matmul_bias_kernel(%arg0: i32, %arg1: memref<210x48xf32, #tpu.memory_space<vmem>>, %arg2: memref<48x48xf32, #tpu.memory_space<vmem>>, %arg3: memref<1x48xf32, #tpu.memory_space<vmem>>, %arg4: memref<210x48xf32, #tpu.memory_space<vmem>>) attributes {dimension_semantics = [#tpu.dimension_semantics<parallel>], iteration_bounds = array<i64: 1>, scalar_prefetch = 0 : i64, scratch_operands = 0 : i64, tpu.core_type = #tpu.core_type<tc>, window_params = [{transform_indices = @transform_0, window_bounds = array<i64: 210, 48>}, {pipeline_mode = #tpu.pipeline_mode<synchronous>, transform_indices = @transform_1, window_bounds = array<i64: 48, 48>}, {pipeline_mode = #tpu.pipeline_mode<synchronous>, transform_indices = @transform_2, window_bounds = array<i64: 1, 48>}, {transform_indices = @transform_3, window_bounds = array<i64: 210, 48>}]} {
    %c0 = arith.constant 0 : index
    %c0_0 = arith.constant 0 : index
    %0 = vector.load %arg1[%c0, %c0_0] : memref<210x48xf32, #tpu.memory_space<vmem>>, vector<210x48xf32>
    %c0_1 = arith.constant 0 : index
    %c0_2 = arith.constant 0 : index
    %1 = vector.load %arg2[%c0_1, %c0_2] : memref<48x48xf32, #tpu.memory_space<vmem>>, vector<48x48xf32>
    %cst = arith.constant dense<0.000000e+00> : vector<210x48xf32>
    %2 = tpu.matmul %0, %1, %cst {dimension_numbers = #tpu.dot_dimension_numbers<[1], [0], [0], [1], [0, 0, 1, 1], [], []>} : vector<210x48xf32>, vector<48x48xf32>, vector<210x48xf32> -> vector<210x48xf32>
    %c0_3 = arith.constant 0 : index
    %c0_4 = arith.constant 0 : index
    %3 = vector.load %arg3[%c0_3, %c0_4] : memref<1x48xf32, #tpu.memory_space<vmem>>, vector<1x48xf32>
    %4 = vector.broadcast %3 : vector<1x48xf32> to vector<210x48xf32>
    %5 = arith.addf %2, %4 : vector<210x48xf32>
    %c0_5 = arith.constant 0 : index
    %c0_6 = arith.constant 0 : index
    %6 = vector.load %arg4[%c0_5, %c0_6] : memref<210x48xf32, #tpu.memory_space<vmem>>, vector<210x48xf32>
    tpu.vector_store %arg4[%c0_5, %c0_6], %5 {strides = array<i32>} : memref<210x48xf32, #tpu.memory_space<vmem>>, vector<210x48xf32>,
    return
  }
  func.func @transform_0(%arg0: i32) -> (i32, i32) {
    %c0_i32 = arith.constant 0 : i32
    %c0_i32_0 = arith.constant 0 : i32
    return %arg0, %c0_i32 : i32, i32
  }
  func.func @transform_1(%arg0: i32) -> (i32, i32) {
    %c0_i32 = arith.constant 0 : i32
    %c0_i32_0 = arith.constant 0 : i32
    %c0_i32_1 = arith.constant 0 : i32
    return %c0_i32, %c0_i32_0 : i32, i32
  }
  func.func @transform_2(%arg0: i32) -> (i32, i32) {
    %c0_i32 = arith.constant 0 : i32
    %c0_i32_0 = arith.constant 0 : i32
    %c0_i32_1 = arith.constant 0 : i32
    return %c0_i32, %c0_i32_0 : i32, i32
  }
  func.func @transform_3(%arg0: i32) -> (i32, i32) {
    %c0_i32 = arith.constant 0 : i32
    %c0_i32_0 = arith.constant 0 : i32
    return %arg0, %c0_i32 : i32, i32
  }
}

module attributes {stable_mosaic.version = 11 : i64} {
  func.func @_ln_matmul_bias_kernel(%arg0: i32, %arg1: memref<98x48xf32, #tpu.memory_space<vmem>>, %arg2: memref<1x48xf32, #tpu.memory_space<vmem>>, %arg3: memref<1x48xf32, #tpu.memory_space<vmem>>, %arg4: memref<48x32xf32, #tpu.memory_space<vmem>>, %arg5: memref<1x32xf32, #tpu.memory_space<vmem>>, %arg6: memref<98x32xf32, #tpu.memory_space<vmem>>) attributes {dimension_semantics = [#tpu.dimension_semantics<parallel>], iteration_bounds = array<i64: 1>, scalar_prefetch = 0 : i64, scratch_operands = 0 : i64, tpu.core_type = #tpu.core_type<tc>, window_params = [{transform_indices = @transform_0, window_bounds = array<i64: 98, 48>}, {pipeline_mode = #tpu.pipeline_mode<synchronous>, transform_indices = @transform_1, window_bounds = array<i64: 1, 48>}, {pipeline_mode = #tpu.pipeline_mode<synchronous>, transform_indices = @transform_2, window_bounds = array<i64: 1, 48>}, {pipeline_mode = #tpu.pipeline_mode<synchronous>, transform_indices = @transform_3, window_bounds = array<i64: 48, 32>}, {pipeline_mode = #tpu.pipeline_mode<synchronous>, transform_indices = @transform_4, window_bounds = array<i64: 1, 32>}, {transform_indices = @transform_5, window_bounds = array<i64: 98, 32>}]} {
    %c0 = arith.constant 0 : index
    %c0_0 = arith.constant 0 : index
    %0 = vector.load %arg1[%c0, %c0_0] : memref<98x48xf32, #tpu.memory_space<vmem>>, vector<98x48xf32>
    %cst = arith.constant dense<0.000000e+00> : vector<98xf32>
    %1 = vector.multi_reduction <add>, %0, %cst [1] : vector<98x48xf32> to vector<98xf32>
    %2 = vector.shape_cast %1 : vector<98xf32> to vector<98x1xf32>
    %cst_1 = arith.constant 4.800000e+01 : f32
    %3 = vector.broadcast %cst_1 : f32 to vector<98x1xf32>
    %4 = arith.divf %2, %3 : vector<98x1xf32>
    %5 = vector.broadcast %4 : vector<98x1xf32> to vector<98x48xf32>
    %6 = arith.subf %0, %5 : vector<98x48xf32>
    %7 = arith.mulf %6, %6 : vector<98x48xf32>
    %cst_2 = arith.constant dense<0.000000e+00> : vector<98xf32>
    %8 = vector.multi_reduction <add>, %7, %cst_2 [1] : vector<98x48xf32> to vector<98xf32>
    %9 = vector.shape_cast %8 : vector<98xf32> to vector<98x1xf32>
    %cst_3 = arith.constant 4.800000e+01 : f32
    %10 = vector.broadcast %cst_3 : f32 to vector<98x1xf32>
    %11 = arith.divf %9, %10 : vector<98x1xf32>
    %cst_4 = arith.constant 9.99999974E-6 : f32
    %12 = vector.broadcast %cst_4 : f32 to vector<98x1xf32>
    %13 = arith.addf %11, %12 : vector<98x1xf32>
    %14 = math.rsqrt %13 : vector<98x1xf32>
    %15 = vector.broadcast %14 : vector<98x1xf32> to vector<98x48xf32>
    %16 = arith.mulf %6, %15 : vector<98x48xf32>
    %c0_5 = arith.constant 0 : index
    %c0_6 = arith.constant 0 : index
    %17 = vector.load %arg2[%c0_5, %c0_6] : memref<1x48xf32, #tpu.memory_space<vmem>>, vector<1x48xf32>
    %18 = vector.broadcast %17 : vector<1x48xf32> to vector<98x48xf32>
    %19 = arith.mulf %16, %18 : vector<98x48xf32>
    %c0_7 = arith.constant 0 : index
    %c0_8 = arith.constant 0 : index
    %20 = vector.load %arg3[%c0_7, %c0_8] : memref<1x48xf32, #tpu.memory_space<vmem>>, vector<1x48xf32>
    %21 = vector.broadcast %20 : vector<1x48xf32> to vector<98x48xf32>
    %22 = arith.addf %19, %21 : vector<98x48xf32>
    %c0_9 = arith.constant 0 : index
    %c0_10 = arith.constant 0 : index
    %23 = vector.load %arg4[%c0_9, %c0_10] : memref<48x32xf32, #tpu.memory_space<vmem>>, vector<48x32xf32>
    %cst_11 = arith.constant dense<0.000000e+00> : vector<98x32xf32>
    %24 = tpu.matmul %22, %23, %cst_11 {dimension_numbers = #tpu.dot_dimension_numbers<[1], [0], [0], [1], [0, 0, 1, 1], [], []>} : vector<98x48xf32>, vector<48x32xf32>, vector<98x32xf32> -> vector<98x32xf32>
    %c0_12 = arith.constant 0 : index
    %c0_13 = arith.constant 0 : index
    %25 = vector.load %arg5[%c0_12, %c0_13] : memref<1x32xf32, #tpu.memory_space<vmem>>, vector<1x32xf32>
    %26 = vector.broadcast %25 : vector<1x32xf32> to vector<98x32xf32>
    %27 = arith.addf %24, %26 : vector<98x32xf32>
    %c0_14 = arith.constant 0 : index
    %c0_15 = arith.constant 0 : index
    %28 = vector.load %arg6[%c0_14, %c0_15] : memref<98x32xf32, #tpu.memory_space<vmem>>, vector<98x32xf32>
    tpu.vector_store %arg6[%c0_14, %c0_15], %27 {strides = array<i32>} : memref<98x32xf32, #tpu.memory_space<vmem>>, vector<98x32xf32>,
    return
  }
  func.func @transform_0(%arg0: i32) -> (i32, i32) {
    %c0_i32 = arith.constant 0 : i32
    %c0_i32_0 = arith.constant 0 : i32
    return %arg0, %c0_i32 : i32, i32
  }
  func.func @transform_1(%arg0: i32) -> (i32, i32) {
    %c0_i32 = arith.constant 0 : i32
    %c0_i32_0 = arith.constant 0 : i32
    %c0_i32_1 = arith.constant 0 : i32
    return %c0_i32, %c0_i32_0 : i32, i32
  }
  func.func @transform_2(%arg0: i32) -> (i32, i32) {
    %c0_i32 = arith.constant 0 : i32
    %c0_i32_0 = arith.constant 0 : i32
    %c0_i32_1 = arith.constant 0 : i32
    return %c0_i32, %c0_i32_0 : i32, i32
  }
  func.func @transform_3(%arg0: i32) -> (i32, i32) {
    %c0_i32 = arith.constant 0 : i32
    %c0_i32_0 = arith.constant 0 : i32
    %c0_i32_1 = arith.constant 0 : i32
    return %c0_i32, %c0_i32_0 : i32, i32
  }
  func.func @transform_4(%arg0: i32) -> (i32, i32) {
    %c0_i32 = arith.constant 0 : i32
    %c0_i32_0 = arith.constant 0 : i32
    %c0_i32_1 = arith.constant 0 : i32
    return %c0_i32, %c0_i32_0 : i32, i32
  }
  func.func @transform_5(%arg0: i32) -> (i32, i32) {
    %c0_i32 = arith.constant 0 : i32
    %c0_i32_0 = arith.constant 0 : i32
    return %arg0, %c0_i32 : i32, i32
  }
}

module attributes {stable_mosaic.version = 11 : i64} {
  func.func @_resnet_block_kernel(%arg0: i32, %arg1: memref<98x32xf32, #tpu.memory_space<vmem>>, %arg2: memref<32x32xf32, #tpu.memory_space<vmem>>, %arg3: memref<32x32xf32, #tpu.memory_space<vmem>>, %arg4: memref<1x2xf32, #tpu.memory_space<vmem>>, %arg5: memref<1x32xf32, #tpu.memory_space<vmem>>, %arg6: memref<1x32xf32, #tpu.memory_space<vmem>>, %arg7: memref<1x32xf32, #tpu.memory_space<vmem>>, %arg8: memref<1x32xf32, #tpu.memory_space<vmem>>, %arg9: memref<98x32xf32, #tpu.memory_space<vmem>>) attributes {dimension_semantics = [#tpu.dimension_semantics<arbitrary>], iteration_bounds = array<i64: 1>, scalar_prefetch = 0 : i64, scratch_operands = 0 : i64, tpu.core_type = #tpu.core_type<tc>, window_params = [{pipeline_mode = #tpu.pipeline_mode<synchronous>, transform_indices = @transform_0, window_bounds = array<i64: 98, 32>}, {pipeline_mode = #tpu.pipeline_mode<synchronous>, transform_indices = @transform_1, window_bounds = array<i64: 32, 32>}, {pipeline_mode = #tpu.pipeline_mode<synchronous>, transform_indices = @transform_2, window_bounds = array<i64: 32, 32>}, {pipeline_mode = #tpu.pipeline_mode<synchronous>, transform_indices = @transform_3, window_bounds = array<i64: 1, 2>}, {pipeline_mode = #tpu.pipeline_mode<synchronous>, transform_indices = @transform_4, window_bounds = array<i64: 1, 32>}, {pipeline_mode = #tpu.pipeline_mode<synchronous>, transform_indices = @transform_5, window_bounds = array<i64: 1, 32>}, {pipeline_mode = #tpu.pipeline_mode<synchronous>, transform_indices = @transform_6, window_bounds = array<i64: 1, 32>}, {pipeline_mode = #tpu.pipeline_mode<synchronous>, transform_indices = @transform_7, window_bounds = array<i64: 1, 32>}, {pipeline_mode = #tpu.pipeline_mode<synchronous>, transform_indices = @transform_8, window_bounds = array<i64: 98, 32>}]} {
    %c0 = arith.constant 0 : index
    %c0_0 = arith.constant 0 : index
    %0 = vector.load %arg1[%c0, %c0_0] : memref<98x32xf32, #tpu.memory_space<vmem>>, vector<98x32xf32>
    %c0_1 = arith.constant 0 : index
    %c0_2 = arith.constant 0 : index
    %1 = vector.load %arg4[%c0_1, %c0_2] : memref<1x2xf32, #tpu.memory_space<vmem>>, vector<1x2xf32>
    %c0_3 = arith.constant 0 : index
    %c0_4 = arith.constant 0 : index
    %2 = vector.load %arg2[%c0_3, %c0_4] : memref<32x32xf32, #tpu.memory_space<vmem>>, vector<32x32xf32>
    %cst = arith.constant dense<0.000000e+00> : vector<98x32xf32>
    %3 = tpu.matmul %0, %2, %cst {dimension_numbers = #tpu.dot_dimension_numbers<[1], [0], [0], [1], [0, 0, 1, 1], [], []>} : vector<98x32xf32>, vector<32x32xf32>, vector<98x32xf32> -> vector<98x32xf32>
    %cst_5 = arith.constant 0.000000e+00 : f32
    %4 = vector.broadcast %cst_5 : f32 to vector<98x32xf32>
    %5 = arith.cmpf ogt, %3, %4 : vector<98x32xf32>
    %6 = vector.extract_strided_slice %1 {offsets = [0, 0], sizes = [1, 1], strides = [1, 1]} : vector<1x2xf32> to vector<1x1xf32>
    %7 = vector.broadcast %6 : vector<1x1xf32> to vector<98x32xf32>
    %8 = arith.mulf %7, %3 : vector<98x32xf32>
    %9 = arith.select %5, %3, %8 : vector<98x32xi1>, vector<98x32xf32>
    %cst_6 = arith.constant dense<0.000000e+00> : vector<32xf32>
    %10 = vector.multi_reduction <add>, %9, %cst_6 [0] : vector<98x32xf32> to vector<32xf32>
    %11 = vector.shape_cast %10 : vector<32xf32> to vector<1x32xf32>
    %12 = arith.mulf %9, %9 : vector<98x32xf32>
    %cst_7 = arith.constant dense<0.000000e+00> : vector<32xf32>
    %13 = vector.multi_reduction <add>, %12, %cst_7 [0] : vector<98x32xf32> to vector<32xf32>
    %14 = vector.shape_cast %13 : vector<32xf32> to vector<1x32xf32>
    %cst_8 = arith.constant 0.0102040814 : f32
    %15 = vector.broadcast %cst_8 : f32 to vector<1x32xf32>
    %16 = arith.mulf %11, %15 : vector<1x32xf32>
    %cst_9 = arith.constant 0.0102040814 : f32
    %17 = vector.broadcast %cst_9 : f32 to vector<1x32xf32>
    %18 = arith.mulf %14, %17 : vector<1x32xf32>
    %19 = arith.mulf %16, %16 : vector<1x32xf32>
    %20 = arith.subf %18, %19 : vector<1x32xf32>
    %21 = vector.broadcast %16 : vector<1x32xf32> to vector<98x32xf32>
    %22 = arith.subf %9, %21 : vector<98x32xf32>
    %cst_10 = arith.constant 9.99999974E-6 : f32
    %23 = vector.broadcast %cst_10 : f32 to vector<1x32xf32>
    %24 = arith.addf %20, %23 : vector<1x32xf32>
    %25 = math.rsqrt %24 : vector<1x32xf32>
    %26 = vector.broadcast %25 : vector<1x32xf32> to vector<98x32xf32>
    %27 = arith.mulf %22, %26 : vector<98x32xf32>
    %c0_11 = arith.constant 0 : index
    %c0_12 = arith.constant 0 : index
    %28 = vector.load %arg5[%c0_11, %c0_12] : memref<1x32xf32, #tpu.memory_space<vmem>>, vector<1x32xf32>
    %29 = vector.broadcast %28 : vector<1x32xf32> to vector<98x32xf32>
    %30 = arith.mulf %27, %29 : vector<98x32xf32>
    %c0_13 = arith.constant 0 : index
    %c0_14 = arith.constant 0 : index
    %31 = vector.load %arg6[%c0_13, %c0_14] : memref<1x32xf32, #tpu.memory_space<vmem>>, vector<1x32xf32>
    %32 = vector.broadcast %31 : vector<1x32xf32> to vector<98x32xf32>
    %33 = arith.addf %30, %32 : vector<98x32xf32>
    %c0_15 = arith.constant 0 : index
    %c0_16 = arith.constant 0 : index
    %34 = vector.load %arg3[%c0_15, %c0_16] : memref<32x32xf32, #tpu.memory_space<vmem>>, vector<32x32xf32>
    %cst_17 = arith.constant dense<0.000000e+00> : vector<98x32xf32>
    %35 = tpu.matmul %33, %34, %cst_17 {dimension_numbers = #tpu.dot_dimension_numbers<[1], [0], [0], [1], [0, 0, 1, 1], [], []>} : vector<98x32xf32>, vector<32x32xf32>, vector<98x32xf32> -> vector<98x32xf32>
    %cst_18 = arith.constant dense<0.000000e+00> : vector<32xf32>
    %36 = vector.multi_reduction <add>, %35, %cst_18 [0] : vector<98x32xf32> to vector<32xf32>
    %37 = vector.shape_cast %36 : vector<32xf32> to vector<1x32xf32>
    %38 = arith.mulf %35, %35 : vector<98x32xf32>
    %cst_19 = arith.constant dense<0.000000e+00> : vector<32xf32>
    %39 = vector.multi_reduction <add>, %38, %cst_19 [0] : vector<98x32xf32> to vector<32xf32>
    %40 = vector.shape_cast %39 : vector<32xf32> to vector<1x32xf32>
    %cst_20 = arith.constant 0.0102040814 : f32
    %41 = vector.broadcast %cst_20 : f32 to vector<1x32xf32>
    %42 = arith.mulf %37, %41 : vector<1x32xf32>
    %cst_21 = arith.constant 0.0102040814 : f32
    %43 = vector.broadcast %cst_21 : f32 to vector<1x32xf32>
    %44 = arith.mulf %40, %43 : vector<1x32xf32>
    %45 = arith.mulf %42, %42 : vector<1x32xf32>
    %46 = arith.subf %44, %45 : vector<1x32xf32>
    %47 = vector.broadcast %42 : vector<1x32xf32> to vector<98x32xf32>
    %48 = arith.subf %35, %47 : vector<98x32xf32>
    %cst_22 = arith.constant 9.99999974E-6 : f32
    %49 = vector.broadcast %cst_22 : f32 to vector<1x32xf32>
    %50 = arith.addf %46, %49 : vector<1x32xf32>
    %51 = math.rsqrt %50 : vector<1x32xf32>
    %52 = vector.broadcast %51 : vector<1x32xf32> to vector<98x32xf32>
    %53 = arith.mulf %48, %52 : vector<98x32xf32>
    %c0_23 = arith.constant 0 : index
    %c0_24 = arith.constant 0 : index
    %54 = vector.load %arg7[%c0_23, %c0_24] : memref<1x32xf32, #tpu.memory_space<vmem>>, vector<1x32xf32>
    %55 = vector.broadcast %54 : vector<1x32xf32> to vector<98x32xf32>
    %56 = arith.mulf %53, %55 : vector<98x32xf32>
    %c0_25 = arith.constant 0 : index
    %c0_26 = arith.constant 0 : index
    %57 = vector.load %arg8[%c0_25, %c0_26] : memref<1x32xf32, #tpu.memory_space<vmem>>, vector<1x32xf32>
    %58 = vector.broadcast %57 : vector<1x32xf32> to vector<98x32xf32>
    %59 = arith.addf %56, %58 : vector<98x32xf32>
    %60 = arith.addf %59, %0 : vector<98x32xf32>
    %cst_27 = arith.constant 0.000000e+00 : f32
    %61 = vector.broadcast %cst_27 : f32 to vector<98x32xf32>
    %62 = arith.cmpf ogt, %60, %61 : vector<98x32xf32>
    %63 = vector.extract_strided_slice %1 {offsets = [0, 1], sizes = [1, 1], strides = [1, 1]} : vector<1x2xf32> to vector<1x1xf32>
    %64 = vector.broadcast %63 : vector<1x1xf32> to vector<98x32xf32>
    %65 = arith.mulf %64, %60 : vector<98x32xf32>
    %66 = arith.select %62, %60, %65 : vector<98x32xi1>, vector<98x32xf32>
    %c0_28 = arith.constant 0 : index
    %c0_29 = arith.constant 0 : index
    %67 = vector.load %arg9[%c0_28, %c0_29] : memref<98x32xf32, #tpu.memory_space<vmem>>, vector<98x32xf32>
    tpu.vector_store %arg9[%c0_28, %c0_29], %66 {strides = array<i32>} : memref<98x32xf32, #tpu.memory_space<vmem>>, vector<98x32xf32>,
    return
  }
  func.func @transform_0(%arg0: i32) -> (i32, i32) {
    %c0_i32 = arith.constant 0 : i32
    %c0_i32_0 = arith.constant 0 : i32
    %c0_i32_1 = arith.constant 0 : i32
    return %c0_i32, %c0_i32_0 : i32, i32
  }
  func.func @transform_1(%arg0: i32) -> (i32, i32) {
    %c0_i32 = arith.constant 0 : i32
    %c0_i32_0 = arith.constant 0 : i32
    %c0_i32_1 = arith.constant 0 : i32
    return %c0_i32, %c0_i32_0 : i32, i32
  }
  func.func @transform_2(%arg0: i32) -> (i32, i32) {
    %c0_i32 = arith.constant 0 : i32
    %c0_i32_0 = arith.constant 0 : i32
    %c0_i32_1 = arith.constant 0 : i32
    return %c0_i32, %c0_i32_0 : i32, i32
  }
  func.func @transform_3(%arg0: i32) -> (i32, i32) {
    %c0_i32 = arith.constant 0 : i32
    %c0_i32_0 = arith.constant 0 : i32
    %c0_i32_1 = arith.constant 0 : i32
    return %c0_i32, %c0_i32_0 : i32, i32
  }
  func.func @transform_4(%arg0: i32) -> (i32, i32) {
    %c0_i32 = arith.constant 0 : i32
    %c0_i32_0 = arith.constant 0 : i32
    %c0_i32_1 = arith.constant 0 : i32
    return %c0_i32, %c0_i32_0 : i32, i32
  }
  func.func @transform_5(%arg0: i32) -> (i32, i32) {
    %c0_i32 = arith.constant 0 : i32
    %c0_i32_0 = arith.constant 0 : i32
    %c0_i32_1 = arith.constant 0 : i32
    return %c0_i32, %c0_i32_0 : i32, i32
  }
  func.func @transform_6(%arg0: i32) -> (i32, i32) {
    %c0_i32 = arith.constant 0 : i32
    %c0_i32_0 = arith.constant 0 : i32
    %c0_i32_1 = arith.constant 0 : i32
    return %c0_i32, %c0_i32_0 : i32, i32
  }
  func.func @transform_7(%arg0: i32) -> (i32, i32) {
    %c0_i32 = arith.constant 0 : i32
    %c0_i32_0 = arith.constant 0 : i32
    %c0_i32_1 = arith.constant 0 : i32
    return %c0_i32, %c0_i32_0 : i32, i32
  }
  func.func @transform_8(%arg0: i32) -> (i32, i32) {
    %c0_i32 = arith.constant 0 : i32
    %c0_i32_0 = arith.constant 0 : i32
    %c0_i32_1 = arith.constant 0 : i32
    return %c0_i32, %c0_i32_0 : i32, i32
  }
}

module attributes {stable_mosaic.version = 11 : i64} {
  func.func @_resnet_block_kernel(%arg0: i32, %arg1: memref<32x32xf32, #tpu.memory_space<vmem>>, %arg2: memref<32x32xf32, #tpu.memory_space<vmem>>, %arg3: memref<32x32xf32, #tpu.memory_space<vmem>>, %arg4: memref<1x2xf32, #tpu.memory_space<vmem>>, %arg5: memref<1x32xf32, #tpu.memory_space<vmem>>, %arg6: memref<1x32xf32, #tpu.memory_space<vmem>>, %arg7: memref<1x32xf32, #tpu.memory_space<vmem>>, %arg8: memref<1x32xf32, #tpu.memory_space<vmem>>, %arg9: memref<32x32xf32, #tpu.memory_space<vmem>>) attributes {dimension_semantics = [#tpu.dimension_semantics<arbitrary>], iteration_bounds = array<i64: 1>, scalar_prefetch = 0 : i64, scratch_operands = 0 : i64, tpu.core_type = #tpu.core_type<tc>, window_params = [{pipeline_mode = #tpu.pipeline_mode<synchronous>, transform_indices = @transform_0, window_bounds = array<i64: 32, 32>}, {pipeline_mode = #tpu.pipeline_mode<synchronous>, transform_indices = @transform_1, window_bounds = array<i64: 32, 32>}, {pipeline_mode = #tpu.pipeline_mode<synchronous>, transform_indices = @transform_2, window_bounds = array<i64: 32, 32>}, {pipeline_mode = #tpu.pipeline_mode<synchronous>, transform_indices = @transform_3, window_bounds = array<i64: 1, 2>}, {pipeline_mode = #tpu.pipeline_mode<synchronous>, transform_indices = @transform_4, window_bounds = array<i64: 1, 32>}, {pipeline_mode = #tpu.pipeline_mode<synchronous>, transform_indices = @transform_5, window_bounds = array<i64: 1, 32>}, {pipeline_mode = #tpu.pipeline_mode<synchronous>, transform_indices = @transform_6, window_bounds = array<i64: 1, 32>}, {pipeline_mode = #tpu.pipeline_mode<synchronous>, transform_indices = @transform_7, window_bounds = array<i64: 1, 32>}, {pipeline_mode = #tpu.pipeline_mode<synchronous>, transform_indices = @transform_8, window_bounds = array<i64: 32, 32>}]} {
    %c0 = arith.constant 0 : index
    %c0_0 = arith.constant 0 : index
    %0 = vector.load %arg1[%c0, %c0_0] : memref<32x32xf32, #tpu.memory_space<vmem>>, vector<32x32xf32>
    %c0_1 = arith.constant 0 : index
    %c0_2 = arith.constant 0 : index
    %1 = vector.load %arg4[%c0_1, %c0_2] : memref<1x2xf32, #tpu.memory_space<vmem>>, vector<1x2xf32>
    %c0_3 = arith.constant 0 : index
    %c0_4 = arith.constant 0 : index
    %2 = vector.load %arg2[%c0_3, %c0_4] : memref<32x32xf32, #tpu.memory_space<vmem>>, vector<32x32xf32>
    %cst = arith.constant dense<0.000000e+00> : vector<32x32xf32>
    %3 = tpu.matmul %0, %2, %cst {dimension_numbers = #tpu.dot_dimension_numbers<[1], [0], [0], [1], [0, 0, 1, 1], [], []>} : vector<32x32xf32>, vector<32x32xf32>, vector<32x32xf32> -> vector<32x32xf32>
    %cst_5 = arith.constant 0.000000e+00 : f32
    %4 = vector.broadcast %cst_5 : f32 to vector<32x32xf32>
    %5 = arith.cmpf ogt, %3, %4 : vector<32x32xf32>
    %6 = vector.extract_strided_slice %1 {offsets = [0, 0], sizes = [1, 1], strides = [1, 1]} : vector<1x2xf32> to vector<1x1xf32>
    %7 = vector.broadcast %6 : vector<1x1xf32> to vector<32x32xf32>
    %8 = arith.mulf %7, %3 : vector<32x32xf32>
    %9 = arith.select %5, %3, %8 : vector<32x32xi1>, vector<32x32xf32>
    %cst_6 = arith.constant dense<0.000000e+00> : vector<32xf32>
    %10 = vector.multi_reduction <add>, %9, %cst_6 [0] : vector<32x32xf32> to vector<32xf32>
    %11 = vector.shape_cast %10 : vector<32xf32> to vector<1x32xf32>
    %12 = arith.mulf %9, %9 : vector<32x32xf32>
    %cst_7 = arith.constant dense<0.000000e+00> : vector<32xf32>
    %13 = vector.multi_reduction <add>, %12, %cst_7 [0] : vector<32x32xf32> to vector<32xf32>
    %14 = vector.shape_cast %13 : vector<32xf32> to vector<1x32xf32>
    %cst_8 = arith.constant 3.125000e-02 : f32
    %15 = vector.broadcast %cst_8 : f32 to vector<1x32xf32>
    %16 = arith.mulf %11, %15 : vector<1x32xf32>
    %cst_9 = arith.constant 3.125000e-02 : f32
    %17 = vector.broadcast %cst_9 : f32 to vector<1x32xf32>
    %18 = arith.mulf %14, %17 : vector<1x32xf32>
    %19 = arith.mulf %16, %16 : vector<1x32xf32>
    %20 = arith.subf %18, %19 : vector<1x32xf32>
    %21 = vector.broadcast %16 : vector<1x32xf32> to vector<32x32xf32>
    %22 = arith.subf %9, %21 : vector<32x32xf32>
    %cst_10 = arith.constant 9.99999974E-6 : f32
    %23 = vector.broadcast %cst_10 : f32 to vector<1x32xf32>
    %24 = arith.addf %20, %23 : vector<1x32xf32>
    %25 = math.rsqrt %24 : vector<1x32xf32>
    %26 = vector.broadcast %25 : vector<1x32xf32> to vector<32x32xf32>
    %27 = arith.mulf %22, %26 : vector<32x32xf32>
    %c0_11 = arith.constant 0 : index
    %c0_12 = arith.constant 0 : index
    %28 = vector.load %arg5[%c0_11, %c0_12] : memref<1x32xf32, #tpu.memory_space<vmem>>, vector<1x32xf32>
    %29 = vector.broadcast %28 : vector<1x32xf32> to vector<32x32xf32>
    %30 = arith.mulf %27, %29 : vector<32x32xf32>
    %c0_13 = arith.constant 0 : index
    %c0_14 = arith.constant 0 : index
    %31 = vector.load %arg6[%c0_13, %c0_14] : memref<1x32xf32, #tpu.memory_space<vmem>>, vector<1x32xf32>
    %32 = vector.broadcast %31 : vector<1x32xf32> to vector<32x32xf32>
    %33 = arith.addf %30, %32 : vector<32x32xf32>
    %c0_15 = arith.constant 0 : index
    %c0_16 = arith.constant 0 : index
    %34 = vector.load %arg3[%c0_15, %c0_16] : memref<32x32xf32, #tpu.memory_space<vmem>>, vector<32x32xf32>
    %cst_17 = arith.constant dense<0.000000e+00> : vector<32x32xf32>
    %35 = tpu.matmul %33, %34, %cst_17 {dimension_numbers = #tpu.dot_dimension_numbers<[1], [0], [0], [1], [0, 0, 1, 1], [], []>} : vector<32x32xf32>, vector<32x32xf32>, vector<32x32xf32> -> vector<32x32xf32>
    %cst_18 = arith.constant dense<0.000000e+00> : vector<32xf32>
    %36 = vector.multi_reduction <add>, %35, %cst_18 [0] : vector<32x32xf32> to vector<32xf32>
    %37 = vector.shape_cast %36 : vector<32xf32> to vector<1x32xf32>
    %38 = arith.mulf %35, %35 : vector<32x32xf32>
    %cst_19 = arith.constant dense<0.000000e+00> : vector<32xf32>
    %39 = vector.multi_reduction <add>, %38, %cst_19 [0] : vector<32x32xf32> to vector<32xf32>
    %40 = vector.shape_cast %39 : vector<32xf32> to vector<1x32xf32>
    %cst_20 = arith.constant 3.125000e-02 : f32
    %41 = vector.broadcast %cst_20 : f32 to vector<1x32xf32>
    %42 = arith.mulf %37, %41 : vector<1x32xf32>
    %cst_21 = arith.constant 3.125000e-02 : f32
    %43 = vector.broadcast %cst_21 : f32 to vector<1x32xf32>
    %44 = arith.mulf %40, %43 : vector<1x32xf32>
    %45 = arith.mulf %42, %42 : vector<1x32xf32>
    %46 = arith.subf %44, %45 : vector<1x32xf32>
    %47 = vector.broadcast %42 : vector<1x32xf32> to vector<32x32xf32>
    %48 = arith.subf %35, %47 : vector<32x32xf32>
    %cst_22 = arith.constant 9.99999974E-6 : f32
    %49 = vector.broadcast %cst_22 : f32 to vector<1x32xf32>
    %50 = arith.addf %46, %49 : vector<1x32xf32>
    %51 = math.rsqrt %50 : vector<1x32xf32>
    %52 = vector.broadcast %51 : vector<1x32xf32> to vector<32x32xf32>
    %53 = arith.mulf %48, %52 : vector<32x32xf32>
    %c0_23 = arith.constant 0 : index
    %c0_24 = arith.constant 0 : index
    %54 = vector.load %arg7[%c0_23, %c0_24] : memref<1x32xf32, #tpu.memory_space<vmem>>, vector<1x32xf32>
    %55 = vector.broadcast %54 : vector<1x32xf32> to vector<32x32xf32>
    %56 = arith.mulf %53, %55 : vector<32x32xf32>
    %c0_25 = arith.constant 0 : index
    %c0_26 = arith.constant 0 : index
    %57 = vector.load %arg8[%c0_25, %c0_26] : memref<1x32xf32, #tpu.memory_space<vmem>>, vector<1x32xf32>
    %58 = vector.broadcast %57 : vector<1x32xf32> to vector<32x32xf32>
    %59 = arith.addf %56, %58 : vector<32x32xf32>
    %60 = arith.addf %59, %0 : vector<32x32xf32>
    %cst_27 = arith.constant 0.000000e+00 : f32
    %61 = vector.broadcast %cst_27 : f32 to vector<32x32xf32>
    %62 = arith.cmpf ogt, %60, %61 : vector<32x32xf32>
    %63 = vector.extract_strided_slice %1 {offsets = [0, 1], sizes = [1, 1], strides = [1, 1]} : vector<1x2xf32> to vector<1x1xf32>
    %64 = vector.broadcast %63 : vector<1x1xf32> to vector<32x32xf32>
    %65 = arith.mulf %64, %60 : vector<32x32xf32>
    %66 = arith.select %62, %60, %65 : vector<32x32xi1>, vector<32x32xf32>
    %c0_28 = arith.constant 0 : index
    %c0_29 = arith.constant 0 : index
    %67 = vector.load %arg9[%c0_28, %c0_29] : memref<32x32xf32, #tpu.memory_space<vmem>>, vector<32x32xf32>
    tpu.vector_store %arg9[%c0_28, %c0_29], %66 {strides = array<i32>} : memref<32x32xf32, #tpu.memory_space<vmem>>, vector<32x32xf32>,
    return
  }
  func.func @transform_0(%arg0: i32) -> (i32, i32) {
    %c0_i32 = arith.constant 0 : i32
    %c0_i32_0 = arith.constant 0 : i32
    %c0_i32_1 = arith.constant 0 : i32
    return %c0_i32, %c0_i32_0 : i32, i32
  }
  func.func @transform_1(%arg0: i32) -> (i32, i32) {
    %c0_i32 = arith.constant 0 : i32
    %c0_i32_0 = arith.constant 0 : i32
    %c0_i32_1 = arith.constant 0 : i32
    return %c0_i32, %c0_i32_0 : i32, i32
  }
  func.func @transform_2(%arg0: i32) -> (i32, i32) {
    %c0_i32 = arith.constant 0 : i32
    %c0_i32_0 = arith.constant 0 : i32
    %c0_i32_1 = arith.constant 0 : i32
    return %c0_i32, %c0_i32_0 : i32, i32
  }
  func.func @transform_3(%arg0: i32) -> (i32, i32) {
    %c0_i32 = arith.constant 0 : i32
    %c0_i32_0 = arith.constant 0 : i32
    %c0_i32_1 = arith.constant 0 : i32
    return %c0_i32, %c0_i32_0 : i32, i32
  }
  func.func @transform_4(%arg0: i32) -> (i32, i32) {
    %c0_i32 = arith.constant 0 : i32
    %c0_i32_0 = arith.constant 0 : i32
    %c0_i32_1 = arith.constant 0 : i32
    return %c0_i32, %c0_i32_0 : i32, i32
  }
  func.func @transform_5(%arg0: i32) -> (i32, i32) {
    %c0_i32 = arith.constant 0 : i32
    %c0_i32_0 = arith.constant 0 : i32
    %c0_i32_1 = arith.constant 0 : i32
    return %c0_i32, %c0_i32_0 : i32, i32
  }
  func.func @transform_6(%arg0: i32) -> (i32, i32) {
    %c0_i32 = arith.constant 0 : i32
    %c0_i32_0 = arith.constant 0 : i32
    %c0_i32_1 = arith.constant 0 : i32
    return %c0_i32, %c0_i32_0 : i32, i32
  }
  func.func @transform_7(%arg0: i32) -> (i32, i32) {
    %c0_i32 = arith.constant 0 : i32
    %c0_i32_0 = arith.constant 0 : i32
    %c0_i32_1 = arith.constant 0 : i32
    return %c0_i32, %c0_i32_0 : i32, i32
  }
  func.func @transform_8(%arg0: i32) -> (i32, i32) {
    %c0_i32 = arith.constant 0 : i32
    %c0_i32_0 = arith.constant 0 : i32
    %c0_i32_1 = arith.constant 0 : i32
    return %c0_i32, %c0_i32_0 : i32, i32
  }
}

module attributes {stable_mosaic.version = 11 : i64} {
  func.func @_resnet_block_kernel(%arg0: i32, %arg1: memref<10x32xf32, #tpu.memory_space<vmem>>, %arg2: memref<32x32xf32, #tpu.memory_space<vmem>>, %arg3: memref<32x32xf32, #tpu.memory_space<vmem>>, %arg4: memref<1x2xf32, #tpu.memory_space<vmem>>, %arg5: memref<1x32xf32, #tpu.memory_space<vmem>>, %arg6: memref<1x32xf32, #tpu.memory_space<vmem>>, %arg7: memref<1x32xf32, #tpu.memory_space<vmem>>, %arg8: memref<1x32xf32, #tpu.memory_space<vmem>>, %arg9: memref<10x32xf32, #tpu.memory_space<vmem>>) attributes {dimension_semantics = [#tpu.dimension_semantics<arbitrary>], iteration_bounds = array<i64: 1>, scalar_prefetch = 0 : i64, scratch_operands = 0 : i64, tpu.core_type = #tpu.core_type<tc>, window_params = [{pipeline_mode = #tpu.pipeline_mode<synchronous>, transform_indices = @transform_0, window_bounds = array<i64: 10, 32>}, {pipeline_mode = #tpu.pipeline_mode<synchronous>, transform_indices = @transform_1, window_bounds = array<i64: 32, 32>}, {pipeline_mode = #tpu.pipeline_mode<synchronous>, transform_indices = @transform_2, window_bounds = array<i64: 32, 32>}, {pipeline_mode = #tpu.pipeline_mode<synchronous>, transform_indices = @transform_3, window_bounds = array<i64: 1, 2>}, {pipeline_mode = #tpu.pipeline_mode<synchronous>, transform_indices = @transform_4, window_bounds = array<i64: 1, 32>}, {pipeline_mode = #tpu.pipeline_mode<synchronous>, transform_indices = @transform_5, window_bounds = array<i64: 1, 32>}, {pipeline_mode = #tpu.pipeline_mode<synchronous>, transform_indices = @transform_6, window_bounds = array<i64: 1, 32>}, {pipeline_mode = #tpu.pipeline_mode<synchronous>, transform_indices = @transform_7, window_bounds = array<i64: 1, 32>}, {pipeline_mode = #tpu.pipeline_mode<synchronous>, transform_indices = @transform_8, window_bounds = array<i64: 10, 32>}]} {
    %c0 = arith.constant 0 : index
    %c0_0 = arith.constant 0 : index
    %0 = vector.load %arg1[%c0, %c0_0] : memref<10x32xf32, #tpu.memory_space<vmem>>, vector<10x32xf32>
    %c0_1 = arith.constant 0 : index
    %c0_2 = arith.constant 0 : index
    %1 = vector.load %arg4[%c0_1, %c0_2] : memref<1x2xf32, #tpu.memory_space<vmem>>, vector<1x2xf32>
    %c0_3 = arith.constant 0 : index
    %c0_4 = arith.constant 0 : index
    %2 = vector.load %arg2[%c0_3, %c0_4] : memref<32x32xf32, #tpu.memory_space<vmem>>, vector<32x32xf32>
    %cst = arith.constant dense<0.000000e+00> : vector<10x32xf32>
    %3 = tpu.matmul %0, %2, %cst {dimension_numbers = #tpu.dot_dimension_numbers<[1], [0], [0], [1], [0, 0, 1, 1], [], []>} : vector<10x32xf32>, vector<32x32xf32>, vector<10x32xf32> -> vector<10x32xf32>
    %cst_5 = arith.constant 0.000000e+00 : f32
    %4 = vector.broadcast %cst_5 : f32 to vector<10x32xf32>
    %5 = arith.cmpf ogt, %3, %4 : vector<10x32xf32>
    %6 = vector.extract_strided_slice %1 {offsets = [0, 0], sizes = [1, 1], strides = [1, 1]} : vector<1x2xf32> to vector<1x1xf32>
    %7 = vector.broadcast %6 : vector<1x1xf32> to vector<10x32xf32>
    %8 = arith.mulf %7, %3 : vector<10x32xf32>
    %9 = arith.select %5, %3, %8 : vector<10x32xi1>, vector<10x32xf32>
    %cst_6 = arith.constant dense<0.000000e+00> : vector<32xf32>
    %10 = vector.multi_reduction <add>, %9, %cst_6 [0] : vector<10x32xf32> to vector<32xf32>
    %11 = vector.shape_cast %10 : vector<32xf32> to vector<1x32xf32>
    %12 = arith.mulf %9, %9 : vector<10x32xf32>
    %cst_7 = arith.constant dense<0.000000e+00> : vector<32xf32>
    %13 = vector.multi_reduction <add>, %12, %cst_7 [0] : vector<10x32xf32> to vector<32xf32>
    %14 = vector.shape_cast %13 : vector<32xf32> to vector<1x32xf32>
    %cst_8 = arith.constant 1.000000e-01 : f32
    %15 = vector.broadcast %cst_8 : f32 to vector<1x32xf32>
    %16 = arith.mulf %11, %15 : vector<1x32xf32>
    %cst_9 = arith.constant 1.000000e-01 : f32
    %17 = vector.broadcast %cst_9 : f32 to vector<1x32xf32>
    %18 = arith.mulf %14, %17 : vector<1x32xf32>
    %19 = arith.mulf %16, %16 : vector<1x32xf32>
    %20 = arith.subf %18, %19 : vector<1x32xf32>
    %21 = vector.broadcast %16 : vector<1x32xf32> to vector<10x32xf32>
    %22 = arith.subf %9, %21 : vector<10x32xf32>
    %cst_10 = arith.constant 9.99999974E-6 : f32
    %23 = vector.broadcast %cst_10 : f32 to vector<1x32xf32>
    %24 = arith.addf %20, %23 : vector<1x32xf32>
    %25 = math.rsqrt %24 : vector<1x32xf32>
    %26 = vector.broadcast %25 : vector<1x32xf32> to vector<10x32xf32>
    %27 = arith.mulf %22, %26 : vector<10x32xf32>
    %c0_11 = arith.constant 0 : index
    %c0_12 = arith.constant 0 : index
    %28 = vector.load %arg5[%c0_11, %c0_12] : memref<1x32xf32, #tpu.memory_space<vmem>>, vector<1x32xf32>
    %29 = vector.broadcast %28 : vector<1x32xf32> to vector<10x32xf32>
    %30 = arith.mulf %27, %29 : vector<10x32xf32>
    %c0_13 = arith.constant 0 : index
    %c0_14 = arith.constant 0 : index
    %31 = vector.load %arg6[%c0_13, %c0_14] : memref<1x32xf32, #tpu.memory_space<vmem>>, vector<1x32xf32>
    %32 = vector.broadcast %31 : vector<1x32xf32> to vector<10x32xf32>
    %33 = arith.addf %30, %32 : vector<10x32xf32>
    %c0_15 = arith.constant 0 : index
    %c0_16 = arith.constant 0 : index
    %34 = vector.load %arg3[%c0_15, %c0_16] : memref<32x32xf32, #tpu.memory_space<vmem>>, vector<32x32xf32>
    %cst_17 = arith.constant dense<0.000000e+00> : vector<10x32xf32>
    %35 = tpu.matmul %33, %34, %cst_17 {dimension_numbers = #tpu.dot_dimension_numbers<[1], [0], [0], [1], [0, 0, 1, 1], [], []>} : vector<10x32xf32>, vector<32x32xf32>, vector<10x32xf32> -> vector<10x32xf32>
    %cst_18 = arith.constant dense<0.000000e+00> : vector<32xf32>
    %36 = vector.multi_reduction <add>, %35, %cst_18 [0] : vector<10x32xf32> to vector<32xf32>
    %37 = vector.shape_cast %36 : vector<32xf32> to vector<1x32xf32>
    %38 = arith.mulf %35, %35 : vector<10x32xf32>
    %cst_19 = arith.constant dense<0.000000e+00> : vector<32xf32>
    %39 = vector.multi_reduction <add>, %38, %cst_19 [0] : vector<10x32xf32> to vector<32xf32>
    %40 = vector.shape_cast %39 : vector<32xf32> to vector<1x32xf32>
    %cst_20 = arith.constant 1.000000e-01 : f32
    %41 = vector.broadcast %cst_20 : f32 to vector<1x32xf32>
    %42 = arith.mulf %37, %41 : vector<1x32xf32>
    %cst_21 = arith.constant 1.000000e-01 : f32
    %43 = vector.broadcast %cst_21 : f32 to vector<1x32xf32>
    %44 = arith.mulf %40, %43 : vector<1x32xf32>
    %45 = arith.mulf %42, %42 : vector<1x32xf32>
    %46 = arith.subf %44, %45 : vector<1x32xf32>
    %47 = vector.broadcast %42 : vector<1x32xf32> to vector<10x32xf32>
    %48 = arith.subf %35, %47 : vector<10x32xf32>
    %cst_22 = arith.constant 9.99999974E-6 : f32
    %49 = vector.broadcast %cst_22 : f32 to vector<1x32xf32>
    %50 = arith.addf %46, %49 : vector<1x32xf32>
    %51 = math.rsqrt %50 : vector<1x32xf32>
    %52 = vector.broadcast %51 : vector<1x32xf32> to vector<10x32xf32>
    %53 = arith.mulf %48, %52 : vector<10x32xf32>
    %c0_23 = arith.constant 0 : index
    %c0_24 = arith.constant 0 : index
    %54 = vector.load %arg7[%c0_23, %c0_24] : memref<1x32xf32, #tpu.memory_space<vmem>>, vector<1x32xf32>
    %55 = vector.broadcast %54 : vector<1x32xf32> to vector<10x32xf32>
    %56 = arith.mulf %53, %55 : vector<10x32xf32>
    %c0_25 = arith.constant 0 : index
    %c0_26 = arith.constant 0 : index
    %57 = vector.load %arg8[%c0_25, %c0_26] : memref<1x32xf32, #tpu.memory_space<vmem>>, vector<1x32xf32>
    %58 = vector.broadcast %57 : vector<1x32xf32> to vector<10x32xf32>
    %59 = arith.addf %56, %58 : vector<10x32xf32>
    %60 = arith.addf %59, %0 : vector<10x32xf32>
    %cst_27 = arith.constant 0.000000e+00 : f32
    %61 = vector.broadcast %cst_27 : f32 to vector<10x32xf32>
    %62 = arith.cmpf ogt, %60, %61 : vector<10x32xf32>
    %63 = vector.extract_strided_slice %1 {offsets = [0, 1], sizes = [1, 1], strides = [1, 1]} : vector<1x2xf32> to vector<1x1xf32>
    %64 = vector.broadcast %63 : vector<1x1xf32> to vector<10x32xf32>
    %65 = arith.mulf %64, %60 : vector<10x32xf32>
    %66 = arith.select %62, %60, %65 : vector<10x32xi1>, vector<10x32xf32>
    %c0_28 = arith.constant 0 : index
    %c0_29 = arith.constant 0 : index
    %67 = vector.load %arg9[%c0_28, %c0_29] : memref<10x32xf32, #tpu.memory_space<vmem>>, vector<10x32xf32>
    tpu.vector_store %arg9[%c0_28, %c0_29], %66 {strides = array<i32>} : memref<10x32xf32, #tpu.memory_space<vmem>>, vector<10x32xf32>,
    return
  }
  func.func @transform_0(%arg0: i32) -> (i32, i32) {
    %c0_i32 = arith.constant 0 : i32
    %c0_i32_0 = arith.constant 0 : i32
    %c0_i32_1 = arith.constant 0 : i32
    return %c0_i32, %c0_i32_0 : i32, i32
  }
  func.func @transform_1(%arg0: i32) -> (i32, i32) {
    %c0_i32 = arith.constant 0 : i32
    %c0_i32_0 = arith.constant 0 : i32
    %c0_i32_1 = arith.constant 0 : i32
    return %c0_i32, %c0_i32_0 : i32, i32
  }
  func.func @transform_2(%arg0: i32) -> (i32, i32) {
    %c0_i32 = arith.constant 0 : i32
    %c0_i32_0 = arith.constant 0 : i32
    %c0_i32_1 = arith.constant 0 : i32
    return %c0_i32, %c0_i32_0 : i32, i32
  }
  func.func @transform_3(%arg0: i32) -> (i32, i32) {
    %c0_i32 = arith.constant 0 : i32
    %c0_i32_0 = arith.constant 0 : i32
    %c0_i32_1 = arith.constant 0 : i32
    return %c0_i32, %c0_i32_0 : i32, i32
  }
  func.func @transform_4(%arg0: i32) -> (i32, i32) {
    %c0_i32 = arith.constant 0 : i32
    %c0_i32_0 = arith.constant 0 : i32
    %c0_i32_1 = arith.constant 0 : i32
    return %c0_i32, %c0_i32_0 : i32, i32
  }
  func.func @transform_5(%arg0: i32) -> (i32, i32) {
    %c0_i32 = arith.constant 0 : i32
    %c0_i32_0 = arith.constant 0 : i32
    %c0_i32_1 = arith.constant 0 : i32
    return %c0_i32, %c0_i32_0 : i32, i32
  }
  func.func @transform_6(%arg0: i32) -> (i32, i32) {
    %c0_i32 = arith.constant 0 : i32
    %c0_i32_0 = arith.constant 0 : i32
    %c0_i32_1 = arith.constant 0 : i32
    return %c0_i32, %c0_i32_0 : i32, i32
  }
  func.func @transform_7(%arg0: i32) -> (i32, i32) {
    %c0_i32 = arith.constant 0 : i32
    %c0_i32_0 = arith.constant 0 : i32
    %c0_i32_1 = arith.constant 0 : i32
    return %c0_i32, %c0_i32_0 : i32, i32
  }
  func.func @transform_8(%arg0: i32) -> (i32, i32) {
    %c0_i32 = arith.constant 0 : i32
    %c0_i32_0 = arith.constant 0 : i32
    %c0_i32_1 = arith.constant 0 : i32
    return %c0_i32, %c0_i32_0 : i32, i32
  }
}

module attributes {stable_mosaic.version = 11 : i64} {
  func.func @_ln_matmul_bias_kernel(%arg0: i32, %arg1: memref<112x48xf32, #tpu.memory_space<vmem>>, %arg2: memref<1x48xf32, #tpu.memory_space<vmem>>, %arg3: memref<1x48xf32, #tpu.memory_space<vmem>>, %arg4: memref<48x32xf32, #tpu.memory_space<vmem>>, %arg5: memref<1x32xf32, #tpu.memory_space<vmem>>, %arg6: memref<112x32xf32, #tpu.memory_space<vmem>>) attributes {dimension_semantics = [#tpu.dimension_semantics<parallel>], iteration_bounds = array<i64: 1>, scalar_prefetch = 0 : i64, scratch_operands = 0 : i64, tpu.core_type = #tpu.core_type<tc>, window_params = [{transform_indices = @transform_0, window_bounds = array<i64: 112, 48>}, {pipeline_mode = #tpu.pipeline_mode<synchronous>, transform_indices = @transform_1, window_bounds = array<i64: 1, 48>}, {pipeline_mode = #tpu.pipeline_mode<synchronous>, transform_indices = @transform_2, window_bounds = array<i64: 1, 48>}, {pipeline_mode = #tpu.pipeline_mode<synchronous>, transform_indices = @transform_3, window_bounds = array<i64: 48, 32>}, {pipeline_mode = #tpu.pipeline_mode<synchronous>, transform_indices = @transform_4, window_bounds = array<i64: 1, 32>}, {transform_indices = @transform_5, window_bounds = array<i64: 112, 32>}]} {
    %c0 = arith.constant 0 : index
    %c0_0 = arith.constant 0 : index
    %0 = vector.load %arg1[%c0, %c0_0] : memref<112x48xf32, #tpu.memory_space<vmem>>, vector<112x48xf32>
    %cst = arith.constant dense<0.000000e+00> : vector<112xf32>
    %1 = vector.multi_reduction <add>, %0, %cst [1] : vector<112x48xf32> to vector<112xf32>
    %2 = vector.shape_cast %1 : vector<112xf32> to vector<112x1xf32>
    %cst_1 = arith.constant 4.800000e+01 : f32
    %3 = vector.broadcast %cst_1 : f32 to vector<112x1xf32>
    %4 = arith.divf %2, %3 : vector<112x1xf32>
    %5 = vector.broadcast %4 : vector<112x1xf32> to vector<112x48xf32>
    %6 = arith.subf %0, %5 : vector<112x48xf32>
    %7 = arith.mulf %6, %6 : vector<112x48xf32>
    %cst_2 = arith.constant dense<0.000000e+00> : vector<112xf32>
    %8 = vector.multi_reduction <add>, %7, %cst_2 [1] : vector<112x48xf32> to vector<112xf32>
    %9 = vector.shape_cast %8 : vector<112xf32> to vector<112x1xf32>
    %cst_3 = arith.constant 4.800000e+01 : f32
    %10 = vector.broadcast %cst_3 : f32 to vector<112x1xf32>
    %11 = arith.divf %9, %10 : vector<112x1xf32>
    %cst_4 = arith.constant 9.99999974E-6 : f32
    %12 = vector.broadcast %cst_4 : f32 to vector<112x1xf32>
    %13 = arith.addf %11, %12 : vector<112x1xf32>
    %14 = math.rsqrt %13 : vector<112x1xf32>
    %15 = vector.broadcast %14 : vector<112x1xf32> to vector<112x48xf32>
    %16 = arith.mulf %6, %15 : vector<112x48xf32>
    %c0_5 = arith.constant 0 : index
    %c0_6 = arith.constant 0 : index
    %17 = vector.load %arg2[%c0_5, %c0_6] : memref<1x48xf32, #tpu.memory_space<vmem>>, vector<1x48xf32>
    %18 = vector.broadcast %17 : vector<1x48xf32> to vector<112x48xf32>
    %19 = arith.mulf %16, %18 : vector<112x48xf32>
    %c0_7 = arith.constant 0 : index
    %c0_8 = arith.constant 0 : index
    %20 = vector.load %arg3[%c0_7, %c0_8] : memref<1x48xf32, #tpu.memory_space<vmem>>, vector<1x48xf32>
    %21 = vector.broadcast %20 : vector<1x48xf32> to vector<112x48xf32>
    %22 = arith.addf %19, %21 : vector<112x48xf32>
    %c0_9 = arith.constant 0 : index
    %c0_10 = arith.constant 0 : index
    %23 = vector.load %arg4[%c0_9, %c0_10] : memref<48x32xf32, #tpu.memory_space<vmem>>, vector<48x32xf32>
    %cst_11 = arith.constant dense<0.000000e+00> : vector<112x32xf32>
    %24 = tpu.matmul %22, %23, %cst_11 {dimension_numbers = #tpu.dot_dimension_numbers<[1], [0], [0], [1], [0, 0, 1, 1], [], []>} : vector<112x48xf32>, vector<48x32xf32>, vector<112x32xf32> -> vector<112x32xf32>
    %c0_12 = arith.constant 0 : index
    %c0_13 = arith.constant 0 : index
    %25 = vector.load %arg5[%c0_12, %c0_13] : memref<1x32xf32, #tpu.memory_space<vmem>>, vector<1x32xf32>
    %26 = vector.broadcast %25 : vector<1x32xf32> to vector<112x32xf32>
    %27 = arith.addf %24, %26 : vector<112x32xf32>
    %c0_14 = arith.constant 0 : index
    %c0_15 = arith.constant 0 : index
    %28 = vector.load %arg6[%c0_14, %c0_15] : memref<112x32xf32, #tpu.memory_space<vmem>>, vector<112x32xf32>
    tpu.vector_store %arg6[%c0_14, %c0_15], %27 {strides = array<i32>} : memref<112x32xf32, #tpu.memory_space<vmem>>, vector<112x32xf32>,
    return
  }
  func.func @transform_0(%arg0: i32) -> (i32, i32) {
    %c0_i32 = arith.constant 0 : i32
    %c0_i32_0 = arith.constant 0 : i32
    return %arg0, %c0_i32 : i32, i32
  }
  func.func @transform_1(%arg0: i32) -> (i32, i32) {
    %c0_i32 = arith.constant 0 : i32
    %c0_i32_0 = arith.constant 0 : i32
    %c0_i32_1 = arith.constant 0 : i32
    return %c0_i32, %c0_i32_0 : i32, i32
  }
  func.func @transform_2(%arg0: i32) -> (i32, i32) {
    %c0_i32 = arith.constant 0 : i32
    %c0_i32_0 = arith.constant 0 : i32
    %c0_i32_1 = arith.constant 0 : i32
    return %c0_i32, %c0_i32_0 : i32, i32
  }
  func.func @transform_3(%arg0: i32) -> (i32, i32) {
    %c0_i32 = arith.constant 0 : i32
    %c0_i32_0 = arith.constant 0 : i32
    %c0_i32_1 = arith.constant 0 : i32
    return %c0_i32, %c0_i32_0 : i32, i32
  }
  func.func @transform_4(%arg0: i32) -> (i32, i32) {
    %c0_i32 = arith.constant 0 : i32
    %c0_i32_0 = arith.constant 0 : i32
    %c0_i32_1 = arith.constant 0 : i32
    return %c0_i32, %c0_i32_0 : i32, i32
  }
  func.func @transform_5(%arg0: i32) -> (i32, i32) {
    %c0_i32 = arith.constant 0 : i32
    %c0_i32_0 = arith.constant 0 : i32
    return %arg0, %c0_i32 : i32, i32
  }
}

module attributes {stable_mosaic.version = 11 : i64} {
  func.func @_tcn_stack_kernel(%arg0: i32, %arg1: memref<1x56x32xf32, #tpu.memory_space<vmem>>, %arg2: memref<1x56x48xf32, #tpu.memory_space<vmem>>, %arg3: memref<1x2x32xf32, #tpu.memory_space<vmem>>, %arg4: memref<1x4xf32, #tpu.memory_space<vmem>>, %arg5: memref<2x32x32xf32, #tpu.memory_space<vmem>>, %arg6: memref<2x1x32xf32, #tpu.memory_space<vmem>>, %arg7: memref<2x1x32xf32, #tpu.memory_space<vmem>>, %arg8: memref<2x3x32xf32, #tpu.memory_space<vmem>>, %arg9: memref<2x1x32xf32, #tpu.memory_space<vmem>>, %arg10: memref<2x1x32xf32, #tpu.memory_space<vmem>>, %arg11: memref<2x1x32xf32, #tpu.memory_space<vmem>>, %arg12: memref<2x32x32xf32, #tpu.memory_space<vmem>>, %arg13: memref<2x1x32xf32, #tpu.memory_space<vmem>>, %arg14: memref<32x48xf32, #tpu.memory_space<vmem>>, %arg15: memref<1x48xf32, #tpu.memory_space<vmem>>, %arg16: memref<48x48xf32, #tpu.memory_space<vmem>>, %arg17: memref<1x56x48xf32, #tpu.memory_space<vmem>>) attributes {dimension_semantics = [#tpu.dimension_semantics<parallel>], iteration_bounds = array<i64: 2>, scalar_prefetch = 0 : i64, scratch_operands = 0 : i64, tpu.core_type = #tpu.core_type<tc>, window_params = [{transform_indices = @transform_0, window_bounds = array<i64: 1, 56, 32>}, {transform_indices = @transform_1, window_bounds = array<i64: 1, 56, 48>}, {transform_indices = @transform_2, window_bounds = array<i64: 1, 2, 32>}, {pipeline_mode = #tpu.pipeline_mode<synchronous>, transform_indices = @transform_3, window_bounds = array<i64: 1, 4>}, {pipeline_mode = #tpu.pipeline_mode<synchronous>, transform_indices = @transform_4, window_bounds = array<i64: 2, 32, 32>}, {pipeline_mode = #tpu.pipeline_mode<synchronous>, transform_indices = @transform_5, window_bounds = array<i64: 2, 1, 32>}, {pipeline_mode = #tpu.pipeline_mode<synchronous>, transform_indices = @transform_6, window_bounds = array<i64: 2, 1, 32>}, {pipeline_mode = #tpu.pipeline_mode<synchronous>, transform_indices = @transform_7, window_bounds = array<i64: 2, 3, 32>}, {pipeline_mode = #tpu.pipeline_mode<synchronous>, transform_indices = @transform_8, window_bounds = array<i64: 2, 1, 32>}, {pipeline_mode = #tpu.pipeline_mode<synchronous>, transform_indices = @transform_9, window_bounds = array<i64: 2, 1, 32>}, {pipeline_mode = #tpu.pipeline_mode<synchronous>, transform_indices = @transform_10, window_bounds = array<i64: 2, 1, 32>}, {pipeline_mode = #tpu.pipeline_mode<synchronous>, transform_indices = @transform_11, window_bounds = array<i64: 2, 32, 32>}, {pipeline_mode = #tpu.pipeline_mode<synchronous>, transform_indices = @transform_12, window_bounds = array<i64: 2, 1, 32>}, {pipeline_mode = #tpu.pipeline_mode<synchronous>, transform_indices = @transform_13, window_bounds = array<i64: 32, 48>}, {pipeline_mode = #tpu.pipeline_mode<synchronous>, transform_indices = @transform_14, window_bounds = array<i64: 1, 48>}, {pipeline_mode = #tpu.pipeline_mode<synchronous>, transform_indices = @transform_15, window_bounds = array<i64: 48, 48>}, {transform_indices = @transform_16, window_bounds = array<i64: 1, 56, 48>}]} {
    %c0 = arith.constant 0 : index
    %c0_0 = arith.constant 0 : index
    %c0_1 = arith.constant 0 : index
    %0 = vector.load %arg1[%c0, %c0_0, %c0_1] : memref<1x56x32xf32, #tpu.memory_space<vmem>>, vector<1x56x32xf32>
    %1 = vector.shape_cast %0 : vector<1x56x32xf32> to vector<56x32xf32>
    %c0_2 = arith.constant 0 : index
    %c0_3 = arith.constant 0 : index
    %c0_4 = arith.constant 0 : index
    %2 = vector.load %arg3[%c0_2, %c0_3, %c0_4] : memref<1x2x32xf32, #tpu.memory_space<vmem>>, vector<1x2x32xf32>
    %3 = vector.shape_cast %2 : vector<1x2x32xf32> to vector<2x32xf32>
    %c0_5 = arith.constant 0 : index
    %c0_6 = arith.constant 0 : index
    %4 = vector.load %arg4[%c0_5, %c0_6] : memref<1x4xf32, #tpu.memory_space<vmem>>, vector<1x4xf32>
    %5 = tpu.iota {dimensions = array<i32: 0>} : vector<56x32xi32>
    %c49_i32 = arith.constant 49 : i32
    %6 = vector.broadcast %c49_i32 : i32 to vector<56x32xi32>
    %7 = arith.cmpi slt, %5, %6 : vector<56x32xi32>
    %8 = arith.extui %7 : vector<56x32xi1> to vector<56x32xi32>
    %9 = arith.sitofp %8 : vector<56x32xi32> to vector<56x32xf32>
    %10 = vector.extract_strided_slice %4 {offsets = [0, 0], sizes = [1, 1], strides = [1, 1]} : vector<1x4xf32> to vector<1x1xf32>
    %11 = vector.extract_strided_slice %4 {offsets = [0, 1], sizes = [1, 1], strides = [1, 1]} : vector<1x4xf32> to vector<1x1xf32>
    %c0_7 = arith.constant 0 : index
    %c0_8 = arith.constant 0 : index
    %c0_9 = arith.constant 0 : index
    %12 = vector.load %arg5[%c0_7, %c0_8, %c0_9] : memref<2x32x32xf32, #tpu.memory_space<vmem>>, vector<1x32x32xf32>
    %13 = vector.shape_cast %12 : vector<1x32x32xf32> to vector<32x32xf32>
    %cst = arith.constant dense<0.000000e+00> : vector<56x32xf32>
    %14 = tpu.matmul %1, %13, %cst {dimension_numbers = #tpu.dot_dimension_numbers<[1], [0], [0], [1], [0, 0, 1, 1], [], []>} : vector<56x32xf32>, vector<32x32xf32>, vector<56x32xf32> -> vector<56x32xf32>
    %15 = vector.extract_strided_slice %3 {offsets = [0, 0], sizes = [1, 32], strides = [1, 1]} : vector<2x32xf32> to vector<1x32xf32>
    %16 = vector.broadcast %15 : vector<1x32xf32> to vector<56x32xf32>
    %17 = arith.addf %14, %16 : vector<56x32xf32>
    %cst_10 = arith.constant 0.000000e+00 : f32
    %18 = vector.broadcast %cst_10 : f32 to vector<56x32xf32>
    %19 = arith.cmpf ogt, %17, %18 : vector<56x32xf32>
    %20 = vector.broadcast %10 : vector<1x1xf32> to vector<56x32xf32>
    %21 = arith.mulf %20, %17 : vector<56x32xf32>
    %22 = arith.select %19, %17, %21 : vector<56x32xi1>, vector<56x32xf32>
    %23 = arith.mulf %22, %9 : vector<56x32xf32>
    %24 = vector.shape_cast %23 : vector<56x32xf32> to vector<1x56x32xf32>
    %cst_11 = arith.constant dense<0.000000e+00> : vector<1xf32>
    %25 = vector.multi_reduction <add>, %24, %cst_11 [1, 2] : vector<1x56x32xf32> to vector<1xf32>
    %26 = vector.shape_cast %25 : vector<1xf32> to vector<1x1x1xf32>
    %27 = vector.extract %26[0, 0, 0] : f32 from vector<1x1x1xf32>
    %28 = arith.mulf %23, %23 : vector<56x32xf32>
    %29 = vector.shape_cast %28 : vector<56x32xf32> to vector<1x56x32xf32>
    %cst_12 = arith.constant dense<0.000000e+00> : vector<1xf32>
    %30 = vector.multi_reduction <add>, %29, %cst_12 [1, 2] : vector<1x56x32xf32> to vector<1xf32>
    %31 = vector.shape_cast %30 : vector<1xf32> to vector<1x1x1xf32>
    %32 = vector.extract %31[0, 0, 0] : f32 from vector<1x1x1xf32>
    %cst_13 = arith.constant 1.568000e+03 : f32
    %33 = arith.divf %27, %cst_13 : f32
    %cst_14 = arith.constant 1.568000e+03 : f32
    %34 = arith.mulf %cst_14, %33 : f32
    %35 = arith.mulf %34, %33 : f32
    %36 = arith.subf %32, %35 : f32
    %cst_15 = arith.constant 1.567000e+03 : f32
    %37 = arith.divf %36, %cst_15 : f32
    %38 = vector.broadcast %33 : f32 to vector<56x32xf32>
    %39 = arith.subf %23, %38 : vector<56x32xf32>
    %cst_16 = arith.constant 9.99999974E-6 : f32
    %40 = arith.addf %37, %cst_16 : f32
    %41 = math.rsqrt %40 : f32
    %42 = vector.broadcast %41 : f32 to vector<56x32xf32>
    %43 = arith.mulf %39, %42 : vector<56x32xf32>
    %c0_17 = arith.constant 0 : index
    %c0_18 = arith.constant 0 : index
    %c0_19 = arith.constant 0 : index
    %44 = vector.load %arg6[%c0_17, %c0_18, %c0_19] : memref<2x1x32xf32, #tpu.memory_space<vmem>>, vector<1x1x32xf32>
    %45 = vector.shape_cast %44 : vector<1x1x32xf32> to vector<1x32xf32>
    %46 = vector.broadcast %45 : vector<1x32xf32> to vector<56x32xf32>
    %47 = arith.mulf %43, %46 : vector<56x32xf32>
    %c0_20 = arith.constant 0 : index
    %c0_21 = arith.constant 0 : index
    %c0_22 = arith.constant 0 : index
    %48 = vector.load %arg7[%c0_20, %c0_21, %c0_22] : memref<2x1x32xf32, #tpu.memory_space<vmem>>, vector<1x1x32xf32>
    %49 = vector.shape_cast %48 : vector<1x1x32xf32> to vector<1x32xf32>
    %50 = vector.broadcast %49 : vector<1x32xf32> to vector<56x32xf32>
    %51 = arith.addf %47, %50 : vector<56x32xf32>
    %52 = arith.mulf %51, %9 : vector<56x32xf32>
    %c0_23 = arith.constant 0 : index
    %c0_24 = arith.constant 0 : index
    %c0_25 = arith.constant 0 : index
    %53 = vector.load %arg8[%c0_23, %c0_24, %c0_25] : memref<2x3x32xf32, #tpu.memory_space<vmem>>, vector<1x3x32xf32>
    %54 = vector.shape_cast %53 : vector<1x3x32xf32> to vector<3x32xf32>
    %cst_26 = arith.constant 0.000000e+00 : f32
    %55 = vector.broadcast %cst_26 : f32 to vector<56x32xf32>
    %c1_i32 = arith.constant 1 : i32
    %56 = tpu.dynamic_rotate %52 by %c1_i32 dim 0 : vector<56x32xf32>, i32 -> vector<56x32xf32>
    %c-1_i32 = arith.constant -1 : i32
    %57 = vector.broadcast %c-1_i32 : i32 to vector<56x32xi32>
    %58 = arith.addi %5, %57 : vector<56x32xi32>
    %c0_i32 = arith.constant 0 : i32
    %59 = vector.broadcast %c0_i32 : i32 to vector<56x32xi32>
    %60 = arith.cmpi sge, %58, %59 : vector<56x32xi32>
    %c49_i32_27 = arith.constant 49 : i32
    %61 = vector.broadcast %c49_i32_27 : i32 to vector<56x32xi32>
    %62 = arith.cmpi slt, %58, %61 : vector<56x32xi32>
    %63 = arith.andi %60, %62 : vector<56x32xi1>
    %cst_28 = arith.constant 0.000000e+00 : f32
    %64 = vector.broadcast %cst_28 : f32 to vector<56x32xf32>
    %65 = arith.select %63, %56, %64 : vector<56x32xi1>, vector<56x32xf32>
    %66 = vector.extract_strided_slice %54 {offsets = [0, 0], sizes = [1, 32], strides = [1, 1]} : vector<3x32xf32> to vector<1x32xf32>
    %67 = vector.broadcast %66 : vector<1x32xf32> to vector<56x32xf32>
    %68 = arith.mulf %65, %67 : vector<56x32xf32>
    %69 = arith.addf %55, %68 : vector<56x32xf32>
    %70 = vector.extract_strided_slice %54 {offsets = [1, 0], sizes = [1, 32], strides = [1, 1]} : vector<3x32xf32> to vector<1x32xf32>
    %71 = vector.broadcast %70 : vector<1x32xf32> to vector<56x32xf32>
    %72 = arith.mulf %52, %71 : vector<56x32xf32>
    %73 = arith.addf %69, %72 : vector<56x32xf32>
    %c55_i32 = arith.constant 55 : i32
    %74 = tpu.dynamic_rotate %52 by %c55_i32 dim 0 : vector<56x32xf32>, i32 -> vector<56x32xf32>
    %c1_i32_29 = arith.constant 1 : i32
    %75 = vector.broadcast %c1_i32_29 : i32 to vector<56x32xi32>
    %76 = arith.addi %5, %75 : vector<56x32xi32>
    %c0_i32_30 = arith.constant 0 : i32
    %77 = vector.broadcast %c0_i32_30 : i32 to vector<56x32xi32>
    %78 = arith.cmpi sge, %76, %77 : vector<56x32xi32>
    %c49_i32_31 = arith.constant 49 : i32
    %79 = vector.broadcast %c49_i32_31 : i32 to vector<56x32xi32>
    %80 = arith.cmpi slt, %76, %79 : vector<56x32xi32>
    %81 = arith.andi %78, %80 : vector<56x32xi1>
    %cst_32 = arith.constant 0.000000e+00 : f32
    %82 = vector.broadcast %cst_32 : f32 to vector<56x32xf32>
    %83 = arith.select %81, %74, %82 : vector<56x32xi1>, vector<56x32xf32>
    %84 = vector.extract_strided_slice %54 {offsets = [2, 0], sizes = [1, 32], strides = [1, 1]} : vector<3x32xf32> to vector<1x32xf32>
    %85 = vector.broadcast %84 : vector<1x32xf32> to vector<56x32xf32>
    %86 = arith.mulf %83, %85 : vector<56x32xf32>
    %87 = arith.addf %73, %86 : vector<56x32xf32>
    %c0_33 = arith.constant 0 : index
    %c0_34 = arith.constant 0 : index
    %c0_35 = arith.constant 0 : index
    %88 = vector.load %arg9[%c0_33, %c0_34, %c0_35] : memref<2x1x32xf32, #tpu.memory_space<vmem>>, vector<1x1x32xf32>
    %89 = vector.shape_cast %88 : vector<1x1x32xf32> to vector<1x32xf32>
    %90 = vector.broadcast %89 : vector<1x32xf32> to vector<56x32xf32>
    %91 = arith.addf %87, %90 : vector<56x32xf32>
    %cst_36 = arith.constant 0.000000e+00 : f32
    %92 = vector.broadcast %cst_36 : f32 to vector<56x32xf32>
    %93 = arith.cmpf ogt, %91, %92 : vector<56x32xf32>
    %94 = vector.broadcast %11 : vector<1x1xf32> to vector<56x32xf32>
    %95 = arith.mulf %94, %91 : vector<56x32xf32>
    %96 = arith.select %93, %91, %95 : vector<56x32xi1>, vector<56x32xf32>
    %97 = arith.mulf %96, %9 : vector<56x32xf32>
    %98 = vector.shape_cast %97 : vector<56x32xf32> to vector<1x56x32xf32>
    %cst_37 = arith.constant dense<0.000000e+00> : vector<1xf32>
    %99 = vector.multi_reduction <add>, %98, %cst_37 [1, 2] : vector<1x56x32xf32> to vector<1xf32>
    %100 = vector.shape_cast %99 : vector<1xf32> to vector<1x1x1xf32>
    %101 = vector.extract %100[0, 0, 0] : f32 from vector<1x1x1xf32>
    %102 = arith.mulf %97, %97 : vector<56x32xf32>
    %103 = vector.shape_cast %102 : vector<56x32xf32> to vector<1x56x32xf32>
    %cst_38 = arith.constant dense<0.000000e+00> : vector<1xf32>
    %104 = vector.multi_reduction <add>, %103, %cst_38 [1, 2] : vector<1x56x32xf32> to vector<1xf32>
    %105 = vector.shape_cast %104 : vector<1xf32> to vector<1x1x1xf32>
    %106 = vector.extract %105[0, 0, 0] : f32 from vector<1x1x1xf32>
    %cst_39 = arith.constant 1.568000e+03 : f32
    %107 = arith.divf %101, %cst_39 : f32
    %cst_40 = arith.constant 1.568000e+03 : f32
    %108 = arith.mulf %cst_40, %107 : f32
    %109 = arith.mulf %108, %107 : f32
    %110 = arith.subf %106, %109 : f32
    %cst_41 = arith.constant 1.567000e+03 : f32
    %111 = arith.divf %110, %cst_41 : f32
    %112 = vector.broadcast %107 : f32 to vector<56x32xf32>
    %113 = arith.subf %97, %112 : vector<56x32xf32>
    %cst_42 = arith.constant 9.99999974E-6 : f32
    %114 = arith.addf %111, %cst_42 : f32
    %115 = math.rsqrt %114 : f32
    %116 = vector.broadcast %115 : f32 to vector<56x32xf32>
    %117 = arith.mulf %113, %116 : vector<56x32xf32>
    %c0_43 = arith.constant 0 : index
    %c0_44 = arith.constant 0 : index
    %c0_45 = arith.constant 0 : index
    %118 = vector.load %arg10[%c0_43, %c0_44, %c0_45] : memref<2x1x32xf32, #tpu.memory_space<vmem>>, vector<1x1x32xf32>
    %119 = vector.shape_cast %118 : vector<1x1x32xf32> to vector<1x32xf32>
    %120 = vector.broadcast %119 : vector<1x32xf32> to vector<56x32xf32>
    %121 = arith.mulf %117, %120 : vector<56x32xf32>
    %c0_46 = arith.constant 0 : index
    %c0_47 = arith.constant 0 : index
    %c0_48 = arith.constant 0 : index
    %122 = vector.load %arg11[%c0_46, %c0_47, %c0_48] : memref<2x1x32xf32, #tpu.memory_space<vmem>>, vector<1x1x32xf32>
    %123 = vector.shape_cast %122 : vector<1x1x32xf32> to vector<1x32xf32>
    %124 = vector.broadcast %123 : vector<1x32xf32> to vector<56x32xf32>
    %125 = arith.addf %121, %124 : vector<56x32xf32>
    %c0_49 = arith.constant 0 : index
    %c0_50 = arith.constant 0 : index
    %c0_51 = arith.constant 0 : index
    %126 = vector.load %arg12[%c0_49, %c0_50, %c0_51] : memref<2x32x32xf32, #tpu.memory_space<vmem>>, vector<1x32x32xf32>
    %127 = vector.shape_cast %126 : vector<1x32x32xf32> to vector<32x32xf32>
    %cst_52 = arith.constant dense<0.000000e+00> : vector<56x32xf32>
    %128 = tpu.matmul %125, %127, %cst_52 {dimension_numbers = #tpu.dot_dimension_numbers<[1], [0], [0], [1], [0, 0, 1, 1], [], []>} : vector<56x32xf32>, vector<32x32xf32>, vector<56x32xf32> -> vector<56x32xf32>
    %c0_53 = arith.constant 0 : index
    %c0_54 = arith.constant 0 : index
    %c0_55 = arith.constant 0 : index
    %129 = vector.load %arg13[%c0_53, %c0_54, %c0_55] : memref<2x1x32xf32, #tpu.memory_space<vmem>>, vector<1x1x32xf32>
    %130 = vector.shape_cast %129 : vector<1x1x32xf32> to vector<1x32xf32>
    %131 = vector.broadcast %130 : vector<1x32xf32> to vector<56x32xf32>
    %132 = arith.addf %128, %131 : vector<56x32xf32>
    %133 = arith.addf %132, %1 : vector<56x32xf32>
    %134 = vector.extract_strided_slice %4 {offsets = [0, 2], sizes = [1, 1], strides = [1, 1]} : vector<1x4xf32> to vector<1x1xf32>
    %135 = vector.extract_strided_slice %4 {offsets = [0, 3], sizes = [1, 1], strides = [1, 1]} : vector<1x4xf32> to vector<1x1xf32>
    %c1 = arith.constant 1 : index
    %c0_56 = arith.constant 0 : index
    %c0_57 = arith.constant 0 : index
    %136 = vector.load %arg5[%c1, %c0_56, %c0_57] : memref<2x32x32xf32, #tpu.memory_space<vmem>>, vector<1x32x32xf32>
    %137 = vector.shape_cast %136 : vector<1x32x32xf32> to vector<32x32xf32>
    %cst_58 = arith.constant dense<0.000000e+00> : vector<56x32xf32>
    %138 = tpu.matmul %133, %137, %cst_58 {dimension_numbers = #tpu.dot_dimension_numbers<[1], [0], [0], [1], [0, 0, 1, 1], [], []>} : vector<56x32xf32>, vector<32x32xf32>, vector<56x32xf32> -> vector<56x32xf32>
    %139 = vector.extract_strided_slice %3 {offsets = [1, 0], sizes = [1, 32], strides = [1, 1]} : vector<2x32xf32> to vector<1x32xf32>
    %140 = vector.broadcast %139 : vector<1x32xf32> to vector<56x32xf32>
    %141 = arith.addf %138, %140 : vector<56x32xf32>
    %cst_59 = arith.constant 0.000000e+00 : f32
    %142 = vector.broadcast %cst_59 : f32 to vector<56x32xf32>
    %143 = arith.cmpf ogt, %141, %142 : vector<56x32xf32>
    %144 = vector.broadcast %134 : vector<1x1xf32> to vector<56x32xf32>
    %145 = arith.mulf %144, %141 : vector<56x32xf32>
    %146 = arith.select %143, %141, %145 : vector<56x32xi1>, vector<56x32xf32>
    %147 = arith.mulf %146, %9 : vector<56x32xf32>
    %148 = vector.shape_cast %147 : vector<56x32xf32> to vector<1x56x32xf32>
    %cst_60 = arith.constant dense<0.000000e+00> : vector<1xf32>
    %149 = vector.multi_reduction <add>, %148, %cst_60 [1, 2] : vector<1x56x32xf32> to vector<1xf32>
    %150 = vector.shape_cast %149 : vector<1xf32> to vector<1x1x1xf32>
    %151 = vector.extract %150[0, 0, 0] : f32 from vector<1x1x1xf32>
    %152 = arith.mulf %147, %147 : vector<56x32xf32>
    %153 = vector.shape_cast %152 : vector<56x32xf32> to vector<1x56x32xf32>
    %cst_61 = arith.constant dense<0.000000e+00> : vector<1xf32>
    %154 = vector.multi_reduction <add>, %153, %cst_61 [1, 2] : vector<1x56x32xf32> to vector<1xf32>
    %155 = vector.shape_cast %154 : vector<1xf32> to vector<1x1x1xf32>
    %156 = vector.extract %155[0, 0, 0] : f32 from vector<1x1x1xf32>
    %cst_62 = arith.constant 1.568000e+03 : f32
    %157 = arith.divf %151, %cst_62 : f32
    %cst_63 = arith.constant 1.568000e+03 : f32
    %158 = arith.mulf %cst_63, %157 : f32
    %159 = arith.mulf %158, %157 : f32
    %160 = arith.subf %156, %159 : f32
    %cst_64 = arith.constant 1.567000e+03 : f32
    %161 = arith.divf %160, %cst_64 : f32
    %162 = vector.broadcast %157 : f32 to vector<56x32xf32>
    %163 = arith.subf %147, %162 : vector<56x32xf32>
    %cst_65 = arith.constant 9.99999974E-6 : f32
    %164 = arith.addf %161, %cst_65 : f32
    %165 = math.rsqrt %164 : f32
    %166 = vector.broadcast %165 : f32 to vector<56x32xf32>
    %167 = arith.mulf %163, %166 : vector<56x32xf32>
    %c1_66 = arith.constant 1 : index
    %c0_67 = arith.constant 0 : index
    %c0_68 = arith.constant 0 : index
    %168 = vector.load %arg6[%c1_66, %c0_67, %c0_68] : memref<2x1x32xf32, #tpu.memory_space<vmem>>, vector<1x1x32xf32>
    %169 = vector.shape_cast %168 : vector<1x1x32xf32> to vector<1x32xf32>
    %170 = vector.broadcast %169 : vector<1x32xf32> to vector<56x32xf32>
    %171 = arith.mulf %167, %170 : vector<56x32xf32>
    %c1_69 = arith.constant 1 : index
    %c0_70 = arith.constant 0 : index
    %c0_71 = arith.constant 0 : index
    %172 = vector.load %arg7[%c1_69, %c0_70, %c0_71] : memref<2x1x32xf32, #tpu.memory_space<vmem>>, vector<1x1x32xf32>
    %173 = vector.shape_cast %172 : vector<1x1x32xf32> to vector<1x32xf32>
    %174 = vector.broadcast %173 : vector<1x32xf32> to vector<56x32xf32>
    %175 = arith.addf %171, %174 : vector<56x32xf32>
    %176 = arith.mulf %175, %9 : vector<56x32xf32>
    %c1_72 = arith.constant 1 : index
    %c0_73 = arith.constant 0 : index
    %c0_74 = arith.constant 0 : index
    %177 = vector.load %arg8[%c1_72, %c0_73, %c0_74] : memref<2x3x32xf32, #tpu.memory_space<vmem>>, vector<1x3x32xf32>
    %178 = vector.shape_cast %177 : vector<1x3x32xf32> to vector<3x32xf32>
    %cst_75 = arith.constant 0.000000e+00 : f32
    %179 = vector.broadcast %cst_75 : f32 to vector<56x32xf32>
    %c2_i32 = arith.constant 2 : i32
    %180 = tpu.dynamic_rotate %176 by %c2_i32 dim 0 : vector<56x32xf32>, i32 -> vector<56x32xf32>
    %c-2_i32 = arith.constant -2 : i32
    %181 = vector.broadcast %c-2_i32 : i32 to vector<56x32xi32>
    %182 = arith.addi %5, %181 : vector<56x32xi32>
    %c0_i32_76 = arith.constant 0 : i32
    %183 = vector.broadcast %c0_i32_76 : i32 to vector<56x32xi32>
    %184 = arith.cmpi sge, %182, %183 : vector<56x32xi32>
    %c49_i32_77 = arith.constant 49 : i32
    %185 = vector.broadcast %c49_i32_77 : i32 to vector<56x32xi32>
    %186 = arith.cmpi slt, %182, %185 : vector<56x32xi32>
    %187 = arith.andi %184, %186 : vector<56x32xi1>
    %cst_78 = arith.constant 0.000000e+00 : f32
    %188 = vector.broadcast %cst_78 : f32 to vector<56x32xf32>
    %189 = arith.select %187, %180, %188 : vector<56x32xi1>, vector<56x32xf32>
    %190 = vector.extract_strided_slice %178 {offsets = [0, 0], sizes = [1, 32], strides = [1, 1]} : vector<3x32xf32> to vector<1x32xf32>
    %191 = vector.broadcast %190 : vector<1x32xf32> to vector<56x32xf32>
    %192 = arith.mulf %189, %191 : vector<56x32xf32>
    %193 = arith.addf %179, %192 : vector<56x32xf32>
    %194 = vector.extract_strided_slice %178 {offsets = [1, 0], sizes = [1, 32], strides = [1, 1]} : vector<3x32xf32> to vector<1x32xf32>
    %195 = vector.broadcast %194 : vector<1x32xf32> to vector<56x32xf32>
    %196 = arith.mulf %176, %195 : vector<56x32xf32>
    %197 = arith.addf %193, %196 : vector<56x32xf32>
    %c54_i32 = arith.constant 54 : i32
    %198 = tpu.dynamic_rotate %176 by %c54_i32 dim 0 : vector<56x32xf32>, i32 -> vector<56x32xf32>
    %c2_i32_79 = arith.constant 2 : i32
    %199 = vector.broadcast %c2_i32_79 : i32 to vector<56x32xi32>
    %200 = arith.addi %5, %199 : vector<56x32xi32>
    %c0_i32_80 = arith.constant 0 : i32
    %201 = vector.broadcast %c0_i32_80 : i32 to vector<56x32xi32>
    %202 = arith.cmpi sge, %200, %201 : vector<56x32xi32>
    %c49_i32_81 = arith.constant 49 : i32
    %203 = vector.broadcast %c49_i32_81 : i32 to vector<56x32xi32>
    %204 = arith.cmpi slt, %200, %203 : vector<56x32xi32>
    %205 = arith.andi %202, %204 : vector<56x32xi1>
    %cst_82 = arith.constant 0.000000e+00 : f32
    %206 = vector.broadcast %cst_82 : f32 to vector<56x32xf32>
    %207 = arith.select %205, %198, %206 : vector<56x32xi1>, vector<56x32xf32>
    %208 = vector.extract_strided_slice %178 {offsets = [2, 0], sizes = [1, 32], strides = [1, 1]} : vector<3x32xf32> to vector<1x32xf32>
    %209 = vector.broadcast %208 : vector<1x32xf32> to vector<56x32xf32>
    %210 = arith.mulf %207, %209 : vector<56x32xf32>
    %211 = arith.addf %197, %210 : vector<56x32xf32>
    %c1_83 = arith.constant 1 : index
    %c0_84 = arith.constant 0 : index
    %c0_85 = arith.constant 0 : index
    %212 = vector.load %arg9[%c1_83, %c0_84, %c0_85] : memref<2x1x32xf32, #tpu.memory_space<vmem>>, vector<1x1x32xf32>
    %213 = vector.shape_cast %212 : vector<1x1x32xf32> to vector<1x32xf32>
    %214 = vector.broadcast %213 : vector<1x32xf32> to vector<56x32xf32>
    %215 = arith.addf %211, %214 : vector<56x32xf32>
    %cst_86 = arith.constant 0.000000e+00 : f32
    %216 = vector.broadcast %cst_86 : f32 to vector<56x32xf32>
    %217 = arith.cmpf ogt, %215, %216 : vector<56x32xf32>
    %218 = vector.broadcast %135 : vector<1x1xf32> to vector<56x32xf32>
    %219 = arith.mulf %218, %215 : vector<56x32xf32>
    %220 = arith.select %217, %215, %219 : vector<56x32xi1>, vector<56x32xf32>
    %221 = arith.mulf %220, %9 : vector<56x32xf32>
    %222 = vector.shape_cast %221 : vector<56x32xf32> to vector<1x56x32xf32>
    %cst_87 = arith.constant dense<0.000000e+00> : vector<1xf32>
    %223 = vector.multi_reduction <add>, %222, %cst_87 [1, 2] : vector<1x56x32xf32> to vector<1xf32>
    %224 = vector.shape_cast %223 : vector<1xf32> to vector<1x1x1xf32>
    %225 = vector.extract %224[0, 0, 0] : f32 from vector<1x1x1xf32>
    %226 = arith.mulf %221, %221 : vector<56x32xf32>
    %227 = vector.shape_cast %226 : vector<56x32xf32> to vector<1x56x32xf32>
    %cst_88 = arith.constant dense<0.000000e+00> : vector<1xf32>
    %228 = vector.multi_reduction <add>, %227, %cst_88 [1, 2] : vector<1x56x32xf32> to vector<1xf32>
    %229 = vector.shape_cast %228 : vector<1xf32> to vector<1x1x1xf32>
    %230 = vector.extract %229[0, 0, 0] : f32 from vector<1x1x1xf32>
    %cst_89 = arith.constant 1.568000e+03 : f32
    %231 = arith.divf %225, %cst_89 : f32
    %cst_90 = arith.constant 1.568000e+03 : f32
    %232 = arith.mulf %cst_90, %231 : f32
    %233 = arith.mulf %232, %231 : f32
    %234 = arith.subf %230, %233 : f32
    %cst_91 = arith.constant 1.567000e+03 : f32
    %235 = arith.divf %234, %cst_91 : f32
    %236 = vector.broadcast %231 : f32 to vector<56x32xf32>
    %237 = arith.subf %221, %236 : vector<56x32xf32>
    %cst_92 = arith.constant 9.99999974E-6 : f32
    %238 = arith.addf %235, %cst_92 : f32
    %239 = math.rsqrt %238 : f32
    %240 = vector.broadcast %239 : f32 to vector<56x32xf32>
    %241 = arith.mulf %237, %240 : vector<56x32xf32>
    %c1_93 = arith.constant 1 : index
    %c0_94 = arith.constant 0 : index
    %c0_95 = arith.constant 0 : index
    %242 = vector.load %arg10[%c1_93, %c0_94, %c0_95] : memref<2x1x32xf32, #tpu.memory_space<vmem>>, vector<1x1x32xf32>
    %243 = vector.shape_cast %242 : vector<1x1x32xf32> to vector<1x32xf32>
    %244 = vector.broadcast %243 : vector<1x32xf32> to vector<56x32xf32>
    %245 = arith.mulf %241, %244 : vector<56x32xf32>
    %c1_96 = arith.constant 1 : index
    %c0_97 = arith.constant 0 : index
    %c0_98 = arith.constant 0 : index
    %246 = vector.load %arg11[%c1_96, %c0_97, %c0_98] : memref<2x1x32xf32, #tpu.memory_space<vmem>>, vector<1x1x32xf32>
    %247 = vector.shape_cast %246 : vector<1x1x32xf32> to vector<1x32xf32>
    %248 = vector.broadcast %247 : vector<1x32xf32> to vector<56x32xf32>
    %249 = arith.addf %245, %248 : vector<56x32xf32>
    %c1_99 = arith.constant 1 : index
    %c0_100 = arith.constant 0 : index
    %c0_101 = arith.constant 0 : index
    %250 = vector.load %arg12[%c1_99, %c0_100, %c0_101] : memref<2x32x32xf32, #tpu.memory_space<vmem>>, vector<1x32x32xf32>
    %251 = vector.shape_cast %250 : vector<1x32x32xf32> to vector<32x32xf32>
    %cst_102 = arith.constant dense<0.000000e+00> : vector<56x32xf32>
    %252 = tpu.matmul %249, %251, %cst_102 {dimension_numbers = #tpu.dot_dimension_numbers<[1], [0], [0], [1], [0, 0, 1, 1], [], []>} : vector<56x32xf32>, vector<32x32xf32>, vector<56x32xf32> -> vector<56x32xf32>
    %c1_103 = arith.constant 1 : index
    %c0_104 = arith.constant 0 : index
    %c0_105 = arith.constant 0 : index
    %253 = vector.load %arg13[%c1_103, %c0_104, %c0_105] : memref<2x1x32xf32, #tpu.memory_space<vmem>>, vector<1x1x32xf32>
    %254 = vector.shape_cast %253 : vector<1x1x32xf32> to vector<1x32xf32>
    %255 = vector.broadcast %254 : vector<1x32xf32> to vector<56x32xf32>
    %256 = arith.addf %252, %255 : vector<56x32xf32>
    %257 = arith.addf %256, %133 : vector<56x32xf32>
    %cst_106 = arith.constant 0.000000e+00 : f32
    %258 = vector.broadcast %cst_106 : f32 to vector<56x32xf32>
    %259 = arith.maximumf %257, %258 : vector<56x32xf32>
    %c0_107 = arith.constant 0 : index
    %c0_108 = arith.constant 0 : index
    %260 = vector.load %arg14[%c0_107, %c0_108] : memref<32x48xf32, #tpu.memory_space<vmem>>, vector<32x48xf32>
    %cst_109 = arith.constant dense<0.000000e+00> : vector<56x48xf32>
    %261 = tpu.matmul %259, %260, %cst_109 {dimension_numbers = #tpu.dot_dimension_numbers<[1], [0], [0], [1], [0, 0, 1, 1], [], []>} : vector<56x32xf32>, vector<32x48xf32>, vector<56x48xf32> -> vector<56x48xf32>
    %c0_110 = arith.constant 0 : index
    %c0_111 = arith.constant 0 : index
    %262 = vector.load %arg15[%c0_110, %c0_111] : memref<1x48xf32, #tpu.memory_space<vmem>>, vector<1x48xf32>
    %263 = vector.broadcast %262 : vector<1x48xf32> to vector<56x48xf32>
    %264 = arith.addf %261, %263 : vector<56x48xf32>
    %c0_112 = arith.constant 0 : index
    %c0_113 = arith.constant 0 : index
    %c0_114 = arith.constant 0 : index
    %265 = vector.load %arg2[%c0_112, %c0_113, %c0_114] : memref<1x56x48xf32, #tpu.memory_space<vmem>>, vector<1x56x48xf32>
    %266 = vector.shape_cast %265 : vector<1x56x48xf32> to vector<56x48xf32>
    %267 = arith.mulf %264, %266 : vector<56x48xf32>
    %c0_115 = arith.constant 0 : index
    %c0_116 = arith.constant 0 : index
    %268 = vector.load %arg16[%c0_115, %c0_116] : memref<48x48xf32, #tpu.memory_space<vmem>>, vector<48x48xf32>
    %cst_117 = arith.constant dense<0.000000e+00> : vector<56x48xf32>
    %269 = tpu.matmul %267, %268, %cst_117 {dimension_numbers = #tpu.dot_dimension_numbers<[1], [0], [0], [1], [0, 0, 1, 1], [], []>} : vector<56x48xf32>, vector<48x48xf32>, vector<56x48xf32> -> vector<56x48xf32>
    %c0_118 = arith.constant 0 : index
    %c0_119 = arith.constant 0 : index
    %c0_120 = arith.constant 0 : index
    %270 = vector.load %arg17[%c0_118, %c0_119, %c0_120] : memref<1x56x48xf32, #tpu.memory_space<vmem>>, vector<1x56x48xf32>
    %271 = vector.shape_cast %270 : vector<1x56x48xf32> to vector<56x48xf32>
    %272 = vector.shape_cast %269 : vector<56x48xf32> to vector<1x56x48xf32>
    tpu.vector_store %arg17[%c0_118, %c0_119, %c0_120], %272 {strides = array<i32>} : memref<1x56x48xf32, #tpu.memory_space<vmem>>, vector<1x56x48xf32>,
    return
  }
  func.func @transform_0(%arg0: i32) -> (i32, i32, i32) {
    %c0_i32 = arith.constant 0 : i32
    %c0_i32_0 = arith.constant 0 : i32
    %c0_i32_1 = arith.constant 0 : i32
    return %arg0, %c0_i32, %c0_i32_0 : i32, i32, i32
  }
  func.func @transform_1(%arg0: i32) -> (i32, i32, i32) {
    %c0_i32 = arith.constant 0 : i32
    %c0_i32_0 = arith.constant 0 : i32
    %c0_i32_1 = arith.constant 0 : i32
    return %arg0, %c0_i32, %c0_i32_0 : i32, i32, i32
  }
  func.func @transform_2(%arg0: i32) -> (i32, i32, i32) {
    %c0_i32 = arith.constant 0 : i32
    %c0_i32_0 = arith.constant 0 : i32
    %c0_i32_1 = arith.constant 0 : i32
    return %arg0, %c0_i32, %c0_i32_0 : i32, i32, i32
  }
  func.func @transform_3(%arg0: i32) -> (i32, i32) {
    %c0_i32 = arith.constant 0 : i32
    %c0_i32_0 = arith.constant 0 : i32
    %c0_i32_1 = arith.constant 0 : i32
    return %c0_i32, %c0_i32_0 : i32, i32
  }
  func.func @transform_4(%arg0: i32) -> (i32, i32, i32) {
    %c0_i32 = arith.constant 0 : i32
    %c0_i32_0 = arith.constant 0 : i32
    %c0_i32_1 = arith.constant 0 : i32
    %c0_i32_2 = arith.constant 0 : i32
    return %c0_i32, %c0_i32_0, %c0_i32_1 : i32, i32, i32
  }
  func.func @transform_5(%arg0: i32) -> (i32, i32, i32) {
    %c0_i32 = arith.constant 0 : i32
    %c0_i32_0 = arith.constant 0 : i32
    %c0_i32_1 = arith.constant 0 : i32
    %c0_i32_2 = arith.constant 0 : i32
    return %c0_i32, %c0_i32_0, %c0_i32_1 : i32, i32, i32
  }
  func.func @transform_6(%arg0: i32) -> (i32, i32, i32) {
    %c0_i32 = arith.constant 0 : i32
    %c0_i32_0 = arith.constant 0 : i32
    %c0_i32_1 = arith.constant 0 : i32
    %c0_i32_2 = arith.constant 0 : i32
    return %c0_i32, %c0_i32_0, %c0_i32_1 : i32, i32, i32
  }
  func.func @transform_7(%arg0: i32) -> (i32, i32, i32) {
    %c0_i32 = arith.constant 0 : i32
    %c0_i32_0 = arith.constant 0 : i32
    %c0_i32_1 = arith.constant 0 : i32
    %c0_i32_2 = arith.constant 0 : i32
    return %c0_i32, %c0_i32_0, %c0_i32_1 : i32, i32, i32
  }
  func.func @transform_8(%arg0: i32) -> (i32, i32, i32) {
    %c0_i32 = arith.constant 0 : i32
    %c0_i32_0 = arith.constant 0 : i32
    %c0_i32_1 = arith.constant 0 : i32
    %c0_i32_2 = arith.constant 0 : i32
    return %c0_i32, %c0_i32_0, %c0_i32_1 : i32, i32, i32
  }
  func.func @transform_9(%arg0: i32) -> (i32, i32, i32) {
    %c0_i32 = arith.constant 0 : i32
    %c0_i32_0 = arith.constant 0 : i32
    %c0_i32_1 = arith.constant 0 : i32
    %c0_i32_2 = arith.constant 0 : i32
    return %c0_i32, %c0_i32_0, %c0_i32_1 : i32, i32, i32
  }
  func.func @transform_10(%arg0: i32) -> (i32, i32, i32) {
    %c0_i32 = arith.constant 0 : i32
    %c0_i32_0 = arith.constant 0 : i32
    %c0_i32_1 = arith.constant 0 : i32
    %c0_i32_2 = arith.constant 0 : i32
    return %c0_i32, %c0_i32_0, %c0_i32_1 : i32, i32, i32
  }
  func.func @transform_11(%arg0: i32) -> (i32, i32, i32) {
    %c0_i32 = arith.constant 0 : i32
    %c0_i32_0 = arith.constant 0 : i32
    %c0_i32_1 = arith.constant 0 : i32
    %c0_i32_2 = arith.constant 0 : i32
    return %c0_i32, %c0_i32_0, %c0_i32_1 : i32, i32, i32
  }
  func.func @transform_12(%arg0: i32) -> (i32, i32, i32) {
    %c0_i32 = arith.constant 0 : i32
    %c0_i32_0 = arith.constant 0 : i32
    %c0_i32_1 = arith.constant 0 : i32
    %c0_i32_2 = arith.constant 0 : i32
    return %c0_i32, %c0_i32_0, %c0_i32_1 : i32, i32, i32
  }
  func.func @transform_13(%arg0: i32) -> (i32, i32) {
    %c0_i32 = arith.constant 0 : i32
    %c0_i32_0 = arith.constant 0 : i32
    %c0_i32_1 = arith.constant 0 : i32
    return %c0_i32, %c0_i32_0 : i32, i32
  }
  func.func @transform_14(%arg0: i32) -> (i32, i32) {
    %c0_i32 = arith.constant 0 : i32
    %c0_i32_0 = arith.constant 0 : i32
    %c0_i32_1 = arith.constant 0 : i32
    return %c0_i32, %c0_i32_0 : i32, i32
  }
  func.func @transform_15(%arg0: i32) -> (i32, i32) {
    %c0_i32 = arith.constant 0 : i32
    %c0_i32_0 = arith.constant 0 : i32
    %c0_i32_1 = arith.constant 0 : i32
    return %c0_i32, %c0_i32_0 : i32, i32
  }
  func.func @transform_16(%arg0: i32) -> (i32, i32, i32) {
    %c0_i32 = arith.constant 0 : i32
    %c0_i32_0 = arith.constant 0 : i32
    %c0_i32_1 = arith.constant 0 : i32
    return %arg0, %c0_i32, %c0_i32_0 : i32, i32, i32
  }
}

</mosaic_0001>

<llo_original>
// kernel: spex_forward.7
$region0: #{spex_forward.7}
  #allocation0 [shape = 'u32[]', space=smem, size = 0x4, offset = 0x4, fixed_abs, tag = 'smem constant byte address 0x4 - core index']
  #allocation1 [shape = 'u32[144,128]{1,0:T(1,128)}', space=vmem, size = 0x12000, scoped, tag = 'internal scratch']
  %s0 = inlined_call_operand.vmem [shape: f32[210,48], index: 0, kind: input, shape index: {}]
  %s1 = inlined_call_operand.vmem [shape: f32[48,48], index: 1, kind: input, shape index: {}]
  %s2 = inlined_call_operand.vmem [shape: f32[1,48], index: 2, kind: input, shape index: {}]
  %s3 = inlined_call_operand.vmem [shape: f32[210,48], index: 3, kind: output, shape index: {}]
  %s4 = sld [smem:[#allocation0]]
  $region22: #{spex_forward.7} parent=0
    _
  %s6 = ssub.s32 1, %s4
  %s7 = scalar_select 0, %s6, %s4
  // Predicated region
  $region2: #{spex_forward.7} parent=0 // pred_check
    _
  $region3: #{spex_forward.7} parent=0 // pred_check_branch
    %9 = sbr.rel (0) target = $region5
  $region4: #{spex_forward.7} parent=0 // pred_region
    _
  $region5: #{spex_forward.7} parent=0 // pred_fallthru
    _
  // Predicated region
  $region6: #{spex_forward.7} parent=0 // pred_check
    _
  $region7: #{spex_forward.7} parent=0 // pred_check_branch
    %11 = sbr.rel (0) target = $region9
  $region8: #{spex_forward.7} parent=0 // pred_region
    _
  $region9: #{spex_forward.7} parent=0 // pred_fallthru
    _
  // Predicated region
  $region10: #{spex_forward.7} parent=0 // pred_check
    _
  $region11: #{spex_forward.7} parent=0 // pred_check_branch
    %13 = sbr.rel (0) target = $region13
  $region12: #{spex_forward.7} parent=0 // pred_region
    _
  $region13: #{spex_forward.7} parent=0 // pred_fallthru
    _
  %v14 = vld [vmem:[%s0] sm:$0xff]
  %v15 = vld [vmem:[%s0 + $0x8] sm:$0xff]
  %v16 = vld [vmem:[%s0 + $0x10] sm:$0xff]
  %v17 = vld [vmem:[%s0 + $0x18] sm:$0xff]
  %v18 = vld [vmem:[%s0 + $0x20] sm:$0xff]
  %v19 = vld [vmem:[%s0 + $0x28] sm:$0xff]
  %v20 = vld [vmem:[%s0 + $0x30] sm:$0xff]
  %v21 = vld [vmem:[%s0 + $0x38] sm:$0xff]
  %v22 = vld [vmem:[%s0 + $0x40] sm:$0xff]
  %v23 = vld [vmem:[%s0 + $0x48] sm:$0xff]
  %v24 = vld [vmem:[%s0 + $0x50] sm:$0xff]
  %v25 = vld [vmem:[%s0 + $0x58] sm:$0xff]
  %v26 = vld [vmem:[%s0 + $0x60] sm:$0xff]
  %v27 = vld [vmem:[%s0 + $0x68] sm:$0xff]
  %v28 = vld [vmem:[%s0 + $0x70] sm:$0xff]
  %v29 = vld [vmem:[%s0 + $0x78] sm:$0xff]
  %v30 = vld [vmem:[%s0 + $0x80] sm:$0xff]
  %v31 = vld [vmem:[%s0 + $0x88] sm:$0xff]
  %v32 = vld [vmem:[%s0 + $0x90] sm:$0xff]
  %v33 = vld [vmem:[%s0 + $0x98] sm:$0xff]
  %v34 = vld [vmem:[%s0 + $0xa0] sm:$0xff]
  %v35 = vld [vmem:[%s0 + $0xa8] sm:$0xff]
  %v36 = vld [vmem:[%s0 + $0xb0] sm:$0xff]
  %v37 = vld [vmem:[%s0 + $0xb8] sm:$0xff]
  %v38 = vld [vmem:[%s0 + $0xc0] sm:$0xff]
  %v39 = vld [vmem:[%s0 + $0xc8] sm:$0xff]
  %v40 = vld [vmem:[%s0 + $0xd0] sm:$0x3]
  %v41 = vld [vmem:[%s1] sm:$0xff]
  %v42 = vld [vmem:[%s1 + $0x8] sm:$0xff]
  %v43 = vld [vmem:[%s1 + $0x10] sm:$0xff]
  %v44 = vld [vmem:[%s1 + $0x18] sm:$0xff]
  %v45 = vld [vmem:[%s1 + $0x20] sm:$0xff]
  %v46 = vld [vmem:[%s1 + $0x28] sm:$0xff]
  %v47 = vld [vmem:[%s2] sm:$0x1]
  %v49 = vlaneseq
  %v50 = vshrl.u32 %v49, 7
  %v51 = vsub.s32 0, %v50
  %v52 = vrot.slane %v47, %v51
  %vm54 = vcmask 392192
  %v56 = vsel %vm54, %v14, 0
  %v59 = vsel %vm54, %v15, 0
  %v62 = vsel %vm54, %v16, 0
  %v65 = vsel %vm54, %v17, 0
  %v68 = vsel %vm54, %v18, 0
  %v71 = vsel %vm54, %v19, 0
  %v74 = vsel %vm54, %v20, 0
  %v77 = vsel %vm54, %v21, 0
  %v80 = vsel %vm54, %v22, 0
  %v83 = vsel %vm54, %v23, 0
  %v86 = vsel %vm54, %v24, 0
  %v89 = vsel %vm54, %v25, 0
  %v92 = vsel %vm54, %v26, 0
  %v95 = vsel %vm54, %v27, 0
  %v98 = vsel %vm54, %v28, 0
  %v101 = vsel %vm54, %v29, 0
  %v104 = vsel %vm54, %v30, 0
  %v107 = vsel %vm54, %v31, 0
  %v110 = vsel %vm54, %v32, 0
  %v113 = vsel %vm54, %v33, 0
  %v116 = vsel %vm54, %v34, 0
  %v119 = vsel %vm54, %v35, 0
  %v122 = vsel %vm54, %v36, 0
  %v125 = vsel %vm54, %v37, 0
  %v128 = vsel %vm54, %v38, 0
  %v131 = vsel %vm54, %v39, 0
  %v134 = vsel %vm54, %v40, 0
  %136 = vmatprep.subr.mxu0 0.0
  %137 = vmatpush1.msra.mxu0 %v41
  %138 = vmatprep.subr.mxu0 0.0
  %139 = vmatpush1.msra.mxu0 %v42
  %140 = vmatprep.subr.mxu0 0.0
  %141 = vmatpush1.msra.mxu0 %v43
  %142 = vmatprep.subr.mxu0 0.0
  %143 = vmatpush1.msra.mxu0 %v44
  %144 = vmatprep.subr.mxu0 0.0
  %145 = vmatpush1.msra.mxu0 %v45
  %146 = vmatprep.subr.mxu0 0.0
  %147 = vmatpush1.msra.mxu0 %v46
  %148 = vmatprep.subr.mxu0 0.0
  %149 = vmatpush1.msra.mxu0 0.0
  %150 = vmatprep.subr.mxu0 0.0
  %151 = vmatpush1.msra.mxu0 0.0
  %152 = vmatprep.subr.mxu0 0.0
  %153 = vmatpush1.msra.mxu0 0.0
  %154 = vmatprep.subr.mxu0 0.0
  %155 = vmatpush1.msra.mxu0 0.0
  %156 = vmatprep.subr.mxu0 0.0
  %157 = vmatpush1.msra.mxu0 0.0
  %158 = vmatprep.subr.mxu0 0.0
  %159 = vmatpush1.msra.mxu0 0.0
  %160 = vmatprep.subr.mxu0 0.0
  %161 = vmatpush1.msra.mxu0 0.0
  %162 = vmatprep.subr.mxu0 0.0
  %163 = vmatpush1.msra.mxu0 0.0
  %164 = vmatprep.subr.mxu0 0.0
  %165 = vmatpush1.msra.mxu0 0.0
  %166 = vmatprep.subr.mxu0 0.0
  %167 = vmatpush1.msra.mxu0 0.0
  %168 = vmatprep.subr.mxu0 0.0
  %169 = vmatpush1.msra.mxu0 0.0
  %170 = vmatprep.subr.mxu0 0.0
  %171 = vmatpush1.msra.mxu0 0.0
  %172 = vmatprep.subr.mxu0 0.0
  %173 = vmatpush1.msra.mxu0 0.0
  %174 = vmatprep.subr.mxu0 0.0
  %175 = vmatpush1.msra.mxu0 0.0
  %176 = vmatprep.subr.mxu0 0.0
  %177 = vmatpush1.msra.mxu0 0.0
  %178 = vmatprep.subr.mxu0 0.0
  %179 = vmatpush1.msra.mxu0 0.0
  %180 = vmatprep.subr.mxu0 0.0
  %181 = vmatpush1.msra.mxu0 0.0
  %182 = vmatprep.subr.mxu0 0.0
  %183 = vmatpush1.msra.mxu0 0.0
  %184 = vmatprep.subr.mxu0 0.0
  %185 = vmatpush1.msra.mxu0 0.0
  %186 = vmatprep.subr.mxu0 0.0
  %187 = vmatpush1.msra.mxu0 0.0
  %188 = vmatprep.subr.mxu0 0.0
  %189 = vmatpush1.msra.mxu0 0.0
  %190 = vmatprep.subr.mxu0 0.0
  %191 = vmatpush1.msra.mxu0 0.0
  %192 = vmatprep.subr.mxu0 0.0
  %193 = vmatpush1.msra.mxu0 0.0
  %194 = vmatprep.subr.mxu0 0.0
  %195 = vmatpush1.msra.mxu0 0.0
  %196 = vmatprep.subr.mxu0 0.0
  %197 = vmatpush1.msra.mxu0 0.0
  %198 = vmatprep.subr.mxu0 0.0
  %199 = vmatpush1.msra.mxu0 0.0
  %200 = vmatprep.mubr.f32.mxu0 0.0
  %201 = vmatmul.mubr.f32.gmra.mrb[0].mxu0 %v56
  %v202 = vpop.f32.mrb[0].mxu0
  %v203 = vadd.f32 %v52, %v202
  %v204 = vpop.f32.mrb[0].mxu0
  %205 = vmatprep.mubr.f32.mxu0 0.0
  %206 = vmatmul.mubr.f32.gmra.mrb[0].mxu0 %v59
  %v207 = vpop.f32.mrb[0].mxu0
  %v208 = vadd.f32 %v52, %v207
  %v209 = vpop.f32.mrb[0].mxu0
  %210 = vmatprep.mubr.f32.mxu0 0.0
  %211 = vmatmul.mubr.f32.gmra.mrb[0].mxu0 %v62
  %v212 = vpop.f32.mrb[0].mxu0
  %v213 = vadd.f32 %v52, %v212
  %v214 = vpop.f32.mrb[0].mxu0
  %215 = vmatprep.mubr.f32.mxu0 0.0
  %216 = vmatmul.mubr.f32.gmra.mrb[0].mxu0 %v65
  %v217 = vpop.f32.mrb[0].mxu0
  %v218 = vadd.f32 %v52, %v217
  %v219 = vpop.f32.mrb[0].mxu0
  %220 = vmatprep.mubr.f32.mxu0 0.0
  %221 = vmatmul.mubr.f32.gmra.mrb[0].mxu0 %v68
  %v222 = vpop.f32.mrb[0].mxu0
  %v223 = vadd.f32 %v52, %v222
  %v224 = vpop.f32.mrb[0].mxu0
  %225 = vmatprep.mubr.f32.mxu0 0.0
  %226 = vmatmul.mubr.f32.gmra.mrb[0].mxu0 %v71
  %v227 = vpop.f32.mrb[0].mxu0
  %v228 = vadd.f32 %v52, %v227
  %v229 = vpop.f32.mrb[0].mxu0
  %230 = vmatprep.mubr.f32.mxu0 0.0
  %231 = vmatmul.mubr.f32.gmra.mrb[0].mxu0 %v74
  %v232 = vpop.f32.mrb[0].mxu0
  %v233 = vadd.f32 %v52, %v232
  %v234 = vpop.f32.mrb[0].mxu0
  %235 = vmatprep.mubr.f32.mxu0 0.0
  %236 = vmatmul.mubr.f32.gmra.mrb[0].mxu0 %v77
  %v237 = vpop.f32.mrb[0].mxu0
  %v238 = vadd.f32 %v52, %v237
  %v239 = vpop.f32.mrb[0].mxu0
  %240 = vmatprep.mubr.f32.mxu0 0.0
  %241 = vmatmul.mubr.f32.gmra.mrb[0].mxu0 %v80
  %v242 = vpop.f32.mrb[0].mxu0
  %v243 = vadd.f32 %v52, %v242
  %v244 = vpop.f32.mrb[0].mxu0
  %245 = vmatprep.mubr.f32.mxu0 0.0
  %246 = vmatmul.mubr.f32.gmra.mrb[0].mxu0 %v83
  %v247 = vpop.f32.mrb[0].mxu0
  %v248 = vadd.f32 %v52, %v247
  %v249 = vpop.f32.mrb[0].mxu0
  %250 = vmatprep.mubr.f32.mxu0 0.0
  %251 = vmatmul.mubr.f32.gmra.mrb[0].mxu0 %v86
  %v252 = vpop.f32.mrb[0].mxu0
  %v253 = vadd.f32 %v52, %v252
  %v254 = vpop.f32.mrb[0].mxu0
  %255 = vmatprep.mubr.f32.mxu0 0.0
  %256 = vmatmul.mubr.f32.gmra.mrb[0].mxu0 %v89
  %v257 = vpop.f32.mrb[0].mxu0
  %v258 = vadd.f32 %v52, %v257
  %v259 = vpop.f32.mrb[0].mxu0
  %260 = vmatprep.mubr.f32.mxu0 0.0
  %261 = vmatmul.mubr.f32.gmra.mrb[0].mxu0 %v92
  %v262 = vpop.f32.mrb[0].mxu0
  %v263 = vadd.f32 %v52, %v262
  %v264 = vpop.f32.mrb[0].mxu0
  %265 = vmatprep.mubr.f32.mxu0 0.0
  %266 = vmatmul.mubr.f32.gmra.mrb[0].mxu0 %v95
  %v267 = vpop.f32.mrb[0].mxu0
  %v268 = vadd.f32 %v52, %v267
  %v269 = vpop.f32.mrb[0].mxu0
  %270 = vmatprep.mubr.f32.mxu0 0.0
  %271 = vmatmul.mubr.f32.gmra.mrb[0].mxu0 %v98
  %v272 = vpop.f32.mrb[0].mxu0
  %v273 = vadd.f32 %v52, %v272
  %v274 = vpop.f32.mrb[0].mxu0
  %275 = vmatprep.mubr.f32.mxu0 0.0
  %276 = vmatmul.mubr.f32.gmra.mrb[0].mxu0 %v101
  %v277 = vpop.f32.mrb[0].mxu0
  %v278 = vadd.f32 %v52, %v277
  %v279 = vpop.f32.mrb[0].mxu0
  %280 = vmatprep.mubr.f32.mxu0 0.0
  %281 = vmatmul.mubr.f32.gmra.mrb[0].mxu0 %v104
  %v282 = vpop.f32.mrb[0].mxu0
  %v283 = vadd.f32 %v52, %v282
  %v284 = vpop.f32.mrb[0].mxu0
  %285 = vmatprep.mubr.f32.mxu0 0.0
  %286 = vmatmul.mubr.f32.gmra.mrb[0].mxu0 %v107
  %v287 = vpop.f32.mrb[0].mxu0
  %v288 = vadd.f32 %v52, %v287
  %v289 = vpop.f32.mrb[0].mxu0
  %290 = vmatprep.mubr.f32.mxu0 0.0
  %291 = vmatmul.mubr.f32.gmra.mrb[0].mxu0 %v110
  %v292 = vpop.f32.mrb[0].mxu0
  %v293 = vadd.f32 %v52, %v292
  %v294 = vpop.f32.mrb[0].mxu0
  %295 = vmatprep.mubr.f32.mxu0 0.0
  %296 = vmatmul.mubr.f32.gmra.mrb[0].mxu0 %v113
  %v297 = vpop.f32.mrb[0].mxu0
  %v298 = vadd.f32 %v52, %v297
  %v299 = vpop.f32.mrb[0].mxu0
  %300 = vmatprep.mubr.f32.mxu0 0.0
  %301 = vmatmul.mubr.f32.gmra.mrb[0].mxu0 %v116
  %v302 = vpop.f32.mrb[0].mxu0
  %v303 = vadd.f32 %v52, %v302
  %v304 = vpop.f32.mrb[0].mxu0
  %305 = vmatprep.mubr.f32.mxu0 0.0
  %306 = vmatmul.mubr.f32.gmra.mrb[0].mxu0 %v119
  %v307 = vpop.f32.mrb[0].mxu0
  %v308 = vadd.f32 %v52, %v307
  %v309 = vpop.f32.mrb[0].mxu0
  %310 = vmatprep.mubr.f32.mxu0 0.0
  %311 = vmatmul.mubr.f32.gmra.mrb[0].mxu0 %v122
  %v312 = vpop.f32.mrb[0].mxu0
  %v313 = vadd.f32 %v52, %v312
  %v314 = vpop.f32.mrb[0].mxu0
  %315 = vmatprep.mubr.f32.mxu0 0.0
  %316 = vmatmul.mubr.f32.gmra.mrb[0].mxu0 %v125
  %v317 = vpop.f32.mrb[0].mxu0
  %v318 = vadd.f32 %v52, %v317
  %v319 = vpop.f32.mrb[0].mxu0
  %320 = vmatprep.mubr.f32.mxu0 0.0
  %321 = vmatmul.mubr.f32.gmra.mrb[0].mxu0 %v128
  %v322 = vpop.f32.mrb[0].mxu0
  %v323 = vadd.f32 %v52, %v322
  %v324 = vpop.f32.mrb[0].mxu0
  %325 = vmatprep.mubr.f32.mxu0 0.0
  %326 = vmatmul.mubr.f32.gmra.mrb[0].mxu0 %v131
  %v327 = vpop.f32.mrb[0].mxu0
  %v328 = vadd.f32 %v52, %v327
  %v329 = vpop.f32.mrb[0].mxu0
  %330 = vmatprep.mubr.f32.mxu0 0.0
  %331 = vmatmul.mubr.f32.gmra.mrb[0].mxu0 %v134
  %v332 = vpop.f32.mrb[0].mxu0
  %v333 = vadd.f32 %v52, %v332
  %v334 = vpop.f32.mrb[0].mxu0
  %335 = vdwg.mxu0
  %336 = vst.msk [vmem:[%s3] sm:$0xff] %vm54, %v203
  %337 = vst.msk [vmem:[%s3 + $0x8] sm:$0xff] %vm54, %v208
  %338 = vst.msk [vmem:[%s3 + $0x10] sm:$0xff] %vm54, %v213
  %339 = vst.msk [vmem:[%s3 + $0x18] sm:$0xff] %vm54, %v218
  %340 = vst.msk [vmem:[%s3 + $0x20] sm:$0xff] %vm54, %v223
  %341 = vst.msk [vmem:[%s3 + $0x28] sm:$0xff] %vm54, %v228
  %342 = vst.msk [vmem:[%s3 + $0x30] sm:$0xff] %vm54, %v233
  %343 = vst.msk [vmem:[%s3 + $0x38] sm:$0xff] %vm54, %v238
  %344 = vst.msk [vmem:[%s3 + $0x40] sm:$0xff] %vm54, %v243
  %345 = vst.msk [vmem:[%s3 + $0x48] sm:$0xff] %vm54, %v248
  %346 = vst.msk [vmem:[%s3 + $0x50] sm:$0xff] %vm54, %v253
  %347 = vst.msk [vmem:[%s3 + $0x58] sm:$0xff] %vm54, %v258
  %348 = vst.msk [vmem:[%s3 + $0x60] sm:$0xff] %vm54, %v263
  %349 = vst.msk [vmem:[%s3 + $0x68] sm:$0xff] %vm54, %v268
  %350 = vst.msk [vmem:[%s3 + $0x70] sm:$0xff] %vm54, %v273
  %351 = vst.msk [vmem:[%s3 + $0x78] sm:$0xff] %vm54, %v278
  %352 = vst.msk [vmem:[%s3 + $0x80] sm:$0xff] %vm54, %v283
  %353 = vst.msk [vmem:[%s3 + $0x88] sm:$0xff] %vm54, %v288
  %354 = vst.msk [vmem:[%s3 + $0x90] sm:$0xff] %vm54, %v293
  %355 = vst.msk [vmem:[%s3 + $0x98] sm:$0xff] %vm54, %v298
  %356 = vst.msk [vmem:[%s3 + $0xa0] sm:$0xff] %vm54, %v303
  %357 = vst.msk [vmem:[%s3 + $0xa8] sm:$0xff] %vm54, %v308
  %358 = vst.msk [vmem:[%s3 + $0xb0] sm:$0xff] %vm54, %v313
  %359 = vst.msk [vmem:[%s3 + $0xb8] sm:$0xff] %vm54, %v318
  %360 = vst.msk [vmem:[%s3 + $0xc0] sm:$0xff] %vm54, %v323
  %361 = vst.msk [vmem:[%s3 + $0xc8] sm:$0xff] %vm54, %v328
  %vm362 = vcmask 386048
  %363 = vst.msk [vmem:[%s3 + $0xd0] sm:$0x3] %vm362, %v333
  // Predicated region
  $region14: #{spex_forward.7} parent=0 // pred_check
    _
  $region15: #{spex_forward.7} parent=0 // pred_check_branch
    %365 = sbr.rel (0) target = $region17
  $region16: #{spex_forward.7} parent=0 // pred_region
    _
  $region17: #{spex_forward.7} parent=0 // pred_fallthru
    _
  // Predicated region
  $region18: #{spex_forward.7} parent=0 // pred_check
    _
  $region19: #{spex_forward.7} parent=0 // pred_check_branch
    %367 = sbr.rel (0) target = $region21
  $region20: #{spex_forward.7} parent=0 // pred_region
    _
  $region21: #{spex_forward.7} parent=0 // pred_fallthru
    _

// kernel: spex_forward.9
$region0: #{spex_forward.9}
  #allocation0 [shape = 'u32[]', space=smem, size = 0x4, offset = 0x4, fixed_abs, tag = 'smem constant byte address 0x4 - core index']
  #allocation1 [shape = 'u32[144,128]{1,0:T(1,128)}', space=vmem, size = 0x12000, scoped, tag = 'internal scratch']
  %s0 = inlined_call_operand.vmem [shape: f32[98,48], index: 0, kind: input, shape index: {}]
  %s1 = inlined_call_operand.vmem [shape: f32[1,48], index: 1, kind: input, shape index: {}]
  %s2 = inlined_call_operand.vmem [shape: f32[1,48], index: 2, kind: input, shape index: {}]
  %s3 = inlined_call_operand.vmem [shape: f32[48,32], index: 3, kind: input, shape index: {}]
  %s4 = inlined_call_operand.vmem [shape: f32[1,32], index: 4, kind: input, shape index: {}]
  %s5 = inlined_call_operand.vmem [shape: f32[98,32], index: 5, kind: output, shape index: {}]
  %s6 = sld [smem:[#allocation0]]
  $region30: #{spex_forward.9} parent=0
    _
  %s8 = ssub.s32 1, %s6
  %s9 = scalar_select 0, %s8, %s6
  // Predicated region
  $region2: #{spex_forward.9} parent=0 // pred_check
    _
  $region3: #{spex_forward.9} parent=0 // pred_check_branch
    %11 = sbr.rel (0) target = $region5
  $region4: #{spex_forward.9} parent=0 // pred_region
    _
  $region5: #{spex_forward.9} parent=0 // pred_fallthru
    _
  // Predicated region
  $region6: #{spex_forward.9} parent=0 // pred_check
    _
  $region7: #{spex_forward.9} parent=0 // pred_check_branch
    %13 = sbr.rel (0) target = $region9
  $region8: #{spex_forward.9} parent=0 // pred_region
    _
  $region9: #{spex_forward.9} parent=0 // pred_fallthru
    _
  // Predicated region
  $region10: #{spex_forward.9} parent=0 // pred_check
    _
  $region11: #{spex_forward.9} parent=0 // pred_check_branch
    %15 = sbr.rel (0) target = $region13
  $region12: #{spex_forward.9} parent=0 // pred_region
    _
  $region13: #{spex_forward.9} parent=0 // pred_fallthru
    _
  // Predicated region
  $region14: #{spex_forward.9} parent=0 // pred_check
    _
  $region15: #{spex_forward.9} parent=0 // pred_check_branch
    %17 = sbr.rel (0) target = $region17
  $region16: #{spex_forward.9} parent=0 // pred_region
    _
  $region17: #{spex_forward.9} parent=0 // pred_fallthru
    _
  // Predicated region
  $region18: #{spex_forward.9} parent=0 // pred_check
    _
  $region19: #{spex_forward.9} parent=0 // pred_check_branch
    %19 = sbr.rel (0) target = $region21
  $region20: #{spex_forward.9} parent=0 // pred_region
    _
  $region21: #{spex_forward.9} parent=0 // pred_fallthru
    _
  %v20 = vld [vmem:[%s0] sm:$0xff]
  %v21 = vld [vmem:[%s0 + $0x8] sm:$0xff]
  %v22 = vld [vmem:[%s0 + $0x10] sm:$0xff]
  %v23 = vld [vmem:[%s0 + $0x18] sm:$0xff]
  %v24 = vld [vmem:[%s0 + $0x20] sm:$0xff]
  %v25 = vld [vmem:[%s0 + $0x28] sm:$0xff]
  %v26 = vld [vmem:[%s0 + $0x30] sm:$0xff]
  %v27 = vld [vmem:[%s0 + $0x38] sm:$0xff]
  %v28 = vld [vmem:[%s0 + $0x40] sm:$0xff]
  %v29 = vld [vmem:[%s0 + $0x48] sm:$0xff]
  %v30 = vld [vmem:[%s0 + $0x50] sm:$0xff]
  %v31 = vld [vmem:[%s0 + $0x58] sm:$0xff]
  %v32 = vld [vmem:[%s0 + $0x60] sm:$0x3]
  %vm33 = vcmask 392192
  %v34 = vsel %vm33, %v20, 0.0
  %35 = vadd.xlane.f32.xlu0 %v34
  %v36 = vpop.xlane.xlu0 %35
  %v37 = vsel %vm33, %v21, 0.0
  %38 = vadd.xlane.f32.xlu0 %v37
  %v39 = vpop.xlane.xlu0 %38
  %v40 = vsel %vm33, %v22, 0.0
  %41 = vadd.xlane.f32.xlu0 %v40
  %v42 = vpop.xlane.xlu0 %41
  %v43 = vsel %vm33, %v23, 0.0
  %44 = vadd.xlane.f32.xlu0 %v43
  %v45 = vpop.xlane.xlu0 %44
  %v46 = vsel %vm33, %v24, 0.0
  %47 = vadd.xlane.f32.xlu0 %v46
  %v48 = vpop.xlane.xlu0 %47
  %v49 = vsel %vm33, %v25, 0.0
  %50 = vadd.xlane.f32.xlu0 %v49
  %v51 = vpop.xlane.xlu0 %50
  %v52 = vsel %vm33, %v26, 0.0
  %53 = vadd.xlane.f32.xlu0 %v52
  %v54 = vpop.xlane.xlu0 %53
  %v55 = vsel %vm33, %v27, 0.0
  %56 = vadd.xlane.f32.xlu0 %v55
  %v57 = vpop.xlane.xlu0 %56
  %v58 = vsel %vm33, %v28, 0.0
  %59 = vadd.xlane.f32.xlu0 %v58
  %v60 = vpop.xlane.xlu0 %59
  %v61 = vsel %vm33, %v29, 0.0
  %62 = vadd.xlane.f32.xlu0 %v61
  %v63 = vpop.xlane.xlu0 %62
  %v64 = vsel %vm33, %v30, 0.0
  %65 = vadd.xlane.f32.xlu0 %v64
  %v66 = vpop.xlane.xlu0 %65
  %v67 = vsel %vm33, %v31, 0.0
  %68 = vadd.xlane.f32.xlu0 %v67
  %v69 = vpop.xlane.xlu0 %68
  %vm70 = vcmask 386048
  %v71 = vsel %vm70, %v32, 0.0
  %72 = vadd.xlane.f32.xlu0 %v71
  %v73 = vpop.xlane.xlu0 %72
  %v74 = vrcp.pop 48.0
  %v75 = vmul.f32 %v36, %v74
  %v76 = vmul.f32 %v39, %v74
  %v77 = vmul.f32 %v42, %v74
  %v78 = vmul.f32 %v45, %v74
  %v79 = vmul.f32 %v48, %v74
  %v80 = vmul.f32 %v51, %v74
  %v81 = vmul.f32 %v54, %v74
  %v82 = vmul.f32 %v57, %v74
  %v83 = vmul.f32 %v60, %v74
  %v84 = vmul.f32 %v63, %v74
  %v85 = vmul.f32 %v66, %v74
  %v86 = vmul.f32 %v69, %v74
  %v87 = vmul.f32 %v73, %v74
  %v88 = vsub.f32 %v20, %v75
  %v89 = vsub.f32 %v21, %v76
  %v90 = vsub.f32 %v22, %v77
  %v91 = vsub.f32 %v23, %v78
  %v92 = vsub.f32 %v24, %v79
  %v93 = vsub.f32 %v25, %v80
  %v94 = vsub.f32 %v26, %v81
  %v95 = vsub.f32 %v27, %v82
  %v96 = vsub.f32 %v28, %v83
  %v97 = vsub.f32 %v29, %v84
  %v98 = vsub.f32 %v30, %v85
  %v99 = vsub.f32 %v31, %v86
  %v100 = vsub.f32 %v32, %v87
  %v101 = vmul.f32 %v88, %v88
  %v102 = vmul.f32 %v89, %v89
  %v103 = vmul.f32 %v90, %v90
  %v104 = vmul.f32 %v91, %v91
  %v105 = vmul.f32 %v92, %v92
  %v106 = vmul.f32 %v93, %v93
  %v107 = vmul.f32 %v94, %v94
  %v108 = vmul.f32 %v95, %v95
  %v109 = vmul.f32 %v96, %v96
  %v110 = vmul.f32 %v97, %v97
  %v111 = vmul.f32 %v98, %v98
  %v112 = vmul.f32 %v99, %v99
  %v113 = vmul.f32 %v100, %v100
  %v114 = vsel %vm33, %v101, 0.0
  %115 = vadd.xlane.f32.xlu0 %v114
  %v116 = vpop.xlane.xlu0 %115
  %v117 = vsel %vm33, %v102, 0.0
  %118 = vadd.xlane.f32.xlu0 %v117
  %v119 = vpop.xlane.xlu0 %118
  %v120 = vsel %vm33, %v103, 0.0
  %121 = vadd.xlane.f32.xlu0 %v120
  %v122 = vpop.xlane.xlu0 %121
  %v123 = vsel %vm33, %v104, 0.0
  %124 = vadd.xlane.f32.xlu0 %v123
  %v125 = vpop.xlane.xlu0 %124
  %v126 = vsel %vm33, %v105, 0.0
  %127 = vadd.xlane.f32.xlu0 %v126
  %v128 = vpop.xlane.xlu0 %127
  %v129 = vsel %vm33, %v106, 0.0
  %130 = vadd.xlane.f32.xlu0 %v129
  %v131 = vpop.xlane.xlu0 %130
  %v132 = vsel %vm33, %v107, 0.0
  %133 = vadd.xlane.f32.xlu0 %v132
  %v134 = vpop.xlane.xlu0 %133
  %v135 = vsel %vm33, %v108, 0.0
  %136 = vadd.xlane.f32.xlu0 %v135
  %v137 = vpop.xlane.xlu0 %136
  %v138 = vsel %vm33, %v109, 0.0
  %139 = vadd.xlane.f32.xlu0 %v138
  %v140 = vpop.xlane.xlu0 %139
  %v141 = vsel %vm33, %v110, 0.0
  %142 = vadd.xlane.f32.xlu0 %v141
  %v143 = vpop.xlane.xlu0 %142
  %v144 = vsel %vm33, %v111, 0.0
  %145 = vadd.xlane.f32.xlu0 %v144
  %v146 = vpop.xlane.xlu0 %145
  %v147 = vsel %vm33, %v112, 0.0
  %148 = vadd.xlane.f32.xlu0 %v147
  %v149 = vpop.xlane.xlu0 %148
  %v150 = vsel %vm70, %v113, 0.0
  %151 = vadd.xlane.f32.xlu0 %v150
  %v152 = vpop.xlane.xlu0 %151
  %v153 = vmul.f32 %v116, %v74
  %v154 = vmul.f32 %v119, %v74
  %v155 = vmul.f32 %v122, %v74
  %v156 = vmul.f32 %v125, %v74
  %v157 = vmul.f32 %v128, %v74
  %v158 = vmul.f32 %v131, %v74
  %v159 = vmul.f32 %v134, %v74
  %v160 = vmul.f32 %v137, %v74
  %v161 = vmul.f32 %v140, %v74
  %v162 = vmul.f32 %v143, %v74
  %v163 = vmul.f32 %v146, %v74
  %v164 = vmul.f32 %v149, %v74
  %v165 = vmul.f32 %v152, %v74
  %v166 = vadd.f32 %v153, 1e-05
  %v167 = vadd.f32 %v154, 1e-05
  %v168 = vadd.f32 %v155, 1e-05
  %v169 = vadd.f32 %v156, 1e-05
  %v170 = vadd.f32 %v157, 1e-05
  %v171 = vadd.f32 %v158, 1e-05
  %v172 = vadd.f32 %v159, 1e-05
  %v173 = vadd.f32 %v160, 1e-05
  %v174 = vadd.f32 %v161, 1e-05
  %v175 = vadd.f32 %v162, 1e-05
  %v176 = vadd.f32 %v163, 1e-05
  %v177 = vadd.f32 %v164, 1e-05
  %v178 = vadd.f32 %v165, 1e-05
  %v179 = vrsqrt.pop %v166
  %v180 = vrsqrt.pop %v167
  %v181 = vrsqrt.pop %v168
  %v182 = vrsqrt.pop %v169
  %v183 = vrsqrt.pop %v170
  %v184 = vrsqrt.pop %v171
  %v185 = vrsqrt.pop %v172
  %v186 = vrsqrt.pop %v173
  %v187 = vrsqrt.pop %v174
  %v188 = vrsqrt.pop %v175
  %v189 = vrsqrt.pop %v176
  %v190 = vrsqrt.pop %v177
  %v191 = vrsqrt.pop %v178
  %v192 = vmul.f32 %v88, %v179
  %v193 = vmul.f32 %v89, %v180
  %v194 = vmul.f32 %v90, %v181
  %v195 = vmul.f32 %v91, %v182
  %v196 = vmul.f32 %v92, %v183
  %v197 = vmul.f32 %v93, %v184
  %v198 = vmul.f32 %v94, %v185
  %v199 = vmul.f32 %v95, %v186
  %v200 = vmul.f32 %v96, %v187
  %v201 = vmul.f32 %v97, %v188
  %v202 = vmul.f32 %v98, %v189
  %v203 = vmul.f32 %v99, %v190
  %v204 = vmul.f32 %v100, %v191
  %v205 = vld [vmem:[%s1] sm:$0x1]
  %v207 = vlaneseq
  %v208 = vshrl.u32 %v207, 7
  %v209 = vsub.s32 0, %v208
  %v210 = vrot.slane %v205, %v209
  %v212 = vmul.f32 %v192, %v210
  %v213 = vmul.f32 %v193, %v210
  %v214 = vmul.f32 %v194, %v210
  %v215 = vmul.f32 %v195, %v210
  %v216 = vmul.f32 %v196, %v210
  %v217 = vmul.f32 %v197, %v210
  %v218 = vmul.f32 %v198, %v210
  %v219 = vmul.f32 %v199, %v210
  %v220 = vmul.f32 %v200, %v210
  %v221 = vmul.f32 %v201, %v210
  %v222 = vmul.f32 %v202, %v210
  %v223 = vmul.f32 %v203, %v210
  %v224 = vmul.f32 %v204, %v210
  %v225 = vld [vmem:[%s2] sm:$0x1]
  %v227 = vlaneseq
  %v228 = vshrl.u32 %v227, 7
  %v229 = vsub.s32 0, %v228
  %v230 = vrot.slane %v225, %v229
  %v232 = vadd.f32 %v212, %v230
  %v233 = vadd.f32 %v213, %v230
  %v234 = vadd.f32 %v214, %v230
  %v235 = vadd.f32 %v215, %v230
  %v236 = vadd.f32 %v216, %v230
  %v237 = vadd.f32 %v217, %v230
  %v238 = vadd.f32 %v218, %v230
  %v239 = vadd.f32 %v219, %v230
  %v240 = vadd.f32 %v220, %v230
  %v241 = vadd.f32 %v221, %v230
  %v242 = vadd.f32 %v222, %v230
  %v243 = vadd.f32 %v223, %v230
  %v244 = vadd.f32 %v224, %v230
  %v245 = vld [vmem:[%s3] sm:$0xff]
  %v246 = vld [vmem:[%s3 + $0x8] sm:$0xff]
  %v247 = vld [vmem:[%s3 + $0x10] sm:$0xff]
  %v248 = vld [vmem:[%s3 + $0x18] sm:$0xff]
  %v249 = vld [vmem:[%s3 + $0x20] sm:$0xff]
  %v250 = vld [vmem:[%s3 + $0x28] sm:$0xff]
  %v251 = vld [vmem:[%s4] sm:$0x1]
  %v253 = vlaneseq
  %v254 = vshrl.u32 %v253, 7
  %v255 = vsub.s32 0, %v254
  %v256 = vrot.slane %v251, %v255
  %v259 = vsel %vm33, %v232, 0
  %v262 = vsel %vm33, %v233, 0
  %v265 = vsel %vm33, %v234, 0
  %v268 = vsel %vm33, %v235, 0
  %v271 = vsel %vm33, %v236, 0
  %v274 = vsel %vm33, %v237, 0
  %v277 = vsel %vm33, %v238, 0
  %v280 = vsel %vm33, %v239, 0
  %v283 = vsel %vm33, %v240, 0
  %v286 = vsel %vm33, %v241, 0
  %v289 = vsel %vm33, %v242, 0
  %v292 = vsel %vm33, %v243, 0
  %v295 = vsel %vm33, %v244, 0
  %297 = vmatprep.subr.mxu0 0.0
  %298 = vmatpush1.msra.mxu0 %v245
  %299 = vmatprep.subr.mxu0 0.0
  %300 = vmatpush1.msra.mxu0 %v246
  %301 = vmatprep.subr.mxu0 0.0
  %302 = vmatpush1.msra.mxu0 %v247
  %303 = vmatprep.subr.mxu0 0.0
  %304 = vmatpush1.msra.mxu0 %v248
  %305 = vmatprep.subr.mxu0 0.0
  %306 = vmatpush1.msra.mxu0 %v249
  %307 = vmatprep.subr.mxu0 0.0
  %308 = vmatpush1.msra.mxu0 %v250
  %309 = vmatprep.subr.mxu0 0.0
  %310 = vmatpush1.msra.mxu0 0.0
  %311 = vmatprep.subr.mxu0 0.0
  %312 = vmatpush1.msra.mxu0 0.0
  %313 = vmatprep.subr.mxu0 0.0
  %314 = vmatpush1.msra.mxu0 0.0
  %315 = vmatprep.subr.mxu0 0.0
  %316 = vmatpush1.msra.mxu0 0.0
  %317 = vmatprep.subr.mxu0 0.0
  %318 = vmatpush1.msra.mxu0 0.0
  %319 = vmatprep.subr.mxu0 0.0
  %320 = vmatpush1.msra.mxu0 0.0
  %321 = vmatprep.subr.mxu0 0.0
  %322 = vmatpush1.msra.mxu0 0.0
  %323 = vmatprep.subr.mxu0 0.0
  %324 = vmatpush1.msra.mxu0 0.0
  %325 = vmatprep.subr.mxu0 0.0
  %326 = vmatpush1.msra.mxu0 0.0
  %327 = vmatprep.subr.mxu0 0.0
  %328 = vmatpush1.msra.mxu0 0.0
  %329 = vmatprep.subr.mxu0 0.0
  %330 = vmatpush1.msra.mxu0 0.0
  %331 = vmatprep.subr.mxu0 0.0
  %332 = vmatpush1.msra.mxu0 0.0
  %333 = vmatprep.subr.mxu0 0.0
  %334 = vmatpush1.msra.mxu0 0.0
  %335 = vmatprep.subr.mxu0 0.0
  %336 = vmatpush1.msra.mxu0 0.0
  %337 = vmatprep.subr.mxu0 0.0
  %338 = vmatpush1.msra.mxu0 0.0
  %339 = vmatprep.subr.mxu0 0.0
  %340 = vmatpush1.msra.mxu0 0.0
  %341 = vmatprep.subr.mxu0 0.0
  %342 = vmatpush1.msra.mxu0 0.0
  %343 = vmatprep.subr.mxu0 0.0
  %344 = vmatpush1.msra.mxu0 0.0
  %345 = vmatprep.subr.mxu0 0.0
  %346 = vmatpush1.msra.mxu0 0.0
  %347 = vmatprep.subr.mxu0 0.0
  %348 = vmatpush1.msra.mxu0 0.0
  %349 = vmatprep.subr.mxu0 0.0
  %350 = vmatpush1.msra.mxu0 0.0
  %351 = vmatprep.subr.mxu0 0.0
  %352 = vmatpush1.msra.mxu0 0.0
  %353 = vmatprep.subr.mxu0 0.0
  %354 = vmatpush1.msra.mxu0 0.0
  %355 = vmatprep.subr.mxu0 0.0
  %356 = vmatpush1.msra.mxu0 0.0
  %357 = vmatprep.subr.mxu0 0.0
  %358 = vmatpush1.msra.mxu0 0.0
  %359 = vmatprep.subr.mxu0 0.0
  %360 = vmatpush1.msra.mxu0 0.0
  %361 = vmatprep.mubr.f32.mxu0 0.0
  %362 = vmatmul.mubr.f32.gmra.mrb[0].mxu0 %v259
  %v363 = vpop.f32.mrb[0].mxu0
  %v364 = vadd.f32 %v256, %v363
  %v365 = vpop.f32.mrb[0].mxu0
  %366 = vmatprep.mubr.f32.mxu0 0.0
  %367 = vmatmul.mubr.f32.gmra.mrb[0].mxu0 %v262
  %v368 = vpop.f32.mrb[0].mxu0
  %v369 = vadd.f32 %v256, %v368
  %v370 = vpop.f32.mrb[0].mxu0
  %371 = vmatprep.mubr.f32.mxu0 0.0
  %372 = vmatmul.mubr.f32.gmra.mrb[0].mxu0 %v265
  %v373 = vpop.f32.mrb[0].mxu0
  %v374 = vadd.f32 %v256, %v373
  %v375 = vpop.f32.mrb[0].mxu0
  %376 = vmatprep.mubr.f32.mxu0 0.0
  %377 = vmatmul.mubr.f32.gmra.mrb[0].mxu0 %v268
  %v378 = vpop.f32.mrb[0].mxu0
  %v379 = vadd.f32 %v256, %v378
  %v380 = vpop.f32.mrb[0].mxu0
  %381 = vmatprep.mubr.f32.mxu0 0.0
  %382 = vmatmul.mubr.f32.gmra.mrb[0].mxu0 %v271
  %v383 = vpop.f32.mrb[0].mxu0
  %v384 = vadd.f32 %v256, %v383
  %v385 = vpop.f32.mrb[0].mxu0
  %386 = vmatprep.mubr.f32.mxu0 0.0
  %387 = vmatmul.mubr.f32.gmra.mrb[0].mxu0 %v274
  %v388 = vpop.f32.mrb[0].mxu0
  %v389 = vadd.f32 %v256, %v388
  %v390 = vpop.f32.mrb[0].mxu0
  %391 = vmatprep.mubr.f32.mxu0 0.0
  %392 = vmatmul.mubr.f32.gmra.mrb[0].mxu0 %v277
  %v393 = vpop.f32.mrb[0].mxu0
  %v394 = vadd.f32 %v256, %v393
  %v395 = vpop.f32.mrb[0].mxu0
  %396 = vmatprep.mubr.f32.mxu0 0.0
  %397 = vmatmul.mubr.f32.gmra.mrb[0].mxu0 %v280
  %v398 = vpop.f32.mrb[0].mxu0
  %v399 = vadd.f32 %v256, %v398
  %v400 = vpop.f32.mrb[0].mxu0
  %401 = vmatprep.mubr.f32.mxu0 0.0
  %402 = vmatmul.mubr.f32.gmra.mrb[0].mxu0 %v283
  %v403 = vpop.f32.mrb[0].mxu0
  %v404 = vadd.f32 %v256, %v403
  %v405 = vpop.f32.mrb[0].mxu0
  %406 = vmatprep.mubr.f32.mxu0 0.0
  %407 = vmatmul.mubr.f32.gmra.mrb[0].mxu0 %v286
  %v408 = vpop.f32.mrb[0].mxu0
  %v409 = vadd.f32 %v256, %v408
  %v410 = vpop.f32.mrb[0].mxu0
  %411 = vmatprep.mubr.f32.mxu0 0.0
  %412 = vmatmul.mubr.f32.gmra.mrb[0].mxu0 %v289
  %v413 = vpop.f32.mrb[0].mxu0
  %v414 = vadd.f32 %v256, %v413
  %v415 = vpop.f32.mrb[0].mxu0
  %416 = vmatprep.mubr.f32.mxu0 0.0
  %417 = vmatmul.mubr.f32.gmra.mrb[0].mxu0 %v292
  %v418 = vpop.f32.mrb[0].mxu0
  %v419 = vadd.f32 %v256, %v418
  %v420 = vpop.f32.mrb[0].mxu0
  %421 = vmatprep.mubr.f32.mxu0 0.0
  %422 = vmatmul.mubr.f32.gmra.mrb[0].mxu0 %v295
  %v423 = vpop.f32.mrb[0].mxu0
  %v424 = vadd.f32 %v256, %v423
  %v425 = vpop.f32.mrb[0].mxu0
  %426 = vdwg.mxu0
  %vm427 = vcmask 261120
  %428 = vst.msk [vmem:[%s5] sm:$0xff] %vm427, %v364
  %429 = vst.msk [vmem:[%s5 + $0x8] sm:$0xff] %vm427, %v369
  %430 = vst.msk [vmem:[%s5 + $0x10] sm:$0xff] %vm427, %v374
  %431 = vst.msk [vmem:[%s5 + $0x18] sm:$0xff] %vm427, %v379
  %432 = vst.msk [vmem:[%s5 + $0x20] sm:$0xff] %vm427, %v384
  %433 = vst.msk [vmem:[%s5 + $0x28] sm:$0xff] %vm427, %v389
  %434 = vst.msk [vmem:[%s5 + $0x30] sm:$0xff] %vm427, %v394
  %435 = vst.msk [vmem:[%s5 + $0x38] sm:$0xff] %vm427, %v399
  %436 = vst.msk [vmem:[%s5 + $0x40] sm:$0xff] %vm427, %v404
  %437 = vst.msk [vmem:[%s5 + $0x48] sm:$0xff] %vm427, %v409
  %438 = vst.msk [vmem:[%s5 + $0x50] sm:$0xff] %vm427, %v414
  %439 = vst.msk [vmem:[%s5 + $0x58] sm:$0xff] %vm427, %v419
  %vm440 = vcmask 254976
  %441 = vst.msk [vmem:[%s5 + $0x60] sm:$0x3] %vm440, %v424
  // Predicated region
  $region22: #{spex_forward.9} parent=0 // pred_check
    _
  $region23: #{spex_forward.9} parent=0 // pred_check_branch
    %443 = sbr.rel (0) target = $region25
  $region24: #{spex_forward.9} parent=0 // pred_region
    _
  $region25: #{spex_forward.9} parent=0 // pred_fallthru
    _
  // Predicated region
  $region26: #{spex_forward.9} parent=0 // pred_check
    _
  $region27: #{spex_forward.9} parent=0 // pred_check_branch
    %445 = sbr.rel (0) target = $region29
  $region28: #{spex_forward.9} parent=0 // pred_region
    _
  $region29: #{spex_forward.9} parent=0 // pred_fallthru
    _

// kernel: spex_forward.10
$region0: #{spex_forward.10}
  #allocation0 [shape = 'u32[]', space=smem, size = 0x4, offset = 0x4, fixed_abs, tag = 'smem constant byte address 0x4 - core index']
  #allocation1 [shape = 'u32[144,128]{1,0:T(1,128)}', space=vmem, size = 0x12000, scoped, tag = 'internal scratch']
  %s0 = inlined_call_operand.vmem [shape: f32[98,32], index: 0, kind: input, shape index: {}]
  %s1 = inlined_call_operand.vmem [shape: f32[32,32], index: 1, kind: input, shape index: {}]
  %s2 = inlined_call_operand.vmem [shape: f32[32,32], index: 2, kind: input, shape index: {}]
  %s3 = inlined_call_operand.vmem [shape: f32[1,2], index: 3, kind: input, shape index: {}]
  %s4 = inlined_call_operand.vmem [shape: f32[1,32], index: 4, kind: input, shape index: {}]
  %s5 = inlined_call_operand.vmem [shape: f32[1,32], index: 5, kind: input, shape index: {}]
  %s6 = inlined_call_operand.vmem [shape: f32[1,32], index: 6, kind: input, shape index: {}]
  %s7 = inlined_call_operand.vmem [shape: f32[1,32], index: 7, kind: input, shape index: {}]
  %s8 = inlined_call_operand.vmem [shape: f32[98,32], index: 8, kind: output, shape index: {}]
  %s9 = sld [smem:[#allocation0]]
  $region42: #{spex_forward.10} parent=0
    _
  %s11 = ssub.s32 1, %s9
  %s12 = scalar_select 0, %s11, %s9
  // Predicated region
  $region2: #{spex_forward.10} parent=0 // pred_check
    _
  $region3: #{spex_forward.10} parent=0 // pred_check_branch
    %14 = sbr.rel (0) target = $region5
  $region4: #{spex_forward.10} parent=0 // pred_region
    _
  $region5: #{spex_forward.10} parent=0 // pred_fallthru
    _
  // Predicated region
  $region6: #{spex_forward.10} parent=0 // pred_check
    _
  $region7: #{spex_forward.10} parent=0 // pred_check_branch
    %16 = sbr.rel (0) target = $region9
  $region8: #{spex_forward.10} parent=0 // pred_region
    _
  $region9: #{spex_forward.10} parent=0 // pred_fallthru
    _
  // Predicated region
  $region10: #{spex_forward.10} parent=0 // pred_check
    _
  $region11: #{spex_forward.10} parent=0 // pred_check_branch
    %18 = sbr.rel (0) target = $region13
  $region12: #{spex_forward.10} parent=0 // pred_region
    _
  $region13: #{spex_forward.10} parent=0 // pred_fallthru
    _
  // Predicated region
  $region14: #{spex_forward.10} parent=0 // pred_check
    _
  $region15: #{spex_forward.10} parent=0 // pred_check_branch
    %20 = sbr.rel (0) target = $region17
  $region16: #{spex_forward.10} parent=0 // pred_region
    _
  $region17: #{spex_forward.10} parent=0 // pred_fallthru
    _
  // Predicated region
  $region18: #{spex_forward.10} parent=0 // pred_check
    _
  $region19: #{spex_forward.10} parent=0 // pred_check_branch
    %22 = sbr.rel (0) target = $region21
  $region20: #{spex_forward.10} parent=0 // pred_region
    _
  $region21: #{spex_forward.10} parent=0 // pred_fallthru
    _
  // Predicated region
  $region22: #{spex_forward.10} parent=0 // pred_check
    _
  $region23: #{spex_forward.10} parent=0 // pred_check_branch
    %24 = sbr.rel (0) target = $region25
  $region24: #{spex_forward.10} parent=0 // pred_region
    _
  $region25: #{spex_forward.10} parent=0 // pred_fallthru
    _
  // Predicated region
  $region26: #{spex_forward.10} parent=0 // pred_check
    _
  $region27: #{spex_forward.10} parent=0 // pred_check_branch
    %26 = sbr.rel (0) target = $region29
  $region28: #{spex_forward.10} parent=0 // pred_region
    _
  $region29: #{spex_forward.10} parent=0 // pred_fallthru
    _
  // Predicated region
  $region30: #{spex_forward.10} parent=0 // pred_check
    _
  $region31: #{spex_forward.10} parent=0 // pred_check_branch
    %28 = sbr.rel (0) target = $region33
  $region32: #{spex_forward.10} parent=0 // pred_region
    _
  $region33: #{spex_forward.10} parent=0 // pred_fallthru
    _
  %v29 = vld [vmem:[%s0] sm:$0xff]
  %v30 = vld [vmem:[%s0 + $0x8] sm:$0xff]
  %v31 = vld [vmem:[%s0 + $0x10] sm:$0xff]
  %v32 = vld [vmem:[%s0 + $0x18] sm:$0xff]
  %v33 = vld [vmem:[%s0 + $0x20] sm:$0xff]
  %v34 = vld [vmem:[%s0 + $0x28] sm:$0xff]
  %v35 = vld [vmem:[%s0 + $0x30] sm:$0xff]
  %v36 = vld [vmem:[%s0 + $0x38] sm:$0xff]
  %v37 = vld [vmem:[%s0 + $0x40] sm:$0xff]
  %v38 = vld [vmem:[%s0 + $0x48] sm:$0xff]
  %v39 = vld [vmem:[%s0 + $0x50] sm:$0xff]
  %v40 = vld [vmem:[%s0 + $0x58] sm:$0xff]
  %v41 = vld [vmem:[%s0 + $0x60] sm:$0x3]
  %v42 = vld [vmem:[%s3] sm:$0x1]
  %v43 = vld [vmem:[%s1] sm:$0xff]
  %v44 = vld [vmem:[%s1 + $0x8] sm:$0xff]
  %v45 = vld [vmem:[%s1 + $0x10] sm:$0xff]
  %v46 = vld [vmem:[%s1 + $0x18] sm:$0xff]
  %vm47 = vcmask 261120
  %v49 = vsel %vm47, %v29, 0
  %v52 = vsel %vm47, %v30, 0
  %v55 = vsel %vm47, %v31, 0
  %v58 = vsel %vm47, %v32, 0
  %v61 = vsel %vm47, %v33, 0
  %v64 = vsel %vm47, %v34, 0
  %v67 = vsel %vm47, %v35, 0
  %v70 = vsel %vm47, %v36, 0
  %v73 = vsel %vm47, %v37, 0
  %v76 = vsel %vm47, %v38, 0
  %v79 = vsel %vm47, %v39, 0
  %v82 = vsel %vm47, %v40, 0
  %v85 = vsel %vm47, %v41, 0
  %87 = vmatprep.subr.mxu0 0.0
  %88 = vmatpush1.msra.mxu0 %v43
  %89 = vmatprep.subr.mxu0 0.0
  %90 = vmatpush1.msra.mxu0 %v44
  %91 = vmatprep.subr.mxu0 0.0
  %92 = vmatpush1.msra.mxu0 %v45
  %93 = vmatprep.subr.mxu0 0.0
  %94 = vmatpush1.msra.mxu0 %v46
  %95 = vmatprep.subr.mxu0 0.0
  %96 = vmatpush1.msra.mxu0 0.0
  %97 = vmatprep.subr.mxu0 0.0
  %98 = vmatpush1.msra.mxu0 0.0
  %99 = vmatprep.subr.mxu0 0.0
  %100 = vmatpush1.msra.mxu0 0.0
  %101 = vmatprep.subr.mxu0 0.0
  %102 = vmatpush1.msra.mxu0 0.0
  %103 = vmatprep.subr.mxu0 0.0
  %104 = vmatpush1.msra.mxu0 0.0
  %105 = vmatprep.subr.mxu0 0.0
  %106 = vmatpush1.msra.mxu0 0.0
  %107 = vmatprep.subr.mxu0 0.0
  %108 = vmatpush1.msra.mxu0 0.0
  %109 = vmatprep.subr.mxu0 0.0
  %110 = vmatpush1.msra.mxu0 0.0
  %111 = vmatprep.subr.mxu0 0.0
  %112 = vmatpush1.msra.mxu0 0.0
  %113 = vmatprep.subr.mxu0 0.0
  %114 = vmatpush1.msra.mxu0 0.0
  %115 = vmatprep.subr.mxu0 0.0
  %116 = vmatpush1.msra.mxu0 0.0
  %117 = vmatprep.subr.mxu0 0.0
  %118 = vmatpush1.msra.mxu0 0.0
  %119 = vmatprep.subr.mxu0 0.0
  %120 = vmatpush1.msra.mxu0 0.0
  %121 = vmatprep.subr.mxu0 0.0
  %122 = vmatpush1.msra.mxu0 0.0
  %123 = vmatprep.subr.mxu0 0.0
  %124 = vmatpush1.msra.mxu0 0.0
  %125 = vmatprep.subr.mxu0 0.0
  %126 = vmatpush1.msra.mxu0 0.0
  %127 = vmatprep.subr.mxu0 0.0
  %128 = vmatpush1.msra.mxu0 0.0
  %129 = vmatprep.subr.mxu0 0.0
  %130 = vmatpush1.msra.mxu0 0.0
  %131 = vmatprep.subr.mxu0 0.0
  %132 = vmatpush1.msra.mxu0 0.0
  %133 = vmatprep.subr.mxu0 0.0
  %134 = vmatpush1.msra.mxu0 0.0
  %135 = vmatprep.subr.mxu0 0.0
  %136 = vmatpush1.msra.mxu0 0.0
  %137 = vmatprep.subr.mxu0 0.0
  %138 = vmatpush1.msra.mxu0 0.0
  %139 = vmatprep.subr.mxu0 0.0
  %140 = vmatpush1.msra.mxu0 0.0
  %141 = vmatprep.subr.mxu0 0.0
  %142 = vmatpush1.msra.mxu0 0.0
  %143 = vmatprep.subr.mxu0 0.0
  %144 = vmatpush1.msra.mxu0 0.0
  %145 = vmatprep.subr.mxu0 0.0
  %146 = vmatpush1.msra.mxu0 0.0
  %147 = vmatprep.subr.mxu0 0.0
  %148 = vmatpush1.msra.mxu0 0.0
  %149 = vmatprep.subr.mxu0 0.0
  %150 = vmatpush1.msra.mxu0 0.0
  %151 = vmatprep.mubr.f32.mxu0 0.0
  %152 = vmatmul.mubr.f32.gmra.mrb[0].mxu0 %v49
  %v153 = vpop.f32.mrb[0].mxu0
  %v154 = vadd.f32 0.0, %v153
  %v155 = vpop.f32.mrb[0].mxu0
  %156 = vmatprep.mubr.f32.mxu0 0.0
  %157 = vmatmul.mubr.f32.gmra.mrb[0].mxu0 %v52
  %v158 = vpop.f32.mrb[0].mxu0
  %v159 = vadd.f32 0.0, %v158
  %v160 = vpop.f32.mrb[0].mxu0
  %161 = vmatprep.mubr.f32.mxu0 0.0
  %162 = vmatmul.mubr.f32.gmra.mrb[0].mxu0 %v55
  %v163 = vpop.f32.mrb[0].mxu0
  %v164 = vadd.f32 0.0, %v163
  %v165 = vpop.f32.mrb[0].mxu0
  %166 = vmatprep.mubr.f32.mxu0 0.0
  %167 = vmatmul.mubr.f32.gmra.mrb[0].mxu0 %v58
  %v168 = vpop.f32.mrb[0].mxu0
  %v169 = vadd.f32 0.0, %v168
  %v170 = vpop.f32.mrb[0].mxu0
  %171 = vmatprep.mubr.f32.mxu0 0.0
  %172 = vmatmul.mubr.f32.gmra.mrb[0].mxu0 %v61
  %v173 = vpop.f32.mrb[0].mxu0
  %v174 = vadd.f32 0.0, %v173
  %v175 = vpop.f32.mrb[0].mxu0
  %176 = vmatprep.mubr.f32.mxu0 0.0
  %177 = vmatmul.mubr.f32.gmra.mrb[0].mxu0 %v64
  %v178 = vpop.f32.mrb[0].mxu0
  %v179 = vadd.f32 0.0, %v178
  %v180 = vpop.f32.mrb[0].mxu0
  %181 = vmatprep.mubr.f32.mxu0 0.0
  %182 = vmatmul.mubr.f32.gmra.mrb[0].mxu0 %v67
  %v183 = vpop.f32.mrb[0].mxu0
  %v184 = vadd.f32 0.0, %v183
  %v185 = vpop.f32.mrb[0].mxu0
  %186 = vmatprep.mubr.f32.mxu0 0.0
  %187 = vmatmul.mubr.f32.gmra.mrb[0].mxu0 %v70
  %v188 = vpop.f32.mrb[0].mxu0
  %v189 = vadd.f32 0.0, %v188
  %v190 = vpop.f32.mrb[0].mxu0
  %191 = vmatprep.mubr.f32.mxu0 0.0
  %192 = vmatmul.mubr.f32.gmra.mrb[0].mxu0 %v73
  %v193 = vpop.f32.mrb[0].mxu0
  %v194 = vadd.f32 0.0, %v193
  %v195 = vpop.f32.mrb[0].mxu0
  %196 = vmatprep.mubr.f32.mxu0 0.0
  %197 = vmatmul.mubr.f32.gmra.mrb[0].mxu0 %v76
  %v198 = vpop.f32.mrb[0].mxu0
  %v199 = vadd.f32 0.0, %v198
  %v200 = vpop.f32.mrb[0].mxu0
  %201 = vmatprep.mubr.f32.mxu0 0.0
  %202 = vmatmul.mubr.f32.gmra.mrb[0].mxu0 %v79
  %v203 = vpop.f32.mrb[0].mxu0
  %v204 = vadd.f32 0.0, %v203
  %v205 = vpop.f32.mrb[0].mxu0
  %206 = vmatprep.mubr.f32.mxu0 0.0
  %207 = vmatmul.mubr.f32.gmra.mrb[0].mxu0 %v82
  %v208 = vpop.f32.mrb[0].mxu0
  %v209 = vadd.f32 0.0, %v208
  %v210 = vpop.f32.mrb[0].mxu0
  %211 = vmatprep.mubr.f32.mxu0 0.0
  %212 = vmatmul.mubr.f32.gmra.mrb[0].mxu0 %v85
  %v213 = vpop.f32.mrb[0].mxu0
  %v214 = vadd.f32 0.0, %v213
  %v215 = vpop.f32.mrb[0].mxu0
  %216 = vdwg.mxu0
  %vm217 = vcmp.gt.f32.partialorder %v154, 0.0
  %vm218 = vcmp.gt.f32.partialorder %v159, 0.0
  %vm219 = vcmp.gt.f32.partialorder %v164, 0.0
  %vm220 = vcmp.gt.f32.partialorder %v169, 0.0
  %vm221 = vcmp.gt.f32.partialorder %v174, 0.0
  %vm222 = vcmp.gt.f32.partialorder %v179, 0.0
  %vm223 = vcmp.gt.f32.partialorder %v184, 0.0
  %vm224 = vcmp.gt.f32.partialorder %v189, 0.0
  %vm225 = vcmp.gt.f32.partialorder %v194, 0.0
  %vm226 = vcmp.gt.f32.partialorder %v199, 0.0
  %vm227 = vcmp.gt.f32.partialorder %v204, 0.0
  %vm228 = vcmp.gt.f32.partialorder %v209, 0.0
  %vm229 = vcmp.gt.f32.partialorder %v214, 0.0
  %v231 = vlaneseq
  %v232 = vshrl.u32 %v231, 7
  %v233 = vsub.s32 0, %v232
  %v234 = vrot.slane %v42, %v233
  %235 = vset.pattern.permute.xlu0 0
  %236 = vperm.xlu0 %235, %v234
  %v237 = vpop.permute.xlu0 %236
  %v239 = vmul.f32 %v237, %v154
  %v240 = vmul.f32 %v237, %v159
  %v241 = vmul.f32 %v237, %v164
  %v242 = vmul.f32 %v237, %v169
  %v243 = vmul.f32 %v237, %v174
  %v244 = vmul.f32 %v237, %v179
  %v245 = vmul.f32 %v237, %v184
  %v246 = vmul.f32 %v237, %v189
  %v247 = vmul.f32 %v237, %v194
  %v248 = vmul.f32 %v237, %v199
  %v249 = vmul.f32 %v237, %v204
  %v250 = vmul.f32 %v237, %v209
  %v251 = vmul.f32 %v237, %v214
  %v252 = vsel %vm217, %v154, %v239
  %v253 = vsel %vm218, %v159, %v240
  %v254 = vsel %vm219, %v164, %v241
  %v255 = vsel %vm220, %v169, %v242
  %v256 = vsel %vm221, %v174, %v243
  %v257 = vsel %vm222, %v179, %v244
  %v258 = vsel %vm223, %v184, %v245
  %v259 = vsel %vm224, %v189, %v246
  %v260 = vsel %vm225, %v194, %v247
  %v261 = vsel %vm226, %v199, %v248
  %v262 = vsel %vm227, %v204, %v249
  %v263 = vsel %vm228, %v209, %v250
  %v264 = vsel %vm229, %v214, %v251
  %v265 = vsel %vm47, %v252, 0.0
  %v266 = vsel %vm47, %v253, 0.0
  %v267 = vadd.f32 %v265, %v266
  %v268 = vsel %vm47, %v254, 0.0
  %v269 = vadd.f32 %v267, %v268
  %v270 = vsel %vm47, %v255, 0.0
  %v271 = vadd.f32 %v269, %v270
  %v272 = vsel %vm47, %v256, 0.0
  %v273 = vadd.f32 %v271, %v272
  %v274 = vsel %vm47, %v257, 0.0
  %v275 = vadd.f32 %v273, %v274
  %v276 = vsel %vm47, %v258, 0.0
  %v277 = vadd.f32 %v275, %v276
  %v278 = vsel %vm47, %v259, 0.0
  %v279 = vadd.f32 %v277, %v278
  %v280 = vsel %vm47, %v260, 0.0
  %v281 = vadd.f32 %v279, %v280
  %v282 = vsel %vm47, %v261, 0.0
  %v283 = vadd.f32 %v281, %v282
  %v284 = vsel %vm47, %v262, 0.0
  %v285 = vadd.f32 %v283, %v284
  %v286 = vsel %vm47, %v263, 0.0
  %v287 = vadd.f32 %v285, %v286
  %vm288 = vcmask 254976
  %v289 = vsel %vm288, %v264, 0.0
  %v290 = vadd.f32 %v287, %v289
  %v291 = vrot.slane %v290, 4
  %v292 = vadd.f32 %v290, %v291
  %v293 = vrot.slane %v292, 2
  %v294 = vadd.f32 %v292, %v293
  %v295 = vrot.slane %v294, 1
  %v296 = vadd.f32 %v294, %v295
  %v297 = vmul.f32 %v252, %v252
  %v298 = vmul.f32 %v253, %v253
  %v299 = vmul.f32 %v254, %v254
  %v300 = vmul.f32 %v255, %v255
  %v301 = vmul.f32 %v256, %v256
  %v302 = vmul.f32 %v257, %v257
  %v303 = vmul.f32 %v258, %v258
  %v304 = vmul.f32 %v259, %v259
  %v305 = vmul.f32 %v260, %v260
  %v306 = vmul.f32 %v261, %v261
  %v307 = vmul.f32 %v262, %v262
  %v308 = vmul.f32 %v263, %v263
  %v309 = vmul.f32 %v264, %v264
  %v310 = vsel %vm47, %v297, 0.0
  %v311 = vsel %vm47, %v298, 0.0
  %v312 = vadd.f32 %v310, %v311
  %v313 = vsel %vm47, %v299, 0.0
  %v314 = vadd.f32 %v312, %v313
  %v315 = vsel %vm47, %v300, 0.0
  %v316 = vadd.f32 %v314, %v315
  %v317 = vsel %vm47, %v301, 0.0
  %v318 = vadd.f32 %v316, %v317
  %v319 = vsel %vm47, %v302, 0.0
  %v320 = vadd.f32 %v318, %v319
  %v321 = vsel %vm47, %v303, 0.0
  %v322 = vadd.f32 %v320, %v321
  %v323 = vsel %vm47, %v304, 0.0
  %v324 = vadd.f32 %v322, %v323
  %v325 = vsel %vm47, %v305, 0.0
  %v326 = vadd.f32 %v324, %v325
  %v327 = vsel %vm47, %v306, 0.0
  %v328 = vadd.f32 %v326, %v327
  %v329 = vsel %vm47, %v307, 0.0
  %v330 = vadd.f32 %v328, %v329
  %v331 = vsel %vm47, %v308, 0.0
  %v332 = vadd.f32 %v330, %v331
  %v333 = vsel %vm288, %v309, 0.0
  %v334 = vadd.f32 %v332, %v333
  %v335 = vrot.slane %v334, 4
  %v336 = vadd.f32 %v334, %v335
  %v337 = vrot.slane %v336, 2
  %v338 = vadd.f32 %v336, %v337
  %v339 = vrot.slane %v338, 1
  %v340 = vadd.f32 %v338, %v339
  %v341 = vmul.f32 %v296, 0.010204081
  %v342 = vmul.f32 %v340, 0.010204081
  %v343 = vmul.f32 %v341, %v341
  %v344 = vsub.f32 %v342, %v343
  %v345 = vsub.f32 %v252, %v341
  %v346 = vsub.f32 %v253, %v341
  %v347 = vsub.f32 %v254, %v341
  %v348 = vsub.f32 %v255, %v341
  %v349 = vsub.f32 %v256, %v341
  %v350 = vsub.f32 %v257, %v341
  %v351 = vsub.f32 %v258, %v341
  %v352 = vsub.f32 %v259, %v341
  %v353 = vsub.f32 %v260, %v341
  %v354 = vsub.f32 %v261, %v341
  %v355 = vsub.f32 %v262, %v341
  %v356 = vsub.f32 %v263, %v341
  %v357 = vsub.f32 %v264, %v341
  %v358 = vadd.f32 %v344, 1e-05
  %v359 = vrsqrt.pop %v358
  %v360 = vmul.f32 %v345, %v359
  %v361 = vmul.f32 %v346, %v359
  %v362 = vmul.f32 %v347, %v359
  %v363 = vmul.f32 %v348, %v359
  %v364 = vmul.f32 %v349, %v359
  %v365 = vmul.f32 %v350, %v359
  %v366 = vmul.f32 %v351, %v359
  %v367 = vmul.f32 %v352, %v359
  %v368 = vmul.f32 %v353, %v359
  %v369 = vmul.f32 %v354, %v359
  %v370 = vmul.f32 %v355, %v359
  %v371 = vmul.f32 %v356, %v359
  %v372 = vmul.f32 %v357, %v359
  %v373 = vld [vmem:[%s4] sm:$0x1]
  %v375 = vlaneseq
  %v376 = vshrl.u32 %v375, 7
  %v377 = vsub.s32 0, %v376
  %v378 = vrot.slane %v373, %v377
  %v380 = vmul.f32 %v360, %v378
  %v381 = vmul.f32 %v361, %v378
  %v382 = vmul.f32 %v362, %v378
  %v383 = vmul.f32 %v363, %v378
  %v384 = vmul.f32 %v364, %v378
  %v385 = vmul.f32 %v365, %v378
  %v386 = vmul.f32 %v366, %v378
  %v387 = vmul.f32 %v367, %v378
  %v388 = vmul.f32 %v368, %v378
  %v389 = vmul.f32 %v369, %v378
  %v390 = vmul.f32 %v370, %v378
  %v391 = vmul.f32 %v371, %v378
  %v392 = vmul.f32 %v372, %v378
  %v393 = vld [vmem:[%s5] sm:$0x1]
  %v395 = vlaneseq
  %v396 = vshrl.u32 %v395, 7
  %v397 = vsub.s32 0, %v396
  %v398 = vrot.slane %v393, %v397
  %v400 = vadd.f32 %v380, %v398
  %v401 = vadd.f32 %v381, %v398
  %v402 = vadd.f32 %v382, %v398
  %v403 = vadd.f32 %v383, %v398
  %v404 = vadd.f32 %v384, %v398
  %v405 = vadd.f32 %v385, %v398
  %v406 = vadd.f32 %v386, %v398
  %v407 = vadd.f32 %v387, %v398
  %v408 = vadd.f32 %v388, %v398
  %v409 = vadd.f32 %v389, %v398
  %v410 = vadd.f32 %v390, %v398
  %v411 = vadd.f32 %v391, %v398
  %v412 = vadd.f32 %v392, %v398
  %v413 = vld [vmem:[%s2] sm:$0xff]
  %v414 = vld [vmem:[%s2 + $0x8] sm:$0xff]
  %v415 = vld [vmem:[%s2 + $0x10] sm:$0xff]
  %v416 = vld [vmem:[%s2 + $0x18] sm:$0xff]
  %v418 = vsel %vm47, %v400, 0
  %v421 = vsel %vm47, %v401, 0
  %v424 = vsel %vm47, %v402, 0
  %v427 = vsel %vm47, %v403, 0
  %v430 = vsel %vm47, %v404, 0
  %v433 = vsel %vm47, %v405, 0
  %v436 = vsel %vm47, %v406, 0
  %v439 = vsel %vm47, %v407, 0
  %v442 = vsel %vm47, %v408, 0
  %v445 = vsel %vm47, %v409, 0
  %v448 = vsel %vm47, %v410, 0
  %v451 = vsel %vm47, %v411, 0
  %v454 = vsel %vm47, %v412, 0
  %456 = vmatprep.subr.mxu0 0.0
  %457 = vmatpush1.msra.mxu0 %v413
  %458 = vmatprep.subr.mxu0 0.0
  %459 = vmatpush1.msra.mxu0 %v414
  %460 = vmatprep.subr.mxu0 0.0
  %461 = vmatpush1.msra.mxu0 %v415
  %462 = vmatprep.subr.mxu0 0.0
  %463 = vmatpush1.msra.mxu0 %v416
  %464 = vmatprep.subr.mxu0 0.0
  %465 = vmatpush1.msra.mxu0 0.0
  %466 = vmatprep.subr.mxu0 0.0
  %467 = vmatpush1.msra.mxu0 0.0
  %468 = vmatprep.subr.mxu0 0.0
  %469 = vmatpush1.msra.mxu0 0.0
  %470 = vmatprep.subr.mxu0 0.0
  %471 = vmatpush1.msra.mxu0 0.0
  %472 = vmatprep.subr.mxu0 0.0
  %473 = vmatpush1.msra.mxu0 0.0
  %474 = vmatprep.subr.mxu0 0.0
  %475 = vmatpush1.msra.mxu0 0.0
  %476 = vmatprep.subr.mxu0 0.0
  %477 = vmatpush1.msra.mxu0 0.0
  %478 = vmatprep.subr.mxu0 0.0
  %479 = vmatpush1.msra.mxu0 0.0
  %480 = vmatprep.subr.mxu0 0.0
  %481 = vmatpush1.msra.mxu0 0.0
  %482 = vmatprep.subr.mxu0 0.0
  %483 = vmatpush1.msra.mxu0 0.0
  %484 = vmatprep.subr.mxu0 0.0
  %485 = vmatpush1.msra.mxu0 0.0
  %486 = vmatprep.subr.mxu0 0.0
  %487 = vmatpush1.msra.mxu0 0.0
  %488 = vmatprep.subr.mxu0 0.0
  %489 = vmatpush1.msra.mxu0 0.0
  %490 = vmatprep.subr.mxu0 0.0
  %491 = vmatpush1.msra.mxu0 0.0
  %492 = vmatprep.subr.mxu0 0.0
  %493 = vmatpush1.msra.mxu0 0.0
  %494 = vmatprep.subr.mxu0 0.0
  %495 = vmatpush1.msra.mxu0 0.0
  %496 = vmatprep.subr.mxu0 0.0
  %497 = vmatpush1.msra.mxu0 0.0
  %498 = vmatprep.subr.mxu0 0.0
  %499 = vmatpush1.msra.mxu0 0.0
  %500 = vmatprep.subr.mxu0 0.0
  %501 = vmatpush1.msra.mxu0 0.0
  %502 = vmatprep.subr.mxu0 0.0
  %503 = vmatpush1.msra.mxu0 0.0
  %504 = vmatprep.subr.mxu0 0.0
  %505 = vmatpush1.msra.mxu0 0.0
  %506 = vmatprep.subr.mxu0 0.0
  %507 = vmatpush1.msra.mxu0 0.0
  %508 = vmatprep.subr.mxu0 0.0
  %509 = vmatpush1.msra.mxu0 0.0
  %510 = vmatprep.subr.mxu0 0.0
  %511 = vmatpush1.msra.mxu0 0.0
  %512 = vmatprep.subr.mxu0 0.0
  %513 = vmatpush1.msra.mxu0 0.0
  %514 = vmatprep.subr.mxu0 0.0
  %515 = vmatpush1.msra.mxu0 0.0
  %516 = vmatprep.subr.mxu0 0.0
  %517 = vmatpush1.msra.mxu0 0.0
  %518 = vmatprep.subr.mxu0 0.0
  %519 = vmatpush1.msra.mxu0 0.0
  %520 = vmatprep.mubr.f32.mxu0 0.0
  %521 = vmatmul.mubr.f32.gmra.mrb[0].mxu0 %v418
  %v522 = vpop.f32.mrb[0].mxu0
  %v523 = vadd.f32 0.0, %v522
  %v524 = vpop.f32.mrb[0].mxu0
  %525 = vmatprep.mubr.f32.mxu0 0.0
  %526 = vmatmul.mubr.f32.gmra.mrb[0].mxu0 %v421
  %v527 = vpop.f32.mrb[0].mxu0
  %v528 = vadd.f32 0.0, %v527
  %v529 = vpop.f32.mrb[0].mxu0
  %530 = vmatprep.mubr.f32.mxu0 0.0
  %531 = vmatmul.mubr.f32.gmra.mrb[0].mxu0 %v424
  %v532 = vpop.f32.mrb[0].mxu0
  %v533 = vadd.f32 0.0, %v532
  %v534 = vpop.f32.mrb[0].mxu0
  %535 = vmatprep.mubr.f32.mxu0 0.0
  %536 = vmatmul.mubr.f32.gmra.mrb[0].mxu0 %v427
  %v537 = vpop.f32.mrb[0].mxu0
  %v538 = vadd.f32 0.0, %v537
  %v539 = vpop.f32.mrb[0].mxu0
  %540 = vmatprep.mubr.f32.mxu0 0.0
  %541 = vmatmul.mubr.f32.gmra.mrb[0].mxu0 %v430
  %v542 = vpop.f32.mrb[0].mxu0
  %v543 = vadd.f32 0.0, %v542
  %v544 = vpop.f32.mrb[0].mxu0
  %545 = vmatprep.mubr.f32.mxu0 0.0
  %546 = vmatmul.mubr.f32.gmra.mrb[0].mxu0 %v433
  %v547 = vpop.f32.mrb[0].mxu0
  %v548 = vadd.f32 0.0, %v547
  %v549 = vpop.f32.mrb[0].mxu0
  %550 = vmatprep.mubr.f32.mxu0 0.0
  %551 = vmatmul.mubr.f32.gmra.mrb[0].mxu0 %v436
  %v552 = vpop.f32.mrb[0].mxu0
  %v553 = vadd.f32 0.0, %v552
  %v554 = vpop.f32.mrb[0].mxu0
  %555 = vmatprep.mubr.f32.mxu0 0.0
  %556 = vmatmul.mubr.f32.gmra.mrb[0].mxu0 %v439
  %v557 = vpop.f32.mrb[0].mxu0
  %v558 = vadd.f32 0.0, %v557
  %v559 = vpop.f32.mrb[0].mxu0
  %560 = vmatprep.mubr.f32.mxu0 0.0
  %561 = vmatmul.mubr.f32.gmra.mrb[0].mxu0 %v442
  %v562 = vpop.f32.mrb[0].mxu0
  %v563 = vadd.f32 0.0, %v562
  %v564 = vpop.f32.mrb[0].mxu0
  %565 = vmatprep.mubr.f32.mxu0 0.0
  %566 = vmatmul.mubr.f32.gmra.mrb[0].mxu0 %v445
  %v567 = vpop.f32.mrb[0].mxu0
  %v568 = vadd.f32 0.0, %v567
  %v569 = vpop.f32.mrb[0].mxu0
  %570 = vmatprep.mubr.f32.mxu0 0.0
  %571 = vmatmul.mubr.f32.gmra.mrb[0].mxu0 %v448
  %v572 = vpop.f32.mrb[0].mxu0
  %v573 = vadd.f32 0.0, %v572
  %v574 = vpop.f32.mrb[0].mxu0
  %575 = vmatprep.mubr.f32.mxu0 0.0
  %576 = vmatmul.mubr.f32.gmra.mrb[0].mxu0 %v451
  %v577 = vpop.f32.mrb[0].mxu0
  %v578 = vadd.f32 0.0, %v577
  %v579 = vpop.f32.mrb[0].mxu0
  %580 = vmatprep.mubr.f32.mxu0 0.0
  %581 = vmatmul.mubr.f32.gmra.mrb[0].mxu0 %v454
  %v582 = vpop.f32.mrb[0].mxu0
  %v583 = vadd.f32 0.0, %v582
  %v584 = vpop.f32.mrb[0].mxu0
  %585 = vdwg.mxu0
  %v586 = vsel %vm47, %v523, 0.0
  %v587 = vsel %vm47, %v528, 0.0
  %v588 = vadd.f32 %v586, %v587
  %v589 = vsel %vm47, %v533, 0.0
  %v590 = vadd.f32 %v588, %v589
  %v591 = vsel %vm47, %v538, 0.0
  %v592 = vadd.f32 %v590, %v591
  %v593 = vsel %vm47, %v543, 0.0
  %v594 = vadd.f32 %v592, %v593
  %v595 = vsel %vm47, %v548, 0.0
  %v596 = vadd.f32 %v594, %v595
  %v597 = vsel %vm47, %v553, 0.0
  %v598 = vadd.f32 %v596, %v597
  %v599 = vsel %vm47, %v558, 0.0
  %v600 = vadd.f32 %v598, %v599
  %v601 = vsel %vm47, %v563, 0.0
  %v602 = vadd.f32 %v600, %v601
  %v603 = vsel %vm47, %v568, 0.0
  %v604 = vadd.f32 %v602, %v603
  %v605 = vsel %vm47, %v573, 0.0
  %v606 = vadd.f32 %v604, %v605
  %v607 = vsel %vm47, %v578, 0.0
  %v608 = vadd.f32 %v606, %v607
  %v609 = vsel %vm288, %v583, 0.0
  %v610 = vadd.f32 %v608, %v609
  %v611 = vrot.slane %v610, 4
  %v612 = vadd.f32 %v610, %v611
  %v613 = vrot.slane %v612, 2
  %v614 = vadd.f32 %v612, %v613
  %v615 = vrot.slane %v614, 1
  %v616 = vadd.f32 %v614, %v615
  %v617 = vmul.f32 %v523, %v523
  %v618 = vmul.f32 %v528, %v528
  %v619 = vmul.f32 %v533, %v533
  %v620 = vmul.f32 %v538, %v538
  %v621 = vmul.f32 %v543, %v543
  %v622 = vmul.f32 %v548, %v548
  %v623 = vmul.f32 %v553, %v553
  %v624 = vmul.f32 %v558, %v558
  %v625 = vmul.f32 %v563, %v563
  %v626 = vmul.f32 %v568, %v568
  %v627 = vmul.f32 %v573, %v573
  %v628 = vmul.f32 %v578, %v578
  %v629 = vmul.f32 %v583, %v583
  %v630 = vsel %vm47, %v617, 0.0
  %v631 = vsel %vm47, %v618, 0.0
  %v632 = vadd.f32 %v630, %v631
  %v633 = vsel %vm47, %v619, 0.0
  %v634 = vadd.f32 %v632, %v633
  %v635 = vsel %vm47, %v620, 0.0
  %v636 = vadd.f32 %v634, %v635
  %v637 = vsel %vm47, %v621, 0.0
  %v638 = vadd.f32 %v636, %v637
  %v639 = vsel %vm47, %v622, 0.0
  %v640 = vadd.f32 %v638, %v639
  %v641 = vsel %vm47, %v623, 0.0
  %v642 = vadd.f32 %v640, %v641
  %v643 = vsel %vm47, %v624, 0.0
  %v644 = vadd.f32 %v642, %v643
  %v645 = vsel %vm47, %v625, 0.0
  %v646 = vadd.f32 %v644, %v645
  %v647 = vsel %vm47, %v626, 0.0
  %v648 = vadd.f32 %v646, %v647
  %v649 = vsel %vm47, %v627, 0.0
  %v650 = vadd.f32 %v648, %v649
  %v651 = vsel %vm47, %v628, 0.0
  %v652 = vadd.f32 %v650, %v651
  %v653 = vsel %vm288, %v629, 0.0
  %v654 = vadd.f32 %v652, %v653
  %v655 = vrot.slane %v654, 4
  %v656 = vadd.f32 %v654, %v655
  %v657 = vrot.slane %v656, 2
  %v658 = vadd.f32 %v656, %v657
  %v659 = vrot.slane %v658, 1
  %v660 = vadd.f32 %v658, %v659
  %v661 = vmul.f32 %v616, 0.010204081
  %v662 = vmul.f32 %v660, 0.010204081
  %v663 = vmul.f32 %v661, %v661
  %v664 = vsub.f32 %v662, %v663
  %v665 = vsub.f32 %v523, %v661
  %v666 = vsub.f32 %v528, %v661
  %v667 = vsub.f32 %v533, %v661
  %v668 = vsub.f32 %v538, %v661
  %v669 = vsub.f32 %v543, %v661
  %v670 = vsub.f32 %v548, %v661
  %v671 = vsub.f32 %v553, %v661
  %v672 = vsub.f32 %v558, %v661
  %v673 = vsub.f32 %v563, %v661
  %v674 = vsub.f32 %v568, %v661
  %v675 = vsub.f32 %v573, %v661
  %v676 = vsub.f32 %v578, %v661
  %v677 = vsub.f32 %v583, %v661
  %v678 = vadd.f32 %v664, 1e-05
  %v679 = vrsqrt.pop %v678
  %v680 = vmul.f32 %v665, %v679
  %v681 = vmul.f32 %v666, %v679
  %v682 = vmul.f32 %v667, %v679
  %v683 = vmul.f32 %v668, %v679
  %v684 = vmul.f32 %v669, %v679
  %v685 = vmul.f32 %v670, %v679
  %v686 = vmul.f32 %v671, %v679
  %v687 = vmul.f32 %v672, %v679
  %v688 = vmul.f32 %v673, %v679
  %v689 = vmul.f32 %v674, %v679
  %v690 = vmul.f32 %v675, %v679
  %v691 = vmul.f32 %v676, %v679
  %v692 = vmul.f32 %v677, %v679
  %v693 = vld [vmem:[%s6] sm:$0x1]
  %v695 = vlaneseq
  %v696 = vshrl.u32 %v695, 7
  %v697 = vsub.s32 0, %v696
  %v698 = vrot.slane %v693, %v697
  %v700 = vmul.f32 %v680, %v698
  %v701 = vmul.f32 %v681, %v698
  %v702 = vmul.f32 %v682, %v698
  %v703 = vmul.f32 %v683, %v698
  %v704 = vmul.f32 %v684, %v698
  %v705 = vmul.f32 %v685, %v698
  %v706 = vmul.f32 %v686, %v698
  %v707 = vmul.f32 %v687, %v698
  %v708 = vmul.f32 %v688, %v698
  %v709 = vmul.f32 %v689, %v698
  %v710 = vmul.f32 %v690, %v698
  %v711 = vmul.f32 %v691, %v698
  %v712 = vmul.f32 %v692, %v698
  %v713 = vld [vmem:[%s7] sm:$0x1]
  %v715 = vlaneseq
  %v716 = vshrl.u32 %v715, 7
  %v717 = vsub.s32 0, %v716
  %v718 = vrot.slane %v713, %v717
  %v720 = vadd.f32 %v700, %v718
  %v721 = vadd.f32 %v701, %v718
  %v722 = vadd.f32 %v702, %v718
  %v723 = vadd.f32 %v703, %v718
  %v724 = vadd.f32 %v704, %v718
  %v725 = vadd.f32 %v705, %v718
  %v726 = vadd.f32 %v706, %v718
  %v727 = vadd.f32 %v707, %v718
  %v728 = vadd.f32 %v708, %v718
  %v729 = vadd.f32 %v709, %v718
  %v730 = vadd.f32 %v710, %v718
  %v731 = vadd.f32 %v711, %v718
  %v732 = vadd.f32 %v712, %v718
  %v733 = vadd.f32 %v720, %v29
  %v734 = vadd.f32 %v721, %v30
  %v735 = vadd.f32 %v722, %v31
  %v736 = vadd.f32 %v723, %v32
  %v737 = vadd.f32 %v724, %v33
  %v738 = vadd.f32 %v725, %v34
  %v739 = vadd.f32 %v726, %v35
  %v740 = vadd.f32 %v727, %v36
  %v741 = vadd.f32 %v728, %v37
  %v742 = vadd.f32 %v729, %v38
  %v743 = vadd.f32 %v730, %v39
  %v744 = vadd.f32 %v731, %v40
  %v745 = vadd.f32 %v732, %v41
  %vm746 = vcmp.gt.f32.partialorder %v733, 0.0
  %vm747 = vcmp.gt.f32.partialorder %v734, 0.0
  %vm748 = vcmp.gt.f32.partialorder %v735, 0.0
  %vm749 = vcmp.gt.f32.partialorder %v736, 0.0
  %vm750 = vcmp.gt.f32.partialorder %v737, 0.0
  %vm751 = vcmp.gt.f32.partialorder %v738, 0.0
  %vm752 = vcmp.gt.f32.partialorder %v739, 0.0
  %vm753 = vcmp.gt.f32.partialorder %v740, 0.0
  %vm754 = vcmp.gt.f32.partialorder %v741, 0.0
  %vm755 = vcmp.gt.f32.partialorder %v742, 0.0
  %vm756 = vcmp.gt.f32.partialorder %v743, 0.0
  %vm757 = vcmp.gt.f32.partialorder %v744, 0.0
  %vm758 = vcmp.gt.f32.partialorder %v745, 0.0
  %759 = vset.pattern.permute.xlu0 1
  %760 = vperm.xlu0 %759, %v234
  %v761 = vpop.permute.xlu0 %760
  %v763 = vmul.f32 %v761, %v733
  %v764 = vmul.f32 %v761, %v734
  %v765 = vmul.f32 %v761, %v735
  %v766 = vmul.f32 %v761, %v736
  %v767 = vmul.f32 %v761, %v737
  %v768 = vmul.f32 %v761, %v738
  %v769 = vmul.f32 %v761, %v739
  %v770 = vmul.f32 %v761, %v740
  %v771 = vmul.f32 %v761, %v741
  %v772 = vmul.f32 %v761, %v742
  %v773 = vmul.f32 %v761, %v743
  %v774 = vmul.f32 %v761, %v744
  %v775 = vmul.f32 %v761, %v745
  %v776 = vsel %vm746, %v733, %v763
  %v777 = vsel %vm747, %v734, %v764
  %v778 = vsel %vm748, %v735, %v765
  %v779 = vsel %vm749, %v736, %v766
  %v780 = vsel %vm750, %v737, %v767
  %v781 = vsel %vm751, %v738, %v768
  %v782 = vsel %vm752, %v739, %v769
  %v783 = vsel %vm753, %v740, %v770
  %v784 = vsel %vm754, %v741, %v771
  %v785 = vsel %vm755, %v742, %v772
  %v786 = vsel %vm756, %v743, %v773
  %v787 = vsel %vm757, %v744, %v774
  %v788 = vsel %vm758, %v745, %v775
  %789 = vst.msk [vmem:[%s8] sm:$0xff] %vm47, %v776
  %790 = vst.msk [vmem:[%s8 + $0x8] sm:$0xff] %vm47, %v777
  %791 = vst.msk [vmem:[%s8 + $0x10] sm:$0xff] %vm47, %v778
  %792 = vst.msk [vmem:[%s8 + $0x18] sm:$0xff] %vm47, %v779
  %793 = vst.msk [vmem:[%s8 + $0x20] sm:$0xff] %vm47, %v780
  %794 = vst.msk [vmem:[%s8 + $0x28] sm:$0xff] %vm47, %v781
  %795 = vst.msk [vmem:[%s8 + $0x30] sm:$0xff] %vm47, %v782
  %796 = vst.msk [vmem:[%s8 + $0x38] sm:$0xff] %vm47, %v783
  %797 = vst.msk [vmem:[%s8 + $0x40] sm:$0xff] %vm47, %v784
  %798 = vst.msk [vmem:[%s8 + $0x48] sm:$0xff] %vm47, %v785
  %799 = vst.msk [vmem:[%s8 + $0x50] sm:$0xff] %vm47, %v786
  %800 = vst.msk [vmem:[%s8 + $0x58] sm:$0xff] %vm47, %v787
  %801 = vst.msk [vmem:[%s8 + $0x60] sm:$0x3] %vm288, %v788
  // Predicated region
  $region34: #{spex_forward.10} parent=0 // pred_check
    _
  $region35: #{spex_forward.10} parent=0 // pred_check_branch
    %803 = sbr.rel (0) target = $region37
  $region36: #{spex_forward.10} parent=0 // pred_region
    _
  $region37: #{spex_forward.10} parent=0 // pred_fallthru
    _
  // Predicated region
  $region38: #{spex_forward.10} parent=0 // pred_check
    _
  $region39: #{spex_forward.10} parent=0 // pred_check_branch
    %805 = sbr.rel (0) target = $region41
  $region40: #{spex_forward.10} parent=0 // pred_region
    _
  $region41: #{spex_forward.10} parent=0 // pred_fallthru
    _

// kernel: spex_forward.11
$region0: #{spex_forward.11}
  #allocation0 [shape = 'u32[]', space=smem, size = 0x4, offset = 0x4, fixed_abs, tag = 'smem constant byte address 0x4 - core index']
  #allocation1 [shape = 'u32[144,128]{1,0:T(1,128)}', space=vmem, size = 0x12000, scoped, tag = 'internal scratch']
  %s0 = inlined_call_operand.vmem [shape: f32[32,32], index: 0, kind: input, shape index: {}]
  %s1 = inlined_call_operand.vmem [shape: f32[32,32], index: 1, kind: input, shape index: {}]
  %s2 = inlined_call_operand.vmem [shape: f32[32,32], index: 2, kind: input, shape index: {}]
  %s3 = inlined_call_operand.vmem [shape: f32[1,2], index: 3, kind: input, shape index: {}]
  %s4 = inlined_call_operand.vmem [shape: f32[1,32], index: 4, kind: input, shape index: {}]
  %s5 = inlined_call_operand.vmem [shape: f32[1,32], index: 5, kind: input, shape index: {}]
  %s6 = inlined_call_operand.vmem [shape: f32[1,32], index: 6, kind: input, shape index: {}]
  %s7 = inlined_call_operand.vmem [shape: f32[1,32], index: 7, kind: input, shape index: {}]
  %s8 = inlined_call_operand.vmem [shape: f32[32,32], index: 8, kind: output, shape index: {}]
  %s9 = sld [smem:[#allocation0]]
  $region42: #{spex_forward.11} parent=0
    _
  %s11 = ssub.s32 1, %s9
  %s12 = scalar_select 0, %s11, %s9
  // Predicated region
  $region2: #{spex_forward.11} parent=0 // pred_check
    _
  $region3: #{spex_forward.11} parent=0 // pred_check_branch
    %14 = sbr.rel (0) target = $region5
  $region4: #{spex_forward.11} parent=0 // pred_region
    _
  $region5: #{spex_forward.11} parent=0 // pred_fallthru
    _
  // Predicated region
  $region6: #{spex_forward.11} parent=0 // pred_check
    _
  $region7: #{spex_forward.11} parent=0 // pred_check_branch
    %16 = sbr.rel (0) target = $region9
  $region8: #{spex_forward.11} parent=0 // pred_region
    _
  $region9: #{spex_forward.11} parent=0 // pred_fallthru
    _
  // Predicated region
  $region10: #{spex_forward.11} parent=0 // pred_check
    _
  $region11: #{spex_forward.11} parent=0 // pred_check_branch
    %18 = sbr.rel (0) target = $region13
  $region12: #{spex_forward.11} parent=0 // pred_region
    _
  $region13: #{spex_forward.11} parent=0 // pred_fallthru
    _
  // Predicated region
  $region14: #{spex_forward.11} parent=0 // pred_check
    _
  $region15: #{spex_forward.11} parent=0 // pred_check_branch
    %20 = sbr.rel (0) target = $region17
  $region16: #{spex_forward.11} parent=0 // pred_region
    _
  $region17: #{spex_forward.11} parent=0 // pred_fallthru
    _
  // Predicated region
  $region18: #{spex_forward.11} parent=0 // pred_check
    _
  $region19: #{spex_forward.11} parent=0 // pred_check_branch
    %22 = sbr.rel (0) target = $region21
  $region20: #{spex_forward.11} parent=0 // pred_region
    _
  $region21: #{spex_forward.11} parent=0 // pred_fallthru
    _
  // Predicated region
  $region22: #{spex_forward.11} parent=0 // pred_check
    _
  $region23: #{spex_forward.11} parent=0 // pred_check_branch
    %24 = sbr.rel (0) target = $region25
  $region24: #{spex_forward.11} parent=0 // pred_region
    _
  $region25: #{spex_forward.11} parent=0 // pred_fallthru
    _
  // Predicated region
  $region26: #{spex_forward.11} parent=0 // pred_check
    _
  $region27: #{spex_forward.11} parent=0 // pred_check_branch
    %26 = sbr.rel (0) target = $region29
  $region28: #{spex_forward.11} parent=0 // pred_region
    _
  $region29: #{spex_forward.11} parent=0 // pred_fallthru
    _
  // Predicated region
  $region30: #{spex_forward.11} parent=0 // pred_check
    _
  $region31: #{spex_forward.11} parent=0 // pred_check_branch
    %28 = sbr.rel (0) target = $region33
  $region32: #{spex_forward.11} parent=0 // pred_region
    _
  $region33: #{spex_forward.11} parent=0 // pred_fallthru
    _
  %v29 = vld [vmem:[%s0] sm:$0xff]
  %v30 = vld [vmem:[%s0 + $0x8] sm:$0xff]
  %v31 = vld [vmem:[%s0 + $0x10] sm:$0xff]
  %v32 = vld [vmem:[%s0 + $0x18] sm:$0xff]
  %v33 = vld [vmem:[%s3] sm:$0x1]
  %v34 = vld [vmem:[%s1] sm:$0xff]
  %v35 = vld [vmem:[%s1 + $0x8] sm:$0xff]
  %v36 = vld [vmem:[%s1 + $0x10] sm:$0xff]
  %v37 = vld [vmem:[%s1 + $0x18] sm:$0xff]
  %vm38 = vcmask 261120
  %v40 = vsel %vm38, %v29, 0
  %v43 = vsel %vm38, %v30, 0
  %v46 = vsel %vm38, %v31, 0
  %v49 = vsel %vm38, %v32, 0
  %51 = vmatprep.subr.mxu0 0.0
  %52 = vmatpush1.msra.mxu0 %v34
  %53 = vmatprep.subr.mxu0 0.0
  %54 = vmatpush1.msra.mxu0 %v35
  %55 = vmatprep.subr.mxu0 0.0
  %56 = vmatpush1.msra.mxu0 %v36
  %57 = vmatprep.subr.mxu0 0.0
  %58 = vmatpush1.msra.mxu0 %v37
  %59 = vmatprep.subr.mxu0 0.0
  %60 = vmatpush1.msra.mxu0 0.0
  %61 = vmatprep.subr.mxu0 0.0
  %62 = vmatpush1.msra.mxu0 0.0
  %63 = vmatprep.subr.mxu0 0.0
  %64 = vmatpush1.msra.mxu0 0.0
  %65 = vmatprep.subr.mxu0 0.0
  %66 = vmatpush1.msra.mxu0 0.0
  %67 = vmatprep.subr.mxu0 0.0
  %68 = vmatpush1.msra.mxu0 0.0
  %69 = vmatprep.subr.mxu0 0.0
  %70 = vmatpush1.msra.mxu0 0.0
  %71 = vmatprep.subr.mxu0 0.0
  %72 = vmatpush1.msra.mxu0 0.0
  %73 = vmatprep.subr.mxu0 0.0
  %74 = vmatpush1.msra.mxu0 0.0
  %75 = vmatprep.subr.mxu0 0.0
  %76 = vmatpush1.msra.mxu0 0.0
  %77 = vmatprep.subr.mxu0 0.0
  %78 = vmatpush1.msra.mxu0 0.0
  %79 = vmatprep.subr.mxu0 0.0
  %80 = vmatpush1.msra.mxu0 0.0
  %81 = vmatprep.subr.mxu0 0.0
  %82 = vmatpush1.msra.mxu0 0.0
  %83 = vmatprep.subr.mxu0 0.0
  %84 = vmatpush1.msra.mxu0 0.0
  %85 = vmatprep.subr.mxu0 0.0
  %86 = vmatpush1.msra.mxu0 0.0
  %87 = vmatprep.subr.mxu0 0.0
  %88 = vmatpush1.msra.mxu0 0.0
  %89 = vmatprep.subr.mxu0 0.0
  %90 = vmatpush1.msra.mxu0 0.0
  %91 = vmatprep.subr.mxu0 0.0
  %92 = vmatpush1.msra.mxu0 0.0
  %93 = vmatprep.subr.mxu0 0.0
  %94 = vmatpush1.msra.mxu0 0.0
  %95 = vmatprep.subr.mxu0 0.0
  %96 = vmatpush1.msra.mxu0 0.0
  %97 = vmatprep.subr.mxu0 0.0
  %98 = vmatpush1.msra.mxu0 0.0
  %99 = vmatprep.subr.mxu0 0.0
  %100 = vmatpush1.msra.mxu0 0.0
  %101 = vmatprep.subr.mxu0 0.0
  %102 = vmatpush1.msra.mxu0 0.0
  %103 = vmatprep.subr.mxu0 0.0
  %104 = vmatpush1.msra.mxu0 0.0
  %105 = vmatprep.subr.mxu0 0.0
  %106 = vmatpush1.msra.mxu0 0.0
  %107 = vmatprep.subr.mxu0 0.0
  %108 = vmatpush1.msra.mxu0 0.0
  %109 = vmatprep.subr.mxu0 0.0
  %110 = vmatpush1.msra.mxu0 0.0
  %111 = vmatprep.subr.mxu0 0.0
  %112 = vmatpush1.msra.mxu0 0.0
  %113 = vmatprep.subr.mxu0 0.0
  %114 = vmatpush1.msra.mxu0 0.0
  %115 = vmatprep.mubr.f32.mxu0 0.0
  %116 = vmatmul.mubr.f32.gmra.mrb[0].mxu0 %v40
  %v117 = vpop.f32.mrb[0].mxu0
  %v118 = vadd.f32 0.0, %v117
  %v119 = vpop.f32.mrb[0].mxu0
  %120 = vmatprep.mubr.f32.mxu0 0.0
  %121 = vmatmul.mubr.f32.gmra.mrb[0].mxu0 %v43
  %v122 = vpop.f32.mrb[0].mxu0
  %v123 = vadd.f32 0.0, %v122
  %v124 = vpop.f32.mrb[0].mxu0
  %125 = vmatprep.mubr.f32.mxu0 0.0
  %126 = vmatmul.mubr.f32.gmra.mrb[0].mxu0 %v46
  %v127 = vpop.f32.mrb[0].mxu0
  %v128 = vadd.f32 0.0, %v127
  %v129 = vpop.f32.mrb[0].mxu0
  %130 = vmatprep.mubr.f32.mxu0 0.0
  %131 = vmatmul.mubr.f32.gmra.mrb[0].mxu0 %v49
  %v132 = vpop.f32.mrb[0].mxu0
  %v133 = vadd.f32 0.0, %v132
  %v134 = vpop.f32.mrb[0].mxu0
  %135 = vdwg.mxu0
  %vm136 = vcmp.gt.f32.partialorder %v118, 0.0
  %vm137 = vcmp.gt.f32.partialorder %v123, 0.0
  %vm138 = vcmp.gt.f32.partialorder %v128, 0.0
  %vm139 = vcmp.gt.f32.partialorder %v133, 0.0
  %v141 = vlaneseq
  %v142 = vshrl.u32 %v141, 7
  %v143 = vsub.s32 0, %v142
  %v144 = vrot.slane %v33, %v143
  %145 = vset.pattern.permute.xlu0 0
  %146 = vperm.xlu0 %145, %v144
  %v147 = vpop.permute.xlu0 %146
  %v149 = vmul.f32 %v147, %v118
  %v150 = vmul.f32 %v147, %v123
  %v151 = vmul.f32 %v147, %v128
  %v152 = vmul.f32 %v147, %v133
  %v153 = vsel %vm136, %v118, %v149
  %v154 = vsel %vm137, %v123, %v150
  %v155 = vsel %vm138, %v128, %v151
  %v156 = vsel %vm139, %v133, %v152
  %v157 = vsel %vm38, %v153, 0.0
  %v158 = vsel %vm38, %v154, 0.0
  %v159 = vadd.f32 %v157, %v158
  %v160 = vsel %vm38, %v155, 0.0
  %v161 = vadd.f32 %v159, %v160
  %v162 = vsel %vm38, %v156, 0.0
  %v163 = vadd.f32 %v161, %v162
  %v164 = vrot.slane %v163, 4
  %v165 = vadd.f32 %v163, %v164
  %v166 = vrot.slane %v165, 2
  %v167 = vadd.f32 %v165, %v166
  %v168 = vrot.slane %v167, 1
  %v169 = vadd.f32 %v167, %v168
  %v170 = vmul.f32 %v153, %v153
  %v171 = vmul.f32 %v154, %v154
  %v172 = vmul.f32 %v155, %v155
  %v173 = vmul.f32 %v156, %v156
  %v174 = vsel %vm38, %v170, 0.0
  %v175 = vsel %vm38, %v171, 0.0
  %v176 = vadd.f32 %v174, %v175
  %v177 = vsel %vm38, %v172, 0.0
  %v178 = vadd.f32 %v176, %v177
  %v179 = vsel %vm38, %v173, 0.0
  %v180 = vadd.f32 %v178, %v179
  %v181 = vrot.slane %v180, 4
  %v182 = vadd.f32 %v180, %v181
  %v183 = vrot.slane %v182, 2
  %v184 = vadd.f32 %v182, %v183
  %v185 = vrot.slane %v184, 1
  %v186 = vadd.f32 %v184, %v185
  %v187 = vmul.f32 %v169, 0.03125
  %v188 = vmul.f32 %v186, 0.03125
  %v189 = vmul.f32 %v187, %v187
  %v190 = vsub.f32 %v188, %v189
  %v191 = vsub.f32 %v153, %v187
  %v192 = vsub.f32 %v154, %v187
  %v193 = vsub.f32 %v155, %v187
  %v194 = vsub.f32 %v156, %v187
  %v195 = vadd.f32 %v190, 1e-05
  %v196 = vrsqrt.pop %v195
  %v197 = vmul.f32 %v191, %v196
  %v198 = vmul.f32 %v192, %v196
  %v199 = vmul.f32 %v193, %v196
  %v200 = vmul.f32 %v194, %v196
  %v201 = vld [vmem:[%s4] sm:$0x1]
  %v203 = vlaneseq
  %v204 = vshrl.u32 %v203, 7
  %v205 = vsub.s32 0, %v204
  %v206 = vrot.slane %v201, %v205
  %v208 = vmul.f32 %v197, %v206
  %v209 = vmul.f32 %v198, %v206
  %v210 = vmul.f32 %v199, %v206
  %v211 = vmul.f32 %v200, %v206
  %v212 = vld [vmem:[%s5] sm:$0x1]
  %v214 = vlaneseq
  %v215 = vshrl.u32 %v214, 7
  %v216 = vsub.s32 0, %v215
  %v217 = vrot.slane %v212, %v216
  %v219 = vadd.f32 %v208, %v217
  %v220 = vadd.f32 %v209, %v217
  %v221 = vadd.f32 %v210, %v217
  %v222 = vadd.f32 %v211, %v217
  %v223 = vld [vmem:[%s2] sm:$0xff]
  %v224 = vld [vmem:[%s2 + $0x8] sm:$0xff]
  %v225 = vld [vmem:[%s2 + $0x10] sm:$0xff]
  %v226 = vld [vmem:[%s2 + $0x18] sm:$0xff]
  %v228 = vsel %vm38, %v219, 0
  %v231 = vsel %vm38, %v220, 0
  %v234 = vsel %vm38, %v221, 0
  %v237 = vsel %vm38, %v222, 0
  %239 = vmatprep.subr.mxu0 0.0
  %240 = vmatpush1.msra.mxu0 %v223
  %241 = vmatprep.subr.mxu0 0.0
  %242 = vmatpush1.msra.mxu0 %v224
  %243 = vmatprep.subr.mxu0 0.0
  %244 = vmatpush1.msra.mxu0 %v225
  %245 = vmatprep.subr.mxu0 0.0
  %246 = vmatpush1.msra.mxu0 %v226
  %247 = vmatprep.subr.mxu0 0.0
  %248 = vmatpush1.msra.mxu0 0.0
  %249 = vmatprep.subr.mxu0 0.0
  %250 = vmatpush1.msra.mxu0 0.0
  %251 = vmatprep.subr.mxu0 0.0
  %252 = vmatpush1.msra.mxu0 0.0
  %253 = vmatprep.subr.mxu0 0.0
  %254 = vmatpush1.msra.mxu0 0.0
  %255 = vmatprep.subr.mxu0 0.0
  %256 = vmatpush1.msra.mxu0 0.0
  %257 = vmatprep.subr.mxu0 0.0
  %258 = vmatpush1.msra.mxu0 0.0
  %259 = vmatprep.subr.mxu0 0.0
  %260 = vmatpush1.msra.mxu0 0.0
  %261 = vmatprep.subr.mxu0 0.0
  %262 = vmatpush1.msra.mxu0 0.0
  %263 = vmatprep.subr.mxu0 0.0
  %264 = vmatpush1.msra.mxu0 0.0
  %265 = vmatprep.subr.mxu0 0.0
  %266 = vmatpush1.msra.mxu0 0.0
  %267 = vmatprep.subr.mxu0 0.0
  %268 = vmatpush1.msra.mxu0 0.0
  %269 = vmatprep.subr.mxu0 0.0
  %270 = vmatpush1.msra.mxu0 0.0
  %271 = vmatprep.subr.mxu0 0.0
  %272 = vmatpush1.msra.mxu0 0.0
  %273 = vmatprep.subr.mxu0 0.0
  %274 = vmatpush1.msra.mxu0 0.0
  %275 = vmatprep.subr.mxu0 0.0
  %276 = vmatpush1.msra.mxu0 0.0
  %277 = vmatprep.subr.mxu0 0.0
  %278 = vmatpush1.msra.mxu0 0.0
  %279 = vmatprep.subr.mxu0 0.0
  %280 = vmatpush1.msra.mxu0 0.0
  %281 = vmatprep.subr.mxu0 0.0
  %282 = vmatpush1.msra.mxu0 0.0
  %283 = vmatprep.subr.mxu0 0.0
  %284 = vmatpush1.msra.mxu0 0.0
  %285 = vmatprep.subr.mxu0 0.0
  %286 = vmatpush1.msra.mxu0 0.0
  %287 = vmatprep.subr.mxu0 0.0
  %288 = vmatpush1.msra.mxu0 0.0
  %289 = vmatprep.subr.mxu0 0.0
  %290 = vmatpush1.msra.mxu0 0.0
  %291 = vmatprep.subr.mxu0 0.0
  %292 = vmatpush1.msra.mxu0 0.0
  %293 = vmatprep.subr.mxu0 0.0
  %294 = vmatpush1.msra.mxu0 0.0
  %295 = vmatprep.subr.mxu0 0.0
  %296 = vmatpush1.msra.mxu0 0.0
  %297 = vmatprep.subr.mxu0 0.0
  %298 = vmatpush1.msra.mxu0 0.0
  %299 = vmatprep.subr.mxu0 0.0
  %300 = vmatpush1.msra.mxu0 0.0
  %301 = vmatprep.subr.mxu0 0.0
  %302 = vmatpush1.msra.mxu0 0.0
  %303 = vmatprep.mubr.f32.mxu0 0.0
  %304 = vmatmul.mubr.f32.gmra.mrb[0].mxu0 %v228
  %v305 = vpop.f32.mrb[0].mxu0
  %v306 = vadd.f32 0.0, %v305
  %v307 = vpop.f32.mrb[0].mxu0
  %308 = vmatprep.mubr.f32.mxu0 0.0
  %309 = vmatmul.mubr.f32.gmra.mrb[0].mxu0 %v231
  %v310 = vpop.f32.mrb[0].mxu0
  %v311 = vadd.f32 0.0, %v310
  %v312 = vpop.f32.mrb[0].mxu0
  %313 = vmatprep.mubr.f32.mxu0 0.0
  %314 = vmatmul.mubr.f32.gmra.mrb[0].mxu0 %v234
  %v315 = vpop.f32.mrb[0].mxu0
  %v316 = vadd.f32 0.0, %v315
  %v317 = vpop.f32.mrb[0].mxu0
  %318 = vmatprep.mubr.f32.mxu0 0.0
  %319 = vmatmul.mubr.f32.gmra.mrb[0].mxu0 %v237
  %v320 = vpop.f32.mrb[0].mxu0
  %v321 = vadd.f32 0.0, %v320
  %v322 = vpop.f32.mrb[0].mxu0
  %323 = vdwg.mxu0
  %v324 = vsel %vm38, %v306, 0.0
  %v325 = vsel %vm38, %v311, 0.0
  %v326 = vadd.f32 %v324, %v325
  %v327 = vsel %vm38, %v316, 0.0
  %v328 = vadd.f32 %v326, %v327
  %v329 = vsel %vm38, %v321, 0.0
  %v330 = vadd.f32 %v328, %v329
  %v331 = vrot.slane %v330, 4
  %v332 = vadd.f32 %v330, %v331
  %v333 = vrot.slane %v332, 2
  %v334 = vadd.f32 %v332, %v333
  %v335 = vrot.slane %v334, 1
  %v336 = vadd.f32 %v334, %v335
  %v337 = vmul.f32 %v306, %v306
  %v338 = vmul.f32 %v311, %v311
  %v339 = vmul.f32 %v316, %v316
  %v340 = vmul.f32 %v321, %v321
  %v341 = vsel %vm38, %v337, 0.0
  %v342 = vsel %vm38, %v338, 0.0
  %v343 = vadd.f32 %v341, %v342
  %v344 = vsel %vm38, %v339, 0.0
  %v345 = vadd.f32 %v343, %v344
  %v346 = vsel %vm38, %v340, 0.0
  %v347 = vadd.f32 %v345, %v346
  %v348 = vrot.slane %v347, 4
  %v349 = vadd.f32 %v347, %v348
  %v350 = vrot.slane %v349, 2
  %v351 = vadd.f32 %v349, %v350
  %v352 = vrot.slane %v351, 1
  %v353 = vadd.f32 %v351, %v352
  %v354 = vmul.f32 %v336, 0.03125
  %v355 = vmul.f32 %v353, 0.03125
  %v356 = vmul.f32 %v354, %v354
  %v357 = vsub.f32 %v355, %v356
  %v358 = vsub.f32 %v306, %v354
  %v359 = vsub.f32 %v311, %v354
  %v360 = vsub.f32 %v316, %v354
  %v361 = vsub.f32 %v321, %v354
  %v362 = vadd.f32 %v357, 1e-05
  %v363 = vrsqrt.pop %v362
  %v364 = vmul.f32 %v358, %v363
  %v365 = vmul.f32 %v359, %v363
  %v366 = vmul.f32 %v360, %v363
  %v367 = vmul.f32 %v361, %v363
  %v368 = vld [vmem:[%s6] sm:$0x1]
  %v370 = vlaneseq
  %v371 = vshrl.u32 %v370, 7
  %v372 = vsub.s32 0, %v371
  %v373 = vrot.slane %v368, %v372
  %v375 = vmul.f32 %v364, %v373
  %v376 = vmul.f32 %v365, %v373
  %v377 = vmul.f32 %v366, %v373
  %v378 = vmul.f32 %v367, %v373
  %v379 = vld [vmem:[%s7] sm:$0x1]
  %v381 = vlaneseq
  %v382 = vshrl.u32 %v381, 7
  %v383 = vsub.s32 0, %v382
  %v384 = vrot.slane %v379, %v383
  %v386 = vadd.f32 %v375, %v384
  %v387 = vadd.f32 %v376, %v384
  %v388 = vadd.f32 %v377, %v384
  %v389 = vadd.f32 %v378, %v384
  %v390 = vadd.f32 %v386, %v29
  %v391 = vadd.f32 %v387, %v30
  %v392 = vadd.f32 %v388, %v31
  %v393 = vadd.f32 %v389, %v32
  %vm394 = vcmp.gt.f32.partialorder %v390, 0.0
  %vm395 = vcmp.gt.f32.partialorder %v391, 0.0
  %vm396 = vcmp.gt.f32.partialorder %v392, 0.0
  %vm397 = vcmp.gt.f32.partialorder %v393, 0.0
  %398 = vset.pattern.permute.xlu0 1
  %399 = vperm.xlu0 %398, %v144
  %v400 = vpop.permute.xlu0 %399
  %v402 = vmul.f32 %v400, %v390
  %v403 = vmul.f32 %v400, %v391
  %v404 = vmul.f32 %v400, %v392
  %v405 = vmul.f32 %v400, %v393
  %v406 = vsel %vm394, %v390, %v402
  %v407 = vsel %vm395, %v391, %v403
  %v408 = vsel %vm396, %v392, %v404
  %v409 = vsel %vm397, %v393, %v405
  %410 = vst.msk [vmem:[%s8] sm:$0xff] %vm38, %v406
  %411 = vst.msk [vmem:[%s8 + $0x8] sm:$0xff] %vm38, %v407
  %412 = vst.msk [vmem:[%s8 + $0x10] sm:$0xff] %vm38, %v408
  %413 = vst.msk [vmem:[%s8 + $0x18] sm:$0xff] %vm38, %v409
  // Predicated region
  $region34: #{spex_forward.11} parent=0 // pred_check
    _
  $region35: #{spex_forward.11} parent=0 // pred_check_branch
    %415 = sbr.rel (0) target = $region37
  $region36: #{spex_forward.11} parent=0 // pred_region
    _
  $region37: #{spex_forward.11} parent=0 // pred_fallthru
    _
  // Predicated region
  $region38: #{spex_forward.11} parent=0 // pred_check
    _
  $region39: #{spex_forward.11} parent=0 // pred_check_branch
    %417 = sbr.rel (0) target = $region41
  $region40: #{spex_forward.11} parent=0 // pred_region
    _
  $region41: #{spex_forward.11} parent=0 // pred_fallthru
    _

// kernel: spex_forward.12
$region0: #{spex_forward.12}
  #allocation0 [shape = 'u32[]', space=smem, size = 0x4, offset = 0x4, fixed_abs, tag = 'smem constant byte address 0x4 - core index']
  #allocation1 [shape = 'u32[144,128]{1,0:T(1,128)}', space=vmem, size = 0x12000, scoped, tag = 'internal scratch']
  %s0 = inlined_call_operand.vmem [shape: f32[10,32], index: 0, kind: input, shape index: {}]
  %s1 = inlined_call_operand.vmem [shape: f32[32,32], index: 1, kind: input, shape index: {}]
  %s2 = inlined_call_operand.vmem [shape: f32[32,32], index: 2, kind: input, shape index: {}]
  %s3 = inlined_call_operand.vmem [shape: f32[1,2], index: 3, kind: input, shape index: {}]
  %s4 = inlined_call_operand.vmem [shape: f32[1,32], index: 4, kind: input, shape index: {}]
  %s5 = inlined_call_operand.vmem [shape: f32[1,32], index: 5, kind: input, shape index: {}]
  %s6 = inlined_call_operand.vmem [shape: f32[1,32], index: 6, kind: input, shape index: {}]
  %s7 = inlined_call_operand.vmem [shape: f32[1,32], index: 7, kind: input, shape index: {}]
  %s8 = inlined_call_operand.vmem [shape: f32[10,32], index: 8, kind: output, shape index: {}]
  %s9 = sld [smem:[#allocation0]]
  $region42: #{spex_forward.12} parent=0
    _
  %s11 = ssub.s32 1, %s9
  %s12 = scalar_select 0, %s11, %s9
  // Predicated region
  $region2: #{spex_forward.12} parent=0 // pred_check
    _
  $region3: #{spex_forward.12} parent=0 // pred_check_branch
    %14 = sbr.rel (0) target = $region5
  $region4: #{spex_forward.12} parent=0 // pred_region
    _
  $region5: #{spex_forward.12} parent=0 // pred_fallthru
    _
  // Predicated region
  $region6: #{spex_forward.12} parent=0 // pred_check
    _
  $region7: #{spex_forward.12} parent=0 // pred_check_branch
    %16 = sbr.rel (0) target = $region9
  $region8: #{spex_forward.12} parent=0 // pred_region
    _
  $region9: #{spex_forward.12} parent=0 // pred_fallthru
    _
  // Predicated region
  $region10: #{spex_forward.12} parent=0 // pred_check
    _
  $region11: #{spex_forward.12} parent=0 // pred_check_branch
    %18 = sbr.rel (0) target = $region13
  $region12: #{spex_forward.12} parent=0 // pred_region
    _
  $region13: #{spex_forward.12} parent=0 // pred_fallthru
    _
  // Predicated region
  $region14: #{spex_forward.12} parent=0 // pred_check
    _
  $region15: #{spex_forward.12} parent=0 // pred_check_branch
    %20 = sbr.rel (0) target = $region17
  $region16: #{spex_forward.12} parent=0 // pred_region
    _
  $region17: #{spex_forward.12} parent=0 // pred_fallthru
    _
  // Predicated region
  $region18: #{spex_forward.12} parent=0 // pred_check
    _
  $region19: #{spex_forward.12} parent=0 // pred_check_branch
    %22 = sbr.rel (0) target = $region21
  $region20: #{spex_forward.12} parent=0 // pred_region
    _
  $region21: #{spex_forward.12} parent=0 // pred_fallthru
    _
  // Predicated region
  $region22: #{spex_forward.12} parent=0 // pred_check
    _
  $region23: #{spex_forward.12} parent=0 // pred_check_branch
    %24 = sbr.rel (0) target = $region25
  $region24: #{spex_forward.12} parent=0 // pred_region
    _
  $region25: #{spex_forward.12} parent=0 // pred_fallthru
    _
  // Predicated region
  $region26: #{spex_forward.12} parent=0 // pred_check
    _
  $region27: #{spex_forward.12} parent=0 // pred_check_branch
    %26 = sbr.rel (0) target = $region29
  $region28: #{spex_forward.12} parent=0 // pred_region
    _
  $region29: #{spex_forward.12} parent=0 // pred_fallthru
    _
  // Predicated region
  $region30: #{spex_forward.12} parent=0 // pred_check
    _
  $region31: #{spex_forward.12} parent=0 // pred_check_branch
    %28 = sbr.rel (0) target = $region33
  $region32: #{spex_forward.12} parent=0 // pred_region
    _
  $region33: #{spex_forward.12} parent=0 // pred_fallthru
    _
  %v29 = vld [vmem:[%s0] sm:$0xff]
  %v30 = vld [vmem:[%s0 + $0x8] sm:$0x3]
  %v31 = vld [vmem:[%s3] sm:$0x1]
  %v32 = vld [vmem:[%s1] sm:$0xff]
  %v33 = vld [vmem:[%s1 + $0x8] sm:$0xff]
  %v34 = vld [vmem:[%s1 + $0x10] sm:$0xff]
  %v35 = vld [vmem:[%s1 + $0x18] sm:$0xff]
  %vm36 = vcmask 261120
  %v38 = vsel %vm36, %v29, 0
  %v41 = vsel %vm36, %v30, 0
  %43 = vmatprep.subr.mxu0 0.0
  %44 = vmatpush1.msra.mxu0 %v32
  %45 = vmatprep.subr.mxu0 0.0
  %46 = vmatpush1.msra.mxu0 %v33
  %47 = vmatprep.subr.mxu0 0.0
  %48 = vmatpush1.msra.mxu0 %v34
  %49 = vmatprep.subr.mxu0 0.0
  %50 = vmatpush1.msra.mxu0 %v35
  %51 = vmatprep.subr.mxu0 0.0
  %52 = vmatpush1.msra.mxu0 0.0
  %53 = vmatprep.subr.mxu0 0.0
  %54 = vmatpush1.msra.mxu0 0.0
  %55 = vmatprep.subr.mxu0 0.0
  %56 = vmatpush1.msra.mxu0 0.0
  %57 = vmatprep.subr.mxu0 0.0
  %58 = vmatpush1.msra.mxu0 0.0
  %59 = vmatprep.subr.mxu0 0.0
  %60 = vmatpush1.msra.mxu0 0.0
  %61 = vmatprep.subr.mxu0 0.0
  %62 = vmatpush1.msra.mxu0 0.0
  %63 = vmatprep.subr.mxu0 0.0
  %64 = vmatpush1.msra.mxu0 0.0
  %65 = vmatprep.subr.mxu0 0.0
  %66 = vmatpush1.msra.mxu0 0.0
  %67 = vmatprep.subr.mxu0 0.0
  %68 = vmatpush1.msra.mxu0 0.0
  %69 = vmatprep.subr.mxu0 0.0
  %70 = vmatpush1.msra.mxu0 0.0
  %71 = vmatprep.subr.mxu0 0.0
  %72 = vmatpush1.msra.mxu0 0.0
  %73 = vmatprep.subr.mxu0 0.0
  %74 = vmatpush1.msra.mxu0 0.0
  %75 = vmatprep.subr.mxu0 0.0
  %76 = vmatpush1.msra.mxu0 0.0
  %77 = vmatprep.subr.mxu0 0.0
  %78 = vmatpush1.msra.mxu0 0.0
  %79 = vmatprep.subr.mxu0 0.0
  %80 = vmatpush1.msra.mxu0 0.0
  %81 = vmatprep.subr.mxu0 0.0
  %82 = vmatpush1.msra.mxu0 0.0
  %83 = vmatprep.subr.mxu0 0.0
  %84 = vmatpush1.msra.mxu0 0.0
  %85 = vmatprep.subr.mxu0 0.0
  %86 = vmatpush1.msra.mxu0 0.0
  %87 = vmatprep.subr.mxu0 0.0
  %88 = vmatpush1.msra.mxu0 0.0
  %89 = vmatprep.subr.mxu0 0.0
  %90 = vmatpush1.msra.mxu0 0.0
  %91 = vmatprep.subr.mxu0 0.0
  %92 = vmatpush1.msra.mxu0 0.0
  %93 = vmatprep.subr.mxu0 0.0
  %94 = vmatpush1.msra.mxu0 0.0
  %95 = vmatprep.subr.mxu0 0.0
  %96 = vmatpush1.msra.mxu0 0.0
  %97 = vmatprep.subr.mxu0 0.0
  %98 = vmatpush1.msra.mxu0 0.0
  %99 = vmatprep.subr.mxu0 0.0
  %100 = vmatpush1.msra.mxu0 0.0
  %101 = vmatprep.subr.mxu0 0.0
  %102 = vmatpush1.msra.mxu0 0.0
  %103 = vmatprep.subr.mxu0 0.0
  %104 = vmatpush1.msra.mxu0 0.0
  %105 = vmatprep.subr.mxu0 0.0
  %106 = vmatpush1.msra.mxu0 0.0
  %107 = vmatprep.mubr.f32.mxu0 0.0
  %108 = vmatmul.mubr.f32.gmra.mrb[0].mxu0 %v38
  %v109 = vpop.f32.mrb[0].mxu0
  %v110 = vadd.f32 0.0, %v109
  %v111 = vpop.f32.mrb[0].mxu0
  %112 = vmatprep.mubr.f32.mxu0 0.0
  %113 = vmatmul.mubr.f32.gmra.mrb[0].mxu0 %v41
  %v114 = vpop.f32.mrb[0].mxu0
  %v115 = vadd.f32 0.0, %v114
  %v116 = vpop.f32.mrb[0].mxu0
  %117 = vdwg.mxu0
  %vm118 = vcmp.gt.f32.partialorder %v110, 0.0
  %vm119 = vcmp.gt.f32.partialorder %v115, 0.0
  %v121 = vlaneseq
  %v122 = vshrl.u32 %v121, 7
  %v123 = vsub.s32 0, %v122
  %v124 = vrot.slane %v31, %v123
  %125 = vset.pattern.permute.xlu0 0
  %126 = vperm.xlu0 %125, %v124
  %v127 = vpop.permute.xlu0 %126
  %v129 = vmul.f32 %v127, %v110
  %v130 = vmul.f32 %v127, %v115
  %v131 = vsel %vm118, %v110, %v129
  %v132 = vsel %vm119, %v115, %v130
  %v133 = vsel %vm36, %v131, 0.0
  %vm134 = vcmask 254976
  %v135 = vsel %vm134, %v132, 0.0
  %v136 = vadd.f32 %v133, %v135
  %v137 = vrot.slane %v136, 4
  %v138 = vadd.f32 %v136, %v137
  %v139 = vrot.slane %v138, 2
  %v140 = vadd.f32 %v138, %v139
  %v141 = vrot.slane %v140, 1
  %v142 = vadd.f32 %v140, %v141
  %v143 = vmul.f32 %v131, %v131
  %v144 = vmul.f32 %v132, %v132
  %v145 = vsel %vm36, %v143, 0.0
  %v146 = vsel %vm134, %v144, 0.0
  %v147 = vadd.f32 %v145, %v146
  %v148 = vrot.slane %v147, 4
  %v149 = vadd.f32 %v147, %v148
  %v150 = vrot.slane %v149, 2
  %v151 = vadd.f32 %v149, %v150
  %v152 = vrot.slane %v151, 1
  %v153 = vadd.f32 %v151, %v152
  %v154 = vmul.f32 %v142, 0.1
  %v155 = vmul.f32 %v153, 0.1
  %v156 = vmul.f32 %v154, %v154
  %v157 = vsub.f32 %v155, %v156
  %v158 = vsub.f32 %v131, %v154
  %v159 = vsub.f32 %v132, %v154
  %v160 = vadd.f32 %v157, 1e-05
  %v161 = vrsqrt.pop %v160
  %v162 = vmul.f32 %v158, %v161
  %v163 = vmul.f32 %v159, %v161
  %v164 = vld [vmem:[%s4] sm:$0x1]
  %v166 = vlaneseq
  %v167 = vshrl.u32 %v166, 7
  %v168 = vsub.s32 0, %v167
  %v169 = vrot.slane %v164, %v168
  %v171 = vmul.f32 %v162, %v169
  %v172 = vmul.f32 %v163, %v169
  %v173 = vld [vmem:[%s5] sm:$0x1]
  %v175 = vlaneseq
  %v176 = vshrl.u32 %v175, 7
  %v177 = vsub.s32 0, %v176
  %v178 = vrot.slane %v173, %v177
  %v180 = vadd.f32 %v171, %v178
  %v181 = vadd.f32 %v172, %v178
  %v182 = vld [vmem:[%s2] sm:$0xff]
  %v183 = vld [vmem:[%s2 + $0x8] sm:$0xff]
  %v184 = vld [vmem:[%s2 + $0x10] sm:$0xff]
  %v185 = vld [vmem:[%s2 + $0x18] sm:$0xff]
  %v187 = vsel %vm36, %v180, 0
  %v190 = vsel %vm36, %v181, 0
  %192 = vmatprep.subr.mxu0 0.0
  %193 = vmatpush1.msra.mxu0 %v182
  %194 = vmatprep.subr.mxu0 0.0
  %195 = vmatpush1.msra.mxu0 %v183
  %196 = vmatprep.subr.mxu0 0.0
  %197 = vmatpush1.msra.mxu0 %v184
  %198 = vmatprep.subr.mxu0 0.0
  %199 = vmatpush1.msra.mxu0 %v185
  %200 = vmatprep.subr.mxu0 0.0
  %201 = vmatpush1.msra.mxu0 0.0
  %202 = vmatprep.subr.mxu0 0.0
  %203 = vmatpush1.msra.mxu0 0.0
  %204 = vmatprep.subr.mxu0 0.0
  %205 = vmatpush1.msra.mxu0 0.0
  %206 = vmatprep.subr.mxu0 0.0
  %207 = vmatpush1.msra.mxu0 0.0
  %208 = vmatprep.subr.mxu0 0.0
  %209 = vmatpush1.msra.mxu0 0.0
  %210 = vmatprep.subr.mxu0 0.0
  %211 = vmatpush1.msra.mxu0 0.0
  %212 = vmatprep.subr.mxu0 0.0
  %213 = vmatpush1.msra.mxu0 0.0
  %214 = vmatprep.subr.mxu0 0.0
  %215 = vmatpush1.msra.mxu0 0.0
  %216 = vmatprep.subr.mxu0 0.0
  %217 = vmatpush1.msra.mxu0 0.0
  %218 = vmatprep.subr.mxu0 0.0
  %219 = vmatpush1.msra.mxu0 0.0
  %220 = vmatprep.subr.mxu0 0.0
  %221 = vmatpush1.msra.mxu0 0.0
  %222 = vmatprep.subr.mxu0 0.0
  %223 = vmatpush1.msra.mxu0 0.0
  %224 = vmatprep.subr.mxu0 0.0
  %225 = vmatpush1.msra.mxu0 0.0
  %226 = vmatprep.subr.mxu0 0.0
  %227 = vmatpush1.msra.mxu0 0.0
  %228 = vmatprep.subr.mxu0 0.0
  %229 = vmatpush1.msra.mxu0 0.0
  %230 = vmatprep.subr.mxu0 0.0
  %231 = vmatpush1.msra.mxu0 0.0
  %232 = vmatprep.subr.mxu0 0.0
  %233 = vmatpush1.msra.mxu0 0.0
  %234 = vmatprep.subr.mxu0 0.0
  %235 = vmatpush1.msra.mxu0 0.0
  %236 = vmatprep.subr.mxu0 0.0
  %237 = vmatpush1.msra.mxu0 0.0
  %238 = vmatprep.subr.mxu0 0.0
  %239 = vmatpush1.msra.mxu0 0.0
  %240 = vmatprep.subr.mxu0 0.0
  %241 = vmatpush1.msra.mxu0 0.0
  %242 = vmatprep.subr.mxu0 0.0
  %243 = vmatpush1.msra.mxu0 0.0
  %244 = vmatprep.subr.mxu0 0.0
  %245 = vmatpush1.msra.mxu0 0.0
  %246 = vmatprep.subr.mxu0 0.0
  %247 = vmatpush1.msra.mxu0 0.0
  %248 = vmatprep.subr.mxu0 0.0
  %249 = vmatpush1.msra.mxu0 0.0
  %250 = vmatprep.subr.mxu0 0.0
  %251 = vmatpush1.msra.mxu0 0.0
  %252 = vmatprep.subr.mxu0 0.0
  %253 = vmatpush1.msra.mxu0 0.0
  %254 = vmatprep.subr.mxu0 0.0
  %255 = vmatpush1.msra.mxu0 0.0
  %256 = vmatprep.mubr.f32.mxu0 0.0
  %257 = vmatmul.mubr.f32.gmra.mrb[0].mxu0 %v187
  %v258 = vpop.f32.mrb[0].mxu0
  %v259 = vadd.f32 0.0, %v258
  %v260 = vpop.f32.mrb[0].mxu0
  %261 = vmatprep.mubr.f32.mxu0 0.0
  %262 = vmatmul.mubr.f32.gmra.mrb[0].mxu0 %v190
  %v263 = vpop.f32.mrb[0].mxu0
  %v264 = vadd.f32 0.0, %v263
  %v265 = vpop.f32.mrb[0].mxu0
  %266 = vdwg.mxu0
  %v267 = vsel %vm36, %v259, 0.0
  %v268 = vsel %vm134, %v264, 0.0
  %v269 = vadd.f32 %v267, %v268
  %v270 = vrot.slane %v269, 4
  %v271 = vadd.f32 %v269, %v270
  %v272 = vrot.slane %v271, 2
  %v273 = vadd.f32 %v271, %v272
  %v274 = vrot.slane %v273, 1
  %v275 = vadd.f32 %v273, %v274
  %v276 = vmul.f32 %v259, %v259
  %v277 = vmul.f32 %v264, %v264
  %v278 = vsel %vm36, %v276, 0.0
  %v279 = vsel %vm134, %v277, 0.0
  %v280 = vadd.f32 %v278, %v279
  %v281 = vrot.slane %v280, 4
  %v282 = vadd.f32 %v280, %v281
  %v283 = vrot.slane %v282, 2
  %v284 = vadd.f32 %v282, %v283
  %v285 = vrot.slane %v284, 1
  %v286 = vadd.f32 %v284, %v285
  %v287 = vmul.f32 %v275, 0.1
  %v288 = vmul.f32 %v286, 0.1
  %v289 = vmul.f32 %v287, %v287
  %v290 = vsub.f32 %v288, %v289
  %v291 = vsub.f32 %v259, %v287
  %v292 = vsub.f32 %v264, %v287
  %v293 = vadd.f32 %v290, 1e-05
  %v294 = vrsqrt.pop %v293
  %v295 = vmul.f32 %v291, %v294
  %v296 = vmul.f32 %v292, %v294
  %v297 = vld [vmem:[%s6] sm:$0x1]
  %v299 = vlaneseq
  %v300 = vshrl.u32 %v299, 7
  %v301 = vsub.s32 0, %v300
  %v302 = vrot.slane %v297, %v301
  %v304 = vmul.f32 %v295, %v302
  %v305 = vmul.f32 %v296, %v302
  %v306 = vld [vmem:[%s7] sm:$0x1]
  %v308 = vlaneseq
  %v309 = vshrl.u32 %v308, 7
  %v310 = vsub.s32 0, %v309
  %v311 = vrot.slane %v306, %v310
  %v313 = vadd.f32 %v304, %v311
  %v314 = vadd.f32 %v305, %v311
  %v315 = vadd.f32 %v313, %v29
  %v316 = vadd.f32 %v314, %v30
  %vm317 = vcmp.gt.f32.partialorder %v315, 0.0
  %vm318 = vcmp.gt.f32.partialorder %v316, 0.0
  %319 = vset.pattern.permute.xlu0 1
  %320 = vperm.xlu0 %319, %v124
  %v321 = vpop.permute.xlu0 %320
  %v323 = vmul.f32 %v321, %v315
  %v324 = vmul.f32 %v321, %v316
  %v325 = vsel %vm317, %v315, %v323
  %v326 = vsel %vm318, %v316, %v324
  %327 = vst.msk [vmem:[%s8] sm:$0xff] %vm36, %v325
  %328 = vst.msk [vmem:[%s8 + $0x8] sm:$0x3] %vm134, %v326
  // Predicated region
  $region34: #{spex_forward.12} parent=0 // pred_check
    _
  $region35: #{spex_forward.12} parent=0 // pred_check_branch
    %330 = sbr.rel (0) target = $region37
  $region36: #{spex_forward.12} parent=0 // pred_region
    _
  $region37: #{spex_forward.12} parent=0 // pred_fallthru
    _
  // Predicated region
  $region38: #{spex_forward.12} parent=0 // pred_check
    _
  $region39: #{spex_forward.12} parent=0 // pred_check_branch
    %332 = sbr.rel (0) target = $region41
  $region40: #{spex_forward.12} parent=0 // pred_region
    _
  $region41: #{spex_forward.12} parent=0 // pred_fallthru
    _

// kernel: spex_forward.8
$region0: #{spex_forward.8}
  #allocation0 [shape = 'u32[]', space=smem, size = 0x4, offset = 0x4, fixed_abs, tag = 'smem constant byte address 0x4 - core index']
  #allocation1 [shape = 'u32[144,128]{1,0:T(1,128)}', space=vmem, size = 0x12000, scoped, tag = 'internal scratch']
  %s0 = inlined_call_operand.vmem [shape: f32[112,48], index: 0, kind: input, shape index: {}]
  %s1 = inlined_call_operand.vmem [shape: f32[1,48], index: 1, kind: input, shape index: {}]
  %s2 = inlined_call_operand.vmem [shape: f32[1,48], index: 2, kind: input, shape index: {}]
  %s3 = inlined_call_operand.vmem [shape: f32[48,32], index: 3, kind: input, shape index: {}]
  %s4 = inlined_call_operand.vmem [shape: f32[1,32], index: 4, kind: input, shape index: {}]
  %s5 = inlined_call_operand.vmem [shape: f32[112,32], index: 5, kind: output, shape index: {}]
  %s6 = sld [smem:[#allocation0]]
  $region30: #{spex_forward.8} parent=0
    _
  %s8 = ssub.s32 1, %s6
  %s9 = scalar_select 0, %s8, %s6
  // Predicated region
  $region2: #{spex_forward.8} parent=0 // pred_check
    _
  $region3: #{spex_forward.8} parent=0 // pred_check_branch
    %11 = sbr.rel (0) target = $region5
  $region4: #{spex_forward.8} parent=0 // pred_region
    _
  $region5: #{spex_forward.8} parent=0 // pred_fallthru
    _
  // Predicated region
  $region6: #{spex_forward.8} parent=0 // pred_check
    _
  $region7: #{spex_forward.8} parent=0 // pred_check_branch
    %13 = sbr.rel (0) target = $region9
  $region8: #{spex_forward.8} parent=0 // pred_region
    _
  $region9: #{spex_forward.8} parent=0 // pred_fallthru
    _
  // Predicated region
  $region10: #{spex_forward.8} parent=0 // pred_check
    _
  $region11: #{spex_forward.8} parent=0 // pred_check_branch
    %15 = sbr.rel (0) target = $region13
  $region12: #{spex_forward.8} parent=0 // pred_region
    _
  $region13: #{spex_forward.8} parent=0 // pred_fallthru
    _
  // Predicated region
  $region14: #{spex_forward.8} parent=0 // pred_check
    _
  $region15: #{spex_forward.8} parent=0 // pred_check_branch
    %17 = sbr.rel (0) target = $region17
  $region16: #{spex_forward.8} parent=0 // pred_region
    _
  $region17: #{spex_forward.8} parent=0 // pred_fallthru
    _
  // Predicated region
  $region18: #{spex_forward.8} parent=0 // pred_check
    _
  $region19: #{spex_forward.8} parent=0 // pred_check_branch
    %19 = sbr.rel (0) target = $region21
  $region20: #{spex_forward.8} parent=0 // pred_region
    _
  $region21: #{spex_forward.8} parent=0 // pred_fallthru
    _
  %v20 = vld [vmem:[%s0] sm:$0xff]
  %v21 = vld [vmem:[%s0 + $0x8] sm:$0xff]
  %v22 = vld [vmem:[%s0 + $0x10] sm:$0xff]
  %v23 = vld [vmem:[%s0 + $0x18] sm:$0xff]
  %v24 = vld [vmem:[%s0 + $0x20] sm:$0xff]
  %v25 = vld [vmem:[%s0 + $0x28] sm:$0xff]
  %v26 = vld [vmem:[%s0 + $0x30] sm:$0xff]
  %v27 = vld [vmem:[%s0 + $0x38] sm:$0xff]
  %v28 = vld [vmem:[%s0 + $0x40] sm:$0xff]
  %v29 = vld [vmem:[%s0 + $0x48] sm:$0xff]
  %v30 = vld [vmem:[%s0 + $0x50] sm:$0xff]
  %v31 = vld [vmem:[%s0 + $0x58] sm:$0xff]
  %v32 = vld [vmem:[%s0 + $0x60] sm:$0xff]
  %v33 = vld [vmem:[%s0 + $0x68] sm:$0xff]
  %vm34 = vcmask 392192
  %v35 = vsel %vm34, %v20, 0.0
  %36 = vadd.xlane.f32.xlu0 %v35
  %v37 = vpop.xlane.xlu0 %36
  %v38 = vsel %vm34, %v21, 0.0
  %39 = vadd.xlane.f32.xlu0 %v38
  %v40 = vpop.xlane.xlu0 %39
  %v41 = vsel %vm34, %v22, 0.0
  %42 = vadd.xlane.f32.xlu0 %v41
  %v43 = vpop.xlane.xlu0 %42
  %v44 = vsel %vm34, %v23, 0.0
  %45 = vadd.xlane.f32.xlu0 %v44
  %v46 = vpop.xlane.xlu0 %45
  %v47 = vsel %vm34, %v24, 0.0
  %48 = vadd.xlane.f32.xlu0 %v47
  %v49 = vpop.xlane.xlu0 %48
  %v50 = vsel %vm34, %v25, 0.0
  %51 = vadd.xlane.f32.xlu0 %v50
  %v52 = vpop.xlane.xlu0 %51
  %v53 = vsel %vm34, %v26, 0.0
  %54 = vadd.xlane.f32.xlu0 %v53
  %v55 = vpop.xlane.xlu0 %54
  %v56 = vsel %vm34, %v27, 0.0
  %57 = vadd.xlane.f32.xlu0 %v56
  %v58 = vpop.xlane.xlu0 %57
  %v59 = vsel %vm34, %v28, 0.0
  %60 = vadd.xlane.f32.xlu0 %v59
  %v61 = vpop.xlane.xlu0 %60
  %v62 = vsel %vm34, %v29, 0.0
  %63 = vadd.xlane.f32.xlu0 %v62
  %v64 = vpop.xlane.xlu0 %63
  %v65 = vsel %vm34, %v30, 0.0
  %66 = vadd.xlane.f32.xlu0 %v65
  %v67 = vpop.xlane.xlu0 %66
  %v68 = vsel %vm34, %v31, 0.0
  %69 = vadd.xlane.f32.xlu0 %v68
  %v70 = vpop.xlane.xlu0 %69
  %v71 = vsel %vm34, %v32, 0.0
  %72 = vadd.xlane.f32.xlu0 %v71
  %v73 = vpop.xlane.xlu0 %72
  %v74 = vsel %vm34, %v33, 0.0
  %75 = vadd.xlane.f32.xlu0 %v74
  %v76 = vpop.xlane.xlu0 %75
  %v77 = vrcp.pop 48.0
  %v78 = vmul.f32 %v37, %v77
  %v79 = vmul.f32 %v40, %v77
  %v80 = vmul.f32 %v43, %v77
  %v81 = vmul.f32 %v46, %v77
  %v82 = vmul.f32 %v49, %v77
  %v83 = vmul.f32 %v52, %v77
  %v84 = vmul.f32 %v55, %v77
  %v85 = vmul.f32 %v58, %v77
  %v86 = vmul.f32 %v61, %v77
  %v87 = vmul.f32 %v64, %v77
  %v88 = vmul.f32 %v67, %v77
  %v89 = vmul.f32 %v70, %v77
  %v90 = vmul.f32 %v73, %v77
  %v91 = vmul.f32 %v76, %v77
  %v92 = vsub.f32 %v20, %v78
  %v93 = vsub.f32 %v21, %v79
  %v94 = vsub.f32 %v22, %v80
  %v95 = vsub.f32 %v23, %v81
  %v96 = vsub.f32 %v24, %v82
  %v97 = vsub.f32 %v25, %v83
  %v98 = vsub.f32 %v26, %v84
  %v99 = vsub.f32 %v27, %v85
  %v100 = vsub.f32 %v28, %v86
  %v101 = vsub.f32 %v29, %v87
  %v102 = vsub.f32 %v30, %v88
  %v103 = vsub.f32 %v31, %v89
  %v104 = vsub.f32 %v32, %v90
  %v105 = vsub.f32 %v33, %v91
  %v106 = vmul.f32 %v92, %v92
  %v107 = vmul.f32 %v93, %v93
  %v108 = vmul.f32 %v94, %v94
  %v109 = vmul.f32 %v95, %v95
  %v110 = vmul.f32 %v96, %v96
  %v111 = vmul.f32 %v97, %v97
  %v112 = vmul.f32 %v98, %v98
  %v113 = vmul.f32 %v99, %v99
  %v114 = vmul.f32 %v100, %v100
  %v115 = vmul.f32 %v101, %v101
  %v116 = vmul.f32 %v102, %v102
  %v117 = vmul.f32 %v103, %v103
  %v118 = vmul.f32 %v104, %v104
  %v119 = vmul.f32 %v105, %v105
  %v120 = vsel %vm34, %v106, 0.0
  %121 = vadd.xlane.f32.xlu0 %v120
  %v122 = vpop.xlane.xlu0 %121
  %v123 = vsel %vm34, %v107, 0.0
  %124 = vadd.xlane.f32.xlu0 %v123
  %v125 = vpop.xlane.xlu0 %124
  %v126 = vsel %vm34, %v108, 0.0
  %127 = vadd.xlane.f32.xlu0 %v126
  %v128 = vpop.xlane.xlu0 %127
  %v129 = vsel %vm34, %v109, 0.0
  %130 = vadd.xlane.f32.xlu0 %v129
  %v131 = vpop.xlane.xlu0 %130
  %v132 = vsel %vm34, %v110, 0.0
  %133 = vadd.xlane.f32.xlu0 %v132
  %v134 = vpop.xlane.xlu0 %133
  %v135 = vsel %vm34, %v111, 0.0
  %136 = vadd.xlane.f32.xlu0 %v135
  %v137 = vpop.xlane.xlu0 %136
  %v138 = vsel %vm34, %v112, 0.0
  %139 = vadd.xlane.f32.xlu0 %v138
  %v140 = vpop.xlane.xlu0 %139
  %v141 = vsel %vm34, %v113, 0.0
  %142 = vadd.xlane.f32.xlu0 %v141
  %v143 = vpop.xlane.xlu0 %142
  %v144 = vsel %vm34, %v114, 0.0
  %145 = vadd.xlane.f32.xlu0 %v144
  %v146 = vpop.xlane.xlu0 %145
  %v147 = vsel %vm34, %v115, 0.0
  %148 = vadd.xlane.f32.xlu0 %v147
  %v149 = vpop.xlane.xlu0 %148
  %v150 = vsel %vm34, %v116, 0.0
  %151 = vadd.xlane.f32.xlu0 %v150
  %v152 = vpop.xlane.xlu0 %151
  %v153 = vsel %vm34, %v117, 0.0
  %154 = vadd.xlane.f32.xlu0 %v153
  %v155 = vpop.xlane.xlu0 %154
  %v156 = vsel %vm34, %v118, 0.0
  %157 = vadd.xlane.f32.xlu0 %v156
  %v158 = vpop.xlane.xlu0 %157
  %v159 = vsel %vm34, %v119, 0.0
  %160 = vadd.xlane.f32.xlu0 %v159
  %v161 = vpop.xlane.xlu0 %160
  %v162 = vmul.f32 %v122, %v77
  %v163 = vmul.f32 %v125, %v77
  %v164 = vmul.f32 %v128, %v77
  %v165 = vmul.f32 %v131, %v77
  %v166 = vmul.f32 %v134, %v77
  %v167 = vmul.f32 %v137, %v77
  %v168 = vmul.f32 %v140, %v77
  %v169 = vmul.f32 %v143, %v77
  %v170 = vmul.f32 %v146, %v77
  %v171 = vmul.f32 %v149, %v77
  %v172 = vmul.f32 %v152, %v77
  %v173 = vmul.f32 %v155, %v77
  %v174 = vmul.f32 %v158, %v77
  %v175 = vmul.f32 %v161, %v77
  %v176 = vadd.f32 %v162, 1e-05
  %v177 = vadd.f32 %v163, 1e-05
  %v178 = vadd.f32 %v164, 1e-05
  %v179 = vadd.f32 %v165, 1e-05
  %v180 = vadd.f32 %v166, 1e-05
  %v181 = vadd.f32 %v167, 1e-05
  %v182 = vadd.f32 %v168, 1e-05
  %v183 = vadd.f32 %v169, 1e-05
  %v184 = vadd.f32 %v170, 1e-05
  %v185 = vadd.f32 %v171, 1e-05
  %v186 = vadd.f32 %v172, 1e-05
  %v187 = vadd.f32 %v173, 1e-05
  %v188 = vadd.f32 %v174, 1e-05
  %v189 = vadd.f32 %v175, 1e-05
  %v190 = vrsqrt.pop %v176
  %v191 = vrsqrt.pop %v177
  %v192 = vrsqrt.pop %v178
  %v193 = vrsqrt.pop %v179
  %v194 = vrsqrt.pop %v180
  %v195 = vrsqrt.pop %v181
  %v196 = vrsqrt.pop %v182
  %v197 = vrsqrt.pop %v183
  %v198 = vrsqrt.pop %v184
  %v199 = vrsqrt.pop %v185
  %v200 = vrsqrt.pop %v186
  %v201 = vrsqrt.pop %v187
  %v202 = vrsqrt.pop %v188
  %v203 = vrsqrt.pop %v189
  %v204 = vmul.f32 %v92, %v190
  %v205 = vmul.f32 %v93, %v191
  %v206 = vmul.f32 %v94, %v192
  %v207 = vmul.f32 %v95, %v193
  %v208 = vmul.f32 %v96, %v194
  %v209 = vmul.f32 %v97, %v195
  %v210 = vmul.f32 %v98, %v196
  %v211 = vmul.f32 %v99, %v197
  %v212 = vmul.f32 %v100, %v198
  %v213 = vmul.f32 %v101, %v199
  %v214 = vmul.f32 %v102, %v200
  %v215 = vmul.f32 %v103, %v201
  %v216 = vmul.f32 %v104, %v202
  %v217 = vmul.f32 %v105, %v203
  %v218 = vld [vmem:[%s1] sm:$0x1]
  %v220 = vlaneseq
  %v221 = vshrl.u32 %v220, 7
  %v222 = vsub.s32 0, %v221
  %v223 = vrot.slane %v218, %v222
  %v225 = vmul.f32 %v204, %v223
  %v226 = vmul.f32 %v205, %v223
  %v227 = vmul.f32 %v206, %v223
  %v228 = vmul.f32 %v207, %v223
  %v229 = vmul.f32 %v208, %v223
  %v230 = vmul.f32 %v209, %v223
  %v231 = vmul.f32 %v210, %v223
  %v232 = vmul.f32 %v211, %v223
  %v233 = vmul.f32 %v212, %v223
  %v234 = vmul.f32 %v213, %v223
  %v235 = vmul.f32 %v214, %v223
  %v236 = vmul.f32 %v215, %v223
  %v237 = vmul.f32 %v216, %v223
  %v238 = vmul.f32 %v217, %v223
  %v239 = vld [vmem:[%s2] sm:$0x1]
  %v241 = vlaneseq
  %v242 = vshrl.u32 %v241, 7
  %v243 = vsub.s32 0, %v242
  %v244 = vrot.slane %v239, %v243
  %v246 = vadd.f32 %v225, %v244
  %v247 = vadd.f32 %v226, %v244
  %v248 = vadd.f32 %v227, %v244
  %v249 = vadd.f32 %v228, %v244
  %v250 = vadd.f32 %v229, %v244
  %v251 = vadd.f32 %v230, %v244
  %v252 = vadd.f32 %v231, %v244
  %v253 = vadd.f32 %v232, %v244
  %v254 = vadd.f32 %v233, %v244
  %v255 = vadd.f32 %v234, %v244
  %v256 = vadd.f32 %v235, %v244
  %v257 = vadd.f32 %v236, %v244
  %v258 = vadd.f32 %v237, %v244
  %v259 = vadd.f32 %v238, %v244
  %v260 = vld [vmem:[%s3] sm:$0xff]
  %v261 = vld [vmem:[%s3 + $0x8] sm:$0xff]
  %v262 = vld [vmem:[%s3 + $0x10] sm:$0xff]
  %v263 = vld [vmem:[%s3 + $0x18] sm:$0xff]
  %v264 = vld [vmem:[%s3 + $0x20] sm:$0xff]
  %v265 = vld [vmem:[%s3 + $0x28] sm:$0xff]
  %v266 = vld [vmem:[%s4] sm:$0x1]
  %v268 = vlaneseq
  %v269 = vshrl.u32 %v268, 7
  %v270 = vsub.s32 0, %v269
  %v271 = vrot.slane %v266, %v270
  %v274 = vsel %vm34, %v246, 0
  %v277 = vsel %vm34, %v247, 0
  %v280 = vsel %vm34, %v248, 0
  %v283 = vsel %vm34, %v249, 0
  %v286 = vsel %vm34, %v250, 0
  %v289 = vsel %vm34, %v251, 0
  %v292 = vsel %vm34, %v252, 0
  %v295 = vsel %vm34, %v253, 0
  %v298 = vsel %vm34, %v254, 0
  %v301 = vsel %vm34, %v255, 0
  %v304 = vsel %vm34, %v256, 0
  %v307 = vsel %vm34, %v257, 0
  %v310 = vsel %vm34, %v258, 0
  %v313 = vsel %vm34, %v259, 0
  %315 = vmatprep.subr.mxu0 0.0
  %316 = vmatpush1.msra.mxu0 %v260
  %317 = vmatprep.subr.mxu0 0.0
  %318 = vmatpush1.msra.mxu0 %v261
  %319 = vmatprep.subr.mxu0 0.0
  %320 = vmatpush1.msra.mxu0 %v262
  %321 = vmatprep.subr.mxu0 0.0
  %322 = vmatpush1.msra.mxu0 %v263
  %323 = vmatprep.subr.mxu0 0.0
  %324 = vmatpush1.msra.mxu0 %v264
  %325 = vmatprep.subr.mxu0 0.0
  %326 = vmatpush1.msra.mxu0 %v265
  %327 = vmatprep.subr.mxu0 0.0
  %328 = vmatpush1.msra.mxu0 0.0
  %329 = vmatprep.subr.mxu0 0.0
  %330 = vmatpush1.msra.mxu0 0.0
  %331 = vmatprep.subr.mxu0 0.0
  %332 = vmatpush1.msra.mxu0 0.0
  %333 = vmatprep.subr.mxu0 0.0
  %334 = vmatpush1.msra.mxu0 0.0
  %335 = vmatprep.subr.mxu0 0.0
  %336 = vmatpush1.msra.mxu0 0.0
  %337 = vmatprep.subr.mxu0 0.0
  %338 = vmatpush1.msra.mxu0 0.0
  %339 = vmatprep.subr.mxu0 0.0
  %340 = vmatpush1.msra.mxu0 0.0
  %341 = vmatprep.subr.mxu0 0.0
  %342 = vmatpush1.msra.mxu0 0.0
  %343 = vmatprep.subr.mxu0 0.0
  %344 = vmatpush1.msra.mxu0 0.0
  %345 = vmatprep.subr.mxu0 0.0
  %346 = vmatpush1.msra.mxu0 0.0
  %347 = vmatprep.subr.mxu0 0.0
  %348 = vmatpush1.msra.mxu0 0.0
  %349 = vmatprep.subr.mxu0 0.0
  %350 = vmatpush1.msra.mxu0 0.0
  %351 = vmatprep.subr.mxu0 0.0
  %352 = vmatpush1.msra.mxu0 0.0
  %353 = vmatprep.subr.mxu0 0.0
  %354 = vmatpush1.msra.mxu0 0.0
  %355 = vmatprep.subr.mxu0 0.0
  %356 = vmatpush1.msra.mxu0 0.0
  %357 = vmatprep.subr.mxu0 0.0
  %358 = vmatpush1.msra.mxu0 0.0
  %359 = vmatprep.subr.mxu0 0.0
  %360 = vmatpush1.msra.mxu0 0.0
  %361 = vmatprep.subr.mxu0 0.0
  %362 = vmatpush1.msra.mxu0 0.0
  %363 = vmatprep.subr.mxu0 0.0
  %364 = vmatpush1.msra.mxu0 0.0
  %365 = vmatprep.subr.mxu0 0.0
  %366 = vmatpush1.msra.mxu0 0.0
  %367 = vmatprep.subr.mxu0 0.0
  %368 = vmatpush1.msra.mxu0 0.0
  %369 = vmatprep.subr.mxu0 0.0
  %370 = vmatpush1.msra.mxu0 0.0
  %371 = vmatprep.subr.mxu0 0.0
  %372 = vmatpush1.msra.mxu0 0.0
  %373 = vmatprep.subr.mxu0 0.0
  %374 = vmatpush1.msra.mxu0 0.0
  %375 = vmatprep.subr.mxu0 0.0
  %376 = vmatpush1.msra.mxu0 0.0
  %377 = vmatprep.subr.mxu0 0.0
  %378 = vmatpush1.msra.mxu0 0.0
  %379 = vmatprep.mubr.f32.mxu0 0.0
  %380 = vmatmul.mubr.f32.gmra.mrb[0].mxu0 %v274
  %v381 = vpop.f32.mrb[0].mxu0
  %v382 = vadd.f32 %v271, %v381
  %v383 = vpop.f32.mrb[0].mxu0
  %384 = vmatprep.mubr.f32.mxu0 0.0
  %385 = vmatmul.mubr.f32.gmra.mrb[0].mxu0 %v277
  %v386 = vpop.f32.mrb[0].mxu0
  %v387 = vadd.f32 %v271, %v386
  %v388 = vpop.f32.mrb[0].mxu0
  %389 = vmatprep.mubr.f32.mxu0 0.0
  %390 = vmatmul.mubr.f32.gmra.mrb[0].mxu0 %v280
  %v391 = vpop.f32.mrb[0].mxu0
  %v392 = vadd.f32 %v271, %v391
  %v393 = vpop.f32.mrb[0].mxu0
  %394 = vmatprep.mubr.f32.mxu0 0.0
  %395 = vmatmul.mubr.f32.gmra.mrb[0].mxu0 %v283
  %v396 = vpop.f32.mrb[0].mxu0
  %v397 = vadd.f32 %v271, %v396
  %v398 = vpop.f32.mrb[0].mxu0
  %399 = vmatprep.mubr.f32.mxu0 0.0
  %400 = vmatmul.mubr.f32.gmra.mrb[0].mxu0 %v286
  %v401 = vpop.f32.mrb[0].mxu0
  %v402 = vadd.f32 %v271, %v401
  %v403 = vpop.f32.mrb[0].mxu0
  %404 = vmatprep.mubr.f32.mxu0 0.0
  %405 = vmatmul.mubr.f32.gmra.mrb[0].mxu0 %v289
  %v406 = vpop.f32.mrb[0].mxu0
  %v407 = vadd.f32 %v271, %v406
  %v408 = vpop.f32.mrb[0].mxu0
  %409 = vmatprep.mubr.f32.mxu0 0.0
  %410 = vmatmul.mubr.f32.gmra.mrb[0].mxu0 %v292
  %v411 = vpop.f32.mrb[0].mxu0
  %v412 = vadd.f32 %v271, %v411
  %v413 = vpop.f32.mrb[0].mxu0
  %414 = vmatprep.mubr.f32.mxu0 0.0
  %415 = vmatmul.mubr.f32.gmra.mrb[0].mxu0 %v295
  %v416 = vpop.f32.mrb[0].mxu0
  %v417 = vadd.f32 %v271, %v416
  %v418 = vpop.f32.mrb[0].mxu0
  %419 = vmatprep.mubr.f32.mxu0 0.0
  %420 = vmatmul.mubr.f32.gmra.mrb[0].mxu0 %v298
  %v421 = vpop.f32.mrb[0].mxu0
  %v422 = vadd.f32 %v271, %v421
  %v423 = vpop.f32.mrb[0].mxu0
  %424 = vmatprep.mubr.f32.mxu0 0.0
  %425 = vmatmul.mubr.f32.gmra.mrb[0].mxu0 %v301
  %v426 = vpop.f32.mrb[0].mxu0
  %v427 = vadd.f32 %v271, %v426
  %v428 = vpop.f32.mrb[0].mxu0
  %429 = vmatprep.mubr.f32.mxu0 0.0
  %430 = vmatmul.mubr.f32.gmra.mrb[0].mxu0 %v304
  %v431 = vpop.f32.mrb[0].mxu0
  %v432 = vadd.f32 %v271, %v431
  %v433 = vpop.f32.mrb[0].mxu0
  %434 = vmatprep.mubr.f32.mxu0 0.0
  %435 = vmatmul.mubr.f32.gmra.mrb[0].mxu0 %v307
  %v436 = vpop.f32.mrb[0].mxu0
  %v437 = vadd.f32 %v271, %v436
  %v438 = vpop.f32.mrb[0].mxu0
  %439 = vmatprep.mubr.f32.mxu0 0.0
  %440 = vmatmul.mubr.f32.gmra.mrb[0].mxu0 %v310
  %v441 = vpop.f32.mrb[0].mxu0
  %v442 = vadd.f32 %v271, %v441
  %v443 = vpop.f32.mrb[0].mxu0
  %444 = vmatprep.mubr.f32.mxu0 0.0
  %445 = vmatmul.mubr.f32.gmra.mrb[0].mxu0 %v313
  %v446 = vpop.f32.mrb[0].mxu0
  %v447 = vadd.f32 %v271, %v446
  %v448 = vpop.f32.mrb[0].mxu0
  %449 = vdwg.mxu0
  %vm450 = vcmask 261120
  %451 = vst.msk [vmem:[%s5] sm:$0xff] %vm450, %v382
  %452 = vst.msk [vmem:[%s5 + $0x8] sm:$0xff] %vm450, %v387
  %453 = vst.msk [vmem:[%s5 + $0x10] sm:$0xff] %vm450, %v392
  %454 = vst.msk [vmem:[%s5 + $0x18] sm:$0xff] %vm450, %v397
  %455 = vst.msk [vmem:[%s5 + $0x20] sm:$0xff] %vm450, %v402
  %456 = vst.msk [vmem:[%s5 + $0x28] sm:$0xff] %vm450, %v407
  %457 = vst.msk [vmem:[%s5 + $0x30] sm:$0xff] %vm450, %v412
  %458 = vst.msk [vmem:[%s5 + $0x38] sm:$0xff] %vm450, %v417
  %459 = vst.msk [vmem:[%s5 + $0x40] sm:$0xff] %vm450, %v422
  %460 = vst.msk [vmem:[%s5 + $0x48] sm:$0xff] %vm450, %v427
  %461 = vst.msk [vmem:[%s5 + $0x50] sm:$0xff] %vm450, %v432
  %462 = vst.msk [vmem:[%s5 + $0x58] sm:$0xff] %vm450, %v437
  %463 = vst.msk [vmem:[%s5 + $0x60] sm:$0xff] %vm450, %v442
  %464 = vst.msk [vmem:[%s5 + $0x68] sm:$0xff] %vm450, %v447
  // Predicated region
  $region22: #{spex_forward.8} parent=0 // pred_check
    _
  $region23: #{spex_forward.8} parent=0 // pred_check_branch
    %466 = sbr.rel (0) target = $region25
  $region24: #{spex_forward.8} parent=0 // pred_region
    _
  $region25: #{spex_forward.8} parent=0 // pred_fallthru
    _
  // Predicated region
  $region26: #{spex_forward.8} parent=0 // pred_check
    _
  $region27: #{spex_forward.8} parent=0 // pred_check_branch
    %468 = sbr.rel (0) target = $region29
  $region28: #{spex_forward.8} parent=0 // pred_region
    _
  $region29: #{spex_forward.8} parent=0 // pred_fallthru
    _

// kernel: spex_forward.13
$region0: #{spex_forward.13}
  #allocation0 [shape = 'u32[]', space=smem, size = 0x4, offset = 0x4, fixed_abs, tag = 'smem constant byte address 0x4 - core index']
  #allocation1 [shape = 'u32[144,128]{1,0:T(1,128)}', space=vmem, size = 0x12000, scoped, tag = 'internal scratch']
  %s0 = inlined_call_operand.vmem [shape: f32[2,56,32], index: 0, kind: input, shape index: {}]
  %s1 = inlined_call_operand.vmem [shape: f32[2,56,48], index: 1, kind: input, shape index: {}]
  %s2 = inlined_call_operand.vmem [shape: f32[2,2,32], index: 2, kind: input, shape index: {}]
  %s3 = inlined_call_operand.vmem [shape: f32[1,4], index: 3, kind: input, shape index: {}]
  %s4 = inlined_call_operand.vmem [shape: f32[2,32,32], index: 4, kind: input, shape index: {}]
  %s5 = inlined_call_operand.vmem [shape: f32[2,1,32], index: 5, kind: input, shape index: {}]
  %s6 = inlined_call_operand.vmem [shape: f32[2,1,32], index: 6, kind: input, shape index: {}]
  %s7 = inlined_call_operand.vmem [shape: f32[2,3,32], index: 7, kind: input, shape index: {}]
  %s8 = inlined_call_operand.vmem [shape: f32[2,1,32], index: 8, kind: input, shape index: {}]
  %s9 = inlined_call_operand.vmem [shape: f32[2,1,32], index: 9, kind: input, shape index: {}]
  %s10 = inlined_call_operand.vmem [shape: f32[2,1,32], index: 10, kind: input, shape index: {}]
  %s11 = inlined_call_operand.vmem [shape: f32[2,32,32], index: 11, kind: input, shape index: {}]
  %s12 = inlined_call_operand.vmem [shape: f32[2,1,32], index: 12, kind: input, shape index: {}]
  %s13 = inlined_call_operand.vmem [shape: f32[32,48], index: 13, kind: input, shape index: {}]
  %s14 = inlined_call_operand.vmem [shape: f32[1,48], index: 14, kind: input, shape index: {}]
  %s15 = inlined_call_operand.vmem [shape: f32[48,48], index: 15, kind: input, shape index: {}]
  %s16 = inlined_call_operand.vmem [shape: f32[2,56,48], index: 16, kind: output, shape index: {}]
  %s17 = sld [smem:[#allocation0]]
  $region97: #{spex_forward.13} parent=0
    _
  %s19 = ssub.s32 1, %s17
  %s20 = scalar_select 0, %s19, %s17
  loop: start=0, step=1, limit=4
  $region2: #{spex_forward.13} parent=0 // loop_pre_header
    _
  $region3: #{spex_forward.13} parent=0 // loop_header
    %s22 = sphi 0, %s26
    %p23 = scmp.ge.s32.totalorder %s22, 4
    %s32 = sphi 0, %s34
    %s35 = sphi 0, %s32
    %s36 = sphi 0, %s35
    %s52 = sphi 0, %s36
    %s58 = sphi 0, %s60
    %s61 = sphi 0, %s58
    %s62 = sphi 0, %s61
    %s78 = sphi 0, %s62
    %s84 = sphi 0, %s86
    %s87 = sphi 0, %s84
    %s88 = sphi 0, %s87
    %s104 = sphi 0, %s88
    %s108 = sphi 0, %s108
    %s110 = sphi 0, %s108
    %s111 = sphi 0, %s110
    %s125 = sphi 0, %s111
    %s129 = sphi 0, %s129
    %s131 = sphi 0, %s129
    %s132 = sphi 0, %s131
    %s146 = sphi 0, %s132
    %s150 = sphi 0, %s150
    %s152 = sphi 0, %s150
    %s153 = sphi 0, %s152
    %s167 = sphi 0, %s153
    %s171 = sphi 0, %s171
    %s173 = sphi 0, %s171
    %s174 = sphi 0, %s173
    %s188 = sphi 0, %s174
    %s192 = sphi 0, %s192
    %s194 = sphi 0, %s192
    %s195 = sphi 0, %s194
    %s209 = sphi 0, %s195
    %s213 = sphi 0, %s213
    %s215 = sphi 0, %s213
    %s216 = sphi 0, %s215
    %s230 = sphi 0, %s216
    %s234 = sphi 0, %s234
    %s236 = sphi 0, %s234
    %s237 = sphi 0, %s236
    %s251 = sphi 0, %s237
    %s255 = sphi 0, %s255
    %s257 = sphi 0, %s255
    %s258 = sphi 0, %s257
    %s272 = sphi 0, %s258
    %s276 = sphi 0, %s276
    %s278 = sphi 0, %s276
    %s279 = sphi 0, %s278
    %s293 = sphi 0, %s279
    %s297 = sphi 0, %s297
    %s299 = sphi 0, %s297
    %s300 = sphi 0, %s299
    %s314 = sphi 0, %s300
    %s318 = sphi 0, %s318
    %s320 = sphi 0, %s318
    %s321 = sphi 0, %s320
    %s335 = sphi 0, %s321
    %s339 = sphi 0, %s339
    %s341 = sphi 0, %s339
    %s342 = sphi 0, %s341
    %s356 = sphi 0, %s342
    %s360 = sphi 0, %s360
    %s362 = sphi 0, %s360
    %s363 = sphi 0, %s362
    %s377 = sphi 0, %s363
    %s383 = sphi 0, %s385
    %s386 = sphi 0, %s383
    %s387 = sphi 0, %s386
    %s403 = sphi 0, %s387
  $region4: #{spex_forward.13} parent=0 // loop_header_branch
    %25 = sbr.rel (%p23) target = $region8
  $region5: #{spex_forward.13} parent=0 // loop_body
    %s27 = ssub.s32 %s22, 1
    %s28 = ssub.s32 %s22, 2
    %s29 = sadd.s32 %s22, 1
    %s30 = ssub.s32 %s22, %s29
    %p31 = scmp.eq.s32.totalorder %s30, 0
    %s33 = sadd.s32 %s32, 1
    %s34 = scalar_select %p31, %s32, %s33
    %p37 = pneg %p31
    %p38 = scmp.eq.s32.totalorder %s22, 1
    %p39 = por %p37, %p38
    %p40 = scmp.ne.s32.totalorder %s32, %s35
    %p41 = scmp.eq.s32.totalorder %s22, 0
    %p42 = por %p40, %p41
    %p43 = scmp.ne.s32.totalorder %s32, %s35
    %p44 = scmp.eq.s32.totalorder %s27, 1
    %p45 = por %p43, %p44
    %p46 = scmp.ne.s32.totalorder %s35, %s36
    %p47 = scmp.eq.s32.totalorder %s27, 0
    %p48 = por %p46, %p47
    %p49 = scmp.ne.s32.totalorder %s35, %s36
    %p50 = scmp.eq.s32.totalorder %s28, 1
    %p51 = por %p49, %p50
    %p53 = scmp.ne.s32.totalorder %s36, %s52
    %p54 = scmp.eq.s32.totalorder %s28, 0
    %p55 = por %p53, %p54
    %s56 = ssub.s32 %s22, %s29
    %p57 = scmp.eq.s32.totalorder %s56, 0
    %s59 = sadd.s32 %s58, 1
    %s60 = scalar_select %p57, %s58, %s59
    %p63 = pneg %p57
    %p64 = scmp.eq.s32.totalorder %s22, 1
    %p65 = por %p63, %p64
    %p66 = scmp.ne.s32.totalorder %s58, %s61
    %p67 = scmp.eq.s32.totalorder %s22, 0
    %p68 = por %p66, %p67
    %p69 = scmp.ne.s32.totalorder %s58, %s61
    %p70 = scmp.eq.s32.totalorder %s27, 1
    %p71 = por %p69, %p70
    %p72 = scmp.ne.s32.totalorder %s61, %s62
    %p73 = scmp.eq.s32.totalorder %s27, 0
    %p74 = por %p72, %p73
    %p75 = scmp.ne.s32.totalorder %s61, %s62
    %p76 = scmp.eq.s32.totalorder %s28, 1
    %p77 = por %p75, %p76
    %p79 = scmp.ne.s32.totalorder %s62, %s78
    %p80 = scmp.eq.s32.totalorder %s28, 0
    %p81 = por %p79, %p80
    %s82 = ssub.s32 %s22, %s29
    %p83 = scmp.eq.s32.totalorder %s82, 0
    %s85 = sadd.s32 %s84, 1
    %s86 = scalar_select %p83, %s84, %s85
    %p89 = pneg %p83
    %p90 = scmp.eq.s32.totalorder %s22, 1
    %p91 = por %p89, %p90
    %p92 = scmp.ne.s32.totalorder %s84, %s87
    %p93 = scmp.eq.s32.totalorder %s22, 0
    %p94 = por %p92, %p93
    %p95 = scmp.ne.s32.totalorder %s84, %s87
    %p96 = scmp.eq.s32.totalorder %s27, 1
    %p97 = por %p95, %p96
    %p98 = scmp.ne.s32.totalorder %s87, %s88
    %p99 = scmp.eq.s32.totalorder %s27, 0
    %p100 = por %p98, %p99
    %p101 = scmp.ne.s32.totalorder %s87, %s88
    %p102 = scmp.eq.s32.totalorder %s28, 1
    %p103 = por %p101, %p102
    %p105 = scmp.ne.s32.totalorder %s88, %s104
    %p106 = scmp.eq.s32.totalorder %s28, 0
    %p107 = por %p105, %p106
    %s109 = sadd.s32 %s108, 1
    %p112 = scmp.eq.s32.totalorder %s22, 1
    %p113 = scmp.ne.s32.totalorder %s108, %s110
    %p114 = scmp.eq.s32.totalorder %s22, 0
    %p115 = por %p113, %p114
    %p116 = scmp.ne.s32.totalorder %s108, %s110
    %p117 = scmp.eq.s32.totalorder %s27, 1
    %p118 = por %p116, %p117
    %p119 = scmp.ne.s32.totalorder %s110, %s111
    %p120 = scmp.eq.s32.totalorder %s27, 0
    %p121 = por %p119, %p120
    %p122 = scmp.ne.s32.totalorder %s110, %s111
    %p123 = scmp.eq.s32.totalorder %s28, 1
    %p124 = por %p122, %p123
    %p126 = scmp.ne.s32.totalorder %s111, %s125
    %p127 = scmp.eq.s32.totalorder %s28, 0
    %p128 = por %p126, %p127
    %s130 = sadd.s32 %s129, 1
    %p133 = scmp.eq.s32.totalorder %s22, 1
    %p134 = scmp.ne.s32.totalorder %s129, %s131
    %p135 = scmp.eq.s32.totalorder %s22, 0
    %p136 = por %p134, %p135
    %p137 = scmp.ne.s32.totalorder %s129, %s131
    %p138 = scmp.eq.s32.totalorder %s27, 1
    %p139 = por %p137, %p138
    %p140 = scmp.ne.s32.totalorder %s131, %s132
    %p141 = scmp.eq.s32.totalorder %s27, 0
    %p142 = por %p140, %p141
    %p143 = scmp.ne.s32.totalorder %s131, %s132
    %p144 = scmp.eq.s32.totalorder %s28, 1
    %p145 = por %p143, %p144
    %p147 = scmp.ne.s32.totalorder %s132, %s146
    %p148 = scmp.eq.s32.totalorder %s28, 0
    %p149 = por %p147, %p148
    %s151 = sadd.s32 %s150, 1
    %p154 = scmp.eq.s32.totalorder %s22, 1
    %p155 = scmp.ne.s32.totalorder %s150, %s152
    %p156 = scmp.eq.s32.totalorder %s22, 0
    %p157 = por %p155, %p156
    %p158 = scmp.ne.s32.totalorder %s150, %s152
    %p159 = scmp.eq.s32.totalorder %s27, 1
    %p160 = por %p158, %p159
    %p161 = scmp.ne.s32.totalorder %s152, %s153
    %p162 = scmp.eq.s32.totalorder %s27, 0
    %p163 = por %p161, %p162
    %p164 = scmp.ne.s32.totalorder %s152, %s153
    %p165 = scmp.eq.s32.totalorder %s28, 1
    %p166 = por %p164, %p165
    %p168 = scmp.ne.s32.totalorder %s153, %s167
    %p169 = scmp.eq.s32.totalorder %s28, 0
    %p170 = por %p168, %p169
    %s172 = sadd.s32 %s171, 1
    %p175 = scmp.eq.s32.totalorder %s22, 1
    %p176 = scmp.ne.s32.totalorder %s171, %s173
    %p177 = scmp.eq.s32.totalorder %s22, 0
    %p178 = por %p176, %p177
    %p179 = scmp.ne.s32.totalorder %s171, %s173
    %p180 = scmp.eq.s32.totalorder %s27, 1
    %p181 = por %p179, %p180
    %p182 = scmp.ne.s32.totalorder %s173, %s174
    %p183 = scmp.eq.s32.totalorder %s27, 0
    %p184 = por %p182, %p183
    %p185 = scmp.ne.s32.totalorder %s173, %s174
    %p186 = scmp.eq.s32.totalorder %s28, 1
    %p187 = por %p185, %p186
    %p189 = scmp.ne.s32.totalorder %s174, %s188
    %p190 = scmp.eq.s32.totalorder %s28, 0
    %p191 = por %p189, %p190
    %s193 = sadd.s32 %s192, 1
    %p196 = scmp.eq.s32.totalorder %s22, 1
    %p197 = scmp.ne.s32.totalorder %s192, %s194
    %p198 = scmp.eq.s32.totalorder %s22, 0
    %p199 = por %p197, %p198
    %p200 = scmp.ne.s32.totalorder %s192, %s194
    %p201 = scmp.eq.s32.totalorder %s27, 1
    %p202 = por %p200, %p201
    %p203 = scmp.ne.s32.totalorder %s194, %s195
    %p204 = scmp.eq.s32.totalorder %s27, 0
    %p205 = por %p203, %p204
    %p206 = scmp.ne.s32.totalorder %s194, %s195
    %p207 = scmp.eq.s32.totalorder %s28, 1
    %p208 = por %p206, %p207
    %p210 = scmp.ne.s32.totalorder %s195, %s209
    %p211 = scmp.eq.s32.totalorder %s28, 0
    %p212 = por %p210, %p211
    %s214 = sadd.s32 %s213, 1
    %p217 = scmp.eq.s32.totalorder %s22, 1
    %p218 = scmp.ne.s32.totalorder %s213, %s215
    %p219 = scmp.eq.s32.totalorder %s22, 0
    %p220 = por %p218, %p219
    %p221 = scmp.ne.s32.totalorder %s213, %s215
    %p222 = scmp.eq.s32.totalorder %s27, 1
    %p223 = por %p221, %p222
    %p224 = scmp.ne.s32.totalorder %s215, %s216
    %p225 = scmp.eq.s32.totalorder %s27, 0
    %p226 = por %p224, %p225
    %p227 = scmp.ne.s32.totalorder %s215, %s216
    %p228 = scmp.eq.s32.totalorder %s28, 1
    %p229 = por %p227, %p228
    %p231 = scmp.ne.s32.totalorder %s216, %s230
    %p232 = scmp.eq.s32.totalorder %s28, 0
    %p233 = por %p231, %p232
    %s235 = sadd.s32 %s234, 1
    %p238 = scmp.eq.s32.totalorder %s22, 1
    %p239 = scmp.ne.s32.totalorder %s234, %s236
    %p240 = scmp.eq.s32.totalorder %s22, 0
    %p241 = por %p239, %p240
    %p242 = scmp.ne.s32.totalorder %s234, %s236
    %p243 = scmp.eq.s32.totalorder %s27, 1
    %p244 = por %p242, %p243
    %p245 = scmp.ne.s32.totalorder %s236, %s237
    %p246 = scmp.eq.s32.totalorder %s27, 0
    %p247 = por %p245, %p246
    %p248 = scmp.ne.s32.totalorder %s236, %s237
    %p249 = scmp.eq.s32.totalorder %s28, 1
    %p250 = por %p248, %p249
    %p252 = scmp.ne.s32.totalorder %s237, %s251
    %p253 = scmp.eq.s32.totalorder %s28, 0
    %p254 = por %p252, %p253
    %s256 = sadd.s32 %s255, 1
    %p259 = scmp.eq.s32.totalorder %s22, 1
    %p260 = scmp.ne.s32.totalorder %s255, %s257
    %p261 = scmp.eq.s32.totalorder %s22, 0
    %p262 = por %p260, %p261
    %p263 = scmp.ne.s32.totalorder %s255, %s257
    %p264 = scmp.eq.s32.totalorder %s27, 1
    %p265 = por %p263, %p264
    %p266 = scmp.ne.s32.totalorder %s257, %s258
    %p267 = scmp.eq.s32.totalorder %s27, 0
    %p268 = por %p266, %p267
    %p269 = scmp.ne.s32.totalorder %s257, %s258
    %p270 = scmp.eq.s32.totalorder %s28, 1
    %p271 = por %p269, %p270
    %p273 = scmp.ne.s32.totalorder %s258, %s272
    %p274 = scmp.eq.s32.totalorder %s28, 0
    %p275 = por %p273, %p274
    %s277 = sadd.s32 %s276, 1
    %p280 = scmp.eq.s32.totalorder %s22, 1
    %p281 = scmp.ne.s32.totalorder %s276, %s278
    %p282 = scmp.eq.s32.totalorder %s22, 0
    %p283 = por %p281, %p282
    %p284 = scmp.ne.s32.totalorder %s276, %s278
    %p285 = scmp.eq.s32.totalorder %s27, 1
    %p286 = por %p284, %p285
    %p287 = scmp.ne.s32.totalorder %s278, %s279
    %p288 = scmp.eq.s32.totalorder %s27, 0
    %p289 = por %p287, %p288
    %p290 = scmp.ne.s32.totalorder %s278, %s279
    %p291 = scmp.eq.s32.totalorder %s28, 1
    %p292 = por %p290, %p291
    %p294 = scmp.ne.s32.totalorder %s279, %s293
    %p295 = scmp.eq.s32.totalorder %s28, 0
    %p296 = por %p294, %p295
    %s298 = sadd.s32 %s297, 1
    %p301 = scmp.eq.s32.totalorder %s22, 1
    %p302 = scmp.ne.s32.totalorder %s297, %s299
    %p303 = scmp.eq.s32.totalorder %s22, 0
    %p304 = por %p302, %p303
    %p305 = scmp.ne.s32.totalorder %s297, %s299
    %p306 = scmp.eq.s32.totalorder %s27, 1
    %p307 = por %p305, %p306
    %p308 = scmp.ne.s32.totalorder %s299, %s300
    %p309 = scmp.eq.s32.totalorder %s27, 0
    %p310 = por %p308, %p309
    %p311 = scmp.ne.s32.totalorder %s299, %s300
    %p312 = scmp.eq.s32.totalorder %s28, 1
    %p313 = por %p311, %p312
    %p315 = scmp.ne.s32.totalorder %s300, %s314
    %p316 = scmp.eq.s32.totalorder %s28, 0
    %p317 = por %p315, %p316
    %s319 = sadd.s32 %s318, 1
    %p322 = scmp.eq.s32.totalorder %s22, 1
    %p323 = scmp.ne.s32.totalorder %s318, %s320
    %p324 = scmp.eq.s32.totalorder %s22, 0
    %p325 = por %p323, %p324
    %p326 = scmp.ne.s32.totalorder %s318, %s320
    %p327 = scmp.eq.s32.totalorder %s27, 1
    %p328 = por %p326, %p327
    %p329 = scmp.ne.s32.totalorder %s320, %s321
    %p330 = scmp.eq.s32.totalorder %s27, 0
    %p331 = por %p329, %p330
    %p332 = scmp.ne.s32.totalorder %s320, %s321
    %p333 = scmp.eq.s32.totalorder %s28, 1
    %p334 = por %p332, %p333
    %p336 = scmp.ne.s32.totalorder %s321, %s335
    %p337 = scmp.eq.s32.totalorder %s28, 0
    %p338 = por %p336, %p337
    %s340 = sadd.s32 %s339, 1
    %p343 = scmp.eq.s32.totalorder %s22, 1
    %p344 = scmp.ne.s32.totalorder %s339, %s341
    %p345 = scmp.eq.s32.totalorder %s22, 0
    %p346 = por %p344, %p345
    %p347 = scmp.ne.s32.totalorder %s339, %s341
    %p348 = scmp.eq.s32.totalorder %s27, 1
    %p349 = por %p347, %p348
    %p350 = scmp.ne.s32.totalorder %s341, %s342
    %p351 = scmp.eq.s32.totalorder %s27, 0
    %p352 = por %p350, %p351
    %p353 = scmp.ne.s32.totalorder %s341, %s342
    %p354 = scmp.eq.s32.totalorder %s28, 1
    %p355 = por %p353, %p354
    %p357 = scmp.ne.s32.totalorder %s342, %s356
    %p358 = scmp.eq.s32.totalorder %s28, 0
    %p359 = por %p357, %p358
    %s361 = sadd.s32 %s360, 1
    %p364 = scmp.eq.s32.totalorder %s22, 1
    %p365 = scmp.ne.s32.totalorder %s360, %s362
    %p366 = scmp.eq.s32.totalorder %s22, 0
    %p367 = por %p365, %p366
    %p368 = scmp.ne.s32.totalorder %s360, %s362
    %p369 = scmp.eq.s32.totalorder %s27, 1
    %p370 = por %p368, %p369
    %p371 = scmp.ne.s32.totalorder %s362, %s363
    %p372 = scmp.eq.s32.totalorder %s27, 0
    %p373 = por %p371, %p372
    %p374 = scmp.ne.s32.totalorder %s362, %s363
    %p375 = scmp.eq.s32.totalorder %s28, 1
    %p376 = por %p374, %p375
    %p378 = scmp.ne.s32.totalorder %s363, %s377
    %p379 = scmp.eq.s32.totalorder %s28, 0
    %p380 = por %p378, %p379
    %s381 = ssub.s32 %s22, %s29
    %p382 = scmp.eq.s32.totalorder %s381, 0
    %s384 = sadd.s32 %s383, 1
    %s385 = scalar_select %p382, %s383, %s384
    %p388 = pneg %p382
    %p389 = scmp.eq.s32.totalorder %s22, 1
    %p390 = por %p388, %p389
    %p391 = scmp.ne.s32.totalorder %s383, %s386
    %p392 = scmp.eq.s32.totalorder %s22, 0
    %p393 = por %p391, %p392
    %p394 = scmp.ne.s32.totalorder %s383, %s386
    %p395 = scmp.eq.s32.totalorder %s27, 1
    %p396 = por %p394, %p395
    %p397 = scmp.ne.s32.totalorder %s386, %s387
    %p398 = scmp.eq.s32.totalorder %s27, 0
    %p399 = por %p397, %p398
    %p400 = scmp.ne.s32.totalorder %s386, %s387
    %p401 = scmp.eq.s32.totalorder %s28, 1
    %p402 = por %p400, %p401
    %p404 = scmp.ne.s32.totalorder %s387, %s403
    %p405 = scmp.eq.s32.totalorder %s28, 0
    %p406 = por %p404, %p405
    %p407 = scmp.le.s32.totalorder 1, %s22
    %p408 = scmp.lt.s32.totalorder %s22, 3
    %p409 = pnand %p407, %p408
    %p410 = pneg %p409
    // Predicated region
    $region9: #{spex_forward.13} parent=5 // pred_check
      _
    $region10: #{spex_forward.13} parent=5 // pred_check_branch
      %412 = sbr.rel (%p409) target = $region12
    $region11: #{spex_forward.13} parent=5 // pred_region
      %s413 = ssub.s32 %s22, 1
      // Predicated region
      $region13: #{spex_forward.13} parent=11 // pred_check
        %p414 = pneg %p121
      $region14: #{spex_forward.13} parent=11 // pred_check_branch
        %416 = sbr.rel (%p414) target = $region16
      $region15: #{spex_forward.13} parent=11 // pred_region
        _
      $region16: #{spex_forward.13} parent=11 // pred_fallthru
        _
      // Predicated region
      $region17: #{spex_forward.13} parent=11 // pred_check
        %p417 = pneg %p142
      $region18: #{spex_forward.13} parent=11 // pred_check_branch
        %419 = sbr.rel (%p417) target = $region20
      $region19: #{spex_forward.13} parent=11 // pred_region
        _
      $region20: #{spex_forward.13} parent=11 // pred_fallthru
        _
      // Predicated region
      $region21: #{spex_forward.13} parent=11 // pred_check
        %p420 = pneg %p163
      $region22: #{spex_forward.13} parent=11 // pred_check_branch
        %422 = sbr.rel (%p420) target = $region24
      $region23: #{spex_forward.13} parent=11 // pred_region
        _
      $region24: #{spex_forward.13} parent=11 // pred_fallthru
        _
      // Predicated region
      $region25: #{spex_forward.13} parent=11 // pred_check
        %p423 = pneg %p184
      $region26: #{spex_forward.13} parent=11 // pred_check_branch
        %425 = sbr.rel (%p423) target = $region28
      $region27: #{spex_forward.13} parent=11 // pred_region
        _
      $region28: #{spex_forward.13} parent=11 // pred_fallthru
        _
      // Predicated region
      $region29: #{spex_forward.13} parent=11 // pred_check
        %p426 = pneg %p205
      $region30: #{spex_forward.13} parent=11 // pred_check_branch
        %428 = sbr.rel (%p426) target = $region32
      $region31: #{spex_forward.13} parent=11 // pred_region
        _
      $region32: #{spex_forward.13} parent=11 // pred_fallthru
        _
      // Predicated region
      $region33: #{spex_forward.13} parent=11 // pred_check
        %p429 = pneg %p226
      $region34: #{spex_forward.13} parent=11 // pred_check_branch
        %431 = sbr.rel (%p429) target = $region36
      $region35: #{spex_forward.13} parent=11 // pred_region
        _
      $region36: #{spex_forward.13} parent=11 // pred_fallthru
        _
      // Predicated region
      $region37: #{spex_forward.13} parent=11 // pred_check
        %p432 = pneg %p247
      $region38: #{spex_forward.13} parent=11 // pred_check_branch
        %434 = sbr.rel (%p432) target = $region40
      $region39: #{spex_forward.13} parent=11 // pred_region
        _
      $region40: #{spex_forward.13} parent=11 // pred_fallthru
        _
      // Predicated region
      $region41: #{spex_forward.13} parent=11 // pred_check
        %p435 = pneg %p268
      $region42: #{spex_forward.13} parent=11 // pred_check_branch
        %437 = sbr.rel (%p435) target = $region44
      $region43: #{spex_forward.13} parent=11 // pred_region
        _
      $region44: #{spex_forward.13} parent=11 // pred_fallthru
        _
      // Predicated region
      $region45: #{spex_forward.13} parent=11 // pred_check
        %p438 = pneg %p289
      $region46: #{spex_forward.13} parent=11 // pred_check_branch
        %440 = sbr.rel (%p438) target = $region48
      $region47: #{spex_forward.13} parent=11 // pred_region
        _
      $region48: #{spex_forward.13} parent=11 // pred_fallthru
        _
      // Predicated region
      $region49: #{spex_forward.13} parent=11 // pred_check
        %p441 = pneg %p310
      $region50: #{spex_forward.13} parent=11 // pred_check_branch
        %443 = sbr.rel (%p441) target = $region52
      $region51: #{spex_forward.13} parent=11 // pred_region
        _
      $region52: #{spex_forward.13} parent=11 // pred_fallthru
        _
      // Predicated region
      $region53: #{spex_forward.13} parent=11 // pred_check
        %p444 = pneg %p331
      $region54: #{spex_forward.13} parent=11 // pred_check_branch
        %446 = sbr.rel (%p444) target = $region56
      $region55: #{spex_forward.13} parent=11 // pred_region
        _
      $region56: #{spex_forward.13} parent=11 // pred_fallthru
        _
      // Predicated region
      $region57: #{spex_forward.13} parent=11 // pred_check
        %p447 = pneg %p352
      $region58: #{spex_forward.13} parent=11 // pred_check_branch
        %449 = sbr.rel (%p447) target = $region60
      $region59: #{spex_forward.13} parent=11 // pred_region
        _
      $region60: #{spex_forward.13} parent=11 // pred_fallthru
        _
      // Predicated region
      $region61: #{spex_forward.13} parent=11 // pred_check
        %p450 = pneg %p373
      $region62: #{spex_forward.13} parent=11 // pred_check_branch
        %452 = sbr.rel (%p450) target = $region64
      $region63: #{spex_forward.13} parent=11 // pred_region
        _
      $region64: #{spex_forward.13} parent=11 // pred_fallthru
        _
    $region12: #{spex_forward.13} parent=5 // pred_fallthru
      _
    %p453 = scmp.lt.s32.totalorder %s22, 2
    // Predicated region
    $region65: #{spex_forward.13} parent=5 // pred_check
      %p454 = pneg %p453
    $region66: #{spex_forward.13} parent=5 // pred_check_branch
      %456 = sbr.rel (%p454) target = $region68
    $region67: #{spex_forward.13} parent=5 // pred_region
      // Predicated region
      $region69: #{spex_forward.13} parent=67 // pred_check
        %p457 = pneg %p42
      $region70: #{spex_forward.13} parent=67 // pred_check_branch
        %459 = sbr.rel (%p457) target = $region72
      $region71: #{spex_forward.13} parent=67 // pred_region
        %p460 = scmp.lt.s32.totalorder %s22, 1
        %s461 = scalar_select %p460, %s22, 1
        %s462 = smul.addr %s461, 7
        %s463 = smul.addr %s462, 8
        %s464 = scalar_lea.vmem %s0, %s463
      $region72: #{spex_forward.13} parent=67 // pred_fallthru
        _
      // Predicated region
      $region73: #{spex_forward.13} parent=67 // pred_check
        %p465 = pneg %p68
      $region74: #{spex_forward.13} parent=67 // pred_check_branch
        %467 = sbr.rel (%p465) target = $region76
      $region75: #{spex_forward.13} parent=67 // pred_region
        %p468 = scmp.lt.s32.totalorder %s22, 1
        %s469 = scalar_select %p468, %s22, 1
        %s470 = smul.addr %s469, 7
        %s471 = smul.addr %s470, 8
        %s472 = scalar_lea.vmem %s1, %s471
      $region76: #{spex_forward.13} parent=67 // pred_fallthru
        _
      // Predicated region
      $region77: #{spex_forward.13} parent=67 // pred_check
        %p473 = pneg %p94
      $region78: #{spex_forward.13} parent=67 // pred_check_branch
        %475 = sbr.rel (%p473) target = $region80
      $region79: #{spex_forward.13} parent=67 // pred_region
        %p476 = scmp.lt.s32.totalorder %s22, 1
        %s477 = scalar_select %p476, %s22, 1
        %s478 = smul.addr %s477, 2
        %s479 = scalar_lea.vmem %s2, %s478
      $region80: #{spex_forward.13} parent=67 // pred_fallthru
        _
    $region68: #{spex_forward.13} parent=5 // pred_fallthru
      _
    %p480 = scmp.le.s32.totalorder 1, %s22
    %p481 = scmp.lt.s32.totalorder %s22, 3
    %p482 = pnand %p480, %p481
    %p483 = pneg %p482
    // Predicated region
    $region81: #{spex_forward.13} parent=5 // pred_check
      _
    $region82: #{spex_forward.13} parent=5 // pred_check_branch
      %485 = sbr.rel (%p482) target = $region84
    $region83: #{spex_forward.13} parent=5 // pred_region
      %s486 = ssub.s32 %s22, 1
      %p487 = scmp.lt.s32.totalorder %s27, 1
      %s488 = scalar_select %p487, %s27, 1
      %s489 = smul.addr %s488, 7
      %s490 = smul.addr %s489, 8
      %s491 = scalar_lea.vmem %s0, %s490
      %p492 = pneg %p48
      %p493 = pneg %p45
      %p494 = scmp.lt.s32.totalorder %s27, 1
      %s495 = scalar_select %p494, %s27, 1
      %s496 = smul.addr %s495, 7
      %s497 = smul.addr %s496, 8
      %s498 = scalar_lea.vmem %s1, %s497
      %p499 = pneg %p74
      %p500 = pneg %p71
      %p501 = scmp.lt.s32.totalorder %s27, 1
      %s502 = scalar_select %p501, %s27, 1
      %s503 = smul.addr %s502, 2
      %s504 = scalar_lea.vmem %s2, %s503
      %p505 = pneg %p100
      %p506 = pneg %p97
      %p507 = pneg %p121
      %p508 = pneg %p118
      %p509 = pneg %p142
      %p510 = pneg %p139
      %p511 = pneg %p163
      %p512 = pneg %p160
      %p513 = pneg %p184
      %p514 = pneg %p181
      %p515 = pneg %p205
      %p516 = pneg %p202
      %p517 = pneg %p226
      %p518 = pneg %p223
      %p519 = pneg %p247
      %p520 = pneg %p244
      %p521 = pneg %p268
      %p522 = pneg %p265
      %p523 = pneg %p289
      %p524 = pneg %p286
      %p525 = pneg %p310
      %p526 = pneg %p307
      %p527 = pneg %p331
      %p528 = pneg %p328
      %p529 = pneg %p352
      %p530 = pneg %p349
      %p531 = pneg %p373
      %p532 = pneg %p370
      %p533 = pneg %p399
      %p534 = pneg %p396
      %p535 = scmp.lt.s32.totalorder %s27, 1
      %s536 = scalar_select %p535, %s27, 1
      %s537 = smul.addr %s536, 7
      %s538 = smul.addr %s537, 8
      %s539 = scalar_lea.vmem %s16, %s538
      %p540 = scmp.lt.s32.totalorder %s27, 1
      %s541 = scalar_select %p540, %s27, 1
      %s542 = smul.addr %s541, 7
      %s543 = smul.addr %s542, 8
      %s544 = scalar_lea.vmem %s0, %s543
      %p545 = scmp.lt.s32.totalorder %s27, 1
      %s546 = scalar_select %p545, %s27, 1
      %s547 = smul.addr %s546, 7
      %s548 = smul.addr %s547, 8
      %s549 = scalar_lea.vmem %s1, %s548
      %p550 = scmp.lt.s32.totalorder %s27, 1
      %s551 = scalar_select %p550, %s27, 1
      %s552 = smul.addr %s551, 2
      %s553 = scalar_lea.vmem %s2, %s552
      %p554 = scmp.lt.s32.totalorder %s27, 1
      %s555 = scalar_select %p554, %s27, 1
      %s556 = smul.addr %s555, 7
      %s557 = smul.addr %s556, 8
      %s558 = scalar_lea.vmem %s16, %s557
      %v559 = vld [vmem:[%s544] sm:$0xff]
      %v560 = vld [vmem:[%s544 + $0x8] sm:$0xff]
      %v561 = vld [vmem:[%s544 + $0x10] sm:$0xff]
      %v562 = vld [vmem:[%s544 + $0x18] sm:$0xff]
      %v563 = vld [vmem:[%s544 + $0x20] sm:$0xff]
      %v564 = vld [vmem:[%s544 + $0x28] sm:$0xff]
      %v565 = vld [vmem:[%s544 + $0x30] sm:$0xff]
      %v566 = vld [vmem:[%s553] sm:$0x3]
      %v567 = vld [vmem:[%s3] sm:$0x1]
      %v568 = vlaneseq
      %v569 = vshrl.u32 %v568, 7
      %v570 = vadd.s32 %v569, 8
      %v571 = vadd.s32 %v569, 16
      %v572 = vadd.s32 %v569, 24
      %v573 = vadd.s32 %v569, 32
      %v574 = vadd.s32 %v569, 40
      %v575 = vadd.s32 %v569, 48
      %vm576 = vcmp.lt.s32.totalorder %v569, 49
      %vm577 = vcmp.lt.s32.totalorder %v570, 49
      %vm578 = vcmp.lt.s32.totalorder %v571, 49
      %vm579 = vcmp.lt.s32.totalorder %v572, 49
      %vm580 = vcmp.lt.s32.totalorder %v573, 49
      %vm581 = vcmp.lt.s32.totalorder %v574, 49
      %vm582 = vcmp.lt.s32.totalorder %v575, 49
      %v583 = vsel %vm576, 1, 0
      %v584 = vsel %vm577, 1, 0
      %v585 = vsel %vm578, 1, 0
      %v586 = vsel %vm579, 1, 0
      %v587 = vsel %vm580, 1, 0
      %v588 = vsel %vm581, 1, 0
      %v589 = vsel %vm582, 1, 0
      %v590 = vcvt.s32.f32 %v583
      %v591 = vcvt.s32.f32 %v584
      %v592 = vcvt.s32.f32 %v585
      %v593 = vcvt.s32.f32 %v586
      %v594 = vcvt.s32.f32 %v587
      %v595 = vcvt.s32.f32 %v588
      %v596 = vcvt.s32.f32 %v589
      %v597 = vld [vmem:[%s4] sm:$0xff]
      %v598 = vld [vmem:[%s4 + $0x8] sm:$0xff]
      %v599 = vld [vmem:[%s4 + $0x10] sm:$0xff]
      %v600 = vld [vmem:[%s4 + $0x18] sm:$0xff]
      %v601 = vlaneseq
      %v602 = vshrl.u32 %v601, 7
      %v603 = vsub.s32 0, %v602
      %v604 = vrot.slane %v566, %v603
      %vm605 = vcmask 261120
      %v607 = vsel %vm605, %v559, 0
      %v610 = vsel %vm605, %v560, 0
      %v613 = vsel %vm605, %v561, 0
      %v616 = vsel %vm605, %v562, 0
      %v619 = vsel %vm605, %v563, 0
      %v622 = vsel %vm605, %v564, 0
      %v625 = vsel %vm605, %v565, 0
      %627 = vmatprep.subr.mxu0 0.0
      %628 = vmatpush1.msra.mxu0 %v597
      %629 = vmatprep.subr.mxu0 0.0
      %630 = vmatpush1.msra.mxu0 %v598
      %631 = vmatprep.subr.mxu0 0.0
      %632 = vmatpush1.msra.mxu0 %v599
      %633 = vmatprep.subr.mxu0 0.0
      %634 = vmatpush1.msra.mxu0 %v600
      %635 = vmatprep.subr.mxu0 0.0
      %636 = vmatpush1.msra.mxu0 0.0
      %637 = vmatprep.subr.mxu0 0.0
      %638 = vmatpush1.msra.mxu0 0.0
      %639 = vmatprep.subr.mxu0 0.0
      %640 = vmatpush1.msra.mxu0 0.0
      %641 = vmatprep.subr.mxu0 0.0
      %642 = vmatpush1.msra.mxu0 0.0
      %643 = vmatprep.subr.mxu0 0.0
      %644 = vmatpush1.msra.mxu0 0.0
      %645 = vmatprep.subr.mxu0 0.0
      %646 = vmatpush1.msra.mxu0 0.0
      %647 = vmatprep.subr.mxu0 0.0
      %648 = vmatpush1.msra.mxu0 0.0
      %649 = vmatprep.subr.mxu0 0.0
      %650 = vmatpush1.msra.mxu0 0.0
      %651 = vmatprep.subr.mxu0 0.0
      %652 = vmatpush1.msra.mxu0 0.0
      %653 = vmatprep.subr.mxu0 0.0
      %654 = vmatpush1.msra.mxu0 0.0
      %655 = vmatprep.subr.mxu0 0.0
      %656 = vmatpush1.msra.mxu0 0.0
      %657 = vmatprep.subr.mxu0 0.0
      %658 = vmatpush1.msra.mxu0 0.0
      %659 = vmatprep.subr.mxu0 0.0
      %660 = vmatpush1.msra.mxu0 0.0
      %661 = vmatprep.subr.mxu0 0.0
      %662 = vmatpush1.msra.mxu0 0.0
      %663 = vmatprep.subr.mxu0 0.0
      %664 = vmatpush1.msra.mxu0 0.0
      %665 = vmatprep.subr.mxu0 0.0
      %666 = vmatpush1.msra.mxu0 0.0
      %667 = vmatprep.subr.mxu0 0.0
      %668 = vmatpush1.msra.mxu0 0.0
      %669 = vmatprep.subr.mxu0 0.0
      %670 = vmatpush1.msra.mxu0 0.0
      %671 = vmatprep.subr.mxu0 0.0
      %672 = vmatpush1.msra.mxu0 0.0
      %673 = vmatprep.subr.mxu0 0.0
      %674 = vmatpush1.msra.mxu0 0.0
      %675 = vmatprep.subr.mxu0 0.0
      %676 = vmatpush1.msra.mxu0 0.0
      %677 = vmatprep.subr.mxu0 0.0
      %678 = vmatpush1.msra.mxu0 0.0
      %679 = vmatprep.subr.mxu0 0.0
      %680 = vmatpush1.msra.mxu0 0.0
      %681 = vmatprep.subr.mxu0 0.0
      %682 = vmatpush1.msra.mxu0 0.0
      %683 = vmatprep.subr.mxu0 0.0
      %684 = vmatpush1.msra.mxu0 0.0
      %685 = vmatprep.subr.mxu0 0.0
      %686 = vmatpush1.msra.mxu0 0.0
      %687 = vmatprep.subr.mxu0 0.0
      %688 = vmatpush1.msra.mxu0 0.0
      %689 = vmatprep.subr.mxu0 0.0
      %690 = vmatpush1.msra.mxu0 0.0
      %691 = vmatprep.mubr.f32.mxu0 0.0
      %692 = vmatmul.mubr.f32.gmra.mrb[0].mxu0 %v607
      %v693 = vpop.f32.mrb[0].mxu0
      %v694 = vadd.f32 %v604, %v693
      %v695 = vpop.f32.mrb[0].mxu0
      %696 = vmatprep.mubr.f32.mxu0 0.0
      %697 = vmatmul.mubr.f32.gmra.mrb[0].mxu0 %v610
      %v698 = vpop.f32.mrb[0].mxu0
      %v699 = vadd.f32 %v604, %v698
      %v700 = vpop.f32.mrb[0].mxu0
      %701 = vmatprep.mubr.f32.mxu0 0.0
      %702 = vmatmul.mubr.f32.gmra.mrb[0].mxu0 %v613
      %v703 = vpop.f32.mrb[0].mxu0
      %v704 = vadd.f32 %v604, %v703
      %v705 = vpop.f32.mrb[0].mxu0
      %706 = vmatprep.mubr.f32.mxu0 0.0
      %707 = vmatmul.mubr.f32.gmra.mrb[0].mxu0 %v616
      %v708 = vpop.f32.mrb[0].mxu0
      %v709 = vadd.f32 %v604, %v708
      %v710 = vpop.f32.mrb[0].mxu0
      %711 = vmatprep.mubr.f32.mxu0 0.0
      %712 = vmatmul.mubr.f32.gmra.mrb[0].mxu0 %v619
      %v713 = vpop.f32.mrb[0].mxu0
      %v714 = vadd.f32 %v604, %v713
      %v715 = vpop.f32.mrb[0].mxu0
      %716 = vmatprep.mubr.f32.mxu0 0.0
      %717 = vmatmul.mubr.f32.gmra.mrb[0].mxu0 %v622
      %v718 = vpop.f32.mrb[0].mxu0
      %v719 = vadd.f32 %v604, %v718
      %v720 = vpop.f32.mrb[0].mxu0
      %721 = vmatprep.mubr.f32.mxu0 0.0
      %722 = vmatmul.mubr.f32.gmra.mrb[0].mxu0 %v625
      %v723 = vpop.f32.mrb[0].mxu0
      %v724 = vadd.f32 %v604, %v723
      %v725 = vpop.f32.mrb[0].mxu0
      %726 = vdwg.mxu0
      %vm727 = vcmp.gt.f32.partialorder %v694, 0.0
      %vm728 = vcmp.gt.f32.partialorder %v699, 0.0
      %vm729 = vcmp.gt.f32.partialorder %v704, 0.0
      %vm730 = vcmp.gt.f32.partialorder %v709, 0.0
      %vm731 = vcmp.gt.f32.partialorder %v714, 0.0
      %vm732 = vcmp.gt.f32.partialorder %v719, 0.0
      %vm733 = vcmp.gt.f32.partialorder %v724, 0.0
      %v735 = vlaneseq
      %v736 = vshrl.u32 %v735, 7
      %v737 = vsub.s32 0, %v736
      %v738 = vrot.slane %v567, %v737
      %739 = vset.pattern.permute.xlu0 0
      %740 = vperm.xlu0 %739, %v738
      %v741 = vpop.permute.xlu0 %740
      %v743 = vmul.f32 %v741, %v694
      %v744 = vmul.f32 %v741, %v699
      %v745 = vmul.f32 %v741, %v704
      %v746 = vmul.f32 %v741, %v709
      %v747 = vmul.f32 %v741, %v714
      %v748 = vmul.f32 %v741, %v719
      %v749 = vmul.f32 %v741, %v724
      %v750 = vsel %vm727, %v694, %v743
      %v751 = vsel %vm728, %v699, %v744
      %v752 = vsel %vm729, %v704, %v745
      %v753 = vsel %vm730, %v709, %v746
      %v754 = vsel %vm731, %v714, %v747
      %v755 = vsel %vm732, %v719, %v748
      %v756 = vsel %vm733, %v724, %v749
      %v757 = vmul.f32 %v750, %v590
      %v758 = vmul.f32 %v751, %v591
      %v759 = vmul.f32 %v752, %v592
      %v760 = vmul.f32 %v753, %v593
      %v761 = vmul.f32 %v754, %v594
      %v762 = vmul.f32 %v755, %v595
      %v763 = vmul.f32 %v756, %v596
      %v764 = vsel %vm605, %v757, 0.0
      %v765 = vsel %vm605, %v758, 0.0
      %v766 = vadd.f32 %v764, %v765
      %v767 = vsel %vm605, %v759, 0.0
      %v768 = vadd.f32 %v766, %v767
      %v769 = vsel %vm605, %v760, 0.0
      %v770 = vadd.f32 %v768, %v769
      %v771 = vsel %vm605, %v761, 0.0
      %v772 = vadd.f32 %v770, %v771
      %v773 = vsel %vm605, %v762, 0.0
      %v774 = vadd.f32 %v772, %v773
      %v775 = vsel %vm605, %v763, 0.0
      %v776 = vadd.f32 %v774, %v775
      %777 = vadd.xlane.f32.xlu0 %v776
      %v778 = vpop.xlane.xlu0 %777
      %v779 = vrot.slane %v778, 4
      %v780 = vadd.f32 %v778, %v779
      %v781 = vrot.slane %v780, 2
      %v782 = vadd.f32 %v780, %v781
      %v783 = vrot.slane %v782, 1
      %v784 = vadd.f32 %v782, %v783
      %s785 = vtos %v784
      %v786 = vmul.f32 %v757, %v757
      %v787 = vmul.f32 %v758, %v758
      %v788 = vmul.f32 %v759, %v759
      %v789 = vmul.f32 %v760, %v760
      %v790 = vmul.f32 %v761, %v761
      %v791 = vmul.f32 %v762, %v762
      %v792 = vmul.f32 %v763, %v763
      %v793 = vsel %vm605, %v786, 0.0
      %v794 = vsel %vm605, %v787, 0.0
      %v795 = vadd.f32 %v793, %v794
      %v796 = vsel %vm605, %v788, 0.0
      %v797 = vadd.f32 %v795, %v796
      %v798 = vsel %vm605, %v789, 0.0
      %v799 = vadd.f32 %v797, %v798
      %v800 = vsel %vm605, %v790, 0.0
      %v801 = vadd.f32 %v799, %v800
      %v802 = vsel %vm605, %v791, 0.0
      %v803 = vadd.f32 %v801, %v802
      %v804 = vsel %vm605, %v792, 0.0
      %v805 = vadd.f32 %v803, %v804
      %806 = vadd.xlane.f32.xlu0 %v805
      %v807 = vpop.xlane.xlu0 %806
      %v808 = vrot.slane %v807, 4
      %v809 = vadd.f32 %v807, %v808
      %v810 = vrot.slane %v809, 2
      %v811 = vadd.f32 %v809, %v810
      %v812 = vrot.slane %v811, 1
      %v813 = vadd.f32 %v811, %v812
      %s814 = vtos %v813
      %v815 = vrcp.pop 1568.0
      %s816 = vtos %v815
      %s817 = smul.f32 %s785, %s816
      %s818 = smul.f32 %s817, 1568.0
      %s819 = smul.f32 %s818, %s817
      %s820 = ssub.f32 %s814, %s819
      %v821 = vrcp.pop 1567.0
      %s822 = vtos %v821
      %s823 = smul.f32 %s820, %s822
      %v824 = vstv %s817
      %v825 = vsub.f32 %v757, %v824
      %v826 = vsub.f32 %v758, %v824
      %v827 = vsub.f32 %v759, %v824
      %v828 = vsub.f32 %v760, %v824
      %v829 = vsub.f32 %v761, %v824
      %v830 = vsub.f32 %v762, %v824
      %v831 = vsub.f32 %v763, %v824
      %s832 = sadd.f32 %s823, 1e-05
      %v833 = vstv %s832
      %v834 = vrsqrt.pop %v833
      %s835 = vtos %v834
      %v836 = vstv %s835
      %v837 = vmul.f32 %v825, %v836
      %v838 = vmul.f32 %v826, %v836
      %v839 = vmul.f32 %v827, %v836
      %v840 = vmul.f32 %v828, %v836
      %v841 = vmul.f32 %v829, %v836
      %v842 = vmul.f32 %v830, %v836
      %v843 = vmul.f32 %v831, %v836
      %v844 = vld [vmem:[%s5] sm:$0x1]
      %v846 = vlaneseq
      %v847 = vshrl.u32 %v846, 7
      %v848 = vsub.s32 0, %v847
      %v849 = vrot.slane %v844, %v848
      %v851 = vmul.f32 %v837, %v849
      %v852 = vmul.f32 %v838, %v849
      %v853 = vmul.f32 %v839, %v849
      %v854 = vmul.f32 %v840, %v849
      %v855 = vmul.f32 %v841, %v849
      %v856 = vmul.f32 %v842, %v849
      %v857 = vmul.f32 %v843, %v849
      %v858 = vld [vmem:[%s6] sm:$0x1]
      %v860 = vlaneseq
      %v861 = vshrl.u32 %v860, 7
      %v862 = vsub.s32 0, %v861
      %v863 = vrot.slane %v858, %v862
      %v865 = vadd.f32 %v851, %v863
      %v866 = vadd.f32 %v852, %v863
      %v867 = vadd.f32 %v853, %v863
      %v868 = vadd.f32 %v854, %v863
      %v869 = vadd.f32 %v855, %v863
      %v870 = vadd.f32 %v856, %v863
      %v871 = vadd.f32 %v857, %v863
      %v872 = vmul.f32 %v865, %v590
      %v873 = vmul.f32 %v866, %v591
      %v874 = vmul.f32 %v867, %v592
      %v875 = vmul.f32 %v868, %v593
      %v876 = vmul.f32 %v869, %v594
      %v877 = vmul.f32 %v870, %v595
      %v878 = vmul.f32 %v871, %v596
      %v879 = vld [vmem:[%s7] sm:$0x7]
      %v880 = vrot.slane %v872, 7
      %v881 = vrot.slane %v873, 7
      %v882 = vrot.slane %v874, 7
      %v883 = vrot.slane %v875, 7
      %v884 = vrot.slane %v876, 7
      %v885 = vrot.slane %v877, 7
      %v886 = vrot.slane %v878, 7
      %vm887 = vcmp.lt.s32.totalorder %v569, 1
      %v888 = vsel %vm887, %v885, %v886
      %v889 = vsel %vm887, %v884, %v885
      %v890 = vsel %vm887, %v883, %v884
      %v891 = vsel %vm887, %v882, %v883
      %v892 = vsel %vm887, %v881, %v882
      %v893 = vsel %vm887, %v880, %v881
      %v894 = vsel %vm887, %v886, %v880
      %v895 = vadd.s32 %v569, 4294967295
      %v896 = vadd.s32 %v570, 4294967295
      %v897 = vadd.s32 %v571, 4294967295
      %v898 = vadd.s32 %v572, 4294967295
      %v899 = vadd.s32 %v573, 4294967295
      %v900 = vadd.s32 %v574, 4294967295
      %v901 = vadd.s32 %v575, 4294967295
      %vm902 = vcmp.ge.s32.totalorder %v895, 0
      %vm903 = vcmp.ge.s32.totalorder %v896, 0
      %vm904 = vcmp.ge.s32.totalorder %v897, 0
      %vm905 = vcmp.ge.s32.totalorder %v898, 0
      %vm906 = vcmp.ge.s32.totalorder %v899, 0
      %vm907 = vcmp.ge.s32.totalorder %v900, 0
      %vm908 = vcmp.ge.s32.totalorder %v901, 0
      %vm909 = vcmp.lt.s32.totalorder %v895, 49
      %vm910 = vcmp.lt.s32.totalorder %v896, 49
      %vm911 = vcmp.lt.s32.totalorder %v897, 49
      %vm912 = vcmp.lt.s32.totalorder %v898, 49
      %vm913 = vcmp.lt.s32.totalorder %v899, 49
      %vm914 = vcmp.lt.s32.totalorder %v900, 49
      %vm915 = vcmp.lt.s32.totalorder %v901, 49
      %vm916 = vmand %vm902, %vm909
      %vm917 = vmand %vm903, %vm910
      %vm918 = vmand %vm904, %vm911
      %vm919 = vmand %vm905, %vm912
      %vm920 = vmand %vm906, %vm913
      %vm921 = vmand %vm907, %vm914
      %vm922 = vmand %vm908, %vm915
      %v923 = vsel %vm916, %v894, 0.0
      %v924 = vsel %vm917, %v893, 0.0
      %v925 = vsel %vm918, %v892, 0.0
      %v926 = vsel %vm919, %v891, 0.0
      %v927 = vsel %vm920, %v890, 0.0
      %v928 = vsel %vm921, %v889, 0.0
      %v929 = vsel %vm922, %v888, 0.0
      %v930 = vlaneseq
      %v931 = vshrl.u32 %v930, 7
      %v932 = vsub.s32 0, %v931
      %v933 = vrot.slane %v879, %v932
      %v934 = vmul.f32 %v923, %v933
      %v935 = vmul.f32 %v924, %v933
      %v936 = vmul.f32 %v925, %v933
      %v937 = vmul.f32 %v926, %v933
      %v938 = vmul.f32 %v927, %v933
      %v939 = vmul.f32 %v928, %v933
      %v940 = vmul.f32 %v929, %v933
      %v941 = vadd.f32 %v934, 0.0
      %v942 = vadd.f32 %v935, 0.0
      %v943 = vadd.f32 %v936, 0.0
      %v944 = vadd.f32 %v937, 0.0
      %v945 = vadd.f32 %v938, 0.0
      %v946 = vadd.f32 %v939, 0.0
      %v947 = vadd.f32 %v940, 0.0
      %v948 = vlaneseq
      %v949 = vshrl.u32 %v948, 7
      %v950 = vsub.s32 1, %v949
      %v951 = vrot.slane %v879, %v950
      %v952 = vmul.f32 %v872, %v951
      %v953 = vmul.f32 %v873, %v951
      %v954 = vmul.f32 %v874, %v951
      %v955 = vmul.f32 %v875, %v951
      %v956 = vmul.f32 %v876, %v951
      %v957 = vmul.f32 %v877, %v951
      %v958 = vmul.f32 %v878, %v951
      %v959 = vadd.f32 %v941, %v952
      %v960 = vadd.f32 %v942, %v953
      %v961 = vadd.f32 %v943, %v954
      %v962 = vadd.f32 %v944, %v955
      %v963 = vadd.f32 %v945, %v956
      %v964 = vadd.f32 %v946, %v957
      %v965 = vadd.f32 %v947, %v958
      %v966 = vrot.slane %v872, 1
      %v967 = vrot.slane %v873, 1
      %v968 = vrot.slane %v874, 1
      %v969 = vrot.slane %v875, 1
      %v970 = vrot.slane %v876, 1
      %v971 = vrot.slane %v877, 1
      %v972 = vrot.slane %v878, 1
      %vm973 = vcmp.lt.s32.totalorder %v569, 7
      %v974 = vsel %vm973, %v971, %v972
      %v975 = vsel %vm973, %v970, %v971
      %v976 = vsel %vm973, %v969, %v970
      %v977 = vsel %vm973, %v968, %v969
      %v978 = vsel %vm973, %v967, %v968
      %v979 = vsel %vm973, %v966, %v967
      %v980 = vsel %vm973, %v972, %v966
      %v981 = vadd.s32 %v569, 1
      %v982 = vadd.s32 %v570, 1
      %v983 = vadd.s32 %v571, 1
      %v984 = vadd.s32 %v572, 1
      %v985 = vadd.s32 %v573, 1
      %v986 = vadd.s32 %v574, 1
      %v987 = vadd.s32 %v575, 1
      %vm988 = vcmp.ge.s32.totalorder %v981, 0
      %vm989 = vcmp.ge.s32.totalorder %v982, 0
      %vm990 = vcmp.ge.s32.totalorder %v983, 0
      %vm991 = vcmp.ge.s32.totalorder %v984, 0
      %vm992 = vcmp.ge.s32.totalorder %v985, 0
      %vm993 = vcmp.ge.s32.totalorder %v986, 0
      %vm994 = vcmp.ge.s32.totalorder %v987, 0
      %vm995 = vcmp.lt.s32.totalorder %v981, 49
      %vm996 = vcmp.lt.s32.totalorder %v982, 49
      %vm997 = vcmp.lt.s32.totalorder %v983, 49
      %vm998 = vcmp.lt.s32.totalorder %v984, 49
      %vm999 = vcmp.lt.s32.totalorder %v985, 49
      %vm1000 = vcmp.lt.s32.totalorder %v986, 49
      %vm1001 = vcmp.lt.s32.totalorder %v987, 49
      %vm1002 = vmand %vm988, %vm995
      %vm1003 = vmand %vm989, %vm996
      %vm1004 = vmand %vm990, %vm997
      %vm1005 = vmand %vm991, %vm998
      %vm1006 = vmand %vm992, %vm999
      %vm1007 = vmand %vm993, %vm1000
      %vm1008 = vmand %vm994, %vm1001
      %v1009 = vsel %vm1002, %v979, 0.0
      %v1010 = vsel %vm1003, %v978, 0.0
      %v1011 = vsel %vm1004, %v977, 0.0
      %v1012 = vsel %vm1005, %v976, 0.0
      %v1013 = vsel %vm1006, %v975, 0.0
      %v1014 = vsel %vm1007, %v974, 0.0
      %v1015 = vsel %vm1008, %v980, 0.0
      %v1016 = vlaneseq
      %v1017 = vshrl.u32 %v1016, 7
      %v1018 = vsub.s32 2, %v1017
      %v1019 = vrot.slane %v879, %v1018
      %v1020 = vmul.f32 %v1009, %v1019
      %v1021 = vmul.f32 %v1010, %v1019
      %v1022 = vmul.f32 %v1011, %v1019
      %v1023 = vmul.f32 %v1012, %v1019
      %v1024 = vmul.f32 %v1013, %v1019
      %v1025 = vmul.f32 %v1014, %v1019
      %v1026 = vmul.f32 %v1015, %v1019
      %v1027 = vadd.f32 %v959, %v1020
      %v1028 = vadd.f32 %v960, %v1021
      %v1029 = vadd.f32 %v961, %v1022
      %v1030 = vadd.f32 %v962, %v1023
      %v1031 = vadd.f32 %v963, %v1024
      %v1032 = vadd.f32 %v964, %v1025
      %v1033 = vadd.f32 %v965, %v1026
      %v1034 = vld [vmem:[%s8] sm:$0x1]
      %v1036 = vlaneseq
      %v1037 = vshrl.u32 %v1036, 7
      %v1038 = vsub.s32 0, %v1037
      %v1039 = vrot.slane %v1034, %v1038
      %v1041 = vadd.f32 %v1027, %v1039
      %v1042 = vadd.f32 %v1028, %v1039
      %v1043 = vadd.f32 %v1029, %v1039
      %v1044 = vadd.f32 %v1030, %v1039
      %v1045 = vadd.f32 %v1031, %v1039
      %v1046 = vadd.f32 %v1032, %v1039
      %v1047 = vadd.f32 %v1033, %v1039
      %vm1048 = vcmp.gt.f32.partialorder %v1041, 0.0
      %vm1049 = vcmp.gt.f32.partialorder %v1042, 0.0
      %vm1050 = vcmp.gt.f32.partialorder %v1043, 0.0
      %vm1051 = vcmp.gt.f32.partialorder %v1044, 0.0
      %vm1052 = vcmp.gt.f32.partialorder %v1045, 0.0
      %vm1053 = vcmp.gt.f32.partialorder %v1046, 0.0
      %vm1054 = vcmp.gt.f32.partialorder %v1047, 0.0
      %1055 = vset.pattern.permute.xlu0 1
      %1056 = vperm.xlu0 %1055, %v738
      %v1057 = vpop.permute.xlu0 %1056
      %v1059 = vmul.f32 %v1057, %v1041
      %v1060 = vmul.f32 %v1057, %v1042
      %v1061 = vmul.f32 %v1057, %v1043
      %v1062 = vmul.f32 %v1057, %v1044
      %v1063 = vmul.f32 %v1057, %v1045
      %v1064 = vmul.f32 %v1057, %v1046
      %v1065 = vmul.f32 %v1057, %v1047
      %v1066 = vsel %vm1048, %v1041, %v1059
      %v1067 = vsel %vm1049, %v1042, %v1060
      %v1068 = vsel %vm1050, %v1043, %v1061
      %v1069 = vsel %vm1051, %v1044, %v1062
      %v1070 = vsel %vm1052, %v1045, %v1063
      %v1071 = vsel %vm1053, %v1046, %v1064
      %v1072 = vsel %vm1054, %v1047, %v1065
      %v1073 = vmul.f32 %v1066, %v590
      %v1074 = vmul.f32 %v1067, %v591
      %v1075 = vmul.f32 %v1068, %v592
      %v1076 = vmul.f32 %v1069, %v593
      %v1077 = vmul.f32 %v1070, %v594
      %v1078 = vmul.f32 %v1071, %v595
      %v1079 = vmul.f32 %v1072, %v596
      %v1080 = vsel %vm605, %v1073, 0.0
      %v1081 = vsel %vm605, %v1074, 0.0
      %v1082 = vadd.f32 %v1080, %v1081
      %v1083 = vsel %vm605, %v1075, 0.0
      %v1084 = vadd.f32 %v1082, %v1083
      %v1085 = vsel %vm605, %v1076, 0.0
      %v1086 = vadd.f32 %v1084, %v1085
      %v1087 = vsel %vm605, %v1077, 0.0
      %v1088 = vadd.f32 %v1086, %v1087
      %v1089 = vsel %vm605, %v1078, 0.0
      %v1090 = vadd.f32 %v1088, %v1089
      %v1091 = vsel %vm605, %v1079, 0.0
      %v1092 = vadd.f32 %v1090, %v1091
      %1093 = vadd.xlane.f32.xlu0 %v1092
      %v1094 = vpop.xlane.xlu0 %1093
      %v1095 = vrot.slane %v1094, 4
      %v1096 = vadd.f32 %v1094, %v1095
      %v1097 = vrot.slane %v1096, 2
      %v1098 = vadd.f32 %v1096, %v1097
      %v1099 = vrot.slane %v1098, 1
      %v1100 = vadd.f32 %v1098, %v1099
      %s1101 = vtos %v1100
      %v1102 = vmul.f32 %v1073, %v1073
      %v1103 = vmul.f32 %v1074, %v1074
      %v1104 = vmul.f32 %v1075, %v1075
      %v1105 = vmul.f32 %v1076, %v1076
      %v1106 = vmul.f32 %v1077, %v1077
      %v1107 = vmul.f32 %v1078, %v1078
      %v1108 = vmul.f32 %v1079, %v1079
      %v1109 = vsel %vm605, %v1102, 0.0
      %v1110 = vsel %vm605, %v1103, 0.0
      %v1111 = vadd.f32 %v1109, %v1110
      %v1112 = vsel %vm605, %v1104, 0.0
      %v1113 = vadd.f32 %v1111, %v1112
      %v1114 = vsel %vm605, %v1105, 0.0
      %v1115 = vadd.f32 %v1113, %v1114
      %v1116 = vsel %vm605, %v1106, 0.0
      %v1117 = vadd.f32 %v1115, %v1116
      %v1118 = vsel %vm605, %v1107, 0.0
      %v1119 = vadd.f32 %v1117, %v1118
      %v1120 = vsel %vm605, %v1108, 0.0
      %v1121 = vadd.f32 %v1119, %v1120
      %1122 = vadd.xlane.f32.xlu0 %v1121
      %v1123 = vpop.xlane.xlu0 %1122
      %v1124 = vrot.slane %v1123, 4
      %v1125 = vadd.f32 %v1123, %v1124
      %v1126 = vrot.slane %v1125, 2
      %v1127 = vadd.f32 %v1125, %v1126
      %v1128 = vrot.slane %v1127, 1
      %v1129 = vadd.f32 %v1127, %v1128
      %s1130 = vtos %v1129
      %v1131 = vrcp.pop 1568.0
      %s1132 = vtos %v1131
      %s1133 = smul.f32 %s1101, %s1132
      %s1134 = smul.f32 %s1133, 1568.0
      %s1135 = smul.f32 %s1134, %s1133
      %s1136 = ssub.f32 %s1130, %s1135
      %v1137 = vrcp.pop 1567.0
      %s1138 = vtos %v1137
      %s1139 = smul.f32 %s1136, %s1138
      %v1140 = vstv %s1133
      %v1141 = vsub.f32 %v1073, %v1140
      %v1142 = vsub.f32 %v1074, %v1140
      %v1143 = vsub.f32 %v1075, %v1140
      %v1144 = vsub.f32 %v1076, %v1140
      %v1145 = vsub.f32 %v1077, %v1140
      %v1146 = vsub.f32 %v1078, %v1140
      %v1147 = vsub.f32 %v1079, %v1140
      %s1148 = sadd.f32 %s1139, 1e-05
      %v1149 = vstv %s1148
      %v1150 = vrsqrt.pop %v1149
      %s1151 = vtos %v1150
      %v1152 = vstv %s1151
      %v1153 = vmul.f32 %v1141, %v1152
      %v1154 = vmul.f32 %v1142, %v1152
      %v1155 = vmul.f32 %v1143, %v1152
      %v1156 = vmul.f32 %v1144, %v1152
      %v1157 = vmul.f32 %v1145, %v1152
      %v1158 = vmul.f32 %v1146, %v1152
      %v1159 = vmul.f32 %v1147, %v1152
      %v1160 = vld [vmem:[%s9] sm:$0x1]
      %v1162 = vlaneseq
      %v1163 = vshrl.u32 %v1162, 7
      %v1164 = vsub.s32 0, %v1163
      %v1165 = vrot.slane %v1160, %v1164
      %v1167 = vmul.f32 %v1153, %v1165
      %v1168 = vmul.f32 %v1154, %v1165
      %v1169 = vmul.f32 %v1155, %v1165
      %v1170 = vmul.f32 %v1156, %v1165
      %v1171 = vmul.f32 %v1157, %v1165
      %v1172 = vmul.f32 %v1158, %v1165
      %v1173 = vmul.f32 %v1159, %v1165
      %v1174 = vld [vmem:[%s10] sm:$0x1]
      %v1176 = vlaneseq
      %v1177 = vshrl.u32 %v1176, 7
      %v1178 = vsub.s32 0, %v1177
      %v1179 = vrot.slane %v1174, %v1178
      %v1181 = vadd.f32 %v1167, %v1179
      %v1182 = vadd.f32 %v1168, %v1179
      %v1183 = vadd.f32 %v1169, %v1179
      %v1184 = vadd.f32 %v1170, %v1179
      %v1185 = vadd.f32 %v1171, %v1179
      %v1186 = vadd.f32 %v1172, %v1179
      %v1187 = vadd.f32 %v1173, %v1179
      %v1188 = vld [vmem:[%s11] sm:$0xff]
      %v1189 = vld [vmem:[%s11 + $0x8] sm:$0xff]
      %v1190 = vld [vmem:[%s11 + $0x10] sm:$0xff]
      %v1191 = vld [vmem:[%s11 + $0x18] sm:$0xff]
      %v1192 = vld [vmem:[%s12] sm:$0x1]
      %v1194 = vlaneseq
      %v1195 = vshrl.u32 %v1194, 7
      %v1196 = vsub.s32 0, %v1195
      %v1197 = vrot.slane %v1192, %v1196
      %v1200 = vsel %vm605, %v1181, 0
      %v1203 = vsel %vm605, %v1182, 0
      %v1206 = vsel %vm605, %v1183, 0
      %v1209 = vsel %vm605, %v1184, 0
      %v1212 = vsel %vm605, %v1185, 0
      %v1215 = vsel %vm605, %v1186, 0
      %v1218 = vsel %vm605, %v1187, 0
      %1220 = vmatprep.subr.mxu0 0.0
      %1221 = vmatpush1.msra.mxu0 %v1188
      %1222 = vmatprep.subr.mxu0 0.0
      %1223 = vmatpush1.msra.mxu0 %v1189
      %1224 = vmatprep.subr.mxu0 0.0
      %1225 = vmatpush1.msra.mxu0 %v1190
      %1226 = vmatprep.subr.mxu0 0.0
      %1227 = vmatpush1.msra.mxu0 %v1191
      %1228 = vmatprep.subr.mxu0 0.0
      %1229 = vmatpush1.msra.mxu0 0.0
      %1230 = vmatprep.subr.mxu0 0.0
      %1231 = vmatpush1.msra.mxu0 0.0
      %1232 = vmatprep.subr.mxu0 0.0
      %1233 = vmatpush1.msra.mxu0 0.0
      %1234 = vmatprep.subr.mxu0 0.0
      %1235 = vmatpush1.msra.mxu0 0.0
      %1236 = vmatprep.subr.mxu0 0.0
      %1237 = vmatpush1.msra.mxu0 0.0
      %1238 = vmatprep.subr.mxu0 0.0
      %1239 = vmatpush1.msra.mxu0 0.0
      %1240 = vmatprep.subr.mxu0 0.0
      %1241 = vmatpush1.msra.mxu0 0.0
      %1242 = vmatprep.subr.mxu0 0.0
      %1243 = vmatpush1.msra.mxu0 0.0
      %1244 = vmatprep.subr.mxu0 0.0
      %1245 = vmatpush1.msra.mxu0 0.0
      %1246 = vmatprep.subr.mxu0 0.0
      %1247 = vmatpush1.msra.mxu0 0.0
      %1248 = vmatprep.subr.mxu0 0.0
      %1249 = vmatpush1.msra.mxu0 0.0
      %1250 = vmatprep.subr.mxu0 0.0
      %1251 = vmatpush1.msra.mxu0 0.0
      %1252 = vmatprep.subr.mxu0 0.0
      %1253 = vmatpush1.msra.mxu0 0.0
      %1254 = vmatprep.subr.mxu0 0.0
      %1255 = vmatpush1.msra.mxu0 0.0
      %1256 = vmatprep.subr.mxu0 0.0
      %1257 = vmatpush1.msra.mxu0 0.0
      %1258 = vmatprep.subr.mxu0 0.0
      %1259 = vmatpush1.msra.mxu0 0.0
      %1260 = vmatprep.subr.mxu0 0.0
      %1261 = vmatpush1.msra.mxu0 0.0
      %1262 = vmatprep.subr.mxu0 0.0
      %1263 = vmatpush1.msra.mxu0 0.0
      %1264 = vmatprep.subr.mxu0 0.0
      %1265 = vmatpush1.msra.mxu0 0.0
      %1266 = vmatprep.subr.mxu0 0.0
      %1267 = vmatpush1.msra.mxu0 0.0
      %1268 = vmatprep.subr.mxu0 0.0
      %1269 = vmatpush1.msra.mxu0 0.0
      %1270 = vmatprep.subr.mxu0 0.0
      %1271 = vmatpush1.msra.mxu0 0.0
      %1272 = vmatprep.subr.mxu0 0.0
      %1273 = vmatpush1.msra.mxu0 0.0
      %1274 = vmatprep.subr.mxu0 0.0
      %1275 = vmatpush1.msra.mxu0 0.0
      %1276 = vmatprep.subr.mxu0 0.0
      %1277 = vmatpush1.msra.mxu0 0.0
      %1278 = vmatprep.subr.mxu0 0.0
      %1279 = vmatpush1.msra.mxu0 0.0
      %1280 = vmatprep.subr.mxu0 0.0
      %1281 = vmatpush1.msra.mxu0 0.0
      %1282 = vmatprep.subr.mxu0 0.0
      %1283 = vmatpush1.msra.mxu0 0.0
      %1284 = vmatprep.mubr.f32.mxu0 0.0
      %1285 = vmatmul.mubr.f32.gmra.mrb[0].mxu0 %v1200
      %v1286 = vpop.f32.mrb[0].mxu0
      %v1287 = vadd.f32 %v1197, %v1286
      %v1288 = vpop.f32.mrb[0].mxu0
      %1289 = vmatprep.mubr.f32.mxu0 0.0
      %1290 = vmatmul.mubr.f32.gmra.mrb[0].mxu0 %v1203
      %v1291 = vpop.f32.mrb[0].mxu0
      %v1292 = vadd.f32 %v1197, %v1291
      %v1293 = vpop.f32.mrb[0].mxu0
      %1294 = vmatprep.mubr.f32.mxu0 0.0
      %1295 = vmatmul.mubr.f32.gmra.mrb[0].mxu0 %v1206
      %v1296 = vpop.f32.mrb[0].mxu0
      %v1297 = vadd.f32 %v1197, %v1296
      %v1298 = vpop.f32.mrb[0].mxu0
      %1299 = vmatprep.mubr.f32.mxu0 0.0
      %1300 = vmatmul.mubr.f32.gmra.mrb[0].mxu0 %v1209
      %v1301 = vpop.f32.mrb[0].mxu0
      %v1302 = vadd.f32 %v1197, %v1301
      %v1303 = vpop.f32.mrb[0].mxu0
      %1304 = vmatprep.mubr.f32.mxu0 0.0
      %1305 = vmatmul.mubr.f32.gmra.mrb[0].mxu0 %v1212
      %v1306 = vpop.f32.mrb[0].mxu0
      %v1307 = vadd.f32 %v1197, %v1306
      %v1308 = vpop.f32.mrb[0].mxu0
      %1309 = vmatprep.mubr.f32.mxu0 0.0
      %1310 = vmatmul.mubr.f32.gmra.mrb[0].mxu0 %v1215
      %v1311 = vpop.f32.mrb[0].mxu0
      %v1312 = vadd.f32 %v1197, %v1311
      %v1313 = vpop.f32.mrb[0].mxu0
      %1314 = vmatprep.mubr.f32.mxu0 0.0
      %1315 = vmatmul.mubr.f32.gmra.mrb[0].mxu0 %v1218
      %v1316 = vpop.f32.mrb[0].mxu0
      %v1317 = vadd.f32 %v1197, %v1316
      %v1318 = vpop.f32.mrb[0].mxu0
      %1319 = vdwg.mxu0
      %v1320 = vadd.f32 %v1287, %v559
      %v1321 = vadd.f32 %v1292, %v560
      %v1322 = vadd.f32 %v1297, %v561
      %v1323 = vadd.f32 %v1302, %v562
      %v1324 = vadd.f32 %v1307, %v563
      %v1325 = vadd.f32 %v1312, %v564
      %v1326 = vadd.f32 %v1317, %v565
      %s1327 = scalar_lea.vmem %s4, 32
      %v1328 = vld [vmem:[%s1327] sm:$0xff]
      %v1329 = vld [vmem:[%s1327 + $0x8] sm:$0xff]
      %v1330 = vld [vmem:[%s1327 + $0x10] sm:$0xff]
      %v1331 = vld [vmem:[%s1327 + $0x18] sm:$0xff]
      %v1332 = vlaneseq
      %v1333 = vshrl.u32 %v1332, 7
      %v1334 = vsub.s32 1, %v1333
      %v1335 = vrot.slane %v566, %v1334
      %v1337 = vsel %vm605, %v1320, 0
      %v1340 = vsel %vm605, %v1321, 0
      %v1343 = vsel %vm605, %v1322, 0
      %v1346 = vsel %vm605, %v1323, 0
      %v1349 = vsel %vm605, %v1324, 0
      %v1352 = vsel %vm605, %v1325, 0
      %v1355 = vsel %vm605, %v1326, 0
      %1357 = vmatprep.subr.mxu0 0.0
      %1358 = vmatpush1.msra.mxu0 %v1328
      %1359 = vmatprep.subr.mxu0 0.0
      %1360 = vmatpush1.msra.mxu0 %v1329
      %1361 = vmatprep.subr.mxu0 0.0
      %1362 = vmatpush1.msra.mxu0 %v1330
      %1363 = vmatprep.subr.mxu0 0.0
      %1364 = vmatpush1.msra.mxu0 %v1331
      %1365 = vmatprep.subr.mxu0 0.0
      %1366 = vmatpush1.msra.mxu0 0.0
      %1367 = vmatprep.subr.mxu0 0.0
      %1368 = vmatpush1.msra.mxu0 0.0
      %1369 = vmatprep.subr.mxu0 0.0
      %1370 = vmatpush1.msra.mxu0 0.0
      %1371 = vmatprep.subr.mxu0 0.0
      %1372 = vmatpush1.msra.mxu0 0.0
      %1373 = vmatprep.subr.mxu0 0.0
      %1374 = vmatpush1.msra.mxu0 0.0
      %1375 = vmatprep.subr.mxu0 0.0
      %1376 = vmatpush1.msra.mxu0 0.0
      %1377 = vmatprep.subr.mxu0 0.0
      %1378 = vmatpush1.msra.mxu0 0.0
      %1379 = vmatprep.subr.mxu0 0.0
      %1380 = vmatpush1.msra.mxu0 0.0
      %1381 = vmatprep.subr.mxu0 0.0
      %1382 = vmatpush1.msra.mxu0 0.0
      %1383 = vmatprep.subr.mxu0 0.0
      %1384 = vmatpush1.msra.mxu0 0.0
      %1385 = vmatprep.subr.mxu0 0.0
      %1386 = vmatpush1.msra.mxu0 0.0
      %1387 = vmatprep.subr.mxu0 0.0
      %1388 = vmatpush1.msra.mxu0 0.0
      %1389 = vmatprep.subr.mxu0 0.0
      %1390 = vmatpush1.msra.mxu0 0.0
      %1391 = vmatprep.subr.mxu0 0.0
      %1392 = vmatpush1.msra.mxu0 0.0
      %1393 = vmatprep.subr.mxu0 0.0
      %1394 = vmatpush1.msra.mxu0 0.0
      %1395 = vmatprep.subr.mxu0 0.0
      %1396 = vmatpush1.msra.mxu0 0.0
      %1397 = vmatprep.subr.mxu0 0.0
      %1398 = vmatpush1.msra.mxu0 0.0
      %1399 = vmatprep.subr.mxu0 0.0
      %1400 = vmatpush1.msra.mxu0 0.0
      %1401 = vmatprep.subr.mxu0 0.0
      %1402 = vmatpush1.msra.mxu0 0.0
      %1403 = vmatprep.subr.mxu0 0.0
      %1404 = vmatpush1.msra.mxu0 0.0
      %1405 = vmatprep.subr.mxu0 0.0
      %1406 = vmatpush1.msra.mxu0 0.0
      %1407 = vmatprep.subr.mxu0 0.0
      %1408 = vmatpush1.msra.mxu0 0.0
      %1409 = vmatprep.subr.mxu0 0.0
      %1410 = vmatpush1.msra.mxu0 0.0
      %1411 = vmatprep.subr.mxu0 0.0
      %1412 = vmatpush1.msra.mxu0 0.0
      %1413 = vmatprep.subr.mxu0 0.0
      %1414 = vmatpush1.msra.mxu0 0.0
      %1415 = vmatprep.subr.mxu0 0.0
      %1416 = vmatpush1.msra.mxu0 0.0
      %1417 = vmatprep.subr.mxu0 0.0
      %1418 = vmatpush1.msra.mxu0 0.0
      %1419 = vmatprep.subr.mxu0 0.0
      %1420 = vmatpush1.msra.mxu0 0.0
      %1421 = vmatprep.mubr.f32.mxu0 0.0
      %1422 = vmatmul.mubr.f32.gmra.mrb[0].mxu0 %v1337
      %v1423 = vpop.f32.mrb[0].mxu0
      %v1424 = vadd.f32 %v1335, %v1423
      %v1425 = vpop.f32.mrb[0].mxu0
      %1426 = vmatprep.mubr.f32.mxu0 0.0
      %1427 = vmatmul.mubr.f32.gmra.mrb[0].mxu0 %v1340
      %v1428 = vpop.f32.mrb[0].mxu0
      %v1429 = vadd.f32 %v1335, %v1428
      %v1430 = vpop.f32.mrb[0].mxu0
      %1431 = vmatprep.mubr.f32.mxu0 0.0
      %1432 = vmatmul.mubr.f32.gmra.mrb[0].mxu0 %v1343
      %v1433 = vpop.f32.mrb[0].mxu0
      %v1434 = vadd.f32 %v1335, %v1433
      %v1435 = vpop.f32.mrb[0].mxu0
      %1436 = vmatprep.mubr.f32.mxu0 0.0
      %1437 = vmatmul.mubr.f32.gmra.mrb[0].mxu0 %v1346
      %v1438 = vpop.f32.mrb[0].mxu0
      %v1439 = vadd.f32 %v1335, %v1438
      %v1440 = vpop.f32.mrb[0].mxu0
      %1441 = vmatprep.mubr.f32.mxu0 0.0
      %1442 = vmatmul.mubr.f32.gmra.mrb[0].mxu0 %v1349
      %v1443 = vpop.f32.mrb[0].mxu0
      %v1444 = vadd.f32 %v1335, %v1443
      %v1445 = vpop.f32.mrb[0].mxu0
      %1446 = vmatprep.mubr.f32.mxu0 0.0
      %1447 = vmatmul.mubr.f32.gmra.mrb[0].mxu0 %v1352
      %v1448 = vpop.f32.mrb[0].mxu0
      %v1449 = vadd.f32 %v1335, %v1448
      %v1450 = vpop.f32.mrb[0].mxu0
      %1451 = vmatprep.mubr.f32.mxu0 0.0
      %1452 = vmatmul.mubr.f32.gmra.mrb[0].mxu0 %v1355
      %v1453 = vpop.f32.mrb[0].mxu0
      %v1454 = vadd.f32 %v1335, %v1453
      %v1455 = vpop.f32.mrb[0].mxu0
      %1456 = vdwg.mxu0
      %vm1457 = vcmp.gt.f32.partialorder %v1424, 0.0
      %vm1458 = vcmp.gt.f32.partialorder %v1429, 0.0
      %vm1459 = vcmp.gt.f32.partialorder %v1434, 0.0
      %vm1460 = vcmp.gt.f32.partialorder %v1439, 0.0
      %vm1461 = vcmp.gt.f32.partialorder %v1444, 0.0
      %vm1462 = vcmp.gt.f32.partialorder %v1449, 0.0
      %vm1463 = vcmp.gt.f32.partialorder %v1454, 0.0
      %1464 = vset.pattern.permute.xlu0 2
      %1465 = vperm.xlu0 %1464, %v738
      %v1466 = vpop.permute.xlu0 %1465
      %v1468 = vmul.f32 %v1466, %v1424
      %v1469 = vmul.f32 %v1466, %v1429
      %v1470 = vmul.f32 %v1466, %v1434
      %v1471 = vmul.f32 %v1466, %v1439
      %v1472 = vmul.f32 %v1466, %v1444
      %v1473 = vmul.f32 %v1466, %v1449
      %v1474 = vmul.f32 %v1466, %v1454
      %v1475 = vsel %vm1457, %v1424, %v1468
      %v1476 = vsel %vm1458, %v1429, %v1469
      %v1477 = vsel %vm1459, %v1434, %v1470
      %v1478 = vsel %vm1460, %v1439, %v1471
      %v1479 = vsel %vm1461, %v1444, %v1472
      %v1480 = vsel %vm1462, %v1449, %v1473
      %v1481 = vsel %vm1463, %v1454, %v1474
      %v1482 = vmul.f32 %v1475, %v590
      %v1483 = vmul.f32 %v1476, %v591
      %v1484 = vmul.f32 %v1477, %v592
      %v1485 = vmul.f32 %v1478, %v593
      %v1486 = vmul.f32 %v1479, %v594
      %v1487 = vmul.f32 %v1480, %v595
      %v1488 = vmul.f32 %v1481, %v596
      %v1489 = vsel %vm605, %v1482, 0.0
      %v1490 = vsel %vm605, %v1483, 0.0
      %v1491 = vadd.f32 %v1489, %v1490
      %v1492 = vsel %vm605, %v1484, 0.0
      %v1493 = vadd.f32 %v1491, %v1492
      %v1494 = vsel %vm605, %v1485, 0.0
      %v1495 = vadd.f32 %v1493, %v1494
      %v1496 = vsel %vm605, %v1486, 0.0
      %v1497 = vadd.f32 %v1495, %v1496
      %v1498 = vsel %vm605, %v1487, 0.0
      %v1499 = vadd.f32 %v1497, %v1498
      %v1500 = vsel %vm605, %v1488, 0.0
      %v1501 = vadd.f32 %v1499, %v1500
      %1502 = vadd.xlane.f32.xlu0 %v1501
      %v1503 = vpop.xlane.xlu0 %1502
      %v1504 = vrot.slane %v1503, 4
      %v1505 = vadd.f32 %v1503, %v1504
      %v1506 = vrot.slane %v1505, 2
      %v1507 = vadd.f32 %v1505, %v1506
      %v1508 = vrot.slane %v1507, 1
      %v1509 = vadd.f32 %v1507, %v1508
      %s1510 = vtos %v1509
      %v1511 = vmul.f32 %v1482, %v1482
      %v1512 = vmul.f32 %v1483, %v1483
      %v1513 = vmul.f32 %v1484, %v1484
      %v1514 = vmul.f32 %v1485, %v1485
      %v1515 = vmul.f32 %v1486, %v1486
      %v1516 = vmul.f32 %v1487, %v1487
      %v1517 = vmul.f32 %v1488, %v1488
      %v1518 = vsel %vm605, %v1511, 0.0
      %v1519 = vsel %vm605, %v1512, 0.0
      %v1520 = vadd.f32 %v1518, %v1519
      %v1521 = vsel %vm605, %v1513, 0.0
      %v1522 = vadd.f32 %v1520, %v1521
      %v1523 = vsel %vm605, %v1514, 0.0
      %v1524 = vadd.f32 %v1522, %v1523
      %v1525 = vsel %vm605, %v1515, 0.0
      %v1526 = vadd.f32 %v1524, %v1525
      %v1527 = vsel %vm605, %v1516, 0.0
      %v1528 = vadd.f32 %v1526, %v1527
      %v1529 = vsel %vm605, %v1517, 0.0
      %v1530 = vadd.f32 %v1528, %v1529
      %1531 = vadd.xlane.f32.xlu0 %v1530
      %v1532 = vpop.xlane.xlu0 %1531
      %v1533 = vrot.slane %v1532, 4
      %v1534 = vadd.f32 %v1532, %v1533
      %v1535 = vrot.slane %v1534, 2
      %v1536 = vadd.f32 %v1534, %v1535
      %v1537 = vrot.slane %v1536, 1
      %v1538 = vadd.f32 %v1536, %v1537
      %s1539 = vtos %v1538
      %v1540 = vrcp.pop 1568.0
      %s1541 = vtos %v1540
      %s1542 = smul.f32 %s1510, %s1541
      %s1543 = smul.f32 %s1542, 1568.0
      %s1544 = smul.f32 %s1543, %s1542
      %s1545 = ssub.f32 %s1539, %s1544
      %v1546 = vrcp.pop 1567.0
      %s1547 = vtos %v1546
      %s1548 = smul.f32 %s1545, %s1547
      %v1549 = vstv %s1542
      %v1550 = vsub.f32 %v1482, %v1549
      %v1551 = vsub.f32 %v1483, %v1549
      %v1552 = vsub.f32 %v1484, %v1549
      %v1553 = vsub.f32 %v1485, %v1549
      %v1554 = vsub.f32 %v1486, %v1549
      %v1555 = vsub.f32 %v1487, %v1549
      %v1556 = vsub.f32 %v1488, %v1549
      %s1557 = sadd.f32 %s1548, 1e-05
      %v1558 = vstv %s1557
      %v1559 = vrsqrt.pop %v1558
      %s1560 = vtos %v1559
      %v1561 = vstv %s1560
      %v1562 = vmul.f32 %v1550, %v1561
      %v1563 = vmul.f32 %v1551, %v1561
      %v1564 = vmul.f32 %v1552, %v1561
      %v1565 = vmul.f32 %v1553, %v1561
      %v1566 = vmul.f32 %v1554, %v1561
      %v1567 = vmul.f32 %v1555, %v1561
      %v1568 = vmul.f32 %v1556, %v1561
      %s1569 = scalar_lea.vmem %s5, 1
      %v1570 = vld [vmem:[%s1569] sm:$0x1]
      %v1572 = vlaneseq
      %v1573 = vshrl.u32 %v1572, 7
      %v1574 = vsub.s32 0, %v1573
      %v1575 = vrot.slane %v1570, %v1574
      %v1577 = vmul.f32 %v1562, %v1575
      %v1578 = vmul.f32 %v1563, %v1575
      %v1579 = vmul.f32 %v1564, %v1575
      %v1580 = vmul.f32 %v1565, %v1575
      %v1581 = vmul.f32 %v1566, %v1575
      %v1582 = vmul.f32 %v1567, %v1575
      %v1583 = vmul.f32 %v1568, %v1575
      %s1584 = scalar_lea.vmem %s6, 1
      %v1585 = vld [vmem:[%s1584] sm:$0x1]
      %v1587 = vlaneseq
      %v1588 = vshrl.u32 %v1587, 7
      %v1589 = vsub.s32 0, %v1588
      %v1590 = vrot.slane %v1585, %v1589
      %v1592 = vadd.f32 %v1577, %v1590
      %v1593 = vadd.f32 %v1578, %v1590
      %v1594 = vadd.f32 %v1579, %v1590
      %v1595 = vadd.f32 %v1580, %v1590
      %v1596 = vadd.f32 %v1581, %v1590
      %v1597 = vadd.f32 %v1582, %v1590
      %v1598 = vadd.f32 %v1583, %v1590
      %v1599 = vmul.f32 %v1592, %v590
      %v1600 = vmul.f32 %v1593, %v591
      %v1601 = vmul.f32 %v1594, %v592
      %v1602 = vmul.f32 %v1595, %v593
      %v1603 = vmul.f32 %v1596, %v594
      %v1604 = vmul.f32 %v1597, %v595
      %v1605 = vmul.f32 %v1598, %v596
      %s1606 = scalar_lea.vmem %s7, 4
      %v1607 = vld [vmem:[%s1606] sm:$0x7]
      %v1608 = vrot.slane %v1599, 6
      %v1609 = vrot.slane %v1600, 6
      %v1610 = vrot.slane %v1601, 6
      %v1611 = vrot.slane %v1602, 6
      %v1612 = vrot.slane %v1603, 6
      %v1613 = vrot.slane %v1604, 6
      %v1614 = vrot.slane %v1605, 6
      %vm1615 = vcmp.lt.s32.totalorder %v569, 2
      %v1616 = vsel %vm1615, %v1613, %v1614
      %v1617 = vsel %vm1615, %v1612, %v1613
      %v1618 = vsel %vm1615, %v1611, %v1612
      %v1619 = vsel %vm1615, %v1610, %v1611
      %v1620 = vsel %vm1615, %v1609, %v1610
      %v1621 = vsel %vm1615, %v1608, %v1609
      %v1622 = vsel %vm1615, %v1614, %v1608
      %v1623 = vadd.s32 %v569, 4294967294
      %v1624 = vadd.s32 %v570, 4294967294
      %v1625 = vadd.s32 %v571, 4294967294
      %v1626 = vadd.s32 %v572, 4294967294
      %v1627 = vadd.s32 %v573, 4294967294
      %v1628 = vadd.s32 %v574, 4294967294
      %v1629 = vadd.s32 %v575, 4294967294
      %vm1630 = vcmp.ge.s32.totalorder %v1623, 0
      %vm1631 = vcmp.ge.s32.totalorder %v1624, 0
      %vm1632 = vcmp.ge.s32.totalorder %v1625, 0
      %vm1633 = vcmp.ge.s32.totalorder %v1626, 0
      %vm1634 = vcmp.ge.s32.totalorder %v1627, 0
      %vm1635 = vcmp.ge.s32.totalorder %v1628, 0
      %vm1636 = vcmp.ge.s32.totalorder %v1629, 0
      %vm1637 = vcmp.lt.s32.totalorder %v1623, 49
      %vm1638 = vcmp.lt.s32.totalorder %v1624, 49
      %vm1639 = vcmp.lt.s32.totalorder %v1625, 49
      %vm1640 = vcmp.lt.s32.totalorder %v1626, 49
      %vm1641 = vcmp.lt.s32.totalorder %v1627, 49
      %vm1642 = vcmp.lt.s32.totalorder %v1628, 49
      %vm1643 = vcmp.lt.s32.totalorder %v1629, 49
      %vm1644 = vmand %vm1630, %vm1637
      %vm1645 = vmand %vm1631, %vm1638
      %vm1646 = vmand %vm1632, %vm1639
      %vm1647 = vmand %vm1633, %vm1640
      %vm1648 = vmand %vm1634, %vm1641
      %vm1649 = vmand %vm1635, %vm1642
      %vm1650 = vmand %vm1636, %vm1643
      %v1651 = vsel %vm1644, %v1622, 0.0
      %v1652 = vsel %vm1645, %v1621, 0.0
      %v1653 = vsel %vm1646, %v1620, 0.0
      %v1654 = vsel %vm1647, %v1619, 0.0
      %v1655 = vsel %vm1648, %v1618, 0.0
      %v1656 = vsel %vm1649, %v1617, 0.0
      %v1657 = vsel %vm1650, %v1616, 0.0
      %v1658 = vlaneseq
      %v1659 = vshrl.u32 %v1658, 7
      %v1660 = vsub.s32 0, %v1659
      %v1661 = vrot.slane %v1607, %v1660
      %v1662 = vmul.f32 %v1651, %v1661
      %v1663 = vmul.f32 %v1652, %v1661
      %v1664 = vmul.f32 %v1653, %v1661
      %v1665 = vmul.f32 %v1654, %v1661
      %v1666 = vmul.f32 %v1655, %v1661
      %v1667 = vmul.f32 %v1656, %v1661
      %v1668 = vmul.f32 %v1657, %v1661
      %v1669 = vadd.f32 %v1662, 0.0
      %v1670 = vadd.f32 %v1663, 0.0
      %v1671 = vadd.f32 %v1664, 0.0
      %v1672 = vadd.f32 %v1665, 0.0
      %v1673 = vadd.f32 %v1666, 0.0
      %v1674 = vadd.f32 %v1667, 0.0
      %v1675 = vadd.f32 %v1668, 0.0
      %v1676 = vlaneseq
      %v1677 = vshrl.u32 %v1676, 7
      %v1678 = vsub.s32 1, %v1677
      %v1679 = vrot.slane %v1607, %v1678
      %v1680 = vmul.f32 %v1599, %v1679
      %v1681 = vmul.f32 %v1600, %v1679
      %v1682 = vmul.f32 %v1601, %v1679
      %v1683 = vmul.f32 %v1602, %v1679
      %v1684 = vmul.f32 %v1603, %v1679
      %v1685 = vmul.f32 %v1604, %v1679
      %v1686 = vmul.f32 %v1605, %v1679
      %v1687 = vadd.f32 %v1669, %v1680
      %v1688 = vadd.f32 %v1670, %v1681
      %v1689 = vadd.f32 %v1671, %v1682
      %v1690 = vadd.f32 %v1672, %v1683
      %v1691 = vadd.f32 %v1673, %v1684
      %v1692 = vadd.f32 %v1674, %v1685
      %v1693 = vadd.f32 %v1675, %v1686
      %v1694 = vrot.slane %v1599, 2
      %v1695 = vrot.slane %v1600, 2
      %v1696 = vrot.slane %v1601, 2
      %v1697 = vrot.slane %v1602, 2
      %v1698 = vrot.slane %v1603, 2
      %v1699 = vrot.slane %v1604, 2
      %v1700 = vrot.slane %v1605, 2
      %vm1701 = vcmp.lt.s32.totalorder %v569, 6
      %v1702 = vsel %vm1701, %v1699, %v1700
      %v1703 = vsel %vm1701, %v1698, %v1699
      %v1704 = vsel %vm1701, %v1697, %v1698
      %v1705 = vsel %vm1701, %v1696, %v1697
      %v1706 = vsel %vm1701, %v1695, %v1696
      %v1707 = vsel %vm1701, %v1694, %v1695
      %v1708 = vsel %vm1701, %v1700, %v1694
      %v1709 = vadd.s32 %v569, 2
      %v1710 = vadd.s32 %v570, 2
      %v1711 = vadd.s32 %v571, 2
      %v1712 = vadd.s32 %v572, 2
      %v1713 = vadd.s32 %v573, 2
      %v1714 = vadd.s32 %v574, 2
      %v1715 = vadd.s32 %v575, 2
      %vm1716 = vcmp.ge.s32.totalorder %v1709, 0
      %vm1717 = vcmp.ge.s32.totalorder %v1710, 0
      %vm1718 = vcmp.ge.s32.totalorder %v1711, 0
      %vm1719 = vcmp.ge.s32.totalorder %v1712, 0
      %vm1720 = vcmp.ge.s32.totalorder %v1713, 0
      %vm1721 = vcmp.ge.s32.totalorder %v1714, 0
      %vm1722 = vcmp.ge.s32.totalorder %v1715, 0
      %vm1723 = vcmp.lt.s32.totalorder %v1709, 49
      %vm1724 = vcmp.lt.s32.totalorder %v1710, 49
      %vm1725 = vcmp.lt.s32.totalorder %v1711, 49
      %vm1726 = vcmp.lt.s32.totalorder %v1712, 49
      %vm1727 = vcmp.lt.s32.totalorder %v1713, 49
      %vm1728 = vcmp.lt.s32.totalorder %v1714, 49
      %vm1729 = vcmp.lt.s32.totalorder %v1715, 49
      %vm1730 = vmand %vm1716, %vm1723
      %vm1731 = vmand %vm1717, %vm1724
      %vm1732 = vmand %vm1718, %vm1725
      %vm1733 = vmand %vm1719, %vm1726
      %vm1734 = vmand %vm1720, %vm1727
      %vm1735 = vmand %vm1721, %vm1728
      %vm1736 = vmand %vm1722, %vm1729
      %v1737 = vsel %vm1730, %v1707, 0.0
      %v1738 = vsel %vm1731, %v1706, 0.0
      %v1739 = vsel %vm1732, %v1705, 0.0
      %v1740 = vsel %vm1733, %v1704, 0.0
      %v1741 = vsel %vm1734, %v1703, 0.0
      %v1742 = vsel %vm1735, %v1702, 0.0
      %v1743 = vsel %vm1736, %v1708, 0.0
      %v1744 = vlaneseq
      %v1745 = vshrl.u32 %v1744, 7
      %v1746 = vsub.s32 2, %v1745
      %v1747 = vrot.slane %v1607, %v1746
      %v1748 = vmul.f32 %v1737, %v1747
      %v1749 = vmul.f32 %v1738, %v1747
      %v1750 = vmul.f32 %v1739, %v1747
      %v1751 = vmul.f32 %v1740, %v1747
      %v1752 = vmul.f32 %v1741, %v1747
      %v1753 = vmul.f32 %v1742, %v1747
      %v1754 = vmul.f32 %v1743, %v1747
      %v1755 = vadd.f32 %v1687, %v1748
      %v1756 = vadd.f32 %v1688, %v1749
      %v1757 = vadd.f32 %v1689, %v1750
      %v1758 = vadd.f32 %v1690, %v1751
      %v1759 = vadd.f32 %v1691, %v1752
      %v1760 = vadd.f32 %v1692, %v1753
      %v1761 = vadd.f32 %v1693, %v1754
      %s1762 = scalar_lea.vmem %s8, 1
      %v1763 = vld [vmem:[%s1762] sm:$0x1]
      %v1765 = vlaneseq
      %v1766 = vshrl.u32 %v1765, 7
      %v1767 = vsub.s32 0, %v1766
      %v1768 = vrot.slane %v1763, %v1767
      %v1770 = vadd.f32 %v1755, %v1768
      %v1771 = vadd.f32 %v1756, %v1768
      %v1772 = vadd.f32 %v1757, %v1768
      %v1773 = vadd.f32 %v1758, %v1768
      %v1774 = vadd.f32 %v1759, %v1768
      %v1775 = vadd.f32 %v1760, %v1768
      %v1776 = vadd.f32 %v1761, %v1768
      %vm1777 = vcmp.gt.f32.partialorder %v1770, 0.0
      %vm1778 = vcmp.gt.f32.partialorder %v1771, 0.0
      %vm1779 = vcmp.gt.f32.partialorder %v1772, 0.0
      %vm1780 = vcmp.gt.f32.partialorder %v1773, 0.0
      %vm1781 = vcmp.gt.f32.partialorder %v1774, 0.0
      %vm1782 = vcmp.gt.f32.partialorder %v1775, 0.0
      %vm1783 = vcmp.gt.f32.partialorder %v1776, 0.0
      %1784 = vset.pattern.permute.xlu0 3
      %1785 = vperm.xlu0 %1784, %v738
      %v1786 = vpop.permute.xlu0 %1785
      %v1788 = vmul.f32 %v1786, %v1770
      %v1789 = vmul.f32 %v1786, %v1771
      %v1790 = vmul.f32 %v1786, %v1772
      %v1791 = vmul.f32 %v1786, %v1773
      %v1792 = vmul.f32 %v1786, %v1774
      %v1793 = vmul.f32 %v1786, %v1775
      %v1794 = vmul.f32 %v1786, %v1776
      %v1795 = vsel %vm1777, %v1770, %v1788
      %v1796 = vsel %vm1778, %v1771, %v1789
      %v1797 = vsel %vm1779, %v1772, %v1790
      %v1798 = vsel %vm1780, %v1773, %v1791
      %v1799 = vsel %vm1781, %v1774, %v1792
      %v1800 = vsel %vm1782, %v1775, %v1793
      %v1801 = vsel %vm1783, %v1776, %v1794
      %v1802 = vmul.f32 %v1795, %v590
      %v1803 = vmul.f32 %v1796, %v591
      %v1804 = vmul.f32 %v1797, %v592
      %v1805 = vmul.f32 %v1798, %v593
      %v1806 = vmul.f32 %v1799, %v594
      %v1807 = vmul.f32 %v1800, %v595
      %v1808 = vmul.f32 %v1801, %v596
      %v1809 = vsel %vm605, %v1802, 0.0
      %v1810 = vsel %vm605, %v1803, 0.0
      %v1811 = vadd.f32 %v1809, %v1810
      %v1812 = vsel %vm605, %v1804, 0.0
      %v1813 = vadd.f32 %v1811, %v1812
      %v1814 = vsel %vm605, %v1805, 0.0
      %v1815 = vadd.f32 %v1813, %v1814
      %v1816 = vsel %vm605, %v1806, 0.0
      %v1817 = vadd.f32 %v1815, %v1816
      %v1818 = vsel %vm605, %v1807, 0.0
      %v1819 = vadd.f32 %v1817, %v1818
      %v1820 = vsel %vm605, %v1808, 0.0
      %v1821 = vadd.f32 %v1819, %v1820
      %1822 = vadd.xlane.f32.xlu0 %v1821
      %v1823 = vpop.xlane.xlu0 %1822
      %v1824 = vrot.slane %v1823, 4
      %v1825 = vadd.f32 %v1823, %v1824
      %v1826 = vrot.slane %v1825, 2
      %v1827 = vadd.f32 %v1825, %v1826
      %v1828 = vrot.slane %v1827, 1
      %v1829 = vadd.f32 %v1827, %v1828
      %s1830 = vtos %v1829
      %v1831 = vmul.f32 %v1802, %v1802
      %v1832 = vmul.f32 %v1803, %v1803
      %v1833 = vmul.f32 %v1804, %v1804
      %v1834 = vmul.f32 %v1805, %v1805
      %v1835 = vmul.f32 %v1806, %v1806
      %v1836 = vmul.f32 %v1807, %v1807
      %v1837 = vmul.f32 %v1808, %v1808
      %v1838 = vsel %vm605, %v1831, 0.0
      %v1839 = vsel %vm605, %v1832, 0.0
      %v1840 = vadd.f32 %v1838, %v1839
      %v1841 = vsel %vm605, %v1833, 0.0
      %v1842 = vadd.f32 %v1840, %v1841
      %v1843 = vsel %vm605, %v1834, 0.0
      %v1844 = vadd.f32 %v1842, %v1843
      %v1845 = vsel %vm605, %v1835, 0.0
      %v1846 = vadd.f32 %v1844, %v1845
      %v1847 = vsel %vm605, %v1836, 0.0
      %v1848 = vadd.f32 %v1846, %v1847
      %v1849 = vsel %vm605, %v1837, 0.0
      %v1850 = vadd.f32 %v1848, %v1849
      %1851 = vadd.xlane.f32.xlu0 %v1850
      %v1852 = vpop.xlane.xlu0 %1851
      %v1853 = vrot.slane %v1852, 4
      %v1854 = vadd.f32 %v1852, %v1853
      %v1855 = vrot.slane %v1854, 2
      %v1856 = vadd.f32 %v1854, %v1855
      %v1857 = vrot.slane %v1856, 1
      %v1858 = vadd.f32 %v1856, %v1857
      %s1859 = vtos %v1858
      %v1860 = vrcp.pop 1568.0
      %s1861 = vtos %v1860
      %s1862 = smul.f32 %s1830, %s1861
      %s1863 = smul.f32 %s1862, 1568.0
      %s1864 = smul.f32 %s1863, %s1862
      %s1865 = ssub.f32 %s1859, %s1864
      %v1866 = vrcp.pop 1567.0
      %s1867 = vtos %v1866
      %s1868 = smul.f32 %s1865, %s1867
      %v1869 = vstv %s1862
      %v1870 = vsub.f32 %v1802, %v1869
      %v1871 = vsub.f32 %v1803, %v1869
      %v1872 = vsub.f32 %v1804, %v1869
      %v1873 = vsub.f32 %v1805, %v1869
      %v1874 = vsub.f32 %v1806, %v1869
      %v1875 = vsub.f32 %v1807, %v1869
      %v1876 = vsub.f32 %v1808, %v1869
      %s1877 = sadd.f32 %s1868, 1e-05
      %v1878 = vstv %s1877
      %v1879 = vrsqrt.pop %v1878
      %s1880 = vtos %v1879
      %v1881 = vstv %s1880
      %v1882 = vmul.f32 %v1870, %v1881
      %v1883 = vmul.f32 %v1871, %v1881
      %v1884 = vmul.f32 %v1872, %v1881
      %v1885 = vmul.f32 %v1873, %v1881
      %v1886 = vmul.f32 %v1874, %v1881
      %v1887 = vmul.f32 %v1875, %v1881
      %v1888 = vmul.f32 %v1876, %v1881
      %s1889 = scalar_lea.vmem %s9, 1
      %v1890 = vld [vmem:[%s1889] sm:$0x1]
      %v1892 = vlaneseq
      %v1893 = vshrl.u32 %v1892, 7
      %v1894 = vsub.s32 0, %v1893
      %v1895 = vrot.slane %v1890, %v1894
      %v1897 = vmul.f32 %v1882, %v1895
      %v1898 = vmul.f32 %v1883, %v1895
      %v1899 = vmul.f32 %v1884, %v1895
      %v1900 = vmul.f32 %v1885, %v1895
      %v1901 = vmul.f32 %v1886, %v1895
      %v1902 = vmul.f32 %v1887, %v1895
      %v1903 = vmul.f32 %v1888, %v1895
      %s1904 = scalar_lea.vmem %s10, 1
      %v1905 = vld [vmem:[%s1904] sm:$0x1]
      %v1907 = vlaneseq
      %v1908 = vshrl.u32 %v1907, 7
      %v1909 = vsub.s32 0, %v1908
      %v1910 = vrot.slane %v1905, %v1909
      %v1912 = vadd.f32 %v1897, %v1910
      %v1913 = vadd.f32 %v1898, %v1910
      %v1914 = vadd.f32 %v1899, %v1910
      %v1915 = vadd.f32 %v1900, %v1910
      %v1916 = vadd.f32 %v1901, %v1910
      %v1917 = vadd.f32 %v1902, %v1910
      %v1918 = vadd.f32 %v1903, %v1910
      %s1919 = scalar_lea.vmem %s11, 32
      %v1920 = vld [vmem:[%s1919] sm:$0xff]
      %v1921 = vld [vmem:[%s1919 + $0x8] sm:$0xff]
      %v1922 = vld [vmem:[%s1919 + $0x10] sm:$0xff]
      %v1923 = vld [vmem:[%s1919 + $0x18] sm:$0xff]
      %s1924 = scalar_lea.vmem %s12, 1
      %v1925 = vld [vmem:[%s1924] sm:$0x1]
      %v1927 = vlaneseq
      %v1928 = vshrl.u32 %v1927, 7
      %v1929 = vsub.s32 0, %v1928
      %v1930 = vrot.slane %v1925, %v1929
      %v1933 = vsel %vm605, %v1912, 0
      %v1936 = vsel %vm605, %v1913, 0
      %v1939 = vsel %vm605, %v1914, 0
      %v1942 = vsel %vm605, %v1915, 0
      %v1945 = vsel %vm605, %v1916, 0
      %v1948 = vsel %vm605, %v1917, 0
      %v1951 = vsel %vm605, %v1918, 0
      %1953 = vmatprep.subr.mxu0 0.0
      %1954 = vmatpush1.msra.mxu0 %v1920
      %1955 = vmatprep.subr.mxu0 0.0
      %1956 = vmatpush1.msra.mxu0 %v1921
      %1957 = vmatprep.subr.mxu0 0.0
      %1958 = vmatpush1.msra.mxu0 %v1922
      %1959 = vmatprep.subr.mxu0 0.0
      %1960 = vmatpush1.msra.mxu0 %v1923
      %1961 = vmatprep.subr.mxu0 0.0
      %1962 = vmatpush1.msra.mxu0 0.0
      %1963 = vmatprep.subr.mxu0 0.0
      %1964 = vmatpush1.msra.mxu0 0.0
      %1965 = vmatprep.subr.mxu0 0.0
      %1966 = vmatpush1.msra.mxu0 0.0
      %1967 = vmatprep.subr.mxu0 0.0
      %1968 = vmatpush1.msra.mxu0 0.0
      %1969 = vmatprep.subr.mxu0 0.0
      %1970 = vmatpush1.msra.mxu0 0.0
      %1971 = vmatprep.subr.mxu0 0.0
      %1972 = vmatpush1.msra.mxu0 0.0
      %1973 = vmatprep.subr.mxu0 0.0
      %1974 = vmatpush1.msra.mxu0 0.0
      %1975 = vmatprep.subr.mxu0 0.0
      %1976 = vmatpush1.msra.mxu0 0.0
      %1977 = vmatprep.subr.mxu0 0.0
      %1978 = vmatpush1.msra.mxu0 0.0
      %1979 = vmatprep.subr.mxu0 0.0
      %1980 = vmatpush1.msra.mxu0 0.0
      %1981 = vmatprep.subr.mxu0 0.0
      %1982 = vmatpush1.msra.mxu0 0.0
      %1983 = vmatprep.subr.mxu0 0.0
      %1984 = vmatpush1.msra.mxu0 0.0
      %1985 = vmatprep.subr.mxu0 0.0
      %1986 = vmatpush1.msra.mxu0 0.0
      %1987 = vmatprep.subr.mxu0 0.0
      %1988 = vmatpush1.msra.mxu0 0.0
      %1989 = vmatprep.subr.mxu0 0.0
      %1990 = vmatpush1.msra.mxu0 0.0
      %1991 = vmatprep.subr.mxu0 0.0
      %1992 = vmatpush1.msra.mxu0 0.0
      %1993 = vmatprep.subr.mxu0 0.0
      %1994 = vmatpush1.msra.mxu0 0.0
      %1995 = vmatprep.subr.mxu0 0.0
      %1996 = vmatpush1.msra.mxu0 0.0
      %1997 = vmatprep.subr.mxu0 0.0
      %1998 = vmatpush1.msra.mxu0 0.0
      %1999 = vmatprep.subr.mxu0 0.0
      %2000 = vmatpush1.msra.mxu0 0.0
      %2001 = vmatprep.subr.mxu0 0.0
      %2002 = vmatpush1.msra.mxu0 0.0
      %2003 = vmatprep.subr.mxu0 0.0
      %2004 = vmatpush1.msra.mxu0 0.0
      %2005 = vmatprep.subr.mxu0 0.0
      %2006 = vmatpush1.msra.mxu0 0.0
      %2007 = vmatprep.subr.mxu0 0.0
      %2008 = vmatpush1.msra.mxu0 0.0
      %2009 = vmatprep.subr.mxu0 0.0
      %2010 = vmatpush1.msra.mxu0 0.0
      %2011 = vmatprep.subr.mxu0 0.0
      %2012 = vmatpush1.msra.mxu0 0.0
      %2013 = vmatprep.subr.mxu0 0.0
      %2014 = vmatpush1.msra.mxu0 0.0
      %2015 = vmatprep.subr.mxu0 0.0
      %2016 = vmatpush1.msra.mxu0 0.0
      %2017 = vmatprep.mubr.f32.mxu0 0.0
      %2018 = vmatmul.mubr.f32.gmra.mrb[0].mxu0 %v1933
      %v2019 = vpop.f32.mrb[0].mxu0
      %v2020 = vadd.f32 %v1930, %v2019
      %v2021 = vpop.f32.mrb[0].mxu0
      %2022 = vmatprep.mubr.f32.mxu0 0.0
      %2023 = vmatmul.mubr.f32.gmra.mrb[0].mxu0 %v1936
      %v2024 = vpop.f32.mrb[0].mxu0
      %v2025 = vadd.f32 %v1930, %v2024
      %v2026 = vpop.f32.mrb[0].mxu0
      %2027 = vmatprep.mubr.f32.mxu0 0.0
      %2028 = vmatmul.mubr.f32.gmra.mrb[0].mxu0 %v1939
      %v2029 = vpop.f32.mrb[0].mxu0
      %v2030 = vadd.f32 %v1930, %v2029
      %v2031 = vpop.f32.mrb[0].mxu0
      %2032 = vmatprep.mubr.f32.mxu0 0.0
      %2033 = vmatmul.mubr.f32.gmra.mrb[0].mxu0 %v1942
      %v2034 = vpop.f32.mrb[0].mxu0
      %v2035 = vadd.f32 %v1930, %v2034
      %v2036 = vpop.f32.mrb[0].mxu0
      %2037 = vmatprep.mubr.f32.mxu0 0.0
      %2038 = vmatmul.mubr.f32.gmra.mrb[0].mxu0 %v1945
      %v2039 = vpop.f32.mrb[0].mxu0
      %v2040 = vadd.f32 %v1930, %v2039
      %v2041 = vpop.f32.mrb[0].mxu0
      %2042 = vmatprep.mubr.f32.mxu0 0.0
      %2043 = vmatmul.mubr.f32.gmra.mrb[0].mxu0 %v1948
      %v2044 = vpop.f32.mrb[0].mxu0
      %v2045 = vadd.f32 %v1930, %v2044
      %v2046 = vpop.f32.mrb[0].mxu0
      %2047 = vmatprep.mubr.f32.mxu0 0.0
      %2048 = vmatmul.mubr.f32.gmra.mrb[0].mxu0 %v1951
      %v2049 = vpop.f32.mrb[0].mxu0
      %v2050 = vadd.f32 %v1930, %v2049
      %v2051 = vpop.f32.mrb[0].mxu0
      %2052 = vdwg.mxu0
      %v2053 = vadd.f32 %v2020, %v1320
      %v2054 = vadd.f32 %v2025, %v1321
      %v2055 = vadd.f32 %v2030, %v1322
      %v2056 = vadd.f32 %v2035, %v1323
      %v2057 = vadd.f32 %v2040, %v1324
      %v2058 = vadd.f32 %v2045, %v1325
      %v2059 = vadd.f32 %v2050, %v1326
      %v2060 = vmax.f32 %v2053, 0.0
      %v2061 = vmax.f32 %v2054, 0.0
      %v2062 = vmax.f32 %v2055, 0.0
      %v2063 = vmax.f32 %v2056, 0.0
      %v2064 = vmax.f32 %v2057, 0.0
      %v2065 = vmax.f32 %v2058, 0.0
      %v2066 = vmax.f32 %v2059, 0.0
      %v2067 = vld [vmem:[%s13] sm:$0xff]
      %v2068 = vld [vmem:[%s13 + $0x8] sm:$0xff]
      %v2069 = vld [vmem:[%s13 + $0x10] sm:$0xff]
      %v2070 = vld [vmem:[%s13 + $0x18] sm:$0xff]
      %v2071 = vld [vmem:[%s14] sm:$0x1]
      %v2073 = vlaneseq
      %v2074 = vshrl.u32 %v2073, 7
      %v2075 = vsub.s32 0, %v2074
      %v2076 = vrot.slane %v2071, %v2075
      %v2079 = vsel %vm605, %v2060, 0
      %v2082 = vsel %vm605, %v2061, 0
      %v2085 = vsel %vm605, %v2062, 0
      %v2088 = vsel %vm605, %v2063, 0
      %v2091 = vsel %vm605, %v2064, 0
      %v2094 = vsel %vm605, %v2065, 0
      %v2097 = vsel %vm605, %v2066, 0
      %2099 = vmatprep.subr.mxu0 0.0
      %2100 = vmatpush1.msra.mxu0 %v2067
      %2101 = vmatprep.subr.mxu0 0.0
      %2102 = vmatpush1.msra.mxu0 %v2068
      %2103 = vmatprep.subr.mxu0 0.0
      %2104 = vmatpush1.msra.mxu0 %v2069
      %2105 = vmatprep.subr.mxu0 0.0
      %2106 = vmatpush1.msra.mxu0 %v2070
      %2107 = vmatprep.subr.mxu0 0.0
      %2108 = vmatpush1.msra.mxu0 0.0
      %2109 = vmatprep.subr.mxu0 0.0
      %2110 = vmatpush1.msra.mxu0 0.0
      %2111 = vmatprep.subr.mxu0 0.0
      %2112 = vmatpush1.msra.mxu0 0.0
      %2113 = vmatprep.subr.mxu0 0.0
      %2114 = vmatpush1.msra.mxu0 0.0
      %2115 = vmatprep.subr.mxu0 0.0
      %2116 = vmatpush1.msra.mxu0 0.0
      %2117 = vmatprep.subr.mxu0 0.0
      %2118 = vmatpush1.msra.mxu0 0.0
      %2119 = vmatprep.subr.mxu0 0.0
      %2120 = vmatpush1.msra.mxu0 0.0
      %2121 = vmatprep.subr.mxu0 0.0
      %2122 = vmatpush1.msra.mxu0 0.0
      %2123 = vmatprep.subr.mxu0 0.0
      %2124 = vmatpush1.msra.mxu0 0.0
      %2125 = vmatprep.subr.mxu0 0.0
      %2126 = vmatpush1.msra.mxu0 0.0
      %2127 = vmatprep.subr.mxu0 0.0
      %2128 = vmatpush1.msra.mxu0 0.0
      %2129 = vmatprep.subr.mxu0 0.0
      %2130 = vmatpush1.msra.mxu0 0.0
      %2131 = vmatprep.subr.mxu0 0.0
      %2132 = vmatpush1.msra.mxu0 0.0
      %2133 = vmatprep.subr.mxu0 0.0
      %2134 = vmatpush1.msra.mxu0 0.0
      %2135 = vmatprep.subr.mxu0 0.0
      %2136 = vmatpush1.msra.mxu0 0.0
      %2137 = vmatprep.subr.mxu0 0.0
      %2138 = vmatpush1.msra.mxu0 0.0
      %2139 = vmatprep.subr.mxu0 0.0
      %2140 = vmatpush1.msra.mxu0 0.0
      %2141 = vmatprep.subr.mxu0 0.0
      %2142 = vmatpush1.msra.mxu0 0.0
      %2143 = vmatprep.subr.mxu0 0.0
      %2144 = vmatpush1.msra.mxu0 0.0
      %2145 = vmatprep.subr.mxu0 0.0
      %2146 = vmatpush1.msra.mxu0 0.0
      %2147 = vmatprep.subr.mxu0 0.0
      %2148 = vmatpush1.msra.mxu0 0.0
      %2149 = vmatprep.subr.mxu0 0.0
      %2150 = vmatpush1.msra.mxu0 0.0
      %2151 = vmatprep.subr.mxu0 0.0
      %2152 = vmatpush1.msra.mxu0 0.0
      %2153 = vmatprep.subr.mxu0 0.0
      %2154 = vmatpush1.msra.mxu0 0.0
      %2155 = vmatprep.subr.mxu0 0.0
      %2156 = vmatpush1.msra.mxu0 0.0
      %2157 = vmatprep.subr.mxu0 0.0
      %2158 = vmatpush1.msra.mxu0 0.0
      %2159 = vmatprep.subr.mxu0 0.0
      %2160 = vmatpush1.msra.mxu0 0.0
      %2161 = vmatprep.subr.mxu0 0.0
      %2162 = vmatpush1.msra.mxu0 0.0
      %2163 = vmatprep.mubr.f32.mxu0 0.0
      %2164 = vmatmul.mubr.f32.gmra.mrb[0].mxu0 %v2079
      %v2165 = vpop.f32.mrb[0].mxu0
      %v2166 = vadd.f32 %v2076, %v2165
      %v2167 = vpop.f32.mrb[0].mxu0
      %2168 = vmatprep.mubr.f32.mxu0 0.0
      %2169 = vmatmul.mubr.f32.gmra.mrb[0].mxu0 %v2082
      %v2170 = vpop.f32.mrb[0].mxu0
      %v2171 = vadd.f32 %v2076, %v2170
      %v2172 = vpop.f32.mrb[0].mxu0
      %2173 = vmatprep.mubr.f32.mxu0 0.0
      %2174 = vmatmul.mubr.f32.gmra.mrb[0].mxu0 %v2085
      %v2175 = vpop.f32.mrb[0].mxu0
      %v2176 = vadd.f32 %v2076, %v2175
      %v2177 = vpop.f32.mrb[0].mxu0
      %2178 = vmatprep.mubr.f32.mxu0 0.0
      %2179 = vmatmul.mubr.f32.gmra.mrb[0].mxu0 %v2088
      %v2180 = vpop.f32.mrb[0].mxu0
      %v2181 = vadd.f32 %v2076, %v2180
      %v2182 = vpop.f32.mrb[0].mxu0
      %2183 = vmatprep.mubr.f32.mxu0 0.0
      %2184 = vmatmul.mubr.f32.gmra.mrb[0].mxu0 %v2091
      %v2185 = vpop.f32.mrb[0].mxu0
      %v2186 = vadd.f32 %v2076, %v2185
      %v2187 = vpop.f32.mrb[0].mxu0
      %2188 = vmatprep.mubr.f32.mxu0 0.0
      %2189 = vmatmul.mubr.f32.gmra.mrb[0].mxu0 %v2094
      %v2190 = vpop.f32.mrb[0].mxu0
      %v2191 = vadd.f32 %v2076, %v2190
      %v2192 = vpop.f32.mrb[0].mxu0
      %2193 = vmatprep.mubr.f32.mxu0 0.0
      %2194 = vmatmul.mubr.f32.gmra.mrb[0].mxu0 %v2097
      %v2195 = vpop.f32.mrb[0].mxu0
      %v2196 = vadd.f32 %v2076, %v2195
      %v2197 = vpop.f32.mrb[0].mxu0
      %2198 = vdwg.mxu0
      %v2199 = vld [vmem:[%s549] sm:$0xff]
      %v2200 = vld [vmem:[%s549 + $0x8] sm:$0xff]
      %v2201 = vld [vmem:[%s549 + $0x10] sm:$0xff]
      %v2202 = vld [vmem:[%s549 + $0x18] sm:$0xff]
      %v2203 = vld [vmem:[%s549 + $0x20] sm:$0xff]
      %v2204 = vld [vmem:[%s549 + $0x28] sm:$0xff]
      %v2205 = vld [vmem:[%s549 + $0x30] sm:$0xff]
      %v2206 = vmul.f32 %v2166, %v2199
      %v2207 = vmul.f32 %v2171, %v2200
      %v2208 = vmul.f32 %v2176, %v2201
      %v2209 = vmul.f32 %v2181, %v2202
      %v2210 = vmul.f32 %v2186, %v2203
      %v2211 = vmul.f32 %v2191, %v2204
      %v2212 = vmul.f32 %v2196, %v2205
      %v2213 = vld [vmem:[%s15] sm:$0xff]
      %v2214 = vld [vmem:[%s15 + $0x8] sm:$0xff]
      %v2215 = vld [vmem:[%s15 + $0x10] sm:$0xff]
      %v2216 = vld [vmem:[%s15 + $0x18] sm:$0xff]
      %v2217 = vld [vmem:[%s15 + $0x20] sm:$0xff]
      %v2218 = vld [vmem:[%s15 + $0x28] sm:$0xff]
      %vm2219 = vcmask 392192
      %v2221 = vsel %vm2219, %v2206, 0
      %v2224 = vsel %vm2219, %v2207, 0
      %v2227 = vsel %vm2219, %v2208, 0
      %v2230 = vsel %vm2219, %v2209, 0
      %v2233 = vsel %vm2219, %v2210, 0
      %v2236 = vsel %vm2219, %v2211, 0
      %v2239 = vsel %vm2219, %v2212, 0
      %2241 = vmatprep.subr.mxu0 0.0
      %2242 = vmatpush1.msra.mxu0 %v2213
      %2243 = vmatprep.subr.mxu0 0.0
      %2244 = vmatpush1.msra.mxu0 %v2214
      %2245 = vmatprep.subr.mxu0 0.0
      %2246 = vmatpush1.msra.mxu0 %v2215
      %2247 = vmatprep.subr.mxu0 0.0
      %2248 = vmatpush1.msra.mxu0 %v2216
      %2249 = vmatprep.subr.mxu0 0.0
      %2250 = vmatpush1.msra.mxu0 %v2217
      %2251 = vmatprep.subr.mxu0 0.0
      %2252 = vmatpush1.msra.mxu0 %v2218
      %2253 = vmatprep.subr.mxu0 0.0
      %2254 = vmatpush1.msra.mxu0 0.0
      %2255 = vmatprep.subr.mxu0 0.0
      %2256 = vmatpush1.msra.mxu0 0.0
      %2257 = vmatprep.subr.mxu0 0.0
      %2258 = vmatpush1.msra.mxu0 0.0
      %2259 = vmatprep.subr.mxu0 0.0
      %2260 = vmatpush1.msra.mxu0 0.0
      %2261 = vmatprep.subr.mxu0 0.0
      %2262 = vmatpush1.msra.mxu0 0.0
      %2263 = vmatprep.subr.mxu0 0.0
      %2264 = vmatpush1.msra.mxu0 0.0
      %2265 = vmatprep.subr.mxu0 0.0
      %2266 = vmatpush1.msra.mxu0 0.0
      %2267 = vmatprep.subr.mxu0 0.0
      %2268 = vmatpush1.msra.mxu0 0.0
      %2269 = vmatprep.subr.mxu0 0.0
      %2270 = vmatpush1.msra.mxu0 0.0
      %2271 = vmatprep.subr.mxu0 0.0
      %2272 = vmatpush1.msra.mxu0 0.0
      %2273 = vmatprep.subr.mxu0 0.0
      %2274 = vmatpush1.msra.mxu0 0.0
      %2275 = vmatprep.subr.mxu0 0.0
      %2276 = vmatpush1.msra.mxu0 0.0
      %2277 = vmatprep.subr.mxu0 0.0
      %2278 = vmatpush1.msra.mxu0 0.0
      %2279 = vmatprep.subr.mxu0 0.0
      %2280 = vmatpush1.msra.mxu0 0.0
      %2281 = vmatprep.subr.mxu0 0.0
      %2282 = vmatpush1.msra.mxu0 0.0
      %2283 = vmatprep.subr.mxu0 0.0
      %2284 = vmatpush1.msra.mxu0 0.0
      %2285 = vmatprep.subr.mxu0 0.0
      %2286 = vmatpush1.msra.mxu0 0.0
      %2287 = vmatprep.subr.mxu0 0.0
      %2288 = vmatpush1.msra.mxu0 0.0
      %2289 = vmatprep.subr.mxu0 0.0
      %2290 = vmatpush1.msra.mxu0 0.0
      %2291 = vmatprep.subr.mxu0 0.0
      %2292 = vmatpush1.msra.mxu0 0.0
      %2293 = vmatprep.subr.mxu0 0.0
      %2294 = vmatpush1.msra.mxu0 0.0
      %2295 = vmatprep.subr.mxu0 0.0
      %2296 = vmatpush1.msra.mxu0 0.0
      %2297 = vmatprep.subr.mxu0 0.0
      %2298 = vmatpush1.msra.mxu0 0.0
      %2299 = vmatprep.subr.mxu0 0.0
      %2300 = vmatpush1.msra.mxu0 0.0
      %2301 = vmatprep.subr.mxu0 0.0
      %2302 = vmatpush1.msra.mxu0 0.0
      %2303 = vmatprep.subr.mxu0 0.0
      %2304 = vmatpush1.msra.mxu0 0.0
      %2305 = vmatprep.mubr.f32.mxu0 0.0
      %2306 = vmatmul.mubr.f32.gmra.mrb[0].mxu0 %v2221
      %v2307 = vpop.f32.mrb[0].mxu0
      %v2308 = vadd.f32 0.0, %v2307
      %v2309 = vpop.f32.mrb[0].mxu0
      %2310 = vmatprep.mubr.f32.mxu0 0.0
      %2311 = vmatmul.mubr.f32.gmra.mrb[0].mxu0 %v2224
      %v2312 = vpop.f32.mrb[0].mxu0
      %v2313 = vadd.f32 0.0, %v2312
      %v2314 = vpop.f32.mrb[0].mxu0
      %2315 = vmatprep.mubr.f32.mxu0 0.0
      %2316 = vmatmul.mubr.f32.gmra.mrb[0].mxu0 %v2227
      %v2317 = vpop.f32.mrb[0].mxu0
      %v2318 = vadd.f32 0.0, %v2317
      %v2319 = vpop.f32.mrb[0].mxu0
      %2320 = vmatprep.mubr.f32.mxu0 0.0
      %2321 = vmatmul.mubr.f32.gmra.mrb[0].mxu0 %v2230
      %v2322 = vpop.f32.mrb[0].mxu0
      %v2323 = vadd.f32 0.0, %v2322
      %v2324 = vpop.f32.mrb[0].mxu0
      %2325 = vmatprep.mubr.f32.mxu0 0.0
      %2326 = vmatmul.mubr.f32.gmra.mrb[0].mxu0 %v2233
      %v2327 = vpop.f32.mrb[0].mxu0
      %v2328 = vadd.f32 0.0, %v2327
      %v2329 = vpop.f32.mrb[0].mxu0
      %2330 = vmatprep.mubr.f32.mxu0 0.0
      %2331 = vmatmul.mubr.f32.gmra.mrb[0].mxu0 %v2236
      %v2332 = vpop.f32.mrb[0].mxu0
      %v2333 = vadd.f32 0.0, %v2332
      %v2334 = vpop.f32.mrb[0].mxu0
      %2335 = vmatprep.mubr.f32.mxu0 0.0
      %2336 = vmatmul.mubr.f32.gmra.mrb[0].mxu0 %v2239
      %v2337 = vpop.f32.mrb[0].mxu0
      %v2338 = vadd.f32 0.0, %v2337
      %v2339 = vpop.f32.mrb[0].mxu0
      %2340 = vdwg.mxu0
      %2341 = vst.msk [vmem:[%s558] sm:$0xff] %vm2219, %v2308
      %2342 = vst.msk [vmem:[%s558 + $0x8] sm:$0xff] %vm2219, %v2313
      %2343 = vst.msk [vmem:[%s558 + $0x10] sm:$0xff] %vm2219, %v2318
      %2344 = vst.msk [vmem:[%s558 + $0x18] sm:$0xff] %vm2219, %v2323
      %2345 = vst.msk [vmem:[%s558 + $0x20] sm:$0xff] %vm2219, %v2328
      %2346 = vst.msk [vmem:[%s558 + $0x28] sm:$0xff] %vm2219, %v2333
      %2347 = vst.msk [vmem:[%s558 + $0x30] sm:$0xff] %vm2219, %v2338
      %p2348 = scmp.lt.s32.totalorder %s27, 1
      %s2349 = scalar_select %p2348, %s27, 1
      %s2350 = smul.addr %s2349, 7
      %s2351 = smul.addr %s2350, 8
      %s2352 = scalar_lea.vmem %s16, %s2351
      // Predicated region
      $region85: #{spex_forward.13} parent=83 // pred_check
        %p2353 = pneg %p396
      $region86: #{spex_forward.13} parent=83 // pred_check_branch
        %2355 = sbr.rel (%p2353) target = $region88
      $region87: #{spex_forward.13} parent=83 // pred_region
        _
      $region88: #{spex_forward.13} parent=83 // pred_fallthru
        _
    $region84: #{spex_forward.13} parent=5 // pred_fallthru
      _
    %p2356 = scmp.le.s32.totalorder 2, %s22
    // Predicated region
    $region89: #{spex_forward.13} parent=5 // pred_check
      %p2357 = pneg %p2356
    $region90: #{spex_forward.13} parent=5 // pred_check_branch
      %2359 = sbr.rel (%p2357) target = $region92
    $region91: #{spex_forward.13} parent=5 // pred_region
      %s2360 = ssub.s32 %s22, 2
      // Predicated region
      $region93: #{spex_forward.13} parent=91 // pred_check
        %p2361 = pneg %p402
      $region94: #{spex_forward.13} parent=91 // pred_check_branch
        %2363 = sbr.rel (%p2361) target = $region96
      $region95: #{spex_forward.13} parent=91 // pred_region
        %p2364 = scmp.lt.s32.totalorder %s28, 1
        %s2365 = scalar_select %p2364, %s28, 1
        %s2366 = smul.addr %s2365, 7
        %s2367 = smul.addr %s2366, 8
        %s2368 = scalar_lea.vmem %s16, %s2367
      $region96: #{spex_forward.13} parent=91 // pred_fallthru
        _
    $region92: #{spex_forward.13} parent=5 // pred_fallthru
      _
  $region6: #{spex_forward.13} parent=0 // loop_footer
    %s26 = sadd.s32 1, %s22
  $region7: #{spex_forward.13} parent=0 // loop_footer_branch
    %21 = sbr.rel target = $region3
  $region8: #{spex_forward.13} parent=0 // loop_exit
    _

</llo_original>
